<compile_context>
chip_gen: v7x
topology: tpu7x:2x2x1
jax: 0.10.0
libtpu: 0.0.40
codegen_flags: <defaults>
</compile_context>

<pallas_src>
import functools

import jax
import jax.numpy as jnp
from jax.experimental import pallas as pl
from jax.experimental.pallas import tpu as pltpu

_BN_EPS = 1e-5


# ----------------------------------------------------------------------------
# In-kernel building blocks
# ----------------------------------------------------------------------------
def _conv3x3_acc(parts, H, W, P):
    """3x3, stride-1, pad-1 conv in channels-x-pixels layout.

    parts: list of (activation (Ci, P) f32, tap-weight ref (9, O, Ci) bf16).
    Passing several parts implements an implicit channel-concat of their activations.
    In-kernel im2col: 9 lane rolls + border masks, each tap is a bf16 MXU matmul
    accumulated in f32.  Returns the raw (O, P) f32 accumulator (no BN/bias/act).
    """
    col = jax.lax.broadcasted_iota(jnp.int32, (1, P), 1)
    log2w = (W - 1).bit_length()                              # W is a power of two
    xw = jnp.bitwise_and(col, W - 1)                          # x coordinate within row
    yh = jnp.bitwise_and(jnp.right_shift(col, log2w), H - 1)  # y coordinate within image
    n_out = parts[0][1].shape[1]
    acc = jnp.zeros((n_out, P), jnp.float32)
    for t in range(9):
        dy, dx = t // 3 - 1, t % 3 - 1
        off = dy * W + dx
        ok = ((yh + dy >= 0) & (yh + dy < H) &
              (xw + dx >= 0) & (xw + dx < W))
        mask = jnp.where(ok, 1.0, 0.0)                        # (1, P) f32 border mask
        for act, w_ref in parts:
            shifted = act if off == 0 else pltpu.roll(act, (-off) % P, 1)
            acc = acc + jnp.dot(w_ref[t], (shifted * mask).astype(jnp.bfloat16),
                                preferred_element_type=jnp.float32)
    return acc


def _twostage_kernel(x_ref, spool_ref, upm_ref, gapm_ref,
                     we1_ref, se1_ref, he1_ref,
                     we2_ref, se2_ref, he2_ref,
                     wd1a_ref, wd1b_ref, sd1_ref, hd1_ref,
                     ws1o_ref, bs1o_ref,
                     wca_ref, wcb_ref, sc_ref, hc_ref,
                     w1_ref, b1_ref, w2_ref, b2_ref, wcls_ref, bcls_ref,
                     o_ref, *, B, H, W):
    f32 = jnp.float32
    P = B * H * W
    Hp, Wp = H // 2, W // 2
    Pp = B * Hp * Wp

    x = x_ref[...]                                                        # (C, P)

    # --------------------------- stage one: U-Net ---------------------------
    e1 = jnp.maximum(_conv3x3_acc([(x, we1_ref)], H, W, P)
                     * se1_ref[...] + he1_ref[...], 0.0)                  # (F, P)

    # 2x2 max-pool: max over 4 lane-rolled copies, then compact anchors with an
    # exact 0/1 selection matmul (keeps pixels lane-dense: P -> Pp).
    pre = jnp.maximum(jnp.maximum(e1, pltpu.roll(e1, P - 1, 1)),
                      jnp.maximum(pltpu.roll(e1, P - W, 1),
                                  pltpu.roll(e1, P - W - 1, 1)))
    pooled = jnp.dot(pre, spool_ref[...], preferred_element_type=f32)     # (F, Pp)

    e2 = jnp.maximum(_conv3x3_acc([(pooled, we2_ref)], Hp, Wp, Pp)
                     * se2_ref[...] + he2_ref[...], 0.0)                  # (2F, Pp)

    # nearest 2x upsample back to full resolution (exact 0/1 replication matmul).
    up = jnp.dot(e2, upm_ref[...], preferred_element_type=f32)            # (2F, P)

    # decoder conv on concat([e1, up]); concat folded into two-part accumulation.
    d1 = jnp.maximum(_conv3x3_acc([(e1, wd1a_ref), (up, wd1b_ref)], H, W, P)
                     * sd1_ref[...] + hd1_ref[...], 0.0)                  # (F, P)

    # 1x1 output conv of stage one -> x_diff.
    x_diff = (jnp.dot(ws1o_ref[...], d1.astype(jnp.bfloat16),
                      preferred_element_type=f32) + bs1o_ref[...])        # (C, P)

    # ---------------- stage two: SE-CNN on concat([x, x_diff]) ----------------
    f = jnp.maximum(_conv3x3_acc([(x, wca_ref), (x_diff, wcb_ref)], H, W, P)
                    * sc_ref[...] + hc_ref[...], 0.0)                     # (F2, P)

    # SE squeeze: per-batch global average pool as one matmul with a (P, B) matrix.
    s = jnp.dot(f, gapm_ref[...], preferred_element_type=f32)             # (F2, B)
    z = jnp.maximum(jnp.dot(w1_ref[...], s, preferred_element_type=f32)
                    + b1_ref[...], 0.0)                                   # (F2//r, B)
    g = jax.nn.sigmoid(jnp.dot(w2_ref[...], z, preferred_element_type=f32)
                       + b2_ref[...])                                     # (F2, B)
    # Exact identity: GAP(f * g_channel) == GAP(f) * g_channel  ->  drop the rescale pass.
    pooled2 = s * g                                                       # (F2, B)
    o_ref[...] = (jnp.dot(wcls_ref[...], pooled2, preferred_element_type=f32)
                  + bcls_ref[...])                                        # (NC, B)


# ----------------------------------------------------------------------------
# Host-side parameter / layout preparation
# ----------------------------------------------------------------------------
def _taps_bf16(w):
    """(O, I, 3, 3) PyTorch conv weight -> (9, O, I) bf16 tap stack, t = dy*3+dx."""
    o, i = w.shape[0], w.shape[1]
    return jnp.transpose(w, (2, 3, 0, 1)).reshape(9, o, i).astype(jnp.bfloat16)


def _fold_bn(gamma, beta, mean, var, conv_bias):
    scale = gamma * jax.lax.rsqrt(var + _BN_EPS)
    shift = beta + scale * (conv_bias - mean)
    return (scale.reshape(-1, 1).astype(jnp.float32),
            shift.reshape(-1, 1).astype(jnp.float32))


def _spatial_mats(B, H, W):
    """Constant 0/1 matrices: pool anchor-select (P,Pp), nearest upsample (Pp,P),
    per-batch mean (P,B)."""
    HW, P = H * W, B * H * W
    Hp, Wp = H // 2, W // 2
    Pp = B * Hp * Wp
    p = jnp.arange(P)
    b, y, xx = p // HW, (p % HW) // W, p % W
    q_src = b * (Hp * Wp) + (y // 2) * Wp + (xx // 2)
    anchor = ((y % 2) == 0) & ((xx % 2) == 0)
    spool = ((q_src[:, None] == jnp.arange(Pp)[None, :]) & anchor[:, None]
             ).astype(jnp.float32)                                        # (P, Pp)
    upm = (jnp.arange(Pp)[:, None] == q_src[None, :]).astype(jnp.float32) # (Pp, P)
    gapm = (b[:, None] == jnp.arange(B)[None, :]).astype(jnp.float32) / float(HW)
    return spool, upm, gapm


def twostage_forward(x_nchw, p):
    B, C, H, W = x_nchw.shape
    assert (H & (H - 1)) == 0 and (W & (W - 1)) == 0 and H >= 2 and W >= 2
    P = B * H * W
    NC = p["cls_w"].shape[0]
    F = p["e1_w"].shape[0]

    # channels-x-pixels layout; pixel (lane) index = b*H*W + y*W + x.
    x_cp = jnp.transpose(x_nchw, (1, 0, 2, 3)).reshape(C, P).astype(jnp.float32)
    spool, upm, gapm = _spatial_mats(B, H, W)

    se1, he1 = _fold_bn(p["e1_g"], p["e1_beta"], p["e1_rm"], p["e1_rv"], p["e1_b"])
    se2, he2 = _fold_bn(p["e2_g"], p["e2_beta"], p["e2_rm"], p["e2_rv"], p["e2_b"])
    sd1, hd1 = _fold_bn(p["d1_g"], p["d1_beta"], p["d1_rm"], p["d1_rv"], p["d1_b"])
    sc, hc = _fold_bn(p["c_g"], p["c_beta"], p["c_rm"], p["c_rv"], p["c_b"])

    logits_nb = pl.pallas_call(
        functools.partial(_twostage_kernel, B=B, H=H, W=W),
        out_shape=jax.ShapeDtypeStruct((NC, B), jnp.float32),
    )(
        x_cp, spool, upm, gapm,
        _taps_bf16(p["e1_w"]), se1, he1,
        _taps_bf16(p["e2_w"]), se2, he2,
        _taps_bf16(p["d1_w"][:, :F]), _taps_bf16(p["d1_w"][:, F:]), sd1, hd1,
        p["s1o_w"][:, :, 0, 0].astype(jnp.bfloat16),
        p["s1o_b"].reshape(-1, 1).astype(jnp.float32),
        _taps_bf16(p["c_w"][:, :C]), _taps_bf16(p["c_w"][:, C:]), sc, hc,
        p["fc1_w"].astype(jnp.float32), p["fc1_b"].reshape(-1, 1).astype(jnp.float32),
        p["fc2_w"].astype(jnp.float32), p["fc2_b"].reshape(-1, 1).astype(jnp.float32),
        p["cls_w"].astype(jnp.float32), p["cls_b"].reshape(-1, 1).astype(jnp.float32),
    )
    return logits_nb.T                                                    # (B, NC)


# ----------------------------------------------------------------------------
# Deterministic parameter construction (synthesized architecture, see TODO above)
# ----------------------------------------------------------------------------
def init_params(key, C=4, F=8, F2=16, r=4, num_classes=2):
    ks = jax.random.split(key, 8)

    def cw(k, o, i, kh=3, kw=3):
        return 0.1 * jax.random.normal(k, (o, i, kh, kw), jnp.float32)

    def lin(k, o, i):
        return 0.1 * jax.random.normal(k, (o, i), jnp.float32)

    def bn(n):
        g = jnp.ones((n,), jnp.float32) + 0.01 * jnp.arange(n, dtype=jnp.float32)
        beta = 0.01 * jnp.arange(n, dtype=jnp.float32)
        rm = jnp.zeros((n,), jnp.float32)    # running_mean
        rv = jnp.ones((n,), jnp.float32)     # running_var
        return g, beta, rm, rv

    p = {}
    p["e1_w"] = cw(ks[0], F, C);          p["e1_b"] = jnp.full((F,), 0.01, jnp.float32)
    p["e1_g"], p["e1_beta"], p["e1_rm"], p["e1_rv"] = bn(F)
    p["e2_w"] = cw(ks[1], 2 * F, F);      p["e2_b"] = jnp.full((2 * F,), 0.01, jnp.float32)
    p["e2_g"], p["e2_beta"], p["e2_rm"], p["e2_rv"] = bn(2 * F)
    p["d1_w"] = cw(ks[2], F, 3 * F);      p["d1_b"] = jnp.full((F,), 0.01, jnp.float32)
    p["d1_g"], p["d1_beta"], p["d1_rm"], p["d1_rv"] = bn(F)
    p["s1o_w"] = cw(ks[3], C, F, 1, 1);   p["s1o_b"] = jnp.zeros((C,), jnp.float32)
    p["c_w"] = cw(ks[4], F2, 2 * C);      p["c_b"] = jnp.full((F2,), 0.01, jnp.float32)
    p["c_g"], p["c_beta"], p["c_rm"], p["c_rv"] = bn(F2)
    p["fc1_w"] = lin(ks[5], F2 // r, F2); p["fc1_b"] = jnp.zeros((F2 // r,), jnp.float32)
    p["fc2_w"] = lin(ks[6], F2, F2 // r); p["fc2_b"] = jnp.zeros((F2,), jnp.float32)
    p["cls_w"] = lin(ks[7], num_classes, F2)
    p["cls_b"] = jnp.zeros((num_classes,), jnp.float32)
    return p


if __name__ == "__main__":
    key = jax.random.PRNGKey(0)
    kx, kp = jax.random.split(key)

    B, C, H, W = 2, 4, 16, 16
    NUM_CLASSES = 2
    x = jax.random.normal(kx, (B, C, H, W), jnp.float32)       # NCHW like PyTorch
    params = init_params(kp, C=C, F=8, F2=16, r=4, num_classes=NUM_CLASSES)

    fwd = jax.jit(twostage_forward)
    out = jax.block_until_ready(fwd(x, params))

    assert out.shape == (B, NUM_CLASSES), out.shape
    assert jnp.all(jnp.isfinite(out))
    print("KERNEL_OK")
</pallas_src>

<mosaic_0001>
module attributes {stable_mosaic.version = 11 : i64} {
  func.func @_twostage_kernel(%arg0: memref<4x512xf32, #tpu.memory_space<vmem>>, %arg1: memref<512x128xf32, #tpu.memory_space<vmem>>, %arg2: memref<128x512xf32, #tpu.memory_space<vmem>>, %arg3: memref<512x2xf32, #tpu.memory_space<vmem>>, %arg4: memref<9x8x4xbf16, #tpu.memory_space<vmem>>, %arg5: memref<8x1xf32, #tpu.memory_space<vmem>>, %arg6: memref<8x1xf32, #tpu.memory_space<vmem>>, %arg7: memref<9x16x8xbf16, #tpu.memory_space<vmem>>, %arg8: memref<16x1xf32, #tpu.memory_space<vmem>>, %arg9: memref<16x1xf32, #tpu.memory_space<vmem>>, %arg10: memref<9x8x8xbf16, #tpu.memory_space<vmem>>, %arg11: memref<9x8x16xbf16, #tpu.memory_space<vmem>>, %arg12: memref<8x1xf32, #tpu.memory_space<vmem>>, %arg13: memref<8x1xf32, #tpu.memory_space<vmem>>, %arg14: memref<4x8xbf16, #tpu.memory_space<vmem>>, %arg15: memref<4x1xf32, #tpu.memory_space<vmem>>, %arg16: memref<9x16x4xbf16, #tpu.memory_space<vmem>>, %arg17: memref<9x16x4xbf16, #tpu.memory_space<vmem>>, %arg18: memref<16x1xf32, #tpu.memory_space<vmem>>, %arg19: memref<16x1xf32, #tpu.memory_space<vmem>>, %arg20: memref<4x16xf32, #tpu.memory_space<vmem>>, %arg21: memref<4x1xf32, #tpu.memory_space<vmem>>, %arg22: memref<16x4xf32, #tpu.memory_space<vmem>>, %arg23: memref<16x1xf32, #tpu.memory_space<vmem>>, %arg24: memref<2x16xf32, #tpu.memory_space<vmem>>, %arg25: memref<2x1xf32, #tpu.memory_space<vmem>>, %arg26: memref<2x2xf32, #tpu.memory_space<vmem>>) attributes {dimension_semantics = [], scalar_prefetch = 0 : i64, scratch_operands = 0 : i64, tpu.core_type = #tpu.core_type<tc>} {
    %c0 = arith.constant 0 : index
    %c0_0 = arith.constant 0 : index
    %0 = vector.load %arg0[%c0, %c0_0] : memref<4x512xf32, #tpu.memory_space<vmem>>, vector<4x512xf32>
    %1 = tpu.iota {dimensions = array<i32: 1>} : vector<1x512xi32>
    %c15_i32 = arith.constant 15 : i32
    %2 = vector.broadcast %c15_i32 : i32 to vector<1x512xi32>
    %3 = arith.andi %1, %2 : vector<1x512xi32>
    %c4_i32 = arith.constant 4 : i32
    %4 = vector.broadcast %c4_i32 : i32 to vector<1x512xi32>
    %5 = arith.shrsi %1, %4 : vector<1x512xi32>
    %c15_i32_1 = arith.constant 15 : i32
    %6 = vector.broadcast %c15_i32_1 : i32 to vector<1x512xi32>
    %7 = arith.andi %5, %6 : vector<1x512xi32>
    %cst = arith.constant 0.000000e+00 : f32
    %8 = vector.broadcast %cst : f32 to vector<8x512xf32>
    %c-1_i32 = arith.constant -1 : i32
    %9 = vector.broadcast %c-1_i32 : i32 to vector<1x512xi32>
    %10 = arith.addi %7, %9 : vector<1x512xi32>
    %c0_i32 = arith.constant 0 : i32
    %11 = vector.broadcast %c0_i32 : i32 to vector<1x512xi32>
    %12 = arith.cmpi sge, %10, %11 : vector<1x512xi32>
    %c-1_i32_2 = arith.constant -1 : i32
    %13 = vector.broadcast %c-1_i32_2 : i32 to vector<1x512xi32>
    %14 = arith.addi %7, %13 : vector<1x512xi32>
    %c16_i32 = arith.constant 16 : i32
    %15 = vector.broadcast %c16_i32 : i32 to vector<1x512xi32>
    %16 = arith.cmpi slt, %14, %15 : vector<1x512xi32>
    %17 = arith.andi %12, %16 : vector<1x512xi1>
    %c-1_i32_3 = arith.constant -1 : i32
    %18 = vector.broadcast %c-1_i32_3 : i32 to vector<1x512xi32>
    %19 = arith.addi %3, %18 : vector<1x512xi32>
    %c0_i32_4 = arith.constant 0 : i32
    %20 = vector.broadcast %c0_i32_4 : i32 to vector<1x512xi32>
    %21 = arith.cmpi sge, %19, %20 : vector<1x512xi32>
    %22 = arith.andi %17, %21 : vector<1x512xi1>
    %c-1_i32_5 = arith.constant -1 : i32
    %23 = vector.broadcast %c-1_i32_5 : i32 to vector<1x512xi32>
    %24 = arith.addi %3, %23 : vector<1x512xi32>
    %c16_i32_6 = arith.constant 16 : i32
    %25 = vector.broadcast %c16_i32_6 : i32 to vector<1x512xi32>
    %26 = arith.cmpi slt, %24, %25 : vector<1x512xi32>
    %27 = arith.andi %22, %26 : vector<1x512xi1>
    %cst_7 = arith.constant 1.000000e+00 : f32
    %cst_8 = arith.constant 0.000000e+00 : f32
    %28 = vector.broadcast %cst_7 : f32 to vector<1x512xf32>
    %29 = vector.broadcast %cst_8 : f32 to vector<1x512xf32>
    %30 = arith.select %27, %28, %29 : vector<1x512xi1>, vector<1x512xf32>
    %c17_i32 = arith.constant 17 : i32
    %31 = tpu.dynamic_rotate %0 by %c17_i32 dim 1 : vector<4x512xf32>, i32 -> vector<4x512xf32>
    %c0_9 = arith.constant 0 : index
    %c0_10 = arith.constant 0 : index
    %c0_11 = arith.constant 0 : index
    %32 = vector.load %arg4[%c0_9, %c0_10, %c0_11] : memref<9x8x4xbf16, #tpu.memory_space<vmem>>, vector<1x8x4xbf16>
    %33 = vector.shape_cast %32 : vector<1x8x4xbf16> to vector<8x4xbf16>
    %34 = vector.broadcast %30 : vector<1x512xf32> to vector<4x512xf32>
    %35 = arith.mulf %31, %34 : vector<4x512xf32>
    %36 = arith.truncf %35 : vector<4x512xf32> to vector<4x512xbf16>
    %cst_12 = arith.constant dense<0.000000e+00> : vector<8x512xf32>
    %37 = tpu.matmul %33, %36, %cst_12 {dimension_numbers = #tpu.dot_dimension_numbers<[1], [0], [0], [1], [0, 0, 1, 1], [], []>} : vector<8x4xbf16>, vector<4x512xbf16>, vector<8x512xf32> -> vector<8x512xf32>
    %38 = arith.addf %8, %37 : vector<8x512xf32>
    %c-1_i32_13 = arith.constant -1 : i32
    %39 = vector.broadcast %c-1_i32_13 : i32 to vector<1x512xi32>
    %40 = arith.addi %7, %39 : vector<1x512xi32>
    %c0_i32_14 = arith.constant 0 : i32
    %41 = vector.broadcast %c0_i32_14 : i32 to vector<1x512xi32>
    %42 = arith.cmpi sge, %40, %41 : vector<1x512xi32>
    %c-1_i32_15 = arith.constant -1 : i32
    %43 = vector.broadcast %c-1_i32_15 : i32 to vector<1x512xi32>
    %44 = arith.addi %7, %43 : vector<1x512xi32>
    %c16_i32_16 = arith.constant 16 : i32
    %45 = vector.broadcast %c16_i32_16 : i32 to vector<1x512xi32>
    %46 = arith.cmpi slt, %44, %45 : vector<1x512xi32>
    %47 = arith.andi %42, %46 : vector<1x512xi1>
    %c0_i32_17 = arith.constant 0 : i32
    %48 = vector.broadcast %c0_i32_17 : i32 to vector<1x512xi32>
    %49 = arith.addi %3, %48 : vector<1x512xi32>
    %c0_i32_18 = arith.constant 0 : i32
    %50 = vector.broadcast %c0_i32_18 : i32 to vector<1x512xi32>
    %51 = arith.cmpi sge, %49, %50 : vector<1x512xi32>
    %52 = arith.andi %47, %51 : vector<1x512xi1>
    %c0_i32_19 = arith.constant 0 : i32
    %53 = vector.broadcast %c0_i32_19 : i32 to vector<1x512xi32>
    %54 = arith.addi %3, %53 : vector<1x512xi32>
    %c16_i32_20 = arith.constant 16 : i32
    %55 = vector.broadcast %c16_i32_20 : i32 to vector<1x512xi32>
    %56 = arith.cmpi slt, %54, %55 : vector<1x512xi32>
    %57 = arith.andi %52, %56 : vector<1x512xi1>
    %cst_21 = arith.constant 1.000000e+00 : f32
    %cst_22 = arith.constant 0.000000e+00 : f32
    %58 = vector.broadcast %cst_21 : f32 to vector<1x512xf32>
    %59 = vector.broadcast %cst_22 : f32 to vector<1x512xf32>
    %60 = arith.select %57, %58, %59 : vector<1x512xi1>, vector<1x512xf32>
    %c16_i32_23 = arith.constant 16 : i32
    %61 = tpu.dynamic_rotate %0 by %c16_i32_23 dim 1 : vector<4x512xf32>, i32 -> vector<4x512xf32>
    %c1 = arith.constant 1 : index
    %c0_24 = arith.constant 0 : index
    %c0_25 = arith.constant 0 : index
    %62 = vector.load %arg4[%c1, %c0_24, %c0_25] : memref<9x8x4xbf16, #tpu.memory_space<vmem>>, vector<1x8x4xbf16>
    %63 = vector.shape_cast %62 : vector<1x8x4xbf16> to vector<8x4xbf16>
    %64 = vector.broadcast %60 : vector<1x512xf32> to vector<4x512xf32>
    %65 = arith.mulf %61, %64 : vector<4x512xf32>
    %66 = arith.truncf %65 : vector<4x512xf32> to vector<4x512xbf16>
    %cst_26 = arith.constant dense<0.000000e+00> : vector<8x512xf32>
    %67 = tpu.matmul %63, %66, %cst_26 {dimension_numbers = #tpu.dot_dimension_numbers<[1], [0], [0], [1], [0, 0, 1, 1], [], []>} : vector<8x4xbf16>, vector<4x512xbf16>, vector<8x512xf32> -> vector<8x512xf32>
    %68 = arith.addf %38, %67 : vector<8x512xf32>
    %c-1_i32_27 = arith.constant -1 : i32
    %69 = vector.broadcast %c-1_i32_27 : i32 to vector<1x512xi32>
    %70 = arith.addi %7, %69 : vector<1x512xi32>
    %c0_i32_28 = arith.constant 0 : i32
    %71 = vector.broadcast %c0_i32_28 : i32 to vector<1x512xi32>
    %72 = arith.cmpi sge, %70, %71 : vector<1x512xi32>
    %c-1_i32_29 = arith.constant -1 : i32
    %73 = vector.broadcast %c-1_i32_29 : i32 to vector<1x512xi32>
    %74 = arith.addi %7, %73 : vector<1x512xi32>
    %c16_i32_30 = arith.constant 16 : i32
    %75 = vector.broadcast %c16_i32_30 : i32 to vector<1x512xi32>
    %76 = arith.cmpi slt, %74, %75 : vector<1x512xi32>
    %77 = arith.andi %72, %76 : vector<1x512xi1>
    %c1_i32 = arith.constant 1 : i32
    %78 = vector.broadcast %c1_i32 : i32 to vector<1x512xi32>
    %79 = arith.addi %3, %78 : vector<1x512xi32>
    %c0_i32_31 = arith.constant 0 : i32
    %80 = vector.broadcast %c0_i32_31 : i32 to vector<1x512xi32>
    %81 = arith.cmpi sge, %79, %80 : vector<1x512xi32>
    %82 = arith.andi %77, %81 : vector<1x512xi1>
    %c1_i32_32 = arith.constant 1 : i32
    %83 = vector.broadcast %c1_i32_32 : i32 to vector<1x512xi32>
    %84 = arith.addi %3, %83 : vector<1x512xi32>
    %c16_i32_33 = arith.constant 16 : i32
    %85 = vector.broadcast %c16_i32_33 : i32 to vector<1x512xi32>
    %86 = arith.cmpi slt, %84, %85 : vector<1x512xi32>
    %87 = arith.andi %82, %86 : vector<1x512xi1>
    %cst_34 = arith.constant 1.000000e+00 : f32
    %cst_35 = arith.constant 0.000000e+00 : f32
    %88 = vector.broadcast %cst_34 : f32 to vector<1x512xf32>
    %89 = vector.broadcast %cst_35 : f32 to vector<1x512xf32>
    %90 = arith.select %87, %88, %89 : vector<1x512xi1>, vector<1x512xf32>
    %c15_i32_36 = arith.constant 15 : i32
    %91 = tpu.dynamic_rotate %0 by %c15_i32_36 dim 1 : vector<4x512xf32>, i32 -> vector<4x512xf32>
    %c2 = arith.constant 2 : index
    %c0_37 = arith.constant 0 : index
    %c0_38 = arith.constant 0 : index
    %92 = vector.load %arg4[%c2, %c0_37, %c0_38] : memref<9x8x4xbf16, #tpu.memory_space<vmem>>, vector<1x8x4xbf16>
    %93 = vector.shape_cast %92 : vector<1x8x4xbf16> to vector<8x4xbf16>
    %94 = vector.broadcast %90 : vector<1x512xf32> to vector<4x512xf32>
    %95 = arith.mulf %91, %94 : vector<4x512xf32>
    %96 = arith.truncf %95 : vector<4x512xf32> to vector<4x512xbf16>
    %cst_39 = arith.constant dense<0.000000e+00> : vector<8x512xf32>
    %97 = tpu.matmul %93, %96, %cst_39 {dimension_numbers = #tpu.dot_dimension_numbers<[1], [0], [0], [1], [0, 0, 1, 1], [], []>} : vector<8x4xbf16>, vector<4x512xbf16>, vector<8x512xf32> -> vector<8x512xf32>
    %98 = arith.addf %68, %97 : vector<8x512xf32>
    %c0_i32_40 = arith.constant 0 : i32
    %99 = vector.broadcast %c0_i32_40 : i32 to vector<1x512xi32>
    %100 = arith.addi %7, %99 : vector<1x512xi32>
    %c0_i32_41 = arith.constant 0 : i32
    %101 = vector.broadcast %c0_i32_41 : i32 to vector<1x512xi32>
    %102 = arith.cmpi sge, %100, %101 : vector<1x512xi32>
    %c0_i32_42 = arith.constant 0 : i32
    %103 = vector.broadcast %c0_i32_42 : i32 to vector<1x512xi32>
    %104 = arith.addi %7, %103 : vector<1x512xi32>
    %c16_i32_43 = arith.constant 16 : i32
    %105 = vector.broadcast %c16_i32_43 : i32 to vector<1x512xi32>
    %106 = arith.cmpi slt, %104, %105 : vector<1x512xi32>
    %107 = arith.andi %102, %106 : vector<1x512xi1>
    %c-1_i32_44 = arith.constant -1 : i32
    %108 = vector.broadcast %c-1_i32_44 : i32 to vector<1x512xi32>
    %109 = arith.addi %3, %108 : vector<1x512xi32>
    %c0_i32_45 = arith.constant 0 : i32
    %110 = vector.broadcast %c0_i32_45 : i32 to vector<1x512xi32>
    %111 = arith.cmpi sge, %109, %110 : vector<1x512xi32>
    %112 = arith.andi %107, %111 : vector<1x512xi1>
    %c-1_i32_46 = arith.constant -1 : i32
    %113 = vector.broadcast %c-1_i32_46 : i32 to vector<1x512xi32>
    %114 = arith.addi %3, %113 : vector<1x512xi32>
    %c16_i32_47 = arith.constant 16 : i32
    %115 = vector.broadcast %c16_i32_47 : i32 to vector<1x512xi32>
    %116 = arith.cmpi slt, %114, %115 : vector<1x512xi32>
    %117 = arith.andi %112, %116 : vector<1x512xi1>
    %cst_48 = arith.constant 1.000000e+00 : f32
    %cst_49 = arith.constant 0.000000e+00 : f32
    %118 = vector.broadcast %cst_48 : f32 to vector<1x512xf32>
    %119 = vector.broadcast %cst_49 : f32 to vector<1x512xf32>
    %120 = arith.select %117, %118, %119 : vector<1x512xi1>, vector<1x512xf32>
    %c1_i32_50 = arith.constant 1 : i32
    %121 = tpu.dynamic_rotate %0 by %c1_i32_50 dim 1 : vector<4x512xf32>, i32 -> vector<4x512xf32>
    %c3 = arith.constant 3 : index
    %c0_51 = arith.constant 0 : index
    %c0_52 = arith.constant 0 : index
    %122 = vector.load %arg4[%c3, %c0_51, %c0_52] : memref<9x8x4xbf16, #tpu.memory_space<vmem>>, vector<1x8x4xbf16>
    %123 = vector.shape_cast %122 : vector<1x8x4xbf16> to vector<8x4xbf16>
    %124 = vector.broadcast %120 : vector<1x512xf32> to vector<4x512xf32>
    %125 = arith.mulf %121, %124 : vector<4x512xf32>
    %126 = arith.truncf %125 : vector<4x512xf32> to vector<4x512xbf16>
    %cst_53 = arith.constant dense<0.000000e+00> : vector<8x512xf32>
    %127 = tpu.matmul %123, %126, %cst_53 {dimension_numbers = #tpu.dot_dimension_numbers<[1], [0], [0], [1], [0, 0, 1, 1], [], []>} : vector<8x4xbf16>, vector<4x512xbf16>, vector<8x512xf32> -> vector<8x512xf32>
    %128 = arith.addf %98, %127 : vector<8x512xf32>
    %c0_i32_54 = arith.constant 0 : i32
    %129 = vector.broadcast %c0_i32_54 : i32 to vector<1x512xi32>
    %130 = arith.addi %7, %129 : vector<1x512xi32>
    %c0_i32_55 = arith.constant 0 : i32
    %131 = vector.broadcast %c0_i32_55 : i32 to vector<1x512xi32>
    %132 = arith.cmpi sge, %130, %131 : vector<1x512xi32>
    %c0_i32_56 = arith.constant 0 : i32
    %133 = vector.broadcast %c0_i32_56 : i32 to vector<1x512xi32>
    %134 = arith.addi %7, %133 : vector<1x512xi32>
    %c16_i32_57 = arith.constant 16 : i32
    %135 = vector.broadcast %c16_i32_57 : i32 to vector<1x512xi32>
    %136 = arith.cmpi slt, %134, %135 : vector<1x512xi32>
    %137 = arith.andi %132, %136 : vector<1x512xi1>
    %c0_i32_58 = arith.constant 0 : i32
    %138 = vector.broadcast %c0_i32_58 : i32 to vector<1x512xi32>
    %139 = arith.addi %3, %138 : vector<1x512xi32>
    %c0_i32_59 = arith.constant 0 : i32
    %140 = vector.broadcast %c0_i32_59 : i32 to vector<1x512xi32>
    %141 = arith.cmpi sge, %139, %140 : vector<1x512xi32>
    %142 = arith.andi %137, %141 : vector<1x512xi1>
    %c0_i32_60 = arith.constant 0 : i32
    %143 = vector.broadcast %c0_i32_60 : i32 to vector<1x512xi32>
    %144 = arith.addi %3, %143 : vector<1x512xi32>
    %c16_i32_61 = arith.constant 16 : i32
    %145 = vector.broadcast %c16_i32_61 : i32 to vector<1x512xi32>
    %146 = arith.cmpi slt, %144, %145 : vector<1x512xi32>
    %147 = arith.andi %142, %146 : vector<1x512xi1>
    %cst_62 = arith.constant 1.000000e+00 : f32
    %cst_63 = arith.constant 0.000000e+00 : f32
    %148 = vector.broadcast %cst_62 : f32 to vector<1x512xf32>
    %149 = vector.broadcast %cst_63 : f32 to vector<1x512xf32>
    %150 = arith.select %147, %148, %149 : vector<1x512xi1>, vector<1x512xf32>
    %c4 = arith.constant 4 : index
    %c0_64 = arith.constant 0 : index
    %c0_65 = arith.constant 0 : index
    %151 = vector.load %arg4[%c4, %c0_64, %c0_65] : memref<9x8x4xbf16, #tpu.memory_space<vmem>>, vector<1x8x4xbf16>
    %152 = vector.shape_cast %151 : vector<1x8x4xbf16> to vector<8x4xbf16>
    %153 = vector.broadcast %150 : vector<1x512xf32> to vector<4x512xf32>
    %154 = arith.mulf %0, %153 : vector<4x512xf32>
    %155 = arith.truncf %154 : vector<4x512xf32> to vector<4x512xbf16>
    %cst_66 = arith.constant dense<0.000000e+00> : vector<8x512xf32>
    %156 = tpu.matmul %152, %155, %cst_66 {dimension_numbers = #tpu.dot_dimension_numbers<[1], [0], [0], [1], [0, 0, 1, 1], [], []>} : vector<8x4xbf16>, vector<4x512xbf16>, vector<8x512xf32> -> vector<8x512xf32>
    %157 = arith.addf %128, %156 : vector<8x512xf32>
    %c0_i32_67 = arith.constant 0 : i32
    %158 = vector.broadcast %c0_i32_67 : i32 to vector<1x512xi32>
    %159 = arith.addi %7, %158 : vector<1x512xi32>
    %c0_i32_68 = arith.constant 0 : i32
    %160 = vector.broadcast %c0_i32_68 : i32 to vector<1x512xi32>
    %161 = arith.cmpi sge, %159, %160 : vector<1x512xi32>
    %c0_i32_69 = arith.constant 0 : i32
    %162 = vector.broadcast %c0_i32_69 : i32 to vector<1x512xi32>
    %163 = arith.addi %7, %162 : vector<1x512xi32>
    %c16_i32_70 = arith.constant 16 : i32
    %164 = vector.broadcast %c16_i32_70 : i32 to vector<1x512xi32>
    %165 = arith.cmpi slt, %163, %164 : vector<1x512xi32>
    %166 = arith.andi %161, %165 : vector<1x512xi1>
    %c1_i32_71 = arith.constant 1 : i32
    %167 = vector.broadcast %c1_i32_71 : i32 to vector<1x512xi32>
    %168 = arith.addi %3, %167 : vector<1x512xi32>
    %c0_i32_72 = arith.constant 0 : i32
    %169 = vector.broadcast %c0_i32_72 : i32 to vector<1x512xi32>
    %170 = arith.cmpi sge, %168, %169 : vector<1x512xi32>
    %171 = arith.andi %166, %170 : vector<1x512xi1>
    %c1_i32_73 = arith.constant 1 : i32
    %172 = vector.broadcast %c1_i32_73 : i32 to vector<1x512xi32>
    %173 = arith.addi %3, %172 : vector<1x512xi32>
    %c16_i32_74 = arith.constant 16 : i32
    %174 = vector.broadcast %c16_i32_74 : i32 to vector<1x512xi32>
    %175 = arith.cmpi slt, %173, %174 : vector<1x512xi32>
    %176 = arith.andi %171, %175 : vector<1x512xi1>
    %cst_75 = arith.constant 1.000000e+00 : f32
    %cst_76 = arith.constant 0.000000e+00 : f32
    %177 = vector.broadcast %cst_75 : f32 to vector<1x512xf32>
    %178 = vector.broadcast %cst_76 : f32 to vector<1x512xf32>
    %179 = arith.select %176, %177, %178 : vector<1x512xi1>, vector<1x512xf32>
    %c511_i32 = arith.constant 511 : i32
    %180 = tpu.dynamic_rotate %0 by %c511_i32 dim 1 : vector<4x512xf32>, i32 -> vector<4x512xf32>
    %c5 = arith.constant 5 : index
    %c0_77 = arith.constant 0 : index
    %c0_78 = arith.constant 0 : index
    %181 = vector.load %arg4[%c5, %c0_77, %c0_78] : memref<9x8x4xbf16, #tpu.memory_space<vmem>>, vector<1x8x4xbf16>
    %182 = vector.shape_cast %181 : vector<1x8x4xbf16> to vector<8x4xbf16>
    %183 = vector.broadcast %179 : vector<1x512xf32> to vector<4x512xf32>
    %184 = arith.mulf %180, %183 : vector<4x512xf32>
    %185 = arith.truncf %184 : vector<4x512xf32> to vector<4x512xbf16>
    %cst_79 = arith.constant dense<0.000000e+00> : vector<8x512xf32>
    %186 = tpu.matmul %182, %185, %cst_79 {dimension_numbers = #tpu.dot_dimension_numbers<[1], [0], [0], [1], [0, 0, 1, 1], [], []>} : vector<8x4xbf16>, vector<4x512xbf16>, vector<8x512xf32> -> vector<8x512xf32>
    %187 = arith.addf %157, %186 : vector<8x512xf32>
    %c1_i32_80 = arith.constant 1 : i32
    %188 = vector.broadcast %c1_i32_80 : i32 to vector<1x512xi32>
    %189 = arith.addi %7, %188 : vector<1x512xi32>
    %c0_i32_81 = arith.constant 0 : i32
    %190 = vector.broadcast %c0_i32_81 : i32 to vector<1x512xi32>
    %191 = arith.cmpi sge, %189, %190 : vector<1x512xi32>
    %c1_i32_82 = arith.constant 1 : i32
    %192 = vector.broadcast %c1_i32_82 : i32 to vector<1x512xi32>
    %193 = arith.addi %7, %192 : vector<1x512xi32>
    %c16_i32_83 = arith.constant 16 : i32
    %194 = vector.broadcast %c16_i32_83 : i32 to vector<1x512xi32>
    %195 = arith.cmpi slt, %193, %194 : vector<1x512xi32>
    %196 = arith.andi %191, %195 : vector<1x512xi1>
    %c-1_i32_84 = arith.constant -1 : i32
    %197 = vector.broadcast %c-1_i32_84 : i32 to vector<1x512xi32>
    %198 = arith.addi %3, %197 : vector<1x512xi32>
    %c0_i32_85 = arith.constant 0 : i32
    %199 = vector.broadcast %c0_i32_85 : i32 to vector<1x512xi32>
    %200 = arith.cmpi sge, %198, %199 : vector<1x512xi32>
    %201 = arith.andi %196, %200 : vector<1x512xi1>
    %c-1_i32_86 = arith.constant -1 : i32
    %202 = vector.broadcast %c-1_i32_86 : i32 to vector<1x512xi32>
    %203 = arith.addi %3, %202 : vector<1x512xi32>
    %c16_i32_87 = arith.constant 16 : i32
    %204 = vector.broadcast %c16_i32_87 : i32 to vector<1x512xi32>
    %205 = arith.cmpi slt, %203, %204 : vector<1x512xi32>
    %206 = arith.andi %201, %205 : vector<1x512xi1>
    %cst_88 = arith.constant 1.000000e+00 : f32
    %cst_89 = arith.constant 0.000000e+00 : f32
    %207 = vector.broadcast %cst_88 : f32 to vector<1x512xf32>
    %208 = vector.broadcast %cst_89 : f32 to vector<1x512xf32>
    %209 = arith.select %206, %207, %208 : vector<1x512xi1>, vector<1x512xf32>
    %c497_i32 = arith.constant 497 : i32
    %210 = tpu.dynamic_rotate %0 by %c497_i32 dim 1 : vector<4x512xf32>, i32 -> vector<4x512xf32>
    %c6 = arith.constant 6 : index
    %c0_90 = arith.constant 0 : index
    %c0_91 = arith.constant 0 : index
    %211 = vector.load %arg4[%c6, %c0_90, %c0_91] : memref<9x8x4xbf16, #tpu.memory_space<vmem>>, vector<1x8x4xbf16>
    %212 = vector.shape_cast %211 : vector<1x8x4xbf16> to vector<8x4xbf16>
    %213 = vector.broadcast %209 : vector<1x512xf32> to vector<4x512xf32>
    %214 = arith.mulf %210, %213 : vector<4x512xf32>
    %215 = arith.truncf %214 : vector<4x512xf32> to vector<4x512xbf16>
    %cst_92 = arith.constant dense<0.000000e+00> : vector<8x512xf32>
    %216 = tpu.matmul %212, %215, %cst_92 {dimension_numbers = #tpu.dot_dimension_numbers<[1], [0], [0], [1], [0, 0, 1, 1], [], []>} : vector<8x4xbf16>, vector<4x512xbf16>, vector<8x512xf32> -> vector<8x512xf32>
    %217 = arith.addf %187, %216 : vector<8x512xf32>
    %c1_i32_93 = arith.constant 1 : i32
    %218 = vector.broadcast %c1_i32_93 : i32 to vector<1x512xi32>
    %219 = arith.addi %7, %218 : vector<1x512xi32>
    %c0_i32_94 = arith.constant 0 : i32
    %220 = vector.broadcast %c0_i32_94 : i32 to vector<1x512xi32>
    %221 = arith.cmpi sge, %219, %220 : vector<1x512xi32>
    %c1_i32_95 = arith.constant 1 : i32
    %222 = vector.broadcast %c1_i32_95 : i32 to vector<1x512xi32>
    %223 = arith.addi %7, %222 : vector<1x512xi32>
    %c16_i32_96 = arith.constant 16 : i32
    %224 = vector.broadcast %c16_i32_96 : i32 to vector<1x512xi32>
    %225 = arith.cmpi slt, %223, %224 : vector<1x512xi32>
    %226 = arith.andi %221, %225 : vector<1x512xi1>
    %c0_i32_97 = arith.constant 0 : i32
    %227 = vector.broadcast %c0_i32_97 : i32 to vector<1x512xi32>
    %228 = arith.addi %3, %227 : vector<1x512xi32>
    %c0_i32_98 = arith.constant 0 : i32
    %229 = vector.broadcast %c0_i32_98 : i32 to vector<1x512xi32>
    %230 = arith.cmpi sge, %228, %229 : vector<1x512xi32>
    %231 = arith.andi %226, %230 : vector<1x512xi1>
    %c0_i32_99 = arith.constant 0 : i32
    %232 = vector.broadcast %c0_i32_99 : i32 to vector<1x512xi32>
    %233 = arith.addi %3, %232 : vector<1x512xi32>
    %c16_i32_100 = arith.constant 16 : i32
    %234 = vector.broadcast %c16_i32_100 : i32 to vector<1x512xi32>
    %235 = arith.cmpi slt, %233, %234 : vector<1x512xi32>
    %236 = arith.andi %231, %235 : vector<1x512xi1>
    %cst_101 = arith.constant 1.000000e+00 : f32
    %cst_102 = arith.constant 0.000000e+00 : f32
    %237 = vector.broadcast %cst_101 : f32 to vector<1x512xf32>
    %238 = vector.broadcast %cst_102 : f32 to vector<1x512xf32>
    %239 = arith.select %236, %237, %238 : vector<1x512xi1>, vector<1x512xf32>
    %c496_i32 = arith.constant 496 : i32
    %240 = tpu.dynamic_rotate %0 by %c496_i32 dim 1 : vector<4x512xf32>, i32 -> vector<4x512xf32>
    %c7 = arith.constant 7 : index
    %c0_103 = arith.constant 0 : index
    %c0_104 = arith.constant 0 : index
    %241 = vector.load %arg4[%c7, %c0_103, %c0_104] : memref<9x8x4xbf16, #tpu.memory_space<vmem>>, vector<1x8x4xbf16>
    %242 = vector.shape_cast %241 : vector<1x8x4xbf16> to vector<8x4xbf16>
    %243 = vector.broadcast %239 : vector<1x512xf32> to vector<4x512xf32>
    %244 = arith.mulf %240, %243 : vector<4x512xf32>
    %245 = arith.truncf %244 : vector<4x512xf32> to vector<4x512xbf16>
    %cst_105 = arith.constant dense<0.000000e+00> : vector<8x512xf32>
    %246 = tpu.matmul %242, %245, %cst_105 {dimension_numbers = #tpu.dot_dimension_numbers<[1], [0], [0], [1], [0, 0, 1, 1], [], []>} : vector<8x4xbf16>, vector<4x512xbf16>, vector<8x512xf32> -> vector<8x512xf32>
    %247 = arith.addf %217, %246 : vector<8x512xf32>
    %c1_i32_106 = arith.constant 1 : i32
    %248 = vector.broadcast %c1_i32_106 : i32 to vector<1x512xi32>
    %249 = arith.addi %7, %248 : vector<1x512xi32>
    %c0_i32_107 = arith.constant 0 : i32
    %250 = vector.broadcast %c0_i32_107 : i32 to vector<1x512xi32>
    %251 = arith.cmpi sge, %249, %250 : vector<1x512xi32>
    %c1_i32_108 = arith.constant 1 : i32
    %252 = vector.broadcast %c1_i32_108 : i32 to vector<1x512xi32>
    %253 = arith.addi %7, %252 : vector<1x512xi32>
    %c16_i32_109 = arith.constant 16 : i32
    %254 = vector.broadcast %c16_i32_109 : i32 to vector<1x512xi32>
    %255 = arith.cmpi slt, %253, %254 : vector<1x512xi32>
    %256 = arith.andi %251, %255 : vector<1x512xi1>
    %c1_i32_110 = arith.constant 1 : i32
    %257 = vector.broadcast %c1_i32_110 : i32 to vector<1x512xi32>
    %258 = arith.addi %3, %257 : vector<1x512xi32>
    %c0_i32_111 = arith.constant 0 : i32
    %259 = vector.broadcast %c0_i32_111 : i32 to vector<1x512xi32>
    %260 = arith.cmpi sge, %258, %259 : vector<1x512xi32>
    %261 = arith.andi %256, %260 : vector<1x512xi1>
    %c1_i32_112 = arith.constant 1 : i32
    %262 = vector.broadcast %c1_i32_112 : i32 to vector<1x512xi32>
    %263 = arith.addi %3, %262 : vector<1x512xi32>
    %c16_i32_113 = arith.constant 16 : i32
    %264 = vector.broadcast %c16_i32_113 : i32 to vector<1x512xi32>
    %265 = arith.cmpi slt, %263, %264 : vector<1x512xi32>
    %266 = arith.andi %261, %265 : vector<1x512xi1>
    %cst_114 = arith.constant 1.000000e+00 : f32
    %cst_115 = arith.constant 0.000000e+00 : f32
    %267 = vector.broadcast %cst_114 : f32 to vector<1x512xf32>
    %268 = vector.broadcast %cst_115 : f32 to vector<1x512xf32>
    %269 = arith.select %266, %267, %268 : vector<1x512xi1>, vector<1x512xf32>
    %c495_i32 = arith.constant 495 : i32
    %270 = tpu.dynamic_rotate %0 by %c495_i32 dim 1 : vector<4x512xf32>, i32 -> vector<4x512xf32>
    %c8 = arith.constant 8 : index
    %c0_116 = arith.constant 0 : index
    %c0_117 = arith.constant 0 : index
    %271 = vector.load %arg4[%c8, %c0_116, %c0_117] : memref<9x8x4xbf16, #tpu.memory_space<vmem>>, vector<1x8x4xbf16>
    %272 = vector.shape_cast %271 : vector<1x8x4xbf16> to vector<8x4xbf16>
    %273 = vector.broadcast %269 : vector<1x512xf32> to vector<4x512xf32>
    %274 = arith.mulf %270, %273 : vector<4x512xf32>
    %275 = arith.truncf %274 : vector<4x512xf32> to vector<4x512xbf16>
    %cst_118 = arith.constant dense<0.000000e+00> : vector<8x512xf32>
    %276 = tpu.matmul %272, %275, %cst_118 {dimension_numbers = #tpu.dot_dimension_numbers<[1], [0], [0], [1], [0, 0, 1, 1], [], []>} : vector<8x4xbf16>, vector<4x512xbf16>, vector<8x512xf32> -> vector<8x512xf32>
    %277 = arith.addf %247, %276 : vector<8x512xf32>
    %c0_119 = arith.constant 0 : index
    %c0_120 = arith.constant 0 : index
    %278 = vector.load %arg5[%c0_119, %c0_120] : memref<8x1xf32, #tpu.memory_space<vmem>>, vector<8x1xf32>
    %279 = vector.broadcast %278 : vector<8x1xf32> to vector<8x512xf32>
    %280 = arith.mulf %277, %279 : vector<8x512xf32>
    %c0_121 = arith.constant 0 : index
    %c0_122 = arith.constant 0 : index
    %281 = vector.load %arg6[%c0_121, %c0_122] : memref<8x1xf32, #tpu.memory_space<vmem>>, vector<8x1xf32>
    %282 = vector.broadcast %281 : vector<8x1xf32> to vector<8x512xf32>
    %283 = arith.addf %280, %282 : vector<8x512xf32>
    %cst_123 = arith.constant 0.000000e+00 : f32
    %284 = vector.broadcast %cst_123 : f32 to vector<8x512xf32>
    %285 = arith.maximumf %283, %284 : vector<8x512xf32>
    %c511_i32_124 = arith.constant 511 : i32
    %286 = tpu.dynamic_rotate %285 by %c511_i32_124 dim 1 : vector<8x512xf32>, i32 -> vector<8x512xf32>
    %287 = arith.maximumf %285, %286 : vector<8x512xf32>
    %c496_i32_125 = arith.constant 496 : i32
    %288 = tpu.dynamic_rotate %285 by %c496_i32_125 dim 1 : vector<8x512xf32>, i32 -> vector<8x512xf32>
    %c495_i32_126 = arith.constant 495 : i32
    %289 = tpu.dynamic_rotate %285 by %c495_i32_126 dim 1 : vector<8x512xf32>, i32 -> vector<8x512xf32>
    %290 = arith.maximumf %288, %289 : vector<8x512xf32>
    %291 = arith.maximumf %287, %290 : vector<8x512xf32>
    %c0_127 = arith.constant 0 : index
    %c0_128 = arith.constant 0 : index
    %292 = vector.load %arg1[%c0_127, %c0_128] : memref<512x128xf32, #tpu.memory_space<vmem>>, vector<512x128xf32>
    %cst_129 = arith.constant dense<0.000000e+00> : vector<8x128xf32>
    %293 = tpu.matmul %291, %292, %cst_129 {dimension_numbers = #tpu.dot_dimension_numbers<[1], [0], [0], [1], [0, 0, 1, 1], [], []>} : vector<8x512xf32>, vector<512x128xf32>, vector<8x128xf32> -> vector<8x128xf32>
    %294 = tpu.iota {dimensions = array<i32: 1>} : vector<1x128xi32>
    %c7_i32 = arith.constant 7 : i32
    %295 = vector.broadcast %c7_i32 : i32 to vector<1x128xi32>
    %296 = arith.andi %294, %295 : vector<1x128xi32>
    %c3_i32 = arith.constant 3 : i32
    %297 = vector.broadcast %c3_i32 : i32 to vector<1x128xi32>
    %298 = arith.shrsi %294, %297 : vector<1x128xi32>
    %c7_i32_130 = arith.constant 7 : i32
    %299 = vector.broadcast %c7_i32_130 : i32 to vector<1x128xi32>
    %300 = arith.andi %298, %299 : vector<1x128xi32>
    %cst_131 = arith.constant 0.000000e+00 : f32
    %301 = vector.broadcast %cst_131 : f32 to vector<16x128xf32>
    %c-1_i32_132 = arith.constant -1 : i32
    %302 = vector.broadcast %c-1_i32_132 : i32 to vector<1x128xi32>
    %303 = arith.addi %300, %302 : vector<1x128xi32>
    %c0_i32_133 = arith.constant 0 : i32
    %304 = vector.broadcast %c0_i32_133 : i32 to vector<1x128xi32>
    %305 = arith.cmpi sge, %303, %304 : vector<1x128xi32>
    %c-1_i32_134 = arith.constant -1 : i32
    %306 = vector.broadcast %c-1_i32_134 : i32 to vector<1x128xi32>
    %307 = arith.addi %300, %306 : vector<1x128xi32>
    %c8_i32 = arith.constant 8 : i32
    %308 = vector.broadcast %c8_i32 : i32 to vector<1x128xi32>
    %309 = arith.cmpi slt, %307, %308 : vector<1x128xi32>
    %310 = arith.andi %305, %309 : vector<1x128xi1>
    %c-1_i32_135 = arith.constant -1 : i32
    %311 = vector.broadcast %c-1_i32_135 : i32 to vector<1x128xi32>
    %312 = arith.addi %296, %311 : vector<1x128xi32>
    %c0_i32_136 = arith.constant 0 : i32
    %313 = vector.broadcast %c0_i32_136 : i32 to vector<1x128xi32>
    %314 = arith.cmpi sge, %312, %313 : vector<1x128xi32>
    %315 = arith.andi %310, %314 : vector<1x128xi1>
    %c-1_i32_137 = arith.constant -1 : i32
    %316 = vector.broadcast %c-1_i32_137 : i32 to vector<1x128xi32>
    %317 = arith.addi %296, %316 : vector<1x128xi32>
    %c8_i32_138 = arith.constant 8 : i32
    %318 = vector.broadcast %c8_i32_138 : i32 to vector<1x128xi32>
    %319 = arith.cmpi slt, %317, %318 : vector<1x128xi32>
    %320 = arith.andi %315, %319 : vector<1x128xi1>
    %cst_139 = arith.constant 1.000000e+00 : f32
    %cst_140 = arith.constant 0.000000e+00 : f32
    %321 = vector.broadcast %cst_139 : f32 to vector<1x128xf32>
    %322 = vector.broadcast %cst_140 : f32 to vector<1x128xf32>
    %323 = arith.select %320, %321, %322 : vector<1x128xi1>, vector<1x128xf32>
    %c9_i32 = arith.constant 9 : i32
    %324 = tpu.dynamic_rotate %293 by %c9_i32 dim 1 : vector<8x128xf32>, i32 -> vector<8x128xf32>
    %c0_141 = arith.constant 0 : index
    %c0_142 = arith.constant 0 : index
    %c0_143 = arith.constant 0 : index
    %325 = vector.load %arg7[%c0_141, %c0_142, %c0_143] : memref<9x16x8xbf16, #tpu.memory_space<vmem>>, vector<1x16x8xbf16>
    %326 = vector.shape_cast %325 : vector<1x16x8xbf16> to vector<16x8xbf16>
    %327 = vector.broadcast %323 : vector<1x128xf32> to vector<8x128xf32>
    %328 = arith.mulf %324, %327 : vector<8x128xf32>
    %329 = arith.truncf %328 : vector<8x128xf32> to vector<8x128xbf16>
    %cst_144 = arith.constant dense<0.000000e+00> : vector<16x128xf32>
    %330 = tpu.matmul %326, %329, %cst_144 {dimension_numbers = #tpu.dot_dimension_numbers<[1], [0], [0], [1], [0, 0, 1, 1], [], []>} : vector<16x8xbf16>, vector<8x128xbf16>, vector<16x128xf32> -> vector<16x128xf32>
    %331 = arith.addf %301, %330 : vector<16x128xf32>
    %c-1_i32_145 = arith.constant -1 : i32
    %332 = vector.broadcast %c-1_i32_145 : i32 to vector<1x128xi32>
    %333 = arith.addi %300, %332 : vector<1x128xi32>
    %c0_i32_146 = arith.constant 0 : i32
    %334 = vector.broadcast %c0_i32_146 : i32 to vector<1x128xi32>
    %335 = arith.cmpi sge, %333, %334 : vector<1x128xi32>
    %c-1_i32_147 = arith.constant -1 : i32
    %336 = vector.broadcast %c-1_i32_147 : i32 to vector<1x128xi32>
    %337 = arith.addi %300, %336 : vector<1x128xi32>
    %c8_i32_148 = arith.constant 8 : i32
    %338 = vector.broadcast %c8_i32_148 : i32 to vector<1x128xi32>
    %339 = arith.cmpi slt, %337, %338 : vector<1x128xi32>
    %340 = arith.andi %335, %339 : vector<1x128xi1>
    %c0_i32_149 = arith.constant 0 : i32
    %341 = vector.broadcast %c0_i32_149 : i32 to vector<1x128xi32>
    %342 = arith.addi %296, %341 : vector<1x128xi32>
    %c0_i32_150 = arith.constant 0 : i32
    %343 = vector.broadcast %c0_i32_150 : i32 to vector<1x128xi32>
    %344 = arith.cmpi sge, %342, %343 : vector<1x128xi32>
    %345 = arith.andi %340, %344 : vector<1x128xi1>
    %c0_i32_151 = arith.constant 0 : i32
    %346 = vector.broadcast %c0_i32_151 : i32 to vector<1x128xi32>
    %347 = arith.addi %296, %346 : vector<1x128xi32>
    %c8_i32_152 = arith.constant 8 : i32
    %348 = vector.broadcast %c8_i32_152 : i32 to vector<1x128xi32>
    %349 = arith.cmpi slt, %347, %348 : vector<1x128xi32>
    %350 = arith.andi %345, %349 : vector<1x128xi1>
    %cst_153 = arith.constant 1.000000e+00 : f32
    %cst_154 = arith.constant 0.000000e+00 : f32
    %351 = vector.broadcast %cst_153 : f32 to vector<1x128xf32>
    %352 = vector.broadcast %cst_154 : f32 to vector<1x128xf32>
    %353 = arith.select %350, %351, %352 : vector<1x128xi1>, vector<1x128xf32>
    %c8_i32_155 = arith.constant 8 : i32
    %354 = tpu.dynamic_rotate %293 by %c8_i32_155 dim 1 : vector<8x128xf32>, i32 -> vector<8x128xf32>
    %c1_156 = arith.constant 1 : index
    %c0_157 = arith.constant 0 : index
    %c0_158 = arith.constant 0 : index
    %355 = vector.load %arg7[%c1_156, %c0_157, %c0_158] : memref<9x16x8xbf16, #tpu.memory_space<vmem>>, vector<1x16x8xbf16>
    %356 = vector.shape_cast %355 : vector<1x16x8xbf16> to vector<16x8xbf16>
    %357 = vector.broadcast %353 : vector<1x128xf32> to vector<8x128xf32>
    %358 = arith.mulf %354, %357 : vector<8x128xf32>
    %359 = arith.truncf %358 : vector<8x128xf32> to vector<8x128xbf16>
    %cst_159 = arith.constant dense<0.000000e+00> : vector<16x128xf32>
    %360 = tpu.matmul %356, %359, %cst_159 {dimension_numbers = #tpu.dot_dimension_numbers<[1], [0], [0], [1], [0, 0, 1, 1], [], []>} : vector<16x8xbf16>, vector<8x128xbf16>, vector<16x128xf32> -> vector<16x128xf32>
    %361 = arith.addf %331, %360 : vector<16x128xf32>
    %c-1_i32_160 = arith.constant -1 : i32
    %362 = vector.broadcast %c-1_i32_160 : i32 to vector<1x128xi32>
    %363 = arith.addi %300, %362 : vector<1x128xi32>
    %c0_i32_161 = arith.constant 0 : i32
    %364 = vector.broadcast %c0_i32_161 : i32 to vector<1x128xi32>
    %365 = arith.cmpi sge, %363, %364 : vector<1x128xi32>
    %c-1_i32_162 = arith.constant -1 : i32
    %366 = vector.broadcast %c-1_i32_162 : i32 to vector<1x128xi32>
    %367 = arith.addi %300, %366 : vector<1x128xi32>
    %c8_i32_163 = arith.constant 8 : i32
    %368 = vector.broadcast %c8_i32_163 : i32 to vector<1x128xi32>
    %369 = arith.cmpi slt, %367, %368 : vector<1x128xi32>
    %370 = arith.andi %365, %369 : vector<1x128xi1>
    %c1_i32_164 = arith.constant 1 : i32
    %371 = vector.broadcast %c1_i32_164 : i32 to vector<1x128xi32>
    %372 = arith.addi %296, %371 : vector<1x128xi32>
    %c0_i32_165 = arith.constant 0 : i32
    %373 = vector.broadcast %c0_i32_165 : i32 to vector<1x128xi32>
    %374 = arith.cmpi sge, %372, %373 : vector<1x128xi32>
    %375 = arith.andi %370, %374 : vector<1x128xi1>
    %c1_i32_166 = arith.constant 1 : i32
    %376 = vector.broadcast %c1_i32_166 : i32 to vector<1x128xi32>
    %377 = arith.addi %296, %376 : vector<1x128xi32>
    %c8_i32_167 = arith.constant 8 : i32
    %378 = vector.broadcast %c8_i32_167 : i32 to vector<1x128xi32>
    %379 = arith.cmpi slt, %377, %378 : vector<1x128xi32>
    %380 = arith.andi %375, %379 : vector<1x128xi1>
    %cst_168 = arith.constant 1.000000e+00 : f32
    %cst_169 = arith.constant 0.000000e+00 : f32
    %381 = vector.broadcast %cst_168 : f32 to vector<1x128xf32>
    %382 = vector.broadcast %cst_169 : f32 to vector<1x128xf32>
    %383 = arith.select %380, %381, %382 : vector<1x128xi1>, vector<1x128xf32>
    %c7_i32_170 = arith.constant 7 : i32
    %384 = tpu.dynamic_rotate %293 by %c7_i32_170 dim 1 : vector<8x128xf32>, i32 -> vector<8x128xf32>
    %c2_171 = arith.constant 2 : index
    %c0_172 = arith.constant 0 : index
    %c0_173 = arith.constant 0 : index
    %385 = vector.load %arg7[%c2_171, %c0_172, %c0_173] : memref<9x16x8xbf16, #tpu.memory_space<vmem>>, vector<1x16x8xbf16>
    %386 = vector.shape_cast %385 : vector<1x16x8xbf16> to vector<16x8xbf16>
    %387 = vector.broadcast %383 : vector<1x128xf32> to vector<8x128xf32>
    %388 = arith.mulf %384, %387 : vector<8x128xf32>
    %389 = arith.truncf %388 : vector<8x128xf32> to vector<8x128xbf16>
    %cst_174 = arith.constant dense<0.000000e+00> : vector<16x128xf32>
    %390 = tpu.matmul %386, %389, %cst_174 {dimension_numbers = #tpu.dot_dimension_numbers<[1], [0], [0], [1], [0, 0, 1, 1], [], []>} : vector<16x8xbf16>, vector<8x128xbf16>, vector<16x128xf32> -> vector<16x128xf32>
    %391 = arith.addf %361, %390 : vector<16x128xf32>
    %c0_i32_175 = arith.constant 0 : i32
    %392 = vector.broadcast %c0_i32_175 : i32 to vector<1x128xi32>
    %393 = arith.addi %300, %392 : vector<1x128xi32>
    %c0_i32_176 = arith.constant 0 : i32
    %394 = vector.broadcast %c0_i32_176 : i32 to vector<1x128xi32>
    %395 = arith.cmpi sge, %393, %394 : vector<1x128xi32>
    %c0_i32_177 = arith.constant 0 : i32
    %396 = vector.broadcast %c0_i32_177 : i32 to vector<1x128xi32>
    %397 = arith.addi %300, %396 : vector<1x128xi32>
    %c8_i32_178 = arith.constant 8 : i32
    %398 = vector.broadcast %c8_i32_178 : i32 to vector<1x128xi32>
    %399 = arith.cmpi slt, %397, %398 : vector<1x128xi32>
    %400 = arith.andi %395, %399 : vector<1x128xi1>
    %c-1_i32_179 = arith.constant -1 : i32
    %401 = vector.broadcast %c-1_i32_179 : i32 to vector<1x128xi32>
    %402 = arith.addi %296, %401 : vector<1x128xi32>
    %c0_i32_180 = arith.constant 0 : i32
    %403 = vector.broadcast %c0_i32_180 : i32 to vector<1x128xi32>
    %404 = arith.cmpi sge, %402, %403 : vector<1x128xi32>
    %405 = arith.andi %400, %404 : vector<1x128xi1>
    %c-1_i32_181 = arith.constant -1 : i32
    %406 = vector.broadcast %c-1_i32_181 : i32 to vector<1x128xi32>
    %407 = arith.addi %296, %406 : vector<1x128xi32>
    %c8_i32_182 = arith.constant 8 : i32
    %408 = vector.broadcast %c8_i32_182 : i32 to vector<1x128xi32>
    %409 = arith.cmpi slt, %407, %408 : vector<1x128xi32>
    %410 = arith.andi %405, %409 : vector<1x128xi1>
    %cst_183 = arith.constant 1.000000e+00 : f32
    %cst_184 = arith.constant 0.000000e+00 : f32
    %411 = vector.broadcast %cst_183 : f32 to vector<1x128xf32>
    %412 = vector.broadcast %cst_184 : f32 to vector<1x128xf32>
    %413 = arith.select %410, %411, %412 : vector<1x128xi1>, vector<1x128xf32>
    %c1_i32_185 = arith.constant 1 : i32
    %414 = tpu.dynamic_rotate %293 by %c1_i32_185 dim 1 : vector<8x128xf32>, i32 -> vector<8x128xf32>
    %c3_186 = arith.constant 3 : index
    %c0_187 = arith.constant 0 : index
    %c0_188 = arith.constant 0 : index
    %415 = vector.load %arg7[%c3_186, %c0_187, %c0_188] : memref<9x16x8xbf16, #tpu.memory_space<vmem>>, vector<1x16x8xbf16>
    %416 = vector.shape_cast %415 : vector<1x16x8xbf16> to vector<16x8xbf16>
    %417 = vector.broadcast %413 : vector<1x128xf32> to vector<8x128xf32>
    %418 = arith.mulf %414, %417 : vector<8x128xf32>
    %419 = arith.truncf %418 : vector<8x128xf32> to vector<8x128xbf16>
    %cst_189 = arith.constant dense<0.000000e+00> : vector<16x128xf32>
    %420 = tpu.matmul %416, %419, %cst_189 {dimension_numbers = #tpu.dot_dimension_numbers<[1], [0], [0], [1], [0, 0, 1, 1], [], []>} : vector<16x8xbf16>, vector<8x128xbf16>, vector<16x128xf32> -> vector<16x128xf32>
    %421 = arith.addf %391, %420 : vector<16x128xf32>
    %c0_i32_190 = arith.constant 0 : i32
    %422 = vector.broadcast %c0_i32_190 : i32 to vector<1x128xi32>
    %423 = arith.addi %300, %422 : vector<1x128xi32>
    %c0_i32_191 = arith.constant 0 : i32
    %424 = vector.broadcast %c0_i32_191 : i32 to vector<1x128xi32>
    %425 = arith.cmpi sge, %423, %424 : vector<1x128xi32>
    %c0_i32_192 = arith.constant 0 : i32
    %426 = vector.broadcast %c0_i32_192 : i32 to vector<1x128xi32>
    %427 = arith.addi %300, %426 : vector<1x128xi32>
    %c8_i32_193 = arith.constant 8 : i32
    %428 = vector.broadcast %c8_i32_193 : i32 to vector<1x128xi32>
    %429 = arith.cmpi slt, %427, %428 : vector<1x128xi32>
    %430 = arith.andi %425, %429 : vector<1x128xi1>
    %c0_i32_194 = arith.constant 0 : i32
    %431 = vector.broadcast %c0_i32_194 : i32 to vector<1x128xi32>
    %432 = arith.addi %296, %431 : vector<1x128xi32>
    %c0_i32_195 = arith.constant 0 : i32
    %433 = vector.broadcast %c0_i32_195 : i32 to vector<1x128xi32>
    %434 = arith.cmpi sge, %432, %433 : vector<1x128xi32>
    %435 = arith.andi %430, %434 : vector<1x128xi1>
    %c0_i32_196 = arith.constant 0 : i32
    %436 = vector.broadcast %c0_i32_196 : i32 to vector<1x128xi32>
    %437 = arith.addi %296, %436 : vector<1x128xi32>
    %c8_i32_197 = arith.constant 8 : i32
    %438 = vector.broadcast %c8_i32_197 : i32 to vector<1x128xi32>
    %439 = arith.cmpi slt, %437, %438 : vector<1x128xi32>
    %440 = arith.andi %435, %439 : vector<1x128xi1>
    %cst_198 = arith.constant 1.000000e+00 : f32
    %cst_199 = arith.constant 0.000000e+00 : f32
    %441 = vector.broadcast %cst_198 : f32 to vector<1x128xf32>
    %442 = vector.broadcast %cst_199 : f32 to vector<1x128xf32>
    %443 = arith.select %440, %441, %442 : vector<1x128xi1>, vector<1x128xf32>
    %c4_200 = arith.constant 4 : index
    %c0_201 = arith.constant 0 : index
    %c0_202 = arith.constant 0 : index
    %444 = vector.load %arg7[%c4_200, %c0_201, %c0_202] : memref<9x16x8xbf16, #tpu.memory_space<vmem>>, vector<1x16x8xbf16>
    %445 = vector.shape_cast %444 : vector<1x16x8xbf16> to vector<16x8xbf16>
    %446 = vector.broadcast %443 : vector<1x128xf32> to vector<8x128xf32>
    %447 = arith.mulf %293, %446 : vector<8x128xf32>
    %448 = arith.truncf %447 : vector<8x128xf32> to vector<8x128xbf16>
    %cst_203 = arith.constant dense<0.000000e+00> : vector<16x128xf32>
    %449 = tpu.matmul %445, %448, %cst_203 {dimension_numbers = #tpu.dot_dimension_numbers<[1], [0], [0], [1], [0, 0, 1, 1], [], []>} : vector<16x8xbf16>, vector<8x128xbf16>, vector<16x128xf32> -> vector<16x128xf32>
    %450 = arith.addf %421, %449 : vector<16x128xf32>
    %c0_i32_204 = arith.constant 0 : i32
    %451 = vector.broadcast %c0_i32_204 : i32 to vector<1x128xi32>
    %452 = arith.addi %300, %451 : vector<1x128xi32>
    %c0_i32_205 = arith.constant 0 : i32
    %453 = vector.broadcast %c0_i32_205 : i32 to vector<1x128xi32>
    %454 = arith.cmpi sge, %452, %453 : vector<1x128xi32>
    %c0_i32_206 = arith.constant 0 : i32
    %455 = vector.broadcast %c0_i32_206 : i32 to vector<1x128xi32>
    %456 = arith.addi %300, %455 : vector<1x128xi32>
    %c8_i32_207 = arith.constant 8 : i32
    %457 = vector.broadcast %c8_i32_207 : i32 to vector<1x128xi32>
    %458 = arith.cmpi slt, %456, %457 : vector<1x128xi32>
    %459 = arith.andi %454, %458 : vector<1x128xi1>
    %c1_i32_208 = arith.constant 1 : i32
    %460 = vector.broadcast %c1_i32_208 : i32 to vector<1x128xi32>
    %461 = arith.addi %296, %460 : vector<1x128xi32>
    %c0_i32_209 = arith.constant 0 : i32
    %462 = vector.broadcast %c0_i32_209 : i32 to vector<1x128xi32>
    %463 = arith.cmpi sge, %461, %462 : vector<1x128xi32>
    %464 = arith.andi %459, %463 : vector<1x128xi1>
    %c1_i32_210 = arith.constant 1 : i32
    %465 = vector.broadcast %c1_i32_210 : i32 to vector<1x128xi32>
    %466 = arith.addi %296, %465 : vector<1x128xi32>
    %c8_i32_211 = arith.constant 8 : i32
    %467 = vector.broadcast %c8_i32_211 : i32 to vector<1x128xi32>
    %468 = arith.cmpi slt, %466, %467 : vector<1x128xi32>
    %469 = arith.andi %464, %468 : vector<1x128xi1>
    %cst_212 = arith.constant 1.000000e+00 : f32
    %cst_213 = arith.constant 0.000000e+00 : f32
    %470 = vector.broadcast %cst_212 : f32 to vector<1x128xf32>
    %471 = vector.broadcast %cst_213 : f32 to vector<1x128xf32>
    %472 = arith.select %469, %470, %471 : vector<1x128xi1>, vector<1x128xf32>
    %c127_i32 = arith.constant 127 : i32
    %473 = tpu.dynamic_rotate %293 by %c127_i32 dim 1 : vector<8x128xf32>, i32 -> vector<8x128xf32>
    %c5_214 = arith.constant 5 : index
    %c0_215 = arith.constant 0 : index
    %c0_216 = arith.constant 0 : index
    %474 = vector.load %arg7[%c5_214, %c0_215, %c0_216] : memref<9x16x8xbf16, #tpu.memory_space<vmem>>, vector<1x16x8xbf16>
    %475 = vector.shape_cast %474 : vector<1x16x8xbf16> to vector<16x8xbf16>
    %476 = vector.broadcast %472 : vector<1x128xf32> to vector<8x128xf32>
    %477 = arith.mulf %473, %476 : vector<8x128xf32>
    %478 = arith.truncf %477 : vector<8x128xf32> to vector<8x128xbf16>
    %cst_217 = arith.constant dense<0.000000e+00> : vector<16x128xf32>
    %479 = tpu.matmul %475, %478, %cst_217 {dimension_numbers = #tpu.dot_dimension_numbers<[1], [0], [0], [1], [0, 0, 1, 1], [], []>} : vector<16x8xbf16>, vector<8x128xbf16>, vector<16x128xf32> -> vector<16x128xf32>
    %480 = arith.addf %450, %479 : vector<16x128xf32>
    %c1_i32_218 = arith.constant 1 : i32
    %481 = vector.broadcast %c1_i32_218 : i32 to vector<1x128xi32>
    %482 = arith.addi %300, %481 : vector<1x128xi32>
    %c0_i32_219 = arith.constant 0 : i32
    %483 = vector.broadcast %c0_i32_219 : i32 to vector<1x128xi32>
    %484 = arith.cmpi sge, %482, %483 : vector<1x128xi32>
    %c1_i32_220 = arith.constant 1 : i32
    %485 = vector.broadcast %c1_i32_220 : i32 to vector<1x128xi32>
    %486 = arith.addi %300, %485 : vector<1x128xi32>
    %c8_i32_221 = arith.constant 8 : i32
    %487 = vector.broadcast %c8_i32_221 : i32 to vector<1x128xi32>
    %488 = arith.cmpi slt, %486, %487 : vector<1x128xi32>
    %489 = arith.andi %484, %488 : vector<1x128xi1>
    %c-1_i32_222 = arith.constant -1 : i32
    %490 = vector.broadcast %c-1_i32_222 : i32 to vector<1x128xi32>
    %491 = arith.addi %296, %490 : vector<1x128xi32>
    %c0_i32_223 = arith.constant 0 : i32
    %492 = vector.broadcast %c0_i32_223 : i32 to vector<1x128xi32>
    %493 = arith.cmpi sge, %491, %492 : vector<1x128xi32>
    %494 = arith.andi %489, %493 : vector<1x128xi1>
    %c-1_i32_224 = arith.constant -1 : i32
    %495 = vector.broadcast %c-1_i32_224 : i32 to vector<1x128xi32>
    %496 = arith.addi %296, %495 : vector<1x128xi32>
    %c8_i32_225 = arith.constant 8 : i32
    %497 = vector.broadcast %c8_i32_225 : i32 to vector<1x128xi32>
    %498 = arith.cmpi slt, %496, %497 : vector<1x128xi32>
    %499 = arith.andi %494, %498 : vector<1x128xi1>
    %cst_226 = arith.constant 1.000000e+00 : f32
    %cst_227 = arith.constant 0.000000e+00 : f32
    %500 = vector.broadcast %cst_226 : f32 to vector<1x128xf32>
    %501 = vector.broadcast %cst_227 : f32 to vector<1x128xf32>
    %502 = arith.select %499, %500, %501 : vector<1x128xi1>, vector<1x128xf32>
    %c121_i32 = arith.constant 121 : i32
    %503 = tpu.dynamic_rotate %293 by %c121_i32 dim 1 : vector<8x128xf32>, i32 -> vector<8x128xf32>
    %c6_228 = arith.constant 6 : index
    %c0_229 = arith.constant 0 : index
    %c0_230 = arith.constant 0 : index
    %504 = vector.load %arg7[%c6_228, %c0_229, %c0_230] : memref<9x16x8xbf16, #tpu.memory_space<vmem>>, vector<1x16x8xbf16>
    %505 = vector.shape_cast %504 : vector<1x16x8xbf16> to vector<16x8xbf16>
    %506 = vector.broadcast %502 : vector<1x128xf32> to vector<8x128xf32>
    %507 = arith.mulf %503, %506 : vector<8x128xf32>
    %508 = arith.truncf %507 : vector<8x128xf32> to vector<8x128xbf16>
    %cst_231 = arith.constant dense<0.000000e+00> : vector<16x128xf32>
    %509 = tpu.matmul %505, %508, %cst_231 {dimension_numbers = #tpu.dot_dimension_numbers<[1], [0], [0], [1], [0, 0, 1, 1], [], []>} : vector<16x8xbf16>, vector<8x128xbf16>, vector<16x128xf32> -> vector<16x128xf32>
    %510 = arith.addf %480, %509 : vector<16x128xf32>
    %c1_i32_232 = arith.constant 1 : i32
    %511 = vector.broadcast %c1_i32_232 : i32 to vector<1x128xi32>
    %512 = arith.addi %300, %511 : vector<1x128xi32>
    %c0_i32_233 = arith.constant 0 : i32
    %513 = vector.broadcast %c0_i32_233 : i32 to vector<1x128xi32>
    %514 = arith.cmpi sge, %512, %513 : vector<1x128xi32>
    %c1_i32_234 = arith.constant 1 : i32
    %515 = vector.broadcast %c1_i32_234 : i32 to vector<1x128xi32>
    %516 = arith.addi %300, %515 : vector<1x128xi32>
    %c8_i32_235 = arith.constant 8 : i32
    %517 = vector.broadcast %c8_i32_235 : i32 to vector<1x128xi32>
    %518 = arith.cmpi slt, %516, %517 : vector<1x128xi32>
    %519 = arith.andi %514, %518 : vector<1x128xi1>
    %c0_i32_236 = arith.constant 0 : i32
    %520 = vector.broadcast %c0_i32_236 : i32 to vector<1x128xi32>
    %521 = arith.addi %296, %520 : vector<1x128xi32>
    %c0_i32_237 = arith.constant 0 : i32
    %522 = vector.broadcast %c0_i32_237 : i32 to vector<1x128xi32>
    %523 = arith.cmpi sge, %521, %522 : vector<1x128xi32>
    %524 = arith.andi %519, %523 : vector<1x128xi1>
    %c0_i32_238 = arith.constant 0 : i32
    %525 = vector.broadcast %c0_i32_238 : i32 to vector<1x128xi32>
    %526 = arith.addi %296, %525 : vector<1x128xi32>
    %c8_i32_239 = arith.constant 8 : i32
    %527 = vector.broadcast %c8_i32_239 : i32 to vector<1x128xi32>
    %528 = arith.cmpi slt, %526, %527 : vector<1x128xi32>
    %529 = arith.andi %524, %528 : vector<1x128xi1>
    %cst_240 = arith.constant 1.000000e+00 : f32
    %cst_241 = arith.constant 0.000000e+00 : f32
    %530 = vector.broadcast %cst_240 : f32 to vector<1x128xf32>
    %531 = vector.broadcast %cst_241 : f32 to vector<1x128xf32>
    %532 = arith.select %529, %530, %531 : vector<1x128xi1>, vector<1x128xf32>
    %c120_i32 = arith.constant 120 : i32
    %533 = tpu.dynamic_rotate %293 by %c120_i32 dim 1 : vector<8x128xf32>, i32 -> vector<8x128xf32>
    %c7_242 = arith.constant 7 : index
    %c0_243 = arith.constant 0 : index
    %c0_244 = arith.constant 0 : index
    %534 = vector.load %arg7[%c7_242, %c0_243, %c0_244] : memref<9x16x8xbf16, #tpu.memory_space<vmem>>, vector<1x16x8xbf16>
    %535 = vector.shape_cast %534 : vector<1x16x8xbf16> to vector<16x8xbf16>
    %536 = vector.broadcast %532 : vector<1x128xf32> to vector<8x128xf32>
    %537 = arith.mulf %533, %536 : vector<8x128xf32>
    %538 = arith.truncf %537 : vector<8x128xf32> to vector<8x128xbf16>
    %cst_245 = arith.constant dense<0.000000e+00> : vector<16x128xf32>
    %539 = tpu.matmul %535, %538, %cst_245 {dimension_numbers = #tpu.dot_dimension_numbers<[1], [0], [0], [1], [0, 0, 1, 1], [], []>} : vector<16x8xbf16>, vector<8x128xbf16>, vector<16x128xf32> -> vector<16x128xf32>
    %540 = arith.addf %510, %539 : vector<16x128xf32>
    %c1_i32_246 = arith.constant 1 : i32
    %541 = vector.broadcast %c1_i32_246 : i32 to vector<1x128xi32>
    %542 = arith.addi %300, %541 : vector<1x128xi32>
    %c0_i32_247 = arith.constant 0 : i32
    %543 = vector.broadcast %c0_i32_247 : i32 to vector<1x128xi32>
    %544 = arith.cmpi sge, %542, %543 : vector<1x128xi32>
    %c1_i32_248 = arith.constant 1 : i32
    %545 = vector.broadcast %c1_i32_248 : i32 to vector<1x128xi32>
    %546 = arith.addi %300, %545 : vector<1x128xi32>
    %c8_i32_249 = arith.constant 8 : i32
    %547 = vector.broadcast %c8_i32_249 : i32 to vector<1x128xi32>
    %548 = arith.cmpi slt, %546, %547 : vector<1x128xi32>
    %549 = arith.andi %544, %548 : vector<1x128xi1>
    %c1_i32_250 = arith.constant 1 : i32
    %550 = vector.broadcast %c1_i32_250 : i32 to vector<1x128xi32>
    %551 = arith.addi %296, %550 : vector<1x128xi32>
    %c0_i32_251 = arith.constant 0 : i32
    %552 = vector.broadcast %c0_i32_251 : i32 to vector<1x128xi32>
    %553 = arith.cmpi sge, %551, %552 : vector<1x128xi32>
    %554 = arith.andi %549, %553 : vector<1x128xi1>
    %c1_i32_252 = arith.constant 1 : i32
    %555 = vector.broadcast %c1_i32_252 : i32 to vector<1x128xi32>
    %556 = arith.addi %296, %555 : vector<1x128xi32>
    %c8_i32_253 = arith.constant 8 : i32
    %557 = vector.broadcast %c8_i32_253 : i32 to vector<1x128xi32>
    %558 = arith.cmpi slt, %556, %557 : vector<1x128xi32>
    %559 = arith.andi %554, %558 : vector<1x128xi1>
    %cst_254 = arith.constant 1.000000e+00 : f32
    %cst_255 = arith.constant 0.000000e+00 : f32
    %560 = vector.broadcast %cst_254 : f32 to vector<1x128xf32>
    %561 = vector.broadcast %cst_255 : f32 to vector<1x128xf32>
    %562 = arith.select %559, %560, %561 : vector<1x128xi1>, vector<1x128xf32>
    %c119_i32 = arith.constant 119 : i32
    %563 = tpu.dynamic_rotate %293 by %c119_i32 dim 1 : vector<8x128xf32>, i32 -> vector<8x128xf32>
    %c8_256 = arith.constant 8 : index
    %c0_257 = arith.constant 0 : index
    %c0_258 = arith.constant 0 : index
    %564 = vector.load %arg7[%c8_256, %c0_257, %c0_258] : memref<9x16x8xbf16, #tpu.memory_space<vmem>>, vector<1x16x8xbf16>
    %565 = vector.shape_cast %564 : vector<1x16x8xbf16> to vector<16x8xbf16>
    %566 = vector.broadcast %562 : vector<1x128xf32> to vector<8x128xf32>
    %567 = arith.mulf %563, %566 : vector<8x128xf32>
    %568 = arith.truncf %567 : vector<8x128xf32> to vector<8x128xbf16>
    %cst_259 = arith.constant dense<0.000000e+00> : vector<16x128xf32>
    %569 = tpu.matmul %565, %568, %cst_259 {dimension_numbers = #tpu.dot_dimension_numbers<[1], [0], [0], [1], [0, 0, 1, 1], [], []>} : vector<16x8xbf16>, vector<8x128xbf16>, vector<16x128xf32> -> vector<16x128xf32>
    %570 = arith.addf %540, %569 : vector<16x128xf32>
    %c0_260 = arith.constant 0 : index
    %c0_261 = arith.constant 0 : index
    %571 = vector.load %arg8[%c0_260, %c0_261] : memref<16x1xf32, #tpu.memory_space<vmem>>, vector<16x1xf32>
    %572 = vector.broadcast %571 : vector<16x1xf32> to vector<16x128xf32>
    %573 = arith.mulf %570, %572 : vector<16x128xf32>
    %c0_262 = arith.constant 0 : index
    %c0_263 = arith.constant 0 : index
    %574 = vector.load %arg9[%c0_262, %c0_263] : memref<16x1xf32, #tpu.memory_space<vmem>>, vector<16x1xf32>
    %575 = vector.broadcast %574 : vector<16x1xf32> to vector<16x128xf32>
    %576 = arith.addf %573, %575 : vector<16x128xf32>
    %cst_264 = arith.constant 0.000000e+00 : f32
    %577 = vector.broadcast %cst_264 : f32 to vector<16x128xf32>
    %578 = arith.maximumf %576, %577 : vector<16x128xf32>
    %c0_265 = arith.constant 0 : index
    %c0_266 = arith.constant 0 : index
    %579 = vector.load %arg2[%c0_265, %c0_266] : memref<128x512xf32, #tpu.memory_space<vmem>>, vector<128x512xf32>
    %cst_267 = arith.constant dense<0.000000e+00> : vector<16x512xf32>
    %580 = tpu.matmul %578, %579, %cst_267 {dimension_numbers = #tpu.dot_dimension_numbers<[1], [0], [0], [1], [0, 0, 1, 1], [], []>} : vector<16x128xf32>, vector<128x512xf32>, vector<16x512xf32> -> vector<16x512xf32>
    %581 = tpu.iota {dimensions = array<i32: 1>} : vector<1x512xi32>
    %c15_i32_268 = arith.constant 15 : i32
    %582 = vector.broadcast %c15_i32_268 : i32 to vector<1x512xi32>
    %583 = arith.andi %581, %582 : vector<1x512xi32>
    %c4_i32_269 = arith.constant 4 : i32
    %584 = vector.broadcast %c4_i32_269 : i32 to vector<1x512xi32>
    %585 = arith.shrsi %581, %584 : vector<1x512xi32>
    %c15_i32_270 = arith.constant 15 : i32
    %586 = vector.broadcast %c15_i32_270 : i32 to vector<1x512xi32>
    %587 = arith.andi %585, %586 : vector<1x512xi32>
    %cst_271 = arith.constant 0.000000e+00 : f32
    %588 = vector.broadcast %cst_271 : f32 to vector<8x512xf32>
    %c-1_i32_272 = arith.constant -1 : i32
    %589 = vector.broadcast %c-1_i32_272 : i32 to vector<1x512xi32>
    %590 = arith.addi %587, %589 : vector<1x512xi32>
    %c0_i32_273 = arith.constant 0 : i32
    %591 = vector.broadcast %c0_i32_273 : i32 to vector<1x512xi32>
    %592 = arith.cmpi sge, %590, %591 : vector<1x512xi32>
    %c-1_i32_274 = arith.constant -1 : i32
    %593 = vector.broadcast %c-1_i32_274 : i32 to vector<1x512xi32>
    %594 = arith.addi %587, %593 : vector<1x512xi32>
    %c16_i32_275 = arith.constant 16 : i32
    %595 = vector.broadcast %c16_i32_275 : i32 to vector<1x512xi32>
    %596 = arith.cmpi slt, %594, %595 : vector<1x512xi32>
    %597 = arith.andi %592, %596 : vector<1x512xi1>
    %c-1_i32_276 = arith.constant -1 : i32
    %598 = vector.broadcast %c-1_i32_276 : i32 to vector<1x512xi32>
    %599 = arith.addi %583, %598 : vector<1x512xi32>
    %c0_i32_277 = arith.constant 0 : i32
    %600 = vector.broadcast %c0_i32_277 : i32 to vector<1x512xi32>
    %601 = arith.cmpi sge, %599, %600 : vector<1x512xi32>
    %602 = arith.andi %597, %601 : vector<1x512xi1>
    %c-1_i32_278 = arith.constant -1 : i32
    %603 = vector.broadcast %c-1_i32_278 : i32 to vector<1x512xi32>
    %604 = arith.addi %583, %603 : vector<1x512xi32>
    %c16_i32_279 = arith.constant 16 : i32
    %605 = vector.broadcast %c16_i32_279 : i32 to vector<1x512xi32>
    %606 = arith.cmpi slt, %604, %605 : vector<1x512xi32>
    %607 = arith.andi %602, %606 : vector<1x512xi1>
    %cst_280 = arith.constant 1.000000e+00 : f32
    %cst_281 = arith.constant 0.000000e+00 : f32
    %608 = vector.broadcast %cst_280 : f32 to vector<1x512xf32>
    %609 = vector.broadcast %cst_281 : f32 to vector<1x512xf32>
    %610 = arith.select %607, %608, %609 : vector<1x512xi1>, vector<1x512xf32>
    %c17_i32_282 = arith.constant 17 : i32
    %611 = tpu.dynamic_rotate %285 by %c17_i32_282 dim 1 : vector<8x512xf32>, i32 -> vector<8x512xf32>
    %c0_283 = arith.constant 0 : index
    %c0_284 = arith.constant 0 : index
    %c0_285 = arith.constant 0 : index
    %612 = vector.load %arg10[%c0_283, %c0_284, %c0_285] : memref<9x8x8xbf16, #tpu.memory_space<vmem>>, vector<1x8x8xbf16>
    %613 = vector.shape_cast %612 : vector<1x8x8xbf16> to vector<8x8xbf16>
    %614 = vector.broadcast %610 : vector<1x512xf32> to vector<8x512xf32>
    %615 = arith.mulf %611, %614 : vector<8x512xf32>
    %616 = arith.truncf %615 : vector<8x512xf32> to vector<8x512xbf16>
    %cst_286 = arith.constant dense<0.000000e+00> : vector<8x512xf32>
    %617 = tpu.matmul %613, %616, %cst_286 {dimension_numbers = #tpu.dot_dimension_numbers<[1], [0], [0], [1], [0, 0, 1, 1], [], []>} : vector<8x8xbf16>, vector<8x512xbf16>, vector<8x512xf32> -> vector<8x512xf32>
    %618 = arith.addf %588, %617 : vector<8x512xf32>
    %c17_i32_287 = arith.constant 17 : i32
    %619 = tpu.dynamic_rotate %580 by %c17_i32_287 dim 1 : vector<16x512xf32>, i32 -> vector<16x512xf32>
    %c0_288 = arith.constant 0 : index
    %c0_289 = arith.constant 0 : index
    %c0_290 = arith.constant 0 : index
    %620 = vector.load %arg11[%c0_288, %c0_289, %c0_290] : memref<9x8x16xbf16, #tpu.memory_space<vmem>>, vector<1x8x16xbf16>
    %621 = vector.shape_cast %620 : vector<1x8x16xbf16> to vector<8x16xbf16>
    %622 = vector.broadcast %610 : vector<1x512xf32> to vector<16x512xf32>
    %623 = arith.mulf %619, %622 : vector<16x512xf32>
    %624 = arith.truncf %623 : vector<16x512xf32> to vector<16x512xbf16>
    %cst_291 = arith.constant dense<0.000000e+00> : vector<8x512xf32>
    %625 = tpu.matmul %621, %624, %cst_291 {dimension_numbers = #tpu.dot_dimension_numbers<[1], [0], [0], [1], [0, 0, 1, 1], [], []>} : vector<8x16xbf16>, vector<16x512xbf16>, vector<8x512xf32> -> vector<8x512xf32>
    %626 = arith.addf %618, %625 : vector<8x512xf32>
    %c-1_i32_292 = arith.constant -1 : i32
    %627 = vector.broadcast %c-1_i32_292 : i32 to vector<1x512xi32>
    %628 = arith.addi %587, %627 : vector<1x512xi32>
    %c0_i32_293 = arith.constant 0 : i32
    %629 = vector.broadcast %c0_i32_293 : i32 to vector<1x512xi32>
    %630 = arith.cmpi sge, %628, %629 : vector<1x512xi32>
    %c-1_i32_294 = arith.constant -1 : i32
    %631 = vector.broadcast %c-1_i32_294 : i32 to vector<1x512xi32>
    %632 = arith.addi %587, %631 : vector<1x512xi32>
    %c16_i32_295 = arith.constant 16 : i32
    %633 = vector.broadcast %c16_i32_295 : i32 to vector<1x512xi32>
    %634 = arith.cmpi slt, %632, %633 : vector<1x512xi32>
    %635 = arith.andi %630, %634 : vector<1x512xi1>
    %c0_i32_296 = arith.constant 0 : i32
    %636 = vector.broadcast %c0_i32_296 : i32 to vector<1x512xi32>
    %637 = arith.addi %583, %636 : vector<1x512xi32>
    %c0_i32_297 = arith.constant 0 : i32
    %638 = vector.broadcast %c0_i32_297 : i32 to vector<1x512xi32>
    %639 = arith.cmpi sge, %637, %638 : vector<1x512xi32>
    %640 = arith.andi %635, %639 : vector<1x512xi1>
    %c0_i32_298 = arith.constant 0 : i32
    %641 = vector.broadcast %c0_i32_298 : i32 to vector<1x512xi32>
    %642 = arith.addi %583, %641 : vector<1x512xi32>
    %c16_i32_299 = arith.constant 16 : i32
    %643 = vector.broadcast %c16_i32_299 : i32 to vector<1x512xi32>
    %644 = arith.cmpi slt, %642, %643 : vector<1x512xi32>
    %645 = arith.andi %640, %644 : vector<1x512xi1>
    %cst_300 = arith.constant 1.000000e+00 : f32
    %cst_301 = arith.constant 0.000000e+00 : f32
    %646 = vector.broadcast %cst_300 : f32 to vector<1x512xf32>
    %647 = vector.broadcast %cst_301 : f32 to vector<1x512xf32>
    %648 = arith.select %645, %646, %647 : vector<1x512xi1>, vector<1x512xf32>
    %c16_i32_302 = arith.constant 16 : i32
    %649 = tpu.dynamic_rotate %285 by %c16_i32_302 dim 1 : vector<8x512xf32>, i32 -> vector<8x512xf32>
    %c1_303 = arith.constant 1 : index
    %c0_304 = arith.constant 0 : index
    %c0_305 = arith.constant 0 : index
    %650 = vector.load %arg10[%c1_303, %c0_304, %c0_305] : memref<9x8x8xbf16, #tpu.memory_space<vmem>>, vector<1x8x8xbf16>
    %651 = vector.shape_cast %650 : vector<1x8x8xbf16> to vector<8x8xbf16>
    %652 = vector.broadcast %648 : vector<1x512xf32> to vector<8x512xf32>
    %653 = arith.mulf %649, %652 : vector<8x512xf32>
    %654 = arith.truncf %653 : vector<8x512xf32> to vector<8x512xbf16>
    %cst_306 = arith.constant dense<0.000000e+00> : vector<8x512xf32>
    %655 = tpu.matmul %651, %654, %cst_306 {dimension_numbers = #tpu.dot_dimension_numbers<[1], [0], [0], [1], [0, 0, 1, 1], [], []>} : vector<8x8xbf16>, vector<8x512xbf16>, vector<8x512xf32> -> vector<8x512xf32>
    %656 = arith.addf %626, %655 : vector<8x512xf32>
    %c16_i32_307 = arith.constant 16 : i32
    %657 = tpu.dynamic_rotate %580 by %c16_i32_307 dim 1 : vector<16x512xf32>, i32 -> vector<16x512xf32>
    %c1_308 = arith.constant 1 : index
    %c0_309 = arith.constant 0 : index
    %c0_310 = arith.constant 0 : index
    %658 = vector.load %arg11[%c1_308, %c0_309, %c0_310] : memref<9x8x16xbf16, #tpu.memory_space<vmem>>, vector<1x8x16xbf16>
    %659 = vector.shape_cast %658 : vector<1x8x16xbf16> to vector<8x16xbf16>
    %660 = vector.broadcast %648 : vector<1x512xf32> to vector<16x512xf32>
    %661 = arith.mulf %657, %660 : vector<16x512xf32>
    %662 = arith.truncf %661 : vector<16x512xf32> to vector<16x512xbf16>
    %cst_311 = arith.constant dense<0.000000e+00> : vector<8x512xf32>
    %663 = tpu.matmul %659, %662, %cst_311 {dimension_numbers = #tpu.dot_dimension_numbers<[1], [0], [0], [1], [0, 0, 1, 1], [], []>} : vector<8x16xbf16>, vector<16x512xbf16>, vector<8x512xf32> -> vector<8x512xf32>
    %664 = arith.addf %656, %663 : vector<8x512xf32>
    %c-1_i32_312 = arith.constant -1 : i32
    %665 = vector.broadcast %c-1_i32_312 : i32 to vector<1x512xi32>
    %666 = arith.addi %587, %665 : vector<1x512xi32>
    %c0_i32_313 = arith.constant 0 : i32
    %667 = vector.broadcast %c0_i32_313 : i32 to vector<1x512xi32>
    %668 = arith.cmpi sge, %666, %667 : vector<1x512xi32>
    %c-1_i32_314 = arith.constant -1 : i32
    %669 = vector.broadcast %c-1_i32_314 : i32 to vector<1x512xi32>
    %670 = arith.addi %587, %669 : vector<1x512xi32>
    %c16_i32_315 = arith.constant 16 : i32
    %671 = vector.broadcast %c16_i32_315 : i32 to vector<1x512xi32>
    %672 = arith.cmpi slt, %670, %671 : vector<1x512xi32>
    %673 = arith.andi %668, %672 : vector<1x512xi1>
    %c1_i32_316 = arith.constant 1 : i32
    %674 = vector.broadcast %c1_i32_316 : i32 to vector<1x512xi32>
    %675 = arith.addi %583, %674 : vector<1x512xi32>
    %c0_i32_317 = arith.constant 0 : i32
    %676 = vector.broadcast %c0_i32_317 : i32 to vector<1x512xi32>
    %677 = arith.cmpi sge, %675, %676 : vector<1x512xi32>
    %678 = arith.andi %673, %677 : vector<1x512xi1>
    %c1_i32_318 = arith.constant 1 : i32
    %679 = vector.broadcast %c1_i32_318 : i32 to vector<1x512xi32>
    %680 = arith.addi %583, %679 : vector<1x512xi32>
    %c16_i32_319 = arith.constant 16 : i32
    %681 = vector.broadcast %c16_i32_319 : i32 to vector<1x512xi32>
    %682 = arith.cmpi slt, %680, %681 : vector<1x512xi32>
    %683 = arith.andi %678, %682 : vector<1x512xi1>
    %cst_320 = arith.constant 1.000000e+00 : f32
    %cst_321 = arith.constant 0.000000e+00 : f32
    %684 = vector.broadcast %cst_320 : f32 to vector<1x512xf32>
    %685 = vector.broadcast %cst_321 : f32 to vector<1x512xf32>
    %686 = arith.select %683, %684, %685 : vector<1x512xi1>, vector<1x512xf32>
    %c15_i32_322 = arith.constant 15 : i32
    %687 = tpu.dynamic_rotate %285 by %c15_i32_322 dim 1 : vector<8x512xf32>, i32 -> vector<8x512xf32>
    %c2_323 = arith.constant 2 : index
    %c0_324 = arith.constant 0 : index
    %c0_325 = arith.constant 0 : index
    %688 = vector.load %arg10[%c2_323, %c0_324, %c0_325] : memref<9x8x8xbf16, #tpu.memory_space<vmem>>, vector<1x8x8xbf16>
    %689 = vector.shape_cast %688 : vector<1x8x8xbf16> to vector<8x8xbf16>
    %690 = vector.broadcast %686 : vector<1x512xf32> to vector<8x512xf32>
    %691 = arith.mulf %687, %690 : vector<8x512xf32>
    %692 = arith.truncf %691 : vector<8x512xf32> to vector<8x512xbf16>
    %cst_326 = arith.constant dense<0.000000e+00> : vector<8x512xf32>
    %693 = tpu.matmul %689, %692, %cst_326 {dimension_numbers = #tpu.dot_dimension_numbers<[1], [0], [0], [1], [0, 0, 1, 1], [], []>} : vector<8x8xbf16>, vector<8x512xbf16>, vector<8x512xf32> -> vector<8x512xf32>
    %694 = arith.addf %664, %693 : vector<8x512xf32>
    %c15_i32_327 = arith.constant 15 : i32
    %695 = tpu.dynamic_rotate %580 by %c15_i32_327 dim 1 : vector<16x512xf32>, i32 -> vector<16x512xf32>
    %c2_328 = arith.constant 2 : index
    %c0_329 = arith.constant 0 : index
    %c0_330 = arith.constant 0 : index
    %696 = vector.load %arg11[%c2_328, %c0_329, %c0_330] : memref<9x8x16xbf16, #tpu.memory_space<vmem>>, vector<1x8x16xbf16>
    %697 = vector.shape_cast %696 : vector<1x8x16xbf16> to vector<8x16xbf16>
    %698 = vector.broadcast %686 : vector<1x512xf32> to vector<16x512xf32>
    %699 = arith.mulf %695, %698 : vector<16x512xf32>
    %700 = arith.truncf %699 : vector<16x512xf32> to vector<16x512xbf16>
    %cst_331 = arith.constant dense<0.000000e+00> : vector<8x512xf32>
    %701 = tpu.matmul %697, %700, %cst_331 {dimension_numbers = #tpu.dot_dimension_numbers<[1], [0], [0], [1], [0, 0, 1, 1], [], []>} : vector<8x16xbf16>, vector<16x512xbf16>, vector<8x512xf32> -> vector<8x512xf32>
    %702 = arith.addf %694, %701 : vector<8x512xf32>
    %c0_i32_332 = arith.constant 0 : i32
    %703 = vector.broadcast %c0_i32_332 : i32 to vector<1x512xi32>
    %704 = arith.addi %587, %703 : vector<1x512xi32>
    %c0_i32_333 = arith.constant 0 : i32
    %705 = vector.broadcast %c0_i32_333 : i32 to vector<1x512xi32>
    %706 = arith.cmpi sge, %704, %705 : vector<1x512xi32>
    %c0_i32_334 = arith.constant 0 : i32
    %707 = vector.broadcast %c0_i32_334 : i32 to vector<1x512xi32>
    %708 = arith.addi %587, %707 : vector<1x512xi32>
    %c16_i32_335 = arith.constant 16 : i32
    %709 = vector.broadcast %c16_i32_335 : i32 to vector<1x512xi32>
    %710 = arith.cmpi slt, %708, %709 : vector<1x512xi32>
    %711 = arith.andi %706, %710 : vector<1x512xi1>
    %c-1_i32_336 = arith.constant -1 : i32
    %712 = vector.broadcast %c-1_i32_336 : i32 to vector<1x512xi32>
    %713 = arith.addi %583, %712 : vector<1x512xi32>
    %c0_i32_337 = arith.constant 0 : i32
    %714 = vector.broadcast %c0_i32_337 : i32 to vector<1x512xi32>
    %715 = arith.cmpi sge, %713, %714 : vector<1x512xi32>
    %716 = arith.andi %711, %715 : vector<1x512xi1>
    %c-1_i32_338 = arith.constant -1 : i32
    %717 = vector.broadcast %c-1_i32_338 : i32 to vector<1x512xi32>
    %718 = arith.addi %583, %717 : vector<1x512xi32>
    %c16_i32_339 = arith.constant 16 : i32
    %719 = vector.broadcast %c16_i32_339 : i32 to vector<1x512xi32>
    %720 = arith.cmpi slt, %718, %719 : vector<1x512xi32>
    %721 = arith.andi %716, %720 : vector<1x512xi1>
    %cst_340 = arith.constant 1.000000e+00 : f32
    %cst_341 = arith.constant 0.000000e+00 : f32
    %722 = vector.broadcast %cst_340 : f32 to vector<1x512xf32>
    %723 = vector.broadcast %cst_341 : f32 to vector<1x512xf32>
    %724 = arith.select %721, %722, %723 : vector<1x512xi1>, vector<1x512xf32>
    %c1_i32_342 = arith.constant 1 : i32
    %725 = tpu.dynamic_rotate %285 by %c1_i32_342 dim 1 : vector<8x512xf32>, i32 -> vector<8x512xf32>
    %c3_343 = arith.constant 3 : index
    %c0_344 = arith.constant 0 : index
    %c0_345 = arith.constant 0 : index
    %726 = vector.load %arg10[%c3_343, %c0_344, %c0_345] : memref<9x8x8xbf16, #tpu.memory_space<vmem>>, vector<1x8x8xbf16>
    %727 = vector.shape_cast %726 : vector<1x8x8xbf16> to vector<8x8xbf16>
    %728 = vector.broadcast %724 : vector<1x512xf32> to vector<8x512xf32>
    %729 = arith.mulf %725, %728 : vector<8x512xf32>
    %730 = arith.truncf %729 : vector<8x512xf32> to vector<8x512xbf16>
    %cst_346 = arith.constant dense<0.000000e+00> : vector<8x512xf32>
    %731 = tpu.matmul %727, %730, %cst_346 {dimension_numbers = #tpu.dot_dimension_numbers<[1], [0], [0], [1], [0, 0, 1, 1], [], []>} : vector<8x8xbf16>, vector<8x512xbf16>, vector<8x512xf32> -> vector<8x512xf32>
    %732 = arith.addf %702, %731 : vector<8x512xf32>
    %c1_i32_347 = arith.constant 1 : i32
    %733 = tpu.dynamic_rotate %580 by %c1_i32_347 dim 1 : vector<16x512xf32>, i32 -> vector<16x512xf32>
    %c3_348 = arith.constant 3 : index
    %c0_349 = arith.constant 0 : index
    %c0_350 = arith.constant 0 : index
    %734 = vector.load %arg11[%c3_348, %c0_349, %c0_350] : memref<9x8x16xbf16, #tpu.memory_space<vmem>>, vector<1x8x16xbf16>
    %735 = vector.shape_cast %734 : vector<1x8x16xbf16> to vector<8x16xbf16>
    %736 = vector.broadcast %724 : vector<1x512xf32> to vector<16x512xf32>
    %737 = arith.mulf %733, %736 : vector<16x512xf32>
    %738 = arith.truncf %737 : vector<16x512xf32> to vector<16x512xbf16>
    %cst_351 = arith.constant dense<0.000000e+00> : vector<8x512xf32>
    %739 = tpu.matmul %735, %738, %cst_351 {dimension_numbers = #tpu.dot_dimension_numbers<[1], [0], [0], [1], [0, 0, 1, 1], [], []>} : vector<8x16xbf16>, vector<16x512xbf16>, vector<8x512xf32> -> vector<8x512xf32>
    %740 = arith.addf %732, %739 : vector<8x512xf32>
    %c0_i32_352 = arith.constant 0 : i32
    %741 = vector.broadcast %c0_i32_352 : i32 to vector<1x512xi32>
    %742 = arith.addi %587, %741 : vector<1x512xi32>
    %c0_i32_353 = arith.constant 0 : i32
    %743 = vector.broadcast %c0_i32_353 : i32 to vector<1x512xi32>
    %744 = arith.cmpi sge, %742, %743 : vector<1x512xi32>
    %c0_i32_354 = arith.constant 0 : i32
    %745 = vector.broadcast %c0_i32_354 : i32 to vector<1x512xi32>
    %746 = arith.addi %587, %745 : vector<1x512xi32>
    %c16_i32_355 = arith.constant 16 : i32
    %747 = vector.broadcast %c16_i32_355 : i32 to vector<1x512xi32>
    %748 = arith.cmpi slt, %746, %747 : vector<1x512xi32>
    %749 = arith.andi %744, %748 : vector<1x512xi1>
    %c0_i32_356 = arith.constant 0 : i32
    %750 = vector.broadcast %c0_i32_356 : i32 to vector<1x512xi32>
    %751 = arith.addi %583, %750 : vector<1x512xi32>
    %c0_i32_357 = arith.constant 0 : i32
    %752 = vector.broadcast %c0_i32_357 : i32 to vector<1x512xi32>
    %753 = arith.cmpi sge, %751, %752 : vector<1x512xi32>
    %754 = arith.andi %749, %753 : vector<1x512xi1>
    %c0_i32_358 = arith.constant 0 : i32
    %755 = vector.broadcast %c0_i32_358 : i32 to vector<1x512xi32>
    %756 = arith.addi %583, %755 : vector<1x512xi32>
    %c16_i32_359 = arith.constant 16 : i32
    %757 = vector.broadcast %c16_i32_359 : i32 to vector<1x512xi32>
    %758 = arith.cmpi slt, %756, %757 : vector<1x512xi32>
    %759 = arith.andi %754, %758 : vector<1x512xi1>
    %cst_360 = arith.constant 1.000000e+00 : f32
    %cst_361 = arith.constant 0.000000e+00 : f32
    %760 = vector.broadcast %cst_360 : f32 to vector<1x512xf32>
    %761 = vector.broadcast %cst_361 : f32 to vector<1x512xf32>
    %762 = arith.select %759, %760, %761 : vector<1x512xi1>, vector<1x512xf32>
    %c4_362 = arith.constant 4 : index
    %c0_363 = arith.constant 0 : index
    %c0_364 = arith.constant 0 : index
    %763 = vector.load %arg10[%c4_362, %c0_363, %c0_364] : memref<9x8x8xbf16, #tpu.memory_space<vmem>>, vector<1x8x8xbf16>
    %764 = vector.shape_cast %763 : vector<1x8x8xbf16> to vector<8x8xbf16>
    %765 = vector.broadcast %762 : vector<1x512xf32> to vector<8x512xf32>
    %766 = arith.mulf %285, %765 : vector<8x512xf32>
    %767 = arith.truncf %766 : vector<8x512xf32> to vector<8x512xbf16>
    %cst_365 = arith.constant dense<0.000000e+00> : vector<8x512xf32>
    %768 = tpu.matmul %764, %767, %cst_365 {dimension_numbers = #tpu.dot_dimension_numbers<[1], [0], [0], [1], [0, 0, 1, 1], [], []>} : vector<8x8xbf16>, vector<8x512xbf16>, vector<8x512xf32> -> vector<8x512xf32>
    %769 = arith.addf %740, %768 : vector<8x512xf32>
    %c4_366 = arith.constant 4 : index
    %c0_367 = arith.constant 0 : index
    %c0_368 = arith.constant 0 : index
    %770 = vector.load %arg11[%c4_366, %c0_367, %c0_368] : memref<9x8x16xbf16, #tpu.memory_space<vmem>>, vector<1x8x16xbf16>
    %771 = vector.shape_cast %770 : vector<1x8x16xbf16> to vector<8x16xbf16>
    %772 = vector.broadcast %762 : vector<1x512xf32> to vector<16x512xf32>
    %773 = arith.mulf %580, %772 : vector<16x512xf32>
    %774 = arith.truncf %773 : vector<16x512xf32> to vector<16x512xbf16>
    %cst_369 = arith.constant dense<0.000000e+00> : vector<8x512xf32>
    %775 = tpu.matmul %771, %774, %cst_369 {dimension_numbers = #tpu.dot_dimension_numbers<[1], [0], [0], [1], [0, 0, 1, 1], [], []>} : vector<8x16xbf16>, vector<16x512xbf16>, vector<8x512xf32> -> vector<8x512xf32>
    %776 = arith.addf %769, %775 : vector<8x512xf32>
    %c0_i32_370 = arith.constant 0 : i32
    %777 = vector.broadcast %c0_i32_370 : i32 to vector<1x512xi32>
    %778 = arith.addi %587, %777 : vector<1x512xi32>
    %c0_i32_371 = arith.constant 0 : i32
    %779 = vector.broadcast %c0_i32_371 : i32 to vector<1x512xi32>
    %780 = arith.cmpi sge, %778, %779 : vector<1x512xi32>
    %c0_i32_372 = arith.constant 0 : i32
    %781 = vector.broadcast %c0_i32_372 : i32 to vector<1x512xi32>
    %782 = arith.addi %587, %781 : vector<1x512xi32>
    %c16_i32_373 = arith.constant 16 : i32
    %783 = vector.broadcast %c16_i32_373 : i32 to vector<1x512xi32>
    %784 = arith.cmpi slt, %782, %783 : vector<1x512xi32>
    %785 = arith.andi %780, %784 : vector<1x512xi1>
    %c1_i32_374 = arith.constant 1 : i32
    %786 = vector.broadcast %c1_i32_374 : i32 to vector<1x512xi32>
    %787 = arith.addi %583, %786 : vector<1x512xi32>
    %c0_i32_375 = arith.constant 0 : i32
    %788 = vector.broadcast %c0_i32_375 : i32 to vector<1x512xi32>
    %789 = arith.cmpi sge, %787, %788 : vector<1x512xi32>
    %790 = arith.andi %785, %789 : vector<1x512xi1>
    %c1_i32_376 = arith.constant 1 : i32
    %791 = vector.broadcast %c1_i32_376 : i32 to vector<1x512xi32>
    %792 = arith.addi %583, %791 : vector<1x512xi32>
    %c16_i32_377 = arith.constant 16 : i32
    %793 = vector.broadcast %c16_i32_377 : i32 to vector<1x512xi32>
    %794 = arith.cmpi slt, %792, %793 : vector<1x512xi32>
    %795 = arith.andi %790, %794 : vector<1x512xi1>
    %cst_378 = arith.constant 1.000000e+00 : f32
    %cst_379 = arith.constant 0.000000e+00 : f32
    %796 = vector.broadcast %cst_378 : f32 to vector<1x512xf32>
    %797 = vector.broadcast %cst_379 : f32 to vector<1x512xf32>
    %798 = arith.select %795, %796, %797 : vector<1x512xi1>, vector<1x512xf32>
    %c511_i32_380 = arith.constant 511 : i32
    %799 = tpu.dynamic_rotate %285 by %c511_i32_380 dim 1 : vector<8x512xf32>, i32 -> vector<8x512xf32>
    %c5_381 = arith.constant 5 : index
    %c0_382 = arith.constant 0 : index
    %c0_383 = arith.constant 0 : index
    %800 = vector.load %arg10[%c5_381, %c0_382, %c0_383] : memref<9x8x8xbf16, #tpu.memory_space<vmem>>, vector<1x8x8xbf16>
    %801 = vector.shape_cast %800 : vector<1x8x8xbf16> to vector<8x8xbf16>
    %802 = vector.broadcast %798 : vector<1x512xf32> to vector<8x512xf32>
    %803 = arith.mulf %799, %802 : vector<8x512xf32>
    %804 = arith.truncf %803 : vector<8x512xf32> to vector<8x512xbf16>
    %cst_384 = arith.constant dense<0.000000e+00> : vector<8x512xf32>
    %805 = tpu.matmul %801, %804, %cst_384 {dimension_numbers = #tpu.dot_dimension_numbers<[1], [0], [0], [1], [0, 0, 1, 1], [], []>} : vector<8x8xbf16>, vector<8x512xbf16>, vector<8x512xf32> -> vector<8x512xf32>
    %806 = arith.addf %776, %805 : vector<8x512xf32>
    %c511_i32_385 = arith.constant 511 : i32
    %807 = tpu.dynamic_rotate %580 by %c511_i32_385 dim 1 : vector<16x512xf32>, i32 -> vector<16x512xf32>
    %c5_386 = arith.constant 5 : index
    %c0_387 = arith.constant 0 : index
    %c0_388 = arith.constant 0 : index
    %808 = vector.load %arg11[%c5_386, %c0_387, %c0_388] : memref<9x8x16xbf16, #tpu.memory_space<vmem>>, vector<1x8x16xbf16>
    %809 = vector.shape_cast %808 : vector<1x8x16xbf16> to vector<8x16xbf16>
    %810 = vector.broadcast %798 : vector<1x512xf32> to vector<16x512xf32>
    %811 = arith.mulf %807, %810 : vector<16x512xf32>
    %812 = arith.truncf %811 : vector<16x512xf32> to vector<16x512xbf16>
    %cst_389 = arith.constant dense<0.000000e+00> : vector<8x512xf32>
    %813 = tpu.matmul %809, %812, %cst_389 {dimension_numbers = #tpu.dot_dimension_numbers<[1], [0], [0], [1], [0, 0, 1, 1], [], []>} : vector<8x16xbf16>, vector<16x512xbf16>, vector<8x512xf32> -> vector<8x512xf32>
    %814 = arith.addf %806, %813 : vector<8x512xf32>
    %c1_i32_390 = arith.constant 1 : i32
    %815 = vector.broadcast %c1_i32_390 : i32 to vector<1x512xi32>
    %816 = arith.addi %587, %815 : vector<1x512xi32>
    %c0_i32_391 = arith.constant 0 : i32
    %817 = vector.broadcast %c0_i32_391 : i32 to vector<1x512xi32>
    %818 = arith.cmpi sge, %816, %817 : vector<1x512xi32>
    %c1_i32_392 = arith.constant 1 : i32
    %819 = vector.broadcast %c1_i32_392 : i32 to vector<1x512xi32>
    %820 = arith.addi %587, %819 : vector<1x512xi32>
    %c16_i32_393 = arith.constant 16 : i32
    %821 = vector.broadcast %c16_i32_393 : i32 to vector<1x512xi32>
    %822 = arith.cmpi slt, %820, %821 : vector<1x512xi32>
    %823 = arith.andi %818, %822 : vector<1x512xi1>
    %c-1_i32_394 = arith.constant -1 : i32
    %824 = vector.broadcast %c-1_i32_394 : i32 to vector<1x512xi32>
    %825 = arith.addi %583, %824 : vector<1x512xi32>
    %c0_i32_395 = arith.constant 0 : i32
    %826 = vector.broadcast %c0_i32_395 : i32 to vector<1x512xi32>
    %827 = arith.cmpi sge, %825, %826 : vector<1x512xi32>
    %828 = arith.andi %823, %827 : vector<1x512xi1>
    %c-1_i32_396 = arith.constant -1 : i32
    %829 = vector.broadcast %c-1_i32_396 : i32 to vector<1x512xi32>
    %830 = arith.addi %583, %829 : vector<1x512xi32>
    %c16_i32_397 = arith.constant 16 : i32
    %831 = vector.broadcast %c16_i32_397 : i32 to vector<1x512xi32>
    %832 = arith.cmpi slt, %830, %831 : vector<1x512xi32>
    %833 = arith.andi %828, %832 : vector<1x512xi1>
    %cst_398 = arith.constant 1.000000e+00 : f32
    %cst_399 = arith.constant 0.000000e+00 : f32
    %834 = vector.broadcast %cst_398 : f32 to vector<1x512xf32>
    %835 = vector.broadcast %cst_399 : f32 to vector<1x512xf32>
    %836 = arith.select %833, %834, %835 : vector<1x512xi1>, vector<1x512xf32>
    %c497_i32_400 = arith.constant 497 : i32
    %837 = tpu.dynamic_rotate %285 by %c497_i32_400 dim 1 : vector<8x512xf32>, i32 -> vector<8x512xf32>
    %c6_401 = arith.constant 6 : index
    %c0_402 = arith.constant 0 : index
    %c0_403 = arith.constant 0 : index
    %838 = vector.load %arg10[%c6_401, %c0_402, %c0_403] : memref<9x8x8xbf16, #tpu.memory_space<vmem>>, vector<1x8x8xbf16>
    %839 = vector.shape_cast %838 : vector<1x8x8xbf16> to vector<8x8xbf16>
    %840 = vector.broadcast %836 : vector<1x512xf32> to vector<8x512xf32>
    %841 = arith.mulf %837, %840 : vector<8x512xf32>
    %842 = arith.truncf %841 : vector<8x512xf32> to vector<8x512xbf16>
    %cst_404 = arith.constant dense<0.000000e+00> : vector<8x512xf32>
    %843 = tpu.matmul %839, %842, %cst_404 {dimension_numbers = #tpu.dot_dimension_numbers<[1], [0], [0], [1], [0, 0, 1, 1], [], []>} : vector<8x8xbf16>, vector<8x512xbf16>, vector<8x512xf32> -> vector<8x512xf32>
    %844 = arith.addf %814, %843 : vector<8x512xf32>
    %c497_i32_405 = arith.constant 497 : i32
    %845 = tpu.dynamic_rotate %580 by %c497_i32_405 dim 1 : vector<16x512xf32>, i32 -> vector<16x512xf32>
    %c6_406 = arith.constant 6 : index
    %c0_407 = arith.constant 0 : index
    %c0_408 = arith.constant 0 : index
    %846 = vector.load %arg11[%c6_406, %c0_407, %c0_408] : memref<9x8x16xbf16, #tpu.memory_space<vmem>>, vector<1x8x16xbf16>
    %847 = vector.shape_cast %846 : vector<1x8x16xbf16> to vector<8x16xbf16>
    %848 = vector.broadcast %836 : vector<1x512xf32> to vector<16x512xf32>
    %849 = arith.mulf %845, %848 : vector<16x512xf32>
    %850 = arith.truncf %849 : vector<16x512xf32> to vector<16x512xbf16>
    %cst_409 = arith.constant dense<0.000000e+00> : vector<8x512xf32>
    %851 = tpu.matmul %847, %850, %cst_409 {dimension_numbers = #tpu.dot_dimension_numbers<[1], [0], [0], [1], [0, 0, 1, 1], [], []>} : vector<8x16xbf16>, vector<16x512xbf16>, vector<8x512xf32> -> vector<8x512xf32>
    %852 = arith.addf %844, %851 : vector<8x512xf32>
    %c1_i32_410 = arith.constant 1 : i32
    %853 = vector.broadcast %c1_i32_410 : i32 to vector<1x512xi32>
    %854 = arith.addi %587, %853 : vector<1x512xi32>
    %c0_i32_411 = arith.constant 0 : i32
    %855 = vector.broadcast %c0_i32_411 : i32 to vector<1x512xi32>
    %856 = arith.cmpi sge, %854, %855 : vector<1x512xi32>
    %c1_i32_412 = arith.constant 1 : i32
    %857 = vector.broadcast %c1_i32_412 : i32 to vector<1x512xi32>
    %858 = arith.addi %587, %857 : vector<1x512xi32>
    %c16_i32_413 = arith.constant 16 : i32
    %859 = vector.broadcast %c16_i32_413 : i32 to vector<1x512xi32>
    %860 = arith.cmpi slt, %858, %859 : vector<1x512xi32>
    %861 = arith.andi %856, %860 : vector<1x512xi1>
    %c0_i32_414 = arith.constant 0 : i32
    %862 = vector.broadcast %c0_i32_414 : i32 to vector<1x512xi32>
    %863 = arith.addi %583, %862 : vector<1x512xi32>
    %c0_i32_415 = arith.constant 0 : i32
    %864 = vector.broadcast %c0_i32_415 : i32 to vector<1x512xi32>
    %865 = arith.cmpi sge, %863, %864 : vector<1x512xi32>
    %866 = arith.andi %861, %865 : vector<1x512xi1>
    %c0_i32_416 = arith.constant 0 : i32
    %867 = vector.broadcast %c0_i32_416 : i32 to vector<1x512xi32>
    %868 = arith.addi %583, %867 : vector<1x512xi32>
    %c16_i32_417 = arith.constant 16 : i32
    %869 = vector.broadcast %c16_i32_417 : i32 to vector<1x512xi32>
    %870 = arith.cmpi slt, %868, %869 : vector<1x512xi32>
    %871 = arith.andi %866, %870 : vector<1x512xi1>
    %cst_418 = arith.constant 1.000000e+00 : f32
    %cst_419 = arith.constant 0.000000e+00 : f32
    %872 = vector.broadcast %cst_418 : f32 to vector<1x512xf32>
    %873 = vector.broadcast %cst_419 : f32 to vector<1x512xf32>
    %874 = arith.select %871, %872, %873 : vector<1x512xi1>, vector<1x512xf32>
    %c496_i32_420 = arith.constant 496 : i32
    %875 = tpu.dynamic_rotate %285 by %c496_i32_420 dim 1 : vector<8x512xf32>, i32 -> vector<8x512xf32>
    %c7_421 = arith.constant 7 : index
    %c0_422 = arith.constant 0 : index
    %c0_423 = arith.constant 0 : index
    %876 = vector.load %arg10[%c7_421, %c0_422, %c0_423] : memref<9x8x8xbf16, #tpu.memory_space<vmem>>, vector<1x8x8xbf16>
    %877 = vector.shape_cast %876 : vector<1x8x8xbf16> to vector<8x8xbf16>
    %878 = vector.broadcast %874 : vector<1x512xf32> to vector<8x512xf32>
    %879 = arith.mulf %875, %878 : vector<8x512xf32>
    %880 = arith.truncf %879 : vector<8x512xf32> to vector<8x512xbf16>
    %cst_424 = arith.constant dense<0.000000e+00> : vector<8x512xf32>
    %881 = tpu.matmul %877, %880, %cst_424 {dimension_numbers = #tpu.dot_dimension_numbers<[1], [0], [0], [1], [0, 0, 1, 1], [], []>} : vector<8x8xbf16>, vector<8x512xbf16>, vector<8x512xf32> -> vector<8x512xf32>
    %882 = arith.addf %852, %881 : vector<8x512xf32>
    %c496_i32_425 = arith.constant 496 : i32
    %883 = tpu.dynamic_rotate %580 by %c496_i32_425 dim 1 : vector<16x512xf32>, i32 -> vector<16x512xf32>
    %c7_426 = arith.constant 7 : index
    %c0_427 = arith.constant 0 : index
    %c0_428 = arith.constant 0 : index
    %884 = vector.load %arg11[%c7_426, %c0_427, %c0_428] : memref<9x8x16xbf16, #tpu.memory_space<vmem>>, vector<1x8x16xbf16>
    %885 = vector.shape_cast %884 : vector<1x8x16xbf16> to vector<8x16xbf16>
    %886 = vector.broadcast %874 : vector<1x512xf32> to vector<16x512xf32>
    %887 = arith.mulf %883, %886 : vector<16x512xf32>
    %888 = arith.truncf %887 : vector<16x512xf32> to vector<16x512xbf16>
    %cst_429 = arith.constant dense<0.000000e+00> : vector<8x512xf32>
    %889 = tpu.matmul %885, %888, %cst_429 {dimension_numbers = #tpu.dot_dimension_numbers<[1], [0], [0], [1], [0, 0, 1, 1], [], []>} : vector<8x16xbf16>, vector<16x512xbf16>, vector<8x512xf32> -> vector<8x512xf32>
    %890 = arith.addf %882, %889 : vector<8x512xf32>
    %c1_i32_430 = arith.constant 1 : i32
    %891 = vector.broadcast %c1_i32_430 : i32 to vector<1x512xi32>
    %892 = arith.addi %587, %891 : vector<1x512xi32>
    %c0_i32_431 = arith.constant 0 : i32
    %893 = vector.broadcast %c0_i32_431 : i32 to vector<1x512xi32>
    %894 = arith.cmpi sge, %892, %893 : vector<1x512xi32>
    %c1_i32_432 = arith.constant 1 : i32
    %895 = vector.broadcast %c1_i32_432 : i32 to vector<1x512xi32>
    %896 = arith.addi %587, %895 : vector<1x512xi32>
    %c16_i32_433 = arith.constant 16 : i32
    %897 = vector.broadcast %c16_i32_433 : i32 to vector<1x512xi32>
    %898 = arith.cmpi slt, %896, %897 : vector<1x512xi32>
    %899 = arith.andi %894, %898 : vector<1x512xi1>
    %c1_i32_434 = arith.constant 1 : i32
    %900 = vector.broadcast %c1_i32_434 : i32 to vector<1x512xi32>
    %901 = arith.addi %583, %900 : vector<1x512xi32>
    %c0_i32_435 = arith.constant 0 : i32
    %902 = vector.broadcast %c0_i32_435 : i32 to vector<1x512xi32>
    %903 = arith.cmpi sge, %901, %902 : vector<1x512xi32>
    %904 = arith.andi %899, %903 : vector<1x512xi1>
    %c1_i32_436 = arith.constant 1 : i32
    %905 = vector.broadcast %c1_i32_436 : i32 to vector<1x512xi32>
    %906 = arith.addi %583, %905 : vector<1x512xi32>
    %c16_i32_437 = arith.constant 16 : i32
    %907 = vector.broadcast %c16_i32_437 : i32 to vector<1x512xi32>
    %908 = arith.cmpi slt, %906, %907 : vector<1x512xi32>
    %909 = arith.andi %904, %908 : vector<1x512xi1>
    %cst_438 = arith.constant 1.000000e+00 : f32
    %cst_439 = arith.constant 0.000000e+00 : f32
    %910 = vector.broadcast %cst_438 : f32 to vector<1x512xf32>
    %911 = vector.broadcast %cst_439 : f32 to vector<1x512xf32>
    %912 = arith.select %909, %910, %911 : vector<1x512xi1>, vector<1x512xf32>
    %c495_i32_440 = arith.constant 495 : i32
    %913 = tpu.dynamic_rotate %285 by %c495_i32_440 dim 1 : vector<8x512xf32>, i32 -> vector<8x512xf32>
    %c8_441 = arith.constant 8 : index
    %c0_442 = arith.constant 0 : index
    %c0_443 = arith.constant 0 : index
    %914 = vector.load %arg10[%c8_441, %c0_442, %c0_443] : memref<9x8x8xbf16, #tpu.memory_space<vmem>>, vector<1x8x8xbf16>
    %915 = vector.shape_cast %914 : vector<1x8x8xbf16> to vector<8x8xbf16>
    %916 = vector.broadcast %912 : vector<1x512xf32> to vector<8x512xf32>
    %917 = arith.mulf %913, %916 : vector<8x512xf32>
    %918 = arith.truncf %917 : vector<8x512xf32> to vector<8x512xbf16>
    %cst_444 = arith.constant dense<0.000000e+00> : vector<8x512xf32>
    %919 = tpu.matmul %915, %918, %cst_444 {dimension_numbers = #tpu.dot_dimension_numbers<[1], [0], [0], [1], [0, 0, 1, 1], [], []>} : vector<8x8xbf16>, vector<8x512xbf16>, vector<8x512xf32> -> vector<8x512xf32>
    %920 = arith.addf %890, %919 : vector<8x512xf32>
    %c495_i32_445 = arith.constant 495 : i32
    %921 = tpu.dynamic_rotate %580 by %c495_i32_445 dim 1 : vector<16x512xf32>, i32 -> vector<16x512xf32>
    %c8_446 = arith.constant 8 : index
    %c0_447 = arith.constant 0 : index
    %c0_448 = arith.constant 0 : index
    %922 = vector.load %arg11[%c8_446, %c0_447, %c0_448] : memref<9x8x16xbf16, #tpu.memory_space<vmem>>, vector<1x8x16xbf16>
    %923 = vector.shape_cast %922 : vector<1x8x16xbf16> to vector<8x16xbf16>
    %924 = vector.broadcast %912 : vector<1x512xf32> to vector<16x512xf32>
    %925 = arith.mulf %921, %924 : vector<16x512xf32>
    %926 = arith.truncf %925 : vector<16x512xf32> to vector<16x512xbf16>
    %cst_449 = arith.constant dense<0.000000e+00> : vector<8x512xf32>
    %927 = tpu.matmul %923, %926, %cst_449 {dimension_numbers = #tpu.dot_dimension_numbers<[1], [0], [0], [1], [0, 0, 1, 1], [], []>} : vector<8x16xbf16>, vector<16x512xbf16>, vector<8x512xf32> -> vector<8x512xf32>
    %928 = arith.addf %920, %927 : vector<8x512xf32>
    %c0_450 = arith.constant 0 : index
    %c0_451 = arith.constant 0 : index
    %929 = vector.load %arg12[%c0_450, %c0_451] : memref<8x1xf32, #tpu.memory_space<vmem>>, vector<8x1xf32>
    %930 = vector.broadcast %929 : vector<8x1xf32> to vector<8x512xf32>
    %931 = arith.mulf %928, %930 : vector<8x512xf32>
    %c0_452 = arith.constant 0 : index
    %c0_453 = arith.constant 0 : index
    %932 = vector.load %arg13[%c0_452, %c0_453] : memref<8x1xf32, #tpu.memory_space<vmem>>, vector<8x1xf32>
    %933 = vector.broadcast %932 : vector<8x1xf32> to vector<8x512xf32>
    %934 = arith.addf %931, %933 : vector<8x512xf32>
    %cst_454 = arith.constant 0.000000e+00 : f32
    %935 = vector.broadcast %cst_454 : f32 to vector<8x512xf32>
    %936 = arith.maximumf %934, %935 : vector<8x512xf32>
    %c0_455 = arith.constant 0 : index
    %c0_456 = arith.constant 0 : index
    %937 = vector.load %arg14[%c0_455, %c0_456] : memref<4x8xbf16, #tpu.memory_space<vmem>>, vector<4x8xbf16>
    %938 = arith.truncf %936 : vector<8x512xf32> to vector<8x512xbf16>
    %cst_457 = arith.constant dense<0.000000e+00> : vector<4x512xf32>
    %939 = tpu.matmul %937, %938, %cst_457 {dimension_numbers = #tpu.dot_dimension_numbers<[1], [0], [0], [1], [0, 0, 1, 1], [], []>} : vector<4x8xbf16>, vector<8x512xbf16>, vector<4x512xf32> -> vector<4x512xf32>
    %c0_458 = arith.constant 0 : index
    %c0_459 = arith.constant 0 : index
    %940 = vector.load %arg15[%c0_458, %c0_459] : memref<4x1xf32, #tpu.memory_space<vmem>>, vector<4x1xf32>
    %941 = vector.broadcast %940 : vector<4x1xf32> to vector<4x512xf32>
    %942 = arith.addf %939, %941 : vector<4x512xf32>
    %943 = tpu.iota {dimensions = array<i32: 1>} : vector<1x512xi32>
    %c15_i32_460 = arith.constant 15 : i32
    %944 = vector.broadcast %c15_i32_460 : i32 to vector<1x512xi32>
    %945 = arith.andi %943, %944 : vector<1x512xi32>
    %c4_i32_461 = arith.constant 4 : i32
    %946 = vector.broadcast %c4_i32_461 : i32 to vector<1x512xi32>
    %947 = arith.shrsi %943, %946 : vector<1x512xi32>
    %c15_i32_462 = arith.constant 15 : i32
    %948 = vector.broadcast %c15_i32_462 : i32 to vector<1x512xi32>
    %949 = arith.andi %947, %948 : vector<1x512xi32>
    %cst_463 = arith.constant 0.000000e+00 : f32
    %950 = vector.broadcast %cst_463 : f32 to vector<16x512xf32>
    %c-1_i32_464 = arith.constant -1 : i32
    %951 = vector.broadcast %c-1_i32_464 : i32 to vector<1x512xi32>
    %952 = arith.addi %949, %951 : vector<1x512xi32>
    %c0_i32_465 = arith.constant 0 : i32
    %953 = vector.broadcast %c0_i32_465 : i32 to vector<1x512xi32>
    %954 = arith.cmpi sge, %952, %953 : vector<1x512xi32>
    %c-1_i32_466 = arith.constant -1 : i32
    %955 = vector.broadcast %c-1_i32_466 : i32 to vector<1x512xi32>
    %956 = arith.addi %949, %955 : vector<1x512xi32>
    %c16_i32_467 = arith.constant 16 : i32
    %957 = vector.broadcast %c16_i32_467 : i32 to vector<1x512xi32>
    %958 = arith.cmpi slt, %956, %957 : vector<1x512xi32>
    %959 = arith.andi %954, %958 : vector<1x512xi1>
    %c-1_i32_468 = arith.constant -1 : i32
    %960 = vector.broadcast %c-1_i32_468 : i32 to vector<1x512xi32>
    %961 = arith.addi %945, %960 : vector<1x512xi32>
    %c0_i32_469 = arith.constant 0 : i32
    %962 = vector.broadcast %c0_i32_469 : i32 to vector<1x512xi32>
    %963 = arith.cmpi sge, %961, %962 : vector<1x512xi32>
    %964 = arith.andi %959, %963 : vector<1x512xi1>
    %c-1_i32_470 = arith.constant -1 : i32
    %965 = vector.broadcast %c-1_i32_470 : i32 to vector<1x512xi32>
    %966 = arith.addi %945, %965 : vector<1x512xi32>
    %c16_i32_471 = arith.constant 16 : i32
    %967 = vector.broadcast %c16_i32_471 : i32 to vector<1x512xi32>
    %968 = arith.cmpi slt, %966, %967 : vector<1x512xi32>
    %969 = arith.andi %964, %968 : vector<1x512xi1>
    %cst_472 = arith.constant 1.000000e+00 : f32
    %cst_473 = arith.constant 0.000000e+00 : f32
    %970 = vector.broadcast %cst_472 : f32 to vector<1x512xf32>
    %971 = vector.broadcast %cst_473 : f32 to vector<1x512xf32>
    %972 = arith.select %969, %970, %971 : vector<1x512xi1>, vector<1x512xf32>
    %c17_i32_474 = arith.constant 17 : i32
    %973 = tpu.dynamic_rotate %0 by %c17_i32_474 dim 1 : vector<4x512xf32>, i32 -> vector<4x512xf32>
    %c0_475 = arith.constant 0 : index
    %c0_476 = arith.constant 0 : index
    %c0_477 = arith.constant 0 : index
    %974 = vector.load %arg16[%c0_475, %c0_476, %c0_477] : memref<9x16x4xbf16, #tpu.memory_space<vmem>>, vector<1x16x4xbf16>
    %975 = vector.shape_cast %974 : vector<1x16x4xbf16> to vector<16x4xbf16>
    %976 = vector.broadcast %972 : vector<1x512xf32> to vector<4x512xf32>
    %977 = arith.mulf %973, %976 : vector<4x512xf32>
    %978 = arith.truncf %977 : vector<4x512xf32> to vector<4x512xbf16>
    %cst_478 = arith.constant dense<0.000000e+00> : vector<16x512xf32>
    %979 = tpu.matmul %975, %978, %cst_478 {dimension_numbers = #tpu.dot_dimension_numbers<[1], [0], [0], [1], [0, 0, 1, 1], [], []>} : vector<16x4xbf16>, vector<4x512xbf16>, vector<16x512xf32> -> vector<16x512xf32>
    %980 = arith.addf %950, %979 : vector<16x512xf32>
    %c17_i32_479 = arith.constant 17 : i32
    %981 = tpu.dynamic_rotate %942 by %c17_i32_479 dim 1 : vector<4x512xf32>, i32 -> vector<4x512xf32>
    %c0_480 = arith.constant 0 : index
    %c0_481 = arith.constant 0 : index
    %c0_482 = arith.constant 0 : index
    %982 = vector.load %arg17[%c0_480, %c0_481, %c0_482] : memref<9x16x4xbf16, #tpu.memory_space<vmem>>, vector<1x16x4xbf16>
    %983 = vector.shape_cast %982 : vector<1x16x4xbf16> to vector<16x4xbf16>
    %984 = vector.broadcast %972 : vector<1x512xf32> to vector<4x512xf32>
    %985 = arith.mulf %981, %984 : vector<4x512xf32>
    %986 = arith.truncf %985 : vector<4x512xf32> to vector<4x512xbf16>
    %cst_483 = arith.constant dense<0.000000e+00> : vector<16x512xf32>
    %987 = tpu.matmul %983, %986, %cst_483 {dimension_numbers = #tpu.dot_dimension_numbers<[1], [0], [0], [1], [0, 0, 1, 1], [], []>} : vector<16x4xbf16>, vector<4x512xbf16>, vector<16x512xf32> -> vector<16x512xf32>
    %988 = arith.addf %980, %987 : vector<16x512xf32>
    %c-1_i32_484 = arith.constant -1 : i32
    %989 = vector.broadcast %c-1_i32_484 : i32 to vector<1x512xi32>
    %990 = arith.addi %949, %989 : vector<1x512xi32>
    %c0_i32_485 = arith.constant 0 : i32
    %991 = vector.broadcast %c0_i32_485 : i32 to vector<1x512xi32>
    %992 = arith.cmpi sge, %990, %991 : vector<1x512xi32>
    %c-1_i32_486 = arith.constant -1 : i32
    %993 = vector.broadcast %c-1_i32_486 : i32 to vector<1x512xi32>
    %994 = arith.addi %949, %993 : vector<1x512xi32>
    %c16_i32_487 = arith.constant 16 : i32
    %995 = vector.broadcast %c16_i32_487 : i32 to vector<1x512xi32>
    %996 = arith.cmpi slt, %994, %995 : vector<1x512xi32>
    %997 = arith.andi %992, %996 : vector<1x512xi1>
    %c0_i32_488 = arith.constant 0 : i32
    %998 = vector.broadcast %c0_i32_488 : i32 to vector<1x512xi32>
    %999 = arith.addi %945, %998 : vector<1x512xi32>
    %c0_i32_489 = arith.constant 0 : i32
    %1000 = vector.broadcast %c0_i32_489 : i32 to vector<1x512xi32>
    %1001 = arith.cmpi sge, %999, %1000 : vector<1x512xi32>
    %1002 = arith.andi %997, %1001 : vector<1x512xi1>
    %c0_i32_490 = arith.constant 0 : i32
    %1003 = vector.broadcast %c0_i32_490 : i32 to vector<1x512xi32>
    %1004 = arith.addi %945, %1003 : vector<1x512xi32>
    %c16_i32_491 = arith.constant 16 : i32
    %1005 = vector.broadcast %c16_i32_491 : i32 to vector<1x512xi32>
    %1006 = arith.cmpi slt, %1004, %1005 : vector<1x512xi32>
    %1007 = arith.andi %1002, %1006 : vector<1x512xi1>
    %cst_492 = arith.constant 1.000000e+00 : f32
    %cst_493 = arith.constant 0.000000e+00 : f32
    %1008 = vector.broadcast %cst_492 : f32 to vector<1x512xf32>
    %1009 = vector.broadcast %cst_493 : f32 to vector<1x512xf32>
    %1010 = arith.select %1007, %1008, %1009 : vector<1x512xi1>, vector<1x512xf32>
    %c16_i32_494 = arith.constant 16 : i32
    %1011 = tpu.dynamic_rotate %0 by %c16_i32_494 dim 1 : vector<4x512xf32>, i32 -> vector<4x512xf32>
    %c1_495 = arith.constant 1 : index
    %c0_496 = arith.constant 0 : index
    %c0_497 = arith.constant 0 : index
    %1012 = vector.load %arg16[%c1_495, %c0_496, %c0_497] : memref<9x16x4xbf16, #tpu.memory_space<vmem>>, vector<1x16x4xbf16>
    %1013 = vector.shape_cast %1012 : vector<1x16x4xbf16> to vector<16x4xbf16>
    %1014 = vector.broadcast %1010 : vector<1x512xf32> to vector<4x512xf32>
    %1015 = arith.mulf %1011, %1014 : vector<4x512xf32>
    %1016 = arith.truncf %1015 : vector<4x512xf32> to vector<4x512xbf16>
    %cst_498 = arith.constant dense<0.000000e+00> : vector<16x512xf32>
    %1017 = tpu.matmul %1013, %1016, %cst_498 {dimension_numbers = #tpu.dot_dimension_numbers<[1], [0], [0], [1], [0, 0, 1, 1], [], []>} : vector<16x4xbf16>, vector<4x512xbf16>, vector<16x512xf32> -> vector<16x512xf32>
    %1018 = arith.addf %988, %1017 : vector<16x512xf32>
    %c16_i32_499 = arith.constant 16 : i32
    %1019 = tpu.dynamic_rotate %942 by %c16_i32_499 dim 1 : vector<4x512xf32>, i32 -> vector<4x512xf32>
    %c1_500 = arith.constant 1 : index
    %c0_501 = arith.constant 0 : index
    %c0_502 = arith.constant 0 : index
    %1020 = vector.load %arg17[%c1_500, %c0_501, %c0_502] : memref<9x16x4xbf16, #tpu.memory_space<vmem>>, vector<1x16x4xbf16>
    %1021 = vector.shape_cast %1020 : vector<1x16x4xbf16> to vector<16x4xbf16>
    %1022 = vector.broadcast %1010 : vector<1x512xf32> to vector<4x512xf32>
    %1023 = arith.mulf %1019, %1022 : vector<4x512xf32>
    %1024 = arith.truncf %1023 : vector<4x512xf32> to vector<4x512xbf16>
    %cst_503 = arith.constant dense<0.000000e+00> : vector<16x512xf32>
    %1025 = tpu.matmul %1021, %1024, %cst_503 {dimension_numbers = #tpu.dot_dimension_numbers<[1], [0], [0], [1], [0, 0, 1, 1], [], []>} : vector<16x4xbf16>, vector<4x512xbf16>, vector<16x512xf32> -> vector<16x512xf32>
    %1026 = arith.addf %1018, %1025 : vector<16x512xf32>
    %c-1_i32_504 = arith.constant -1 : i32
    %1027 = vector.broadcast %c-1_i32_504 : i32 to vector<1x512xi32>
    %1028 = arith.addi %949, %1027 : vector<1x512xi32>
    %c0_i32_505 = arith.constant 0 : i32
    %1029 = vector.broadcast %c0_i32_505 : i32 to vector<1x512xi32>
    %1030 = arith.cmpi sge, %1028, %1029 : vector<1x512xi32>
    %c-1_i32_506 = arith.constant -1 : i32
    %1031 = vector.broadcast %c-1_i32_506 : i32 to vector<1x512xi32>
    %1032 = arith.addi %949, %1031 : vector<1x512xi32>
    %c16_i32_507 = arith.constant 16 : i32
    %1033 = vector.broadcast %c16_i32_507 : i32 to vector<1x512xi32>
    %1034 = arith.cmpi slt, %1032, %1033 : vector<1x512xi32>
    %1035 = arith.andi %1030, %1034 : vector<1x512xi1>
    %c1_i32_508 = arith.constant 1 : i32
    %1036 = vector.broadcast %c1_i32_508 : i32 to vector<1x512xi32>
    %1037 = arith.addi %945, %1036 : vector<1x512xi32>
    %c0_i32_509 = arith.constant 0 : i32
    %1038 = vector.broadcast %c0_i32_509 : i32 to vector<1x512xi32>
    %1039 = arith.cmpi sge, %1037, %1038 : vector<1x512xi32>
    %1040 = arith.andi %1035, %1039 : vector<1x512xi1>
    %c1_i32_510 = arith.constant 1 : i32
    %1041 = vector.broadcast %c1_i32_510 : i32 to vector<1x512xi32>
    %1042 = arith.addi %945, %1041 : vector<1x512xi32>
    %c16_i32_511 = arith.constant 16 : i32
    %1043 = vector.broadcast %c16_i32_511 : i32 to vector<1x512xi32>
    %1044 = arith.cmpi slt, %1042, %1043 : vector<1x512xi32>
    %1045 = arith.andi %1040, %1044 : vector<1x512xi1>
    %cst_512 = arith.constant 1.000000e+00 : f32
    %cst_513 = arith.constant 0.000000e+00 : f32
    %1046 = vector.broadcast %cst_512 : f32 to vector<1x512xf32>
    %1047 = vector.broadcast %cst_513 : f32 to vector<1x512xf32>
    %1048 = arith.select %1045, %1046, %1047 : vector<1x512xi1>, vector<1x512xf32>
    %c15_i32_514 = arith.constant 15 : i32
    %1049 = tpu.dynamic_rotate %0 by %c15_i32_514 dim 1 : vector<4x512xf32>, i32 -> vector<4x512xf32>
    %c2_515 = arith.constant 2 : index
    %c0_516 = arith.constant 0 : index
    %c0_517 = arith.constant 0 : index
    %1050 = vector.load %arg16[%c2_515, %c0_516, %c0_517] : memref<9x16x4xbf16, #tpu.memory_space<vmem>>, vector<1x16x4xbf16>
    %1051 = vector.shape_cast %1050 : vector<1x16x4xbf16> to vector<16x4xbf16>
    %1052 = vector.broadcast %1048 : vector<1x512xf32> to vector<4x512xf32>
    %1053 = arith.mulf %1049, %1052 : vector<4x512xf32>
    %1054 = arith.truncf %1053 : vector<4x512xf32> to vector<4x512xbf16>
    %cst_518 = arith.constant dense<0.000000e+00> : vector<16x512xf32>
    %1055 = tpu.matmul %1051, %1054, %cst_518 {dimension_numbers = #tpu.dot_dimension_numbers<[1], [0], [0], [1], [0, 0, 1, 1], [], []>} : vector<16x4xbf16>, vector<4x512xbf16>, vector<16x512xf32> -> vector<16x512xf32>
    %1056 = arith.addf %1026, %1055 : vector<16x512xf32>
    %c15_i32_519 = arith.constant 15 : i32
    %1057 = tpu.dynamic_rotate %942 by %c15_i32_519 dim 1 : vector<4x512xf32>, i32 -> vector<4x512xf32>
    %c2_520 = arith.constant 2 : index
    %c0_521 = arith.constant 0 : index
    %c0_522 = arith.constant 0 : index
    %1058 = vector.load %arg17[%c2_520, %c0_521, %c0_522] : memref<9x16x4xbf16, #tpu.memory_space<vmem>>, vector<1x16x4xbf16>
    %1059 = vector.shape_cast %1058 : vector<1x16x4xbf16> to vector<16x4xbf16>
    %1060 = vector.broadcast %1048 : vector<1x512xf32> to vector<4x512xf32>
    %1061 = arith.mulf %1057, %1060 : vector<4x512xf32>
    %1062 = arith.truncf %1061 : vector<4x512xf32> to vector<4x512xbf16>
    %cst_523 = arith.constant dense<0.000000e+00> : vector<16x512xf32>
    %1063 = tpu.matmul %1059, %1062, %cst_523 {dimension_numbers = #tpu.dot_dimension_numbers<[1], [0], [0], [1], [0, 0, 1, 1], [], []>} : vector<16x4xbf16>, vector<4x512xbf16>, vector<16x512xf32> -> vector<16x512xf32>
    %1064 = arith.addf %1056, %1063 : vector<16x512xf32>
    %c0_i32_524 = arith.constant 0 : i32
    %1065 = vector.broadcast %c0_i32_524 : i32 to vector<1x512xi32>
    %1066 = arith.addi %949, %1065 : vector<1x512xi32>
    %c0_i32_525 = arith.constant 0 : i32
    %1067 = vector.broadcast %c0_i32_525 : i32 to vector<1x512xi32>
    %1068 = arith.cmpi sge, %1066, %1067 : vector<1x512xi32>
    %c0_i32_526 = arith.constant 0 : i32
    %1069 = vector.broadcast %c0_i32_526 : i32 to vector<1x512xi32>
    %1070 = arith.addi %949, %1069 : vector<1x512xi32>
    %c16_i32_527 = arith.constant 16 : i32
    %1071 = vector.broadcast %c16_i32_527 : i32 to vector<1x512xi32>
    %1072 = arith.cmpi slt, %1070, %1071 : vector<1x512xi32>
    %1073 = arith.andi %1068, %1072 : vector<1x512xi1>
    %c-1_i32_528 = arith.constant -1 : i32
    %1074 = vector.broadcast %c-1_i32_528 : i32 to vector<1x512xi32>
    %1075 = arith.addi %945, %1074 : vector<1x512xi32>
    %c0_i32_529 = arith.constant 0 : i32
    %1076 = vector.broadcast %c0_i32_529 : i32 to vector<1x512xi32>
    %1077 = arith.cmpi sge, %1075, %1076 : vector<1x512xi32>
    %1078 = arith.andi %1073, %1077 : vector<1x512xi1>
    %c-1_i32_530 = arith.constant -1 : i32
    %1079 = vector.broadcast %c-1_i32_530 : i32 to vector<1x512xi32>
    %1080 = arith.addi %945, %1079 : vector<1x512xi32>
    %c16_i32_531 = arith.constant 16 : i32
    %1081 = vector.broadcast %c16_i32_531 : i32 to vector<1x512xi32>
    %1082 = arith.cmpi slt, %1080, %1081 : vector<1x512xi32>
    %1083 = arith.andi %1078, %1082 : vector<1x512xi1>
    %cst_532 = arith.constant 1.000000e+00 : f32
    %cst_533 = arith.constant 0.000000e+00 : f32
    %1084 = vector.broadcast %cst_532 : f32 to vector<1x512xf32>
    %1085 = vector.broadcast %cst_533 : f32 to vector<1x512xf32>
    %1086 = arith.select %1083, %1084, %1085 : vector<1x512xi1>, vector<1x512xf32>
    %c1_i32_534 = arith.constant 1 : i32
    %1087 = tpu.dynamic_rotate %0 by %c1_i32_534 dim 1 : vector<4x512xf32>, i32 -> vector<4x512xf32>
    %c3_535 = arith.constant 3 : index
    %c0_536 = arith.constant 0 : index
    %c0_537 = arith.constant 0 : index
    %1088 = vector.load %arg16[%c3_535, %c0_536, %c0_537] : memref<9x16x4xbf16, #tpu.memory_space<vmem>>, vector<1x16x4xbf16>
    %1089 = vector.shape_cast %1088 : vector<1x16x4xbf16> to vector<16x4xbf16>
    %1090 = vector.broadcast %1086 : vector<1x512xf32> to vector<4x512xf32>
    %1091 = arith.mulf %1087, %1090 : vector<4x512xf32>
    %1092 = arith.truncf %1091 : vector<4x512xf32> to vector<4x512xbf16>
    %cst_538 = arith.constant dense<0.000000e+00> : vector<16x512xf32>
    %1093 = tpu.matmul %1089, %1092, %cst_538 {dimension_numbers = #tpu.dot_dimension_numbers<[1], [0], [0], [1], [0, 0, 1, 1], [], []>} : vector<16x4xbf16>, vector<4x512xbf16>, vector<16x512xf32> -> vector<16x512xf32>
    %1094 = arith.addf %1064, %1093 : vector<16x512xf32>
    %c1_i32_539 = arith.constant 1 : i32
    %1095 = tpu.dynamic_rotate %942 by %c1_i32_539 dim 1 : vector<4x512xf32>, i32 -> vector<4x512xf32>
    %c3_540 = arith.constant 3 : index
    %c0_541 = arith.constant 0 : index
    %c0_542 = arith.constant 0 : index
    %1096 = vector.load %arg17[%c3_540, %c0_541, %c0_542] : memref<9x16x4xbf16, #tpu.memory_space<vmem>>, vector<1x16x4xbf16>
    %1097 = vector.shape_cast %1096 : vector<1x16x4xbf16> to vector<16x4xbf16>
    %1098 = vector.broadcast %1086 : vector<1x512xf32> to vector<4x512xf32>
    %1099 = arith.mulf %1095, %1098 : vector<4x512xf32>
    %1100 = arith.truncf %1099 : vector<4x512xf32> to vector<4x512xbf16>
    %cst_543 = arith.constant dense<0.000000e+00> : vector<16x512xf32>
    %1101 = tpu.matmul %1097, %1100, %cst_543 {dimension_numbers = #tpu.dot_dimension_numbers<[1], [0], [0], [1], [0, 0, 1, 1], [], []>} : vector<16x4xbf16>, vector<4x512xbf16>, vector<16x512xf32> -> vector<16x512xf32>
    %1102 = arith.addf %1094, %1101 : vector<16x512xf32>
    %c0_i32_544 = arith.constant 0 : i32
    %1103 = vector.broadcast %c0_i32_544 : i32 to vector<1x512xi32>
    %1104 = arith.addi %949, %1103 : vector<1x512xi32>
    %c0_i32_545 = arith.constant 0 : i32
    %1105 = vector.broadcast %c0_i32_545 : i32 to vector<1x512xi32>
    %1106 = arith.cmpi sge, %1104, %1105 : vector<1x512xi32>
    %c0_i32_546 = arith.constant 0 : i32
    %1107 = vector.broadcast %c0_i32_546 : i32 to vector<1x512xi32>
    %1108 = arith.addi %949, %1107 : vector<1x512xi32>
    %c16_i32_547 = arith.constant 16 : i32
    %1109 = vector.broadcast %c16_i32_547 : i32 to vector<1x512xi32>
    %1110 = arith.cmpi slt, %1108, %1109 : vector<1x512xi32>
    %1111 = arith.andi %1106, %1110 : vector<1x512xi1>
    %c0_i32_548 = arith.constant 0 : i32
    %1112 = vector.broadcast %c0_i32_548 : i32 to vector<1x512xi32>
    %1113 = arith.addi %945, %1112 : vector<1x512xi32>
    %c0_i32_549 = arith.constant 0 : i32
    %1114 = vector.broadcast %c0_i32_549 : i32 to vector<1x512xi32>
    %1115 = arith.cmpi sge, %1113, %1114 : vector<1x512xi32>
    %1116 = arith.andi %1111, %1115 : vector<1x512xi1>
    %c0_i32_550 = arith.constant 0 : i32
    %1117 = vector.broadcast %c0_i32_550 : i32 to vector<1x512xi32>
    %1118 = arith.addi %945, %1117 : vector<1x512xi32>
    %c16_i32_551 = arith.constant 16 : i32
    %1119 = vector.broadcast %c16_i32_551 : i32 to vector<1x512xi32>
    %1120 = arith.cmpi slt, %1118, %1119 : vector<1x512xi32>
    %1121 = arith.andi %1116, %1120 : vector<1x512xi1>
    %cst_552 = arith.constant 1.000000e+00 : f32
    %cst_553 = arith.constant 0.000000e+00 : f32
    %1122 = vector.broadcast %cst_552 : f32 to vector<1x512xf32>
    %1123 = vector.broadcast %cst_553 : f32 to vector<1x512xf32>
    %1124 = arith.select %1121, %1122, %1123 : vector<1x512xi1>, vector<1x512xf32>
    %c4_554 = arith.constant 4 : index
    %c0_555 = arith.constant 0 : index
    %c0_556 = arith.constant 0 : index
    %1125 = vector.load %arg16[%c4_554, %c0_555, %c0_556] : memref<9x16x4xbf16, #tpu.memory_space<vmem>>, vector<1x16x4xbf16>
    %1126 = vector.shape_cast %1125 : vector<1x16x4xbf16> to vector<16x4xbf16>
    %1127 = vector.broadcast %1124 : vector<1x512xf32> to vector<4x512xf32>
    %1128 = arith.mulf %0, %1127 : vector<4x512xf32>
    %1129 = arith.truncf %1128 : vector<4x512xf32> to vector<4x512xbf16>
    %cst_557 = arith.constant dense<0.000000e+00> : vector<16x512xf32>
    %1130 = tpu.matmul %1126, %1129, %cst_557 {dimension_numbers = #tpu.dot_dimension_numbers<[1], [0], [0], [1], [0, 0, 1, 1], [], []>} : vector<16x4xbf16>, vector<4x512xbf16>, vector<16x512xf32> -> vector<16x512xf32>
    %1131 = arith.addf %1102, %1130 : vector<16x512xf32>
    %c4_558 = arith.constant 4 : index
    %c0_559 = arith.constant 0 : index
    %c0_560 = arith.constant 0 : index
    %1132 = vector.load %arg17[%c4_558, %c0_559, %c0_560] : memref<9x16x4xbf16, #tpu.memory_space<vmem>>, vector<1x16x4xbf16>
    %1133 = vector.shape_cast %1132 : vector<1x16x4xbf16> to vector<16x4xbf16>
    %1134 = vector.broadcast %1124 : vector<1x512xf32> to vector<4x512xf32>
    %1135 = arith.mulf %942, %1134 : vector<4x512xf32>
    %1136 = arith.truncf %1135 : vector<4x512xf32> to vector<4x512xbf16>
    %cst_561 = arith.constant dense<0.000000e+00> : vector<16x512xf32>
    %1137 = tpu.matmul %1133, %1136, %cst_561 {dimension_numbers = #tpu.dot_dimension_numbers<[1], [0], [0], [1], [0, 0, 1, 1], [], []>} : vector<16x4xbf16>, vector<4x512xbf16>, vector<16x512xf32> -> vector<16x512xf32>
    %1138 = arith.addf %1131, %1137 : vector<16x512xf32>
    %c0_i32_562 = arith.constant 0 : i32
    %1139 = vector.broadcast %c0_i32_562 : i32 to vector<1x512xi32>
    %1140 = arith.addi %949, %1139 : vector<1x512xi32>
    %c0_i32_563 = arith.constant 0 : i32
    %1141 = vector.broadcast %c0_i32_563 : i32 to vector<1x512xi32>
    %1142 = arith.cmpi sge, %1140, %1141 : vector<1x512xi32>
    %c0_i32_564 = arith.constant 0 : i32
    %1143 = vector.broadcast %c0_i32_564 : i32 to vector<1x512xi32>
    %1144 = arith.addi %949, %1143 : vector<1x512xi32>
    %c16_i32_565 = arith.constant 16 : i32
    %1145 = vector.broadcast %c16_i32_565 : i32 to vector<1x512xi32>
    %1146 = arith.cmpi slt, %1144, %1145 : vector<1x512xi32>
    %1147 = arith.andi %1142, %1146 : vector<1x512xi1>
    %c1_i32_566 = arith.constant 1 : i32
    %1148 = vector.broadcast %c1_i32_566 : i32 to vector<1x512xi32>
    %1149 = arith.addi %945, %1148 : vector<1x512xi32>
    %c0_i32_567 = arith.constant 0 : i32
    %1150 = vector.broadcast %c0_i32_567 : i32 to vector<1x512xi32>
    %1151 = arith.cmpi sge, %1149, %1150 : vector<1x512xi32>
    %1152 = arith.andi %1147, %1151 : vector<1x512xi1>
    %c1_i32_568 = arith.constant 1 : i32
    %1153 = vector.broadcast %c1_i32_568 : i32 to vector<1x512xi32>
    %1154 = arith.addi %945, %1153 : vector<1x512xi32>
    %c16_i32_569 = arith.constant 16 : i32
    %1155 = vector.broadcast %c16_i32_569 : i32 to vector<1x512xi32>
    %1156 = arith.cmpi slt, %1154, %1155 : vector<1x512xi32>
    %1157 = arith.andi %1152, %1156 : vector<1x512xi1>
    %cst_570 = arith.constant 1.000000e+00 : f32
    %cst_571 = arith.constant 0.000000e+00 : f32
    %1158 = vector.broadcast %cst_570 : f32 to vector<1x512xf32>
    %1159 = vector.broadcast %cst_571 : f32 to vector<1x512xf32>
    %1160 = arith.select %1157, %1158, %1159 : vector<1x512xi1>, vector<1x512xf32>
    %c511_i32_572 = arith.constant 511 : i32
    %1161 = tpu.dynamic_rotate %0 by %c511_i32_572 dim 1 : vector<4x512xf32>, i32 -> vector<4x512xf32>
    %c5_573 = arith.constant 5 : index
    %c0_574 = arith.constant 0 : index
    %c0_575 = arith.constant 0 : index
    %1162 = vector.load %arg16[%c5_573, %c0_574, %c0_575] : memref<9x16x4xbf16, #tpu.memory_space<vmem>>, vector<1x16x4xbf16>
    %1163 = vector.shape_cast %1162 : vector<1x16x4xbf16> to vector<16x4xbf16>
    %1164 = vector.broadcast %1160 : vector<1x512xf32> to vector<4x512xf32>
    %1165 = arith.mulf %1161, %1164 : vector<4x512xf32>
    %1166 = arith.truncf %1165 : vector<4x512xf32> to vector<4x512xbf16>
    %cst_576 = arith.constant dense<0.000000e+00> : vector<16x512xf32>
    %1167 = tpu.matmul %1163, %1166, %cst_576 {dimension_numbers = #tpu.dot_dimension_numbers<[1], [0], [0], [1], [0, 0, 1, 1], [], []>} : vector<16x4xbf16>, vector<4x512xbf16>, vector<16x512xf32> -> vector<16x512xf32>
    %1168 = arith.addf %1138, %1167 : vector<16x512xf32>
    %c511_i32_577 = arith.constant 511 : i32
    %1169 = tpu.dynamic_rotate %942 by %c511_i32_577 dim 1 : vector<4x512xf32>, i32 -> vector<4x512xf32>
    %c5_578 = arith.constant 5 : index
    %c0_579 = arith.constant 0 : index
    %c0_580 = arith.constant 0 : index
    %1170 = vector.load %arg17[%c5_578, %c0_579, %c0_580] : memref<9x16x4xbf16, #tpu.memory_space<vmem>>, vector<1x16x4xbf16>
    %1171 = vector.shape_cast %1170 : vector<1x16x4xbf16> to vector<16x4xbf16>
    %1172 = vector.broadcast %1160 : vector<1x512xf32> to vector<4x512xf32>
    %1173 = arith.mulf %1169, %1172 : vector<4x512xf32>
    %1174 = arith.truncf %1173 : vector<4x512xf32> to vector<4x512xbf16>
    %cst_581 = arith.constant dense<0.000000e+00> : vector<16x512xf32>
    %1175 = tpu.matmul %1171, %1174, %cst_581 {dimension_numbers = #tpu.dot_dimension_numbers<[1], [0], [0], [1], [0, 0, 1, 1], [], []>} : vector<16x4xbf16>, vector<4x512xbf16>, vector<16x512xf32> -> vector<16x512xf32>
    %1176 = arith.addf %1168, %1175 : vector<16x512xf32>
    %c1_i32_582 = arith.constant 1 : i32
    %1177 = vector.broadcast %c1_i32_582 : i32 to vector<1x512xi32>
    %1178 = arith.addi %949, %1177 : vector<1x512xi32>
    %c0_i32_583 = arith.constant 0 : i32
    %1179 = vector.broadcast %c0_i32_583 : i32 to vector<1x512xi32>
    %1180 = arith.cmpi sge, %1178, %1179 : vector<1x512xi32>
    %c1_i32_584 = arith.constant 1 : i32
    %1181 = vector.broadcast %c1_i32_584 : i32 to vector<1x512xi32>
    %1182 = arith.addi %949, %1181 : vector<1x512xi32>
    %c16_i32_585 = arith.constant 16 : i32
    %1183 = vector.broadcast %c16_i32_585 : i32 to vector<1x512xi32>
    %1184 = arith.cmpi slt, %1182, %1183 : vector<1x512xi32>
    %1185 = arith.andi %1180, %1184 : vector<1x512xi1>
    %c-1_i32_586 = arith.constant -1 : i32
    %1186 = vector.broadcast %c-1_i32_586 : i32 to vector<1x512xi32>
    %1187 = arith.addi %945, %1186 : vector<1x512xi32>
    %c0_i32_587 = arith.constant 0 : i32
    %1188 = vector.broadcast %c0_i32_587 : i32 to vector<1x512xi32>
    %1189 = arith.cmpi sge, %1187, %1188 : vector<1x512xi32>
    %1190 = arith.andi %1185, %1189 : vector<1x512xi1>
    %c-1_i32_588 = arith.constant -1 : i32
    %1191 = vector.broadcast %c-1_i32_588 : i32 to vector<1x512xi32>
    %1192 = arith.addi %945, %1191 : vector<1x512xi32>
    %c16_i32_589 = arith.constant 16 : i32
    %1193 = vector.broadcast %c16_i32_589 : i32 to vector<1x512xi32>
    %1194 = arith.cmpi slt, %1192, %1193 : vector<1x512xi32>
    %1195 = arith.andi %1190, %1194 : vector<1x512xi1>
    %cst_590 = arith.constant 1.000000e+00 : f32
    %cst_591 = arith.constant 0.000000e+00 : f32
    %1196 = vector.broadcast %cst_590 : f32 to vector<1x512xf32>
    %1197 = vector.broadcast %cst_591 : f32 to vector<1x512xf32>
    %1198 = arith.select %1195, %1196, %1197 : vector<1x512xi1>, vector<1x512xf32>
    %c497_i32_592 = arith.constant 497 : i32
    %1199 = tpu.dynamic_rotate %0 by %c497_i32_592 dim 1 : vector<4x512xf32>, i32 -> vector<4x512xf32>
    %c6_593 = arith.constant 6 : index
    %c0_594 = arith.constant 0 : index
    %c0_595 = arith.constant 0 : index
    %1200 = vector.load %arg16[%c6_593, %c0_594, %c0_595] : memref<9x16x4xbf16, #tpu.memory_space<vmem>>, vector<1x16x4xbf16>
    %1201 = vector.shape_cast %1200 : vector<1x16x4xbf16> to vector<16x4xbf16>
    %1202 = vector.broadcast %1198 : vector<1x512xf32> to vector<4x512xf32>
    %1203 = arith.mulf %1199, %1202 : vector<4x512xf32>
    %1204 = arith.truncf %1203 : vector<4x512xf32> to vector<4x512xbf16>
    %cst_596 = arith.constant dense<0.000000e+00> : vector<16x512xf32>
    %1205 = tpu.matmul %1201, %1204, %cst_596 {dimension_numbers = #tpu.dot_dimension_numbers<[1], [0], [0], [1], [0, 0, 1, 1], [], []>} : vector<16x4xbf16>, vector<4x512xbf16>, vector<16x512xf32> -> vector<16x512xf32>
    %1206 = arith.addf %1176, %1205 : vector<16x512xf32>
    %c497_i32_597 = arith.constant 497 : i32
    %1207 = tpu.dynamic_rotate %942 by %c497_i32_597 dim 1 : vector<4x512xf32>, i32 -> vector<4x512xf32>
    %c6_598 = arith.constant 6 : index
    %c0_599 = arith.constant 0 : index
    %c0_600 = arith.constant 0 : index
    %1208 = vector.load %arg17[%c6_598, %c0_599, %c0_600] : memref<9x16x4xbf16, #tpu.memory_space<vmem>>, vector<1x16x4xbf16>
    %1209 = vector.shape_cast %1208 : vector<1x16x4xbf16> to vector<16x4xbf16>
    %1210 = vector.broadcast %1198 : vector<1x512xf32> to vector<4x512xf32>
    %1211 = arith.mulf %1207, %1210 : vector<4x512xf32>
    %1212 = arith.truncf %1211 : vector<4x512xf32> to vector<4x512xbf16>
    %cst_601 = arith.constant dense<0.000000e+00> : vector<16x512xf32>
    %1213 = tpu.matmul %1209, %1212, %cst_601 {dimension_numbers = #tpu.dot_dimension_numbers<[1], [0], [0], [1], [0, 0, 1, 1], [], []>} : vector<16x4xbf16>, vector<4x512xbf16>, vector<16x512xf32> -> vector<16x512xf32>
    %1214 = arith.addf %1206, %1213 : vector<16x512xf32>
    %c1_i32_602 = arith.constant 1 : i32
    %1215 = vector.broadcast %c1_i32_602 : i32 to vector<1x512xi32>
    %1216 = arith.addi %949, %1215 : vector<1x512xi32>
    %c0_i32_603 = arith.constant 0 : i32
    %1217 = vector.broadcast %c0_i32_603 : i32 to vector<1x512xi32>
    %1218 = arith.cmpi sge, %1216, %1217 : vector<1x512xi32>
    %c1_i32_604 = arith.constant 1 : i32
    %1219 = vector.broadcast %c1_i32_604 : i32 to vector<1x512xi32>
    %1220 = arith.addi %949, %1219 : vector<1x512xi32>
    %c16_i32_605 = arith.constant 16 : i32
    %1221 = vector.broadcast %c16_i32_605 : i32 to vector<1x512xi32>
    %1222 = arith.cmpi slt, %1220, %1221 : vector<1x512xi32>
    %1223 = arith.andi %1218, %1222 : vector<1x512xi1>
    %c0_i32_606 = arith.constant 0 : i32
    %1224 = vector.broadcast %c0_i32_606 : i32 to vector<1x512xi32>
    %1225 = arith.addi %945, %1224 : vector<1x512xi32>
    %c0_i32_607 = arith.constant 0 : i32
    %1226 = vector.broadcast %c0_i32_607 : i32 to vector<1x512xi32>
    %1227 = arith.cmpi sge, %1225, %1226 : vector<1x512xi32>
    %1228 = arith.andi %1223, %1227 : vector<1x512xi1>
    %c0_i32_608 = arith.constant 0 : i32
    %1229 = vector.broadcast %c0_i32_608 : i32 to vector<1x512xi32>
    %1230 = arith.addi %945, %1229 : vector<1x512xi32>
    %c16_i32_609 = arith.constant 16 : i32
    %1231 = vector.broadcast %c16_i32_609 : i32 to vector<1x512xi32>
    %1232 = arith.cmpi slt, %1230, %1231 : vector<1x512xi32>
    %1233 = arith.andi %1228, %1232 : vector<1x512xi1>
    %cst_610 = arith.constant 1.000000e+00 : f32
    %cst_611 = arith.constant 0.000000e+00 : f32
    %1234 = vector.broadcast %cst_610 : f32 to vector<1x512xf32>
    %1235 = vector.broadcast %cst_611 : f32 to vector<1x512xf32>
    %1236 = arith.select %1233, %1234, %1235 : vector<1x512xi1>, vector<1x512xf32>
    %c496_i32_612 = arith.constant 496 : i32
    %1237 = tpu.dynamic_rotate %0 by %c496_i32_612 dim 1 : vector<4x512xf32>, i32 -> vector<4x512xf32>
    %c7_613 = arith.constant 7 : index
    %c0_614 = arith.constant 0 : index
    %c0_615 = arith.constant 0 : index
    %1238 = vector.load %arg16[%c7_613, %c0_614, %c0_615] : memref<9x16x4xbf16, #tpu.memory_space<vmem>>, vector<1x16x4xbf16>
    %1239 = vector.shape_cast %1238 : vector<1x16x4xbf16> to vector<16x4xbf16>
    %1240 = vector.broadcast %1236 : vector<1x512xf32> to vector<4x512xf32>
    %1241 = arith.mulf %1237, %1240 : vector<4x512xf32>
    %1242 = arith.truncf %1241 : vector<4x512xf32> to vector<4x512xbf16>
    %cst_616 = arith.constant dense<0.000000e+00> : vector<16x512xf32>
    %1243 = tpu.matmul %1239, %1242, %cst_616 {dimension_numbers = #tpu.dot_dimension_numbers<[1], [0], [0], [1], [0, 0, 1, 1], [], []>} : vector<16x4xbf16>, vector<4x512xbf16>, vector<16x512xf32> -> vector<16x512xf32>
    %1244 = arith.addf %1214, %1243 : vector<16x512xf32>
    %c496_i32_617 = arith.constant 496 : i32
    %1245 = tpu.dynamic_rotate %942 by %c496_i32_617 dim 1 : vector<4x512xf32>, i32 -> vector<4x512xf32>
    %c7_618 = arith.constant 7 : index
    %c0_619 = arith.constant 0 : index
    %c0_620 = arith.constant 0 : index
    %1246 = vector.load %arg17[%c7_618, %c0_619, %c0_620] : memref<9x16x4xbf16, #tpu.memory_space<vmem>>, vector<1x16x4xbf16>
    %1247 = vector.shape_cast %1246 : vector<1x16x4xbf16> to vector<16x4xbf16>
    %1248 = vector.broadcast %1236 : vector<1x512xf32> to vector<4x512xf32>
    %1249 = arith.mulf %1245, %1248 : vector<4x512xf32>
    %1250 = arith.truncf %1249 : vector<4x512xf32> to vector<4x512xbf16>
    %cst_621 = arith.constant dense<0.000000e+00> : vector<16x512xf32>
    %1251 = tpu.matmul %1247, %1250, %cst_621 {dimension_numbers = #tpu.dot_dimension_numbers<[1], [0], [0], [1], [0, 0, 1, 1], [], []>} : vector<16x4xbf16>, vector<4x512xbf16>, vector<16x512xf32> -> vector<16x512xf32>
    %1252 = arith.addf %1244, %1251 : vector<16x512xf32>
    %c1_i32_622 = arith.constant 1 : i32
    %1253 = vector.broadcast %c1_i32_622 : i32 to vector<1x512xi32>
    %1254 = arith.addi %949, %1253 : vector<1x512xi32>
    %c0_i32_623 = arith.constant 0 : i32
    %1255 = vector.broadcast %c0_i32_623 : i32 to vector<1x512xi32>
    %1256 = arith.cmpi sge, %1254, %1255 : vector<1x512xi32>
    %c1_i32_624 = arith.constant 1 : i32
    %1257 = vector.broadcast %c1_i32_624 : i32 to vector<1x512xi32>
    %1258 = arith.addi %949, %1257 : vector<1x512xi32>
    %c16_i32_625 = arith.constant 16 : i32
    %1259 = vector.broadcast %c16_i32_625 : i32 to vector<1x512xi32>
    %1260 = arith.cmpi slt, %1258, %1259 : vector<1x512xi32>
    %1261 = arith.andi %1256, %1260 : vector<1x512xi1>
    %c1_i32_626 = arith.constant 1 : i32
    %1262 = vector.broadcast %c1_i32_626 : i32 to vector<1x512xi32>
    %1263 = arith.addi %945, %1262 : vector<1x512xi32>
    %c0_i32_627 = arith.constant 0 : i32
    %1264 = vector.broadcast %c0_i32_627 : i32 to vector<1x512xi32>
    %1265 = arith.cmpi sge, %1263, %1264 : vector<1x512xi32>
    %1266 = arith.andi %1261, %1265 : vector<1x512xi1>
    %c1_i32_628 = arith.constant 1 : i32
    %1267 = vector.broadcast %c1_i32_628 : i32 to vector<1x512xi32>
    %1268 = arith.addi %945, %1267 : vector<1x512xi32>
    %c16_i32_629 = arith.constant 16 : i32
    %1269 = vector.broadcast %c16_i32_629 : i32 to vector<1x512xi32>
    %1270 = arith.cmpi slt, %1268, %1269 : vector<1x512xi32>
    %1271 = arith.andi %1266, %1270 : vector<1x512xi1>
    %cst_630 = arith.constant 1.000000e+00 : f32
    %cst_631 = arith.constant 0.000000e+00 : f32
    %1272 = vector.broadcast %cst_630 : f32 to vector<1x512xf32>
    %1273 = vector.broadcast %cst_631 : f32 to vector<1x512xf32>
    %1274 = arith.select %1271, %1272, %1273 : vector<1x512xi1>, vector<1x512xf32>
    %c495_i32_632 = arith.constant 495 : i32
    %1275 = tpu.dynamic_rotate %0 by %c495_i32_632 dim 1 : vector<4x512xf32>, i32 -> vector<4x512xf32>
    %c8_633 = arith.constant 8 : index
    %c0_634 = arith.constant 0 : index
    %c0_635 = arith.constant 0 : index
    %1276 = vector.load %arg16[%c8_633, %c0_634, %c0_635] : memref<9x16x4xbf16, #tpu.memory_space<vmem>>, vector<1x16x4xbf16>
    %1277 = vector.shape_cast %1276 : vector<1x16x4xbf16> to vector<16x4xbf16>
    %1278 = vector.broadcast %1274 : vector<1x512xf32> to vector<4x512xf32>
    %1279 = arith.mulf %1275, %1278 : vector<4x512xf32>
    %1280 = arith.truncf %1279 : vector<4x512xf32> to vector<4x512xbf16>
    %cst_636 = arith.constant dense<0.000000e+00> : vector<16x512xf32>
    %1281 = tpu.matmul %1277, %1280, %cst_636 {dimension_numbers = #tpu.dot_dimension_numbers<[1], [0], [0], [1], [0, 0, 1, 1], [], []>} : vector<16x4xbf16>, vector<4x512xbf16>, vector<16x512xf32> -> vector<16x512xf32>
    %1282 = arith.addf %1252, %1281 : vector<16x512xf32>
    %c495_i32_637 = arith.constant 495 : i32
    %1283 = tpu.dynamic_rotate %942 by %c495_i32_637 dim 1 : vector<4x512xf32>, i32 -> vector<4x512xf32>
    %c8_638 = arith.constant 8 : index
    %c0_639 = arith.constant 0 : index
    %c0_640 = arith.constant 0 : index
    %1284 = vector.load %arg17[%c8_638, %c0_639, %c0_640] : memref<9x16x4xbf16, #tpu.memory_space<vmem>>, vector<1x16x4xbf16>
    %1285 = vector.shape_cast %1284 : vector<1x16x4xbf16> to vector<16x4xbf16>
    %1286 = vector.broadcast %1274 : vector<1x512xf32> to vector<4x512xf32>
    %1287 = arith.mulf %1283, %1286 : vector<4x512xf32>
    %1288 = arith.truncf %1287 : vector<4x512xf32> to vector<4x512xbf16>
    %cst_641 = arith.constant dense<0.000000e+00> : vector<16x512xf32>
    %1289 = tpu.matmul %1285, %1288, %cst_641 {dimension_numbers = #tpu.dot_dimension_numbers<[1], [0], [0], [1], [0, 0, 1, 1], [], []>} : vector<16x4xbf16>, vector<4x512xbf16>, vector<16x512xf32> -> vector<16x512xf32>
    %1290 = arith.addf %1282, %1289 : vector<16x512xf32>
    %c0_642 = arith.constant 0 : index
    %c0_643 = arith.constant 0 : index
    %1291 = vector.load %arg18[%c0_642, %c0_643] : memref<16x1xf32, #tpu.memory_space<vmem>>, vector<16x1xf32>
    %1292 = vector.broadcast %1291 : vector<16x1xf32> to vector<16x512xf32>
    %1293 = arith.mulf %1290, %1292 : vector<16x512xf32>
    %c0_644 = arith.constant 0 : index
    %c0_645 = arith.constant 0 : index
    %1294 = vector.load %arg19[%c0_644, %c0_645] : memref<16x1xf32, #tpu.memory_space<vmem>>, vector<16x1xf32>
    %1295 = vector.broadcast %1294 : vector<16x1xf32> to vector<16x512xf32>
    %1296 = arith.addf %1293, %1295 : vector<16x512xf32>
    %cst_646 = arith.constant 0.000000e+00 : f32
    %1297 = vector.broadcast %cst_646 : f32 to vector<16x512xf32>
    %1298 = arith.maximumf %1296, %1297 : vector<16x512xf32>
    %c0_647 = arith.constant 0 : index
    %c0_648 = arith.constant 0 : index
    %1299 = vector.load %arg3[%c0_647, %c0_648] : memref<512x2xf32, #tpu.memory_space<vmem>>, vector<512x2xf32>
    %cst_649 = arith.constant dense<0.000000e+00> : vector<16x2xf32>
    %1300 = tpu.matmul %1298, %1299, %cst_649 {dimension_numbers = #tpu.dot_dimension_numbers<[1], [0], [0], [1], [0, 0, 1, 1], [], []>} : vector<16x512xf32>, vector<512x2xf32>, vector<16x2xf32> -> vector<16x2xf32>
    %c0_650 = arith.constant 0 : index
    %c0_651 = arith.constant 0 : index
    %1301 = vector.load %arg20[%c0_650, %c0_651] : memref<4x16xf32, #tpu.memory_space<vmem>>, vector<4x16xf32>
    %cst_652 = arith.constant dense<0.000000e+00> : vector<4x2xf32>
    %1302 = tpu.matmul %1301, %1300, %cst_652 {dimension_numbers = #tpu.dot_dimension_numbers<[1], [0], [0], [1], [0, 0, 1, 1], [], []>} : vector<4x16xf32>, vector<16x2xf32>, vector<4x2xf32> -> vector<4x2xf32>
    %c0_653 = arith.constant 0 : index
    %c0_654 = arith.constant 0 : index
    %1303 = vector.load %arg21[%c0_653, %c0_654] : memref<4x1xf32, #tpu.memory_space<vmem>>, vector<4x1xf32>
    %1304 = vector.broadcast %1303 : vector<4x1xf32> to vector<4x2xf32>
    %1305 = arith.addf %1302, %1304 : vector<4x2xf32>
    %cst_655 = arith.constant 0.000000e+00 : f32
    %1306 = vector.broadcast %cst_655 : f32 to vector<4x2xf32>
    %1307 = arith.maximumf %1305, %1306 : vector<4x2xf32>
    %c0_656 = arith.constant 0 : index
    %c0_657 = arith.constant 0 : index
    %1308 = vector.load %arg22[%c0_656, %c0_657] : memref<16x4xf32, #tpu.memory_space<vmem>>, vector<16x4xf32>
    %cst_658 = arith.constant dense<0.000000e+00> : vector<16x2xf32>
    %1309 = tpu.matmul %1308, %1307, %cst_658 {dimension_numbers = #tpu.dot_dimension_numbers<[1], [0], [0], [1], [0, 0, 1, 1], [], []>} : vector<16x4xf32>, vector<4x2xf32>, vector<16x2xf32> -> vector<16x2xf32>
    %c0_659 = arith.constant 0 : index
    %c0_660 = arith.constant 0 : index
    %1310 = vector.load %arg23[%c0_659, %c0_660] : memref<16x1xf32, #tpu.memory_space<vmem>>, vector<16x1xf32>
    %1311 = vector.broadcast %1310 : vector<16x1xf32> to vector<16x2xf32>
    %1312 = arith.addf %1309, %1311 : vector<16x2xf32>
    %1313 = arith.negf %1312 : vector<16x2xf32>
    %1314 = math.exp %1313 : vector<16x2xf32>
    %cst_661 = arith.constant 1.000000e+00 : f32
    %1315 = vector.broadcast %cst_661 : f32 to vector<16x2xf32>
    %1316 = arith.addf %1315, %1314 : vector<16x2xf32>
    %1317 = arith.divf %1315, %1316 : vector<16x2xf32>
    %1318 = arith.mulf %1300, %1317 : vector<16x2xf32>
    %c0_662 = arith.constant 0 : index
    %c0_663 = arith.constant 0 : index
    %1319 = vector.load %arg24[%c0_662, %c0_663] : memref<2x16xf32, #tpu.memory_space<vmem>>, vector<2x16xf32>
    %cst_664 = arith.constant dense<0.000000e+00> : vector<2x2xf32>
    %1320 = tpu.matmul %1319, %1318, %cst_664 {dimension_numbers = #tpu.dot_dimension_numbers<[1], [0], [0], [1], [0, 0, 1, 1], [], []>} : vector<2x16xf32>, vector<16x2xf32>, vector<2x2xf32> -> vector<2x2xf32>
    %c0_665 = arith.constant 0 : index
    %c0_666 = arith.constant 0 : index
    %1321 = vector.load %arg25[%c0_665, %c0_666] : memref<2x1xf32, #tpu.memory_space<vmem>>, vector<2x1xf32>
    %1322 = vector.broadcast %1321 : vector<2x1xf32> to vector<2x2xf32>
    %1323 = arith.addf %1320, %1322 : vector<2x2xf32>
    %c0_667 = arith.constant 0 : index
    %c0_668 = arith.constant 0 : index
    %1324 = vector.load %arg26[%c0_667, %c0_668] : memref<2x2xf32, #tpu.memory_space<vmem>>, vector<2x2xf32>
    tpu.vector_store %arg26[%c0_667, %c0_668], %1323 {strides = array<i32>} : memref<2x2xf32, #tpu.memory_space<vmem>>, vector<2x2xf32>,
    return
  }
}

</mosaic_0001>

<llo_original>
// kernel: twostage_forward.1
$region0: #{twostage_forward.1}
  #allocation0 [shape = 'u32[]', space=smem, size = 0x4, offset = 0x4, fixed_abs, tag = 'smem constant byte address 0x4 - core index']
  #allocation1 [shape = 'u32[144,128]{1,0:T(1,128)}', space=vmem, size = 0x12000, scoped, tag = 'internal scratch']
  %s0 = inlined_call_operand.vmem [shape: f32[4,512], index: 0, kind: input, shape index: {}]
  %s1 = inlined_call_operand.vmem [shape: f32[512,128], index: 1, kind: input, shape index: {}]
  %s2 = inlined_call_operand.vmem [shape: f32[128,512], index: 2, kind: input, shape index: {}]
  %s3 = inlined_call_operand.vmem [shape: f32[512,2], index: 3, kind: input, shape index: {}]
  %s4 = inlined_call_operand.vmem [shape: bf16[9,8,4], index: 4, kind: input, shape index: {}]
  %s5 = inlined_call_operand.vmem [shape: f32[8,1], index: 5, kind: input, shape index: {}]
  %s6 = inlined_call_operand.vmem [shape: f32[8,1], index: 6, kind: input, shape index: {}]
  %s7 = inlined_call_operand.vmem [shape: bf16[9,16,8], index: 7, kind: input, shape index: {}]
  %s8 = inlined_call_operand.vmem [shape: f32[16,1], index: 8, kind: input, shape index: {}]
  %s9 = inlined_call_operand.vmem [shape: f32[16,1], index: 9, kind: input, shape index: {}]
  %s10 = inlined_call_operand.vmem [shape: bf16[9,8,8], index: 10, kind: input, shape index: {}]
  %s11 = inlined_call_operand.vmem [shape: bf16[9,8,16], index: 11, kind: input, shape index: {}]
  %s12 = inlined_call_operand.vmem [shape: f32[8,1], index: 12, kind: input, shape index: {}]
  %s13 = inlined_call_operand.vmem [shape: f32[8,1], index: 13, kind: input, shape index: {}]
  %s14 = inlined_call_operand.vmem [shape: bf16[4,8], index: 14, kind: input, shape index: {}]
  %s15 = inlined_call_operand.vmem [shape: f32[4,1], index: 15, kind: input, shape index: {}]
  %s16 = inlined_call_operand.vmem [shape: bf16[9,16,4], index: 16, kind: input, shape index: {}]
  %s17 = inlined_call_operand.vmem [shape: bf16[9,16,4], index: 17, kind: input, shape index: {}]
  %s18 = inlined_call_operand.vmem [shape: f32[16,1], index: 18, kind: input, shape index: {}]
  %s19 = inlined_call_operand.vmem [shape: f32[16,1], index: 19, kind: input, shape index: {}]
  %s20 = inlined_call_operand.vmem [shape: f32[4,16], index: 20, kind: input, shape index: {}]
  %s21 = inlined_call_operand.vmem [shape: f32[4,1], index: 21, kind: input, shape index: {}]
  %s22 = inlined_call_operand.vmem [shape: f32[16,4], index: 22, kind: input, shape index: {}]
  %s23 = inlined_call_operand.vmem [shape: f32[16,1], index: 23, kind: input, shape index: {}]
  %s24 = inlined_call_operand.vmem [shape: f32[2,16], index: 24, kind: input, shape index: {}]
  %s25 = inlined_call_operand.vmem [shape: f32[2,1], index: 25, kind: input, shape index: {}]
  %s26 = inlined_call_operand.vmem [shape: f32[2,2], index: 26, kind: output, shape index: {}]
  %s27 = sld [smem:[#allocation0]]
  $region114: #{twostage_forward.1} parent=0
    _
  %s29 = ssub.s32 1, %s27
  %s30 = scalar_select 0, %s29, %s27
  // Predicated region
  $region2: #{twostage_forward.1} parent=0 // pred_check
    _
  $region3: #{twostage_forward.1} parent=0 // pred_check_branch
    %32 = sbr.rel (0) target = $region5
  $region4: #{twostage_forward.1} parent=0 // pred_region
    _
  $region5: #{twostage_forward.1} parent=0 // pred_fallthru
    _
  // Predicated region
  $region6: #{twostage_forward.1} parent=0 // pred_check
    _
  $region7: #{twostage_forward.1} parent=0 // pred_check_branch
    %34 = sbr.rel (0) target = $region9
  $region8: #{twostage_forward.1} parent=0 // pred_region
    _
  $region9: #{twostage_forward.1} parent=0 // pred_fallthru
    _
  // Predicated region
  $region10: #{twostage_forward.1} parent=0 // pred_check
    _
  $region11: #{twostage_forward.1} parent=0 // pred_check_branch
    %36 = sbr.rel (0) target = $region13
  $region12: #{twostage_forward.1} parent=0 // pred_region
    _
  $region13: #{twostage_forward.1} parent=0 // pred_fallthru
    _
  // Predicated region
  $region14: #{twostage_forward.1} parent=0 // pred_check
    _
  $region15: #{twostage_forward.1} parent=0 // pred_check_branch
    %38 = sbr.rel (0) target = $region17
  $region16: #{twostage_forward.1} parent=0 // pred_region
    _
  $region17: #{twostage_forward.1} parent=0 // pred_fallthru
    _
  // Predicated region
  $region18: #{twostage_forward.1} parent=0 // pred_check
    _
  $region19: #{twostage_forward.1} parent=0 // pred_check_branch
    %40 = sbr.rel (0) target = $region21
  $region20: #{twostage_forward.1} parent=0 // pred_region
    _
  $region21: #{twostage_forward.1} parent=0 // pred_fallthru
    _
  // Predicated region
  $region22: #{twostage_forward.1} parent=0 // pred_check
    _
  $region23: #{twostage_forward.1} parent=0 // pred_check_branch
    %42 = sbr.rel (0) target = $region25
  $region24: #{twostage_forward.1} parent=0 // pred_region
    _
  $region25: #{twostage_forward.1} parent=0 // pred_fallthru
    _
  // Predicated region
  $region26: #{twostage_forward.1} parent=0 // pred_check
    _
  $region27: #{twostage_forward.1} parent=0 // pred_check_branch
    %44 = sbr.rel (0) target = $region29
  $region28: #{twostage_forward.1} parent=0 // pred_region
    _
  $region29: #{twostage_forward.1} parent=0 // pred_fallthru
    _
  // Predicated region
  $region30: #{twostage_forward.1} parent=0 // pred_check
    _
  $region31: #{twostage_forward.1} parent=0 // pred_check_branch
    %46 = sbr.rel (0) target = $region33
  $region32: #{twostage_forward.1} parent=0 // pred_region
    _
  $region33: #{twostage_forward.1} parent=0 // pred_fallthru
    _
  // Predicated region
  $region34: #{twostage_forward.1} parent=0 // pred_check
    _
  $region35: #{twostage_forward.1} parent=0 // pred_check_branch
    %48 = sbr.rel (0) target = $region37
  $region36: #{twostage_forward.1} parent=0 // pred_region
    _
  $region37: #{twostage_forward.1} parent=0 // pred_fallthru
    _
  // Predicated region
  $region38: #{twostage_forward.1} parent=0 // pred_check
    _
  $region39: #{twostage_forward.1} parent=0 // pred_check_branch
    %50 = sbr.rel (0) target = $region41
  $region40: #{twostage_forward.1} parent=0 // pred_region
    _
  $region41: #{twostage_forward.1} parent=0 // pred_fallthru
    _
  // Predicated region
  $region42: #{twostage_forward.1} parent=0 // pred_check
    _
  $region43: #{twostage_forward.1} parent=0 // pred_check_branch
    %52 = sbr.rel (0) target = $region45
  $region44: #{twostage_forward.1} parent=0 // pred_region
    _
  $region45: #{twostage_forward.1} parent=0 // pred_fallthru
    _
  // Predicated region
  $region46: #{twostage_forward.1} parent=0 // pred_check
    _
  $region47: #{twostage_forward.1} parent=0 // pred_check_branch
    %54 = sbr.rel (0) target = $region49
  $region48: #{twostage_forward.1} parent=0 // pred_region
    _
  $region49: #{twostage_forward.1} parent=0 // pred_fallthru
    _
  // Predicated region
  $region50: #{twostage_forward.1} parent=0 // pred_check
    _
  $region51: #{twostage_forward.1} parent=0 // pred_check_branch
    %56 = sbr.rel (0) target = $region53
  $region52: #{twostage_forward.1} parent=0 // pred_region
    _
  $region53: #{twostage_forward.1} parent=0 // pred_fallthru
    _
  // Predicated region
  $region54: #{twostage_forward.1} parent=0 // pred_check
    _
  $region55: #{twostage_forward.1} parent=0 // pred_check_branch
    %58 = sbr.rel (0) target = $region57
  $region56: #{twostage_forward.1} parent=0 // pred_region
    _
  $region57: #{twostage_forward.1} parent=0 // pred_fallthru
    _
  // Predicated region
  $region58: #{twostage_forward.1} parent=0 // pred_check
    _
  $region59: #{twostage_forward.1} parent=0 // pred_check_branch
    %60 = sbr.rel (0) target = $region61
  $region60: #{twostage_forward.1} parent=0 // pred_region
    _
  $region61: #{twostage_forward.1} parent=0 // pred_fallthru
    _
  // Predicated region
  $region62: #{twostage_forward.1} parent=0 // pred_check
    _
  $region63: #{twostage_forward.1} parent=0 // pred_check_branch
    %62 = sbr.rel (0) target = $region65
  $region64: #{twostage_forward.1} parent=0 // pred_region
    _
  $region65: #{twostage_forward.1} parent=0 // pred_fallthru
    _
  // Predicated region
  $region66: #{twostage_forward.1} parent=0 // pred_check
    _
  $region67: #{twostage_forward.1} parent=0 // pred_check_branch
    %64 = sbr.rel (0) target = $region69
  $region68: #{twostage_forward.1} parent=0 // pred_region
    _
  $region69: #{twostage_forward.1} parent=0 // pred_fallthru
    _
  // Predicated region
  $region70: #{twostage_forward.1} parent=0 // pred_check
    _
  $region71: #{twostage_forward.1} parent=0 // pred_check_branch
    %66 = sbr.rel (0) target = $region73
  $region72: #{twostage_forward.1} parent=0 // pred_region
    _
  $region73: #{twostage_forward.1} parent=0 // pred_fallthru
    _
  // Predicated region
  $region74: #{twostage_forward.1} parent=0 // pred_check
    _
  $region75: #{twostage_forward.1} parent=0 // pred_check_branch
    %68 = sbr.rel (0) target = $region77
  $region76: #{twostage_forward.1} parent=0 // pred_region
    _
  $region77: #{twostage_forward.1} parent=0 // pred_fallthru
    _
  // Predicated region
  $region78: #{twostage_forward.1} parent=0 // pred_check
    _
  $region79: #{twostage_forward.1} parent=0 // pred_check_branch
    %70 = sbr.rel (0) target = $region81
  $region80: #{twostage_forward.1} parent=0 // pred_region
    _
  $region81: #{twostage_forward.1} parent=0 // pred_fallthru
    _
  // Predicated region
  $region82: #{twostage_forward.1} parent=0 // pred_check
    _
  $region83: #{twostage_forward.1} parent=0 // pred_check_branch
    %72 = sbr.rel (0) target = $region85
  $region84: #{twostage_forward.1} parent=0 // pred_region
    _
  $region85: #{twostage_forward.1} parent=0 // pred_fallthru
    _
  // Predicated region
  $region86: #{twostage_forward.1} parent=0 // pred_check
    _
  $region87: #{twostage_forward.1} parent=0 // pred_check_branch
    %74 = sbr.rel (0) target = $region89
  $region88: #{twostage_forward.1} parent=0 // pred_region
    _
  $region89: #{twostage_forward.1} parent=0 // pred_fallthru
    _
  // Predicated region
  $region90: #{twostage_forward.1} parent=0 // pred_check
    _
  $region91: #{twostage_forward.1} parent=0 // pred_check_branch
    %76 = sbr.rel (0) target = $region93
  $region92: #{twostage_forward.1} parent=0 // pred_region
    _
  $region93: #{twostage_forward.1} parent=0 // pred_fallthru
    _
  // Predicated region
  $region94: #{twostage_forward.1} parent=0 // pred_check
    _
  $region95: #{twostage_forward.1} parent=0 // pred_check_branch
    %78 = sbr.rel (0) target = $region97
  $region96: #{twostage_forward.1} parent=0 // pred_region
    _
  $region97: #{twostage_forward.1} parent=0 // pred_fallthru
    _
  // Predicated region
  $region98: #{twostage_forward.1} parent=0 // pred_check
    _
  $region99: #{twostage_forward.1} parent=0 // pred_check_branch
    %80 = sbr.rel (0) target = $region101
  $region100: #{twostage_forward.1} parent=0 // pred_region
    _
  $region101: #{twostage_forward.1} parent=0 // pred_fallthru
    _
  // Predicated region
  $region102: #{twostage_forward.1} parent=0 // pred_check
    _
  $region103: #{twostage_forward.1} parent=0 // pred_check_branch
    %82 = sbr.rel (0) target = $region105
  $region104: #{twostage_forward.1} parent=0 // pred_region
    _
  $region105: #{twostage_forward.1} parent=0 // pred_fallthru
    _
  %v84 = vld [vmem:[%s0] sm:$0xff]
  %v85 = vld [vmem:[%s0 + $0x8] sm:$0xff]
  %v86 = vlaneseq
  %v87 = vand.u32 %v86, 127
  %v88 = vadd.s32 %v87, 128
  %v89 = vadd.s32 %v87, 256
  %v90 = vadd.s32 %v87, 384
  %v91 = vand.u32 %v87, 15
  %v92 = vand.u32 %v88, 15
  %v93 = vand.u32 %v89, 15
  %v94 = vand.u32 %v90, 15
  %v95 = vshra.s32 %v87, 4
  %v96 = vshra.s32 %v88, 4
  %v97 = vshra.s32 %v89, 4
  %v98 = vshra.s32 %v90, 4
  %v99 = vand.u32 %v95, 15
  %v100 = vand.u32 %v96, 15
  %v101 = vand.u32 %v97, 15
  %v102 = vand.u32 %v98, 15
  %v103 = vadd.s32 %v99, 4294967295
  %v104 = vadd.s32 %v100, 4294967295
  %v105 = vadd.s32 %v101, 4294967295
  %v106 = vadd.s32 %v102, 4294967295
  %vm107 = vcmp.ge.s32.totalorder %v103, 0
  %vm108 = vcmp.ge.s32.totalorder %v104, 0
  %vm109 = vcmp.ge.s32.totalorder %v105, 0
  %vm110 = vcmp.ge.s32.totalorder %v106, 0
  %vm111 = vcmp.lt.s32.totalorder %v103, 16
  %vm112 = vcmp.lt.s32.totalorder %v104, 16
  %vm113 = vcmp.lt.s32.totalorder %v105, 16
  %vm114 = vcmp.lt.s32.totalorder %v106, 16
  %vm115 = vmand %vm107, %vm111
  %vm116 = vmand %vm108, %vm112
  %vm117 = vmand %vm109, %vm113
  %vm118 = vmand %vm110, %vm114
  %v119 = vadd.s32 %v91, 4294967295
  %v120 = vadd.s32 %v92, 4294967295
  %v121 = vadd.s32 %v93, 4294967295
  %v122 = vadd.s32 %v94, 4294967295
  %vm123 = vcmp.ge.s32.totalorder %v119, 0
  %vm124 = vcmp.ge.s32.totalorder %v120, 0
  %vm125 = vcmp.ge.s32.totalorder %v121, 0
  %vm126 = vcmp.ge.s32.totalorder %v122, 0
  %vm127 = vmand %vm115, %vm123
  %vm128 = vmand %vm116, %vm124
  %vm129 = vmand %vm117, %vm125
  %vm130 = vmand %vm118, %vm126
  %vm131 = vcmp.lt.s32.totalorder %v119, 16
  %vm132 = vcmp.lt.s32.totalorder %v120, 16
  %vm133 = vcmp.lt.s32.totalorder %v121, 16
  %vm134 = vcmp.lt.s32.totalorder %v122, 16
  %vm135 = vmand %vm127, %vm131
  %vm136 = vmand %vm128, %vm132
  %vm137 = vmand %vm129, %vm133
  %vm138 = vmand %vm130, %vm134
  %v139 = vsel %vm135, 1.0, 0.0
  %v140 = vsel %vm136, 1.0, 0.0
  %v141 = vsel %vm137, 1.0, 0.0
  %v142 = vsel %vm138, 1.0, 0.0
  %v145 = vcombine.high %v84, %v84
  %v146 = vcombine.high %v85, %v85
  %149 = vrot.lane.b32.xlu0 %v84, 17
  %v150 = vpop.permute.xlu0 %149
  %151 = vrot.lane.b32.xlu0 %v145, 17
  %v152 = vpop.permute.xlu0 %151
  %153 = vrot.lane.b32.xlu0 %v85, 17
  %v154 = vpop.permute.xlu0 %153
  %155 = vrot.lane.b32.xlu0 %v146, 17
  %v156 = vpop.permute.xlu0 %155
  %vm157 = vcmp.lt.s32.totalorder %v87, 17
  %v158 = vsel %vm157, %v154, %v156
  %v159 = vsel %vm157, %v152, %v154
  %v160 = vsel %vm157, %v150, %v152
  %v161 = vsel %vm157, %v156, %v150
  %v162 = vld [vmem:[%s4] sm:$0xf]
  %v163 = vmul.f32 %v161, %v139
  %v164 = vmul.f32 %v160, %v140
  %v165 = vmul.f32 %v159, %v141
  %v166 = vmul.f32 %v158, %v142
  %v167 = vpack.c.bf16 %v163, %v163
  %v168 = vpack.c.bf16 %v164, %v164
  %v169 = vpack.c.bf16 %v165, %v165
  %v170 = vpack.c.bf16 %v166, %v166
  %vm171 = vcmp.ge.s32.totalorder %v91, 0
  %vm172 = vcmp.ge.s32.totalorder %v92, 0
  %vm173 = vcmp.ge.s32.totalorder %v93, 0
  %vm174 = vcmp.ge.s32.totalorder %v94, 0
  %vm175 = vmand %vm115, %vm171
  %vm176 = vmand %vm116, %vm172
  %vm177 = vmand %vm117, %vm173
  %vm178 = vmand %vm118, %vm174
  %vm179 = vcmp.lt.s32.totalorder %v91, 16
  %vm180 = vcmp.lt.s32.totalorder %v92, 16
  %vm181 = vcmp.lt.s32.totalorder %v93, 16
  %vm182 = vcmp.lt.s32.totalorder %v94, 16
  %vm183 = vmand %vm175, %vm179
  %vm184 = vmand %vm176, %vm180
  %vm185 = vmand %vm177, %vm181
  %vm186 = vmand %vm178, %vm182
  %v187 = vsel %vm183, 1.0, 0.0
  %v188 = vsel %vm184, 1.0, 0.0
  %v189 = vsel %vm185, 1.0, 0.0
  %v190 = vsel %vm186, 1.0, 0.0
  %191 = vrot.lane.b32.xlu0 %v84, 16
  %v192 = vpop.permute.xlu0 %191
  %193 = vrot.lane.b32.xlu0 %v145, 16
  %v194 = vpop.permute.xlu0 %193
  %195 = vrot.lane.b32.xlu0 %v85, 16
  %v196 = vpop.permute.xlu0 %195
  %197 = vrot.lane.b32.xlu0 %v146, 16
  %v198 = vpop.permute.xlu0 %197
  %vm199 = vcmp.lt.s32.totalorder %v87, 16
  %v200 = vsel %vm199, %v196, %v198
  %v201 = vsel %vm199, %v194, %v196
  %v202 = vsel %vm199, %v192, %v194
  %v203 = vsel %vm199, %v198, %v192
  %s204 = scalar_lea.vmem %s4, 4
  %v205 = vld [vmem:[%s204] sm:$0xf]
  %v206 = vmul.f32 %v203, %v187
  %v207 = vmul.f32 %v202, %v188
  %v208 = vmul.f32 %v201, %v189
  %v209 = vmul.f32 %v200, %v190
  %v210 = vpack.c.bf16 %v206, %v206
  %v211 = vpack.c.bf16 %v207, %v207
  %v212 = vpack.c.bf16 %v208, %v208
  %v213 = vpack.c.bf16 %v209, %v209
  %vm214 = vcmask 31744
  %v216 = vsel %vm214, %v205, 0
  %vm218 = vcmask 1041408
  %v220 = vsel %vm218, %v210, 0
  %v223 = vsel %vm218, %v211, 0
  %v226 = vsel %vm218, %v212, 0
  %v229 = vsel %vm218, %v213, 0
  %231 = vmatprep.subr.bf16.mxu0 %v223
  %232 = vmatpush1.bf16.msra.mxu0 %v220
  %233 = vmatprep.subr.bf16.mxu0 0
  %234 = vmatpush1.bf16.msra.mxu0 0
  %235 = vmatprep.subr.bf16.mxu0 0
  %236 = vmatpush1.bf16.msra.mxu0 0
  %237 = vmatprep.subr.bf16.mxu0 0
  %238 = vmatpush1.bf16.msra.mxu0 0
  %239 = vmatprep.subr.bf16.mxu0 0
  %240 = vmatpush1.bf16.msra.mxu0 0
  %241 = vmatprep.subr.bf16.mxu0 0
  %242 = vmatpush1.bf16.msra.mxu0 0
  %243 = vmatprep.subr.bf16.mxu0 0
  %244 = vmatpush1.bf16.msra.mxu0 0
  %245 = vmatprep.subr.bf16.mxu0 0
  %246 = vmatpush1.bf16.msra.mxu0 0
  %247 = vmatprep.subr.bf16.mxu0 0
  %248 = vmatpush1.bf16.msra.mxu0 0
  %249 = vmatprep.subr.bf16.mxu0 0
  %250 = vmatpush1.bf16.msra.mxu0 0
  %251 = vmatprep.subr.bf16.mxu0 0
  %252 = vmatpush1.bf16.msra.mxu0 0
  %253 = vmatprep.subr.bf16.mxu0 0
  %254 = vmatpush1.bf16.msra.mxu0 0
  %255 = vmatprep.subr.bf16.mxu0 0
  %256 = vmatpush1.bf16.msra.mxu0 0
  %257 = vmatprep.subr.bf16.mxu0 0
  %258 = vmatpush1.bf16.msra.mxu0 0
  %259 = vmatprep.subr.bf16.mxu0 0
  %260 = vmatpush1.bf16.msra.mxu0 0
  %261 = vmatprep.subr.bf16.mxu0 0
  %262 = vmatpush1.bf16.msra.mxu0 0
  %263 = vmatprep.mubr.bf16.mxu0 0
  %264 = vmatmul.mubr.bf16.gmra.mrb[0].mxu0 %v216
  %v265 = vpop.f32.mrb[0].mxu0
  %v266 = vadd.f32 0.0, %v265
  %v267 = vpop.f32.mrb[0].mxu0
  %v268 = vadd.f32 0.0, %v267
  %v269 = vpop.f32.mrb[0].mxu0
  %v270 = vpop.f32.mrb[0].mxu0
  %271 = vdwg.mxu0
  %272 = vmatprep.subr.bf16.mxu0 %v229
  %273 = vmatpush1.bf16.msra.mxu0 %v226
  %274 = vmatprep.subr.bf16.mxu0 0
  %275 = vmatpush1.bf16.msra.mxu0 0
  %276 = vmatprep.subr.bf16.mxu0 0
  %277 = vmatpush1.bf16.msra.mxu0 0
  %278 = vmatprep.subr.bf16.mxu0 0
  %279 = vmatpush1.bf16.msra.mxu0 0
  %280 = vmatprep.subr.bf16.mxu0 0
  %281 = vmatpush1.bf16.msra.mxu0 0
  %282 = vmatprep.subr.bf16.mxu0 0
  %283 = vmatpush1.bf16.msra.mxu0 0
  %284 = vmatprep.subr.bf16.mxu0 0
  %285 = vmatpush1.bf16.msra.mxu0 0
  %286 = vmatprep.subr.bf16.mxu0 0
  %287 = vmatpush1.bf16.msra.mxu0 0
  %288 = vmatprep.subr.bf16.mxu0 0
  %289 = vmatpush1.bf16.msra.mxu0 0
  %290 = vmatprep.subr.bf16.mxu0 0
  %291 = vmatpush1.bf16.msra.mxu0 0
  %292 = vmatprep.subr.bf16.mxu0 0
  %293 = vmatpush1.bf16.msra.mxu0 0
  %294 = vmatprep.subr.bf16.mxu0 0
  %295 = vmatpush1.bf16.msra.mxu0 0
  %296 = vmatprep.subr.bf16.mxu0 0
  %297 = vmatpush1.bf16.msra.mxu0 0
  %298 = vmatprep.subr.bf16.mxu0 0
  %299 = vmatpush1.bf16.msra.mxu0 0
  %300 = vmatprep.subr.bf16.mxu0 0
  %301 = vmatpush1.bf16.msra.mxu0 0
  %302 = vmatprep.subr.bf16.mxu0 0
  %303 = vmatpush1.bf16.msra.mxu0 0
  %304 = vmatprep.mubr.bf16.mxu0 0
  %305 = vmatmul.mubr.bf16.gmra.mrb[0].mxu0 %v216
  %v306 = vpop.f32.mrb[0].mxu0
  %v307 = vadd.f32 0.0, %v306
  %v308 = vpop.f32.mrb[0].mxu0
  %v309 = vadd.f32 0.0, %v308
  %v310 = vpop.f32.mrb[0].mxu0
  %v311 = vpop.f32.mrb[0].mxu0
  %312 = vdwg.mxu0
  %v314 = vsel %vm214, %v162, 0
  %v317 = vsel %vm218, %v167, 0
  %v320 = vsel %vm218, %v168, 0
  %v323 = vsel %vm218, %v169, 0
  %v326 = vsel %vm218, %v170, 0
  %328 = vmatprep.subr.bf16.mxu0 %v320
  %329 = vmatpush1.bf16.msra.mxu0 %v317
  %330 = vmatprep.subr.bf16.mxu0 0
  %331 = vmatpush1.bf16.msra.mxu0 0
  %332 = vmatprep.subr.bf16.mxu0 0
  %333 = vmatpush1.bf16.msra.mxu0 0
  %334 = vmatprep.subr.bf16.mxu0 0
  %335 = vmatpush1.bf16.msra.mxu0 0
  %336 = vmatprep.subr.bf16.mxu0 0
  %337 = vmatpush1.bf16.msra.mxu0 0
  %338 = vmatprep.subr.bf16.mxu0 0
  %339 = vmatpush1.bf16.msra.mxu0 0
  %340 = vmatprep.subr.bf16.mxu0 0
  %341 = vmatpush1.bf16.msra.mxu0 0
  %342 = vmatprep.subr.bf16.mxu0 0
  %343 = vmatpush1.bf16.msra.mxu0 0
  %344 = vmatprep.subr.bf16.mxu0 0
  %345 = vmatpush1.bf16.msra.mxu0 0
  %346 = vmatprep.subr.bf16.mxu0 0
  %347 = vmatpush1.bf16.msra.mxu0 0
  %348 = vmatprep.subr.bf16.mxu0 0
  %349 = vmatpush1.bf16.msra.mxu0 0
  %350 = vmatprep.subr.bf16.mxu0 0
  %351 = vmatpush1.bf16.msra.mxu0 0
  %352 = vmatprep.subr.bf16.mxu0 0
  %353 = vmatpush1.bf16.msra.mxu0 0
  %354 = vmatprep.subr.bf16.mxu0 0
  %355 = vmatpush1.bf16.msra.mxu0 0
  %356 = vmatprep.subr.bf16.mxu0 0
  %357 = vmatpush1.bf16.msra.mxu0 0
  %358 = vmatprep.subr.bf16.mxu0 0
  %359 = vmatpush1.bf16.msra.mxu0 0
  %360 = vmatprep.mubr.bf16.mxu0 0
  %361 = vmatmul.mubr.bf16.gmra.mrb[0].mxu0 %v314
  %v362 = vpop.f32.mrb[0].mxu0
  %v363 = vadd.f32 %v266, %v362
  %v364 = vpop.f32.mrb[0].mxu0
  %v365 = vadd.f32 %v268, %v364
  %v366 = vpop.f32.mrb[0].mxu0
  %v367 = vpop.f32.mrb[0].mxu0
  %368 = vdwg.mxu0
  %369 = vmatprep.subr.bf16.mxu0 %v326
  %370 = vmatpush1.bf16.msra.mxu0 %v323
  %371 = vmatprep.subr.bf16.mxu0 0
  %372 = vmatpush1.bf16.msra.mxu0 0
  %373 = vmatprep.subr.bf16.mxu0 0
  %374 = vmatpush1.bf16.msra.mxu0 0
  %375 = vmatprep.subr.bf16.mxu0 0
  %376 = vmatpush1.bf16.msra.mxu0 0
  %377 = vmatprep.subr.bf16.mxu0 0
  %378 = vmatpush1.bf16.msra.mxu0 0
  %379 = vmatprep.subr.bf16.mxu0 0
  %380 = vmatpush1.bf16.msra.mxu0 0
  %381 = vmatprep.subr.bf16.mxu0 0
  %382 = vmatpush1.bf16.msra.mxu0 0
  %383 = vmatprep.subr.bf16.mxu0 0
  %384 = vmatpush1.bf16.msra.mxu0 0
  %385 = vmatprep.subr.bf16.mxu0 0
  %386 = vmatpush1.bf16.msra.mxu0 0
  %387 = vmatprep.subr.bf16.mxu0 0
  %388 = vmatpush1.bf16.msra.mxu0 0
  %389 = vmatprep.subr.bf16.mxu0 0
  %390 = vmatpush1.bf16.msra.mxu0 0
  %391 = vmatprep.subr.bf16.mxu0 0
  %392 = vmatpush1.bf16.msra.mxu0 0
  %393 = vmatprep.subr.bf16.mxu0 0
  %394 = vmatpush1.bf16.msra.mxu0 0
  %395 = vmatprep.subr.bf16.mxu0 0
  %396 = vmatpush1.bf16.msra.mxu0 0
  %397 = vmatprep.subr.bf16.mxu0 0
  %398 = vmatpush1.bf16.msra.mxu0 0
  %399 = vmatprep.subr.bf16.mxu0 0
  %400 = vmatpush1.bf16.msra.mxu0 0
  %401 = vmatprep.mubr.bf16.mxu0 0
  %402 = vmatmul.mubr.bf16.gmra.mrb[0].mxu0 %v314
  %v403 = vpop.f32.mrb[0].mxu0
  %v404 = vadd.f32 %v307, %v403
  %v405 = vpop.f32.mrb[0].mxu0
  %v406 = vadd.f32 %v309, %v405
  %v407 = vpop.f32.mrb[0].mxu0
  %v408 = vpop.f32.mrb[0].mxu0
  %409 = vdwg.mxu0
  %v410 = vadd.s32 %v91, 1
  %v411 = vadd.s32 %v92, 1
  %v412 = vadd.s32 %v93, 1
  %v413 = vadd.s32 %v94, 1
  %vm414 = vcmp.ge.s32.totalorder %v410, 0
  %vm415 = vcmp.ge.s32.totalorder %v411, 0
  %vm416 = vcmp.ge.s32.totalorder %v412, 0
  %vm417 = vcmp.ge.s32.totalorder %v413, 0
  %vm418 = vmand %vm115, %vm414
  %vm419 = vmand %vm116, %vm415
  %vm420 = vmand %vm117, %vm416
  %vm421 = vmand %vm118, %vm417
  %vm422 = vcmp.lt.s32.totalorder %v410, 16
  %vm423 = vcmp.lt.s32.totalorder %v411, 16
  %vm424 = vcmp.lt.s32.totalorder %v412, 16
  %vm425 = vcmp.lt.s32.totalorder %v413, 16
  %vm426 = vmand %vm418, %vm422
  %vm427 = vmand %vm419, %vm423
  %vm428 = vmand %vm420, %vm424
  %vm429 = vmand %vm421, %vm425
  %v430 = vsel %vm426, 1.0, 0.0
  %v431 = vsel %vm427, 1.0, 0.0
  %v432 = vsel %vm428, 1.0, 0.0
  %v433 = vsel %vm429, 1.0, 0.0
  %434 = vrot.lane.b32.xlu0 %v84, 15
  %v435 = vpop.permute.xlu0 %434
  %436 = vrot.lane.b32.xlu0 %v145, 15
  %v437 = vpop.permute.xlu0 %436
  %438 = vrot.lane.b32.xlu0 %v85, 15
  %v439 = vpop.permute.xlu0 %438
  %440 = vrot.lane.b32.xlu0 %v146, 15
  %v441 = vpop.permute.xlu0 %440
  %vm442 = vcmp.lt.s32.totalorder %v87, 15
  %v443 = vsel %vm442, %v439, %v441
  %v444 = vsel %vm442, %v437, %v439
  %v445 = vsel %vm442, %v435, %v437
  %v446 = vsel %vm442, %v441, %v435
  %s447 = scalar_lea.vmem %s4, 8
  %v448 = vld [vmem:[%s447] sm:$0xf]
  %v449 = vmul.f32 %v446, %v430
  %v450 = vmul.f32 %v445, %v431
  %v451 = vmul.f32 %v444, %v432
  %v452 = vmul.f32 %v443, %v433
  %v453 = vpack.c.bf16 %v449, %v449
  %v454 = vpack.c.bf16 %v450, %v450
  %v455 = vpack.c.bf16 %v451, %v451
  %v456 = vpack.c.bf16 %v452, %v452
  %v458 = vsel %vm214, %v448, 0
  %v461 = vsel %vm218, %v453, 0
  %v464 = vsel %vm218, %v454, 0
  %v467 = vsel %vm218, %v455, 0
  %v470 = vsel %vm218, %v456, 0
  %472 = vmatprep.subr.bf16.mxu0 %v464
  %473 = vmatpush1.bf16.msra.mxu0 %v461
  %474 = vmatprep.subr.bf16.mxu0 0
  %475 = vmatpush1.bf16.msra.mxu0 0
  %476 = vmatprep.subr.bf16.mxu0 0
  %477 = vmatpush1.bf16.msra.mxu0 0
  %478 = vmatprep.subr.bf16.mxu0 0
  %479 = vmatpush1.bf16.msra.mxu0 0
  %480 = vmatprep.subr.bf16.mxu0 0
  %481 = vmatpush1.bf16.msra.mxu0 0
  %482 = vmatprep.subr.bf16.mxu0 0
  %483 = vmatpush1.bf16.msra.mxu0 0
  %484 = vmatprep.subr.bf16.mxu0 0
  %485 = vmatpush1.bf16.msra.mxu0 0
  %486 = vmatprep.subr.bf16.mxu0 0
  %487 = vmatpush1.bf16.msra.mxu0 0
  %488 = vmatprep.subr.bf16.mxu0 0
  %489 = vmatpush1.bf16.msra.mxu0 0
  %490 = vmatprep.subr.bf16.mxu0 0
  %491 = vmatpush1.bf16.msra.mxu0 0
  %492 = vmatprep.subr.bf16.mxu0 0
  %493 = vmatpush1.bf16.msra.mxu0 0
  %494 = vmatprep.subr.bf16.mxu0 0
  %495 = vmatpush1.bf16.msra.mxu0 0
  %496 = vmatprep.subr.bf16.mxu0 0
  %497 = vmatpush1.bf16.msra.mxu0 0
  %498 = vmatprep.subr.bf16.mxu0 0
  %499 = vmatpush1.bf16.msra.mxu0 0
  %500 = vmatprep.subr.bf16.mxu0 0
  %501 = vmatpush1.bf16.msra.mxu0 0
  %502 = vmatprep.subr.bf16.mxu0 0
  %503 = vmatpush1.bf16.msra.mxu0 0
  %504 = vmatprep.mubr.bf16.mxu0 0
  %505 = vmatmul.mubr.bf16.gmra.mrb[0].mxu0 %v458
  %v506 = vpop.f32.mrb[0].mxu0
  %v507 = vadd.f32 0.0, %v506
  %v508 = vpop.f32.mrb[0].mxu0
  %v509 = vadd.f32 0.0, %v508
  %v510 = vpop.f32.mrb[0].mxu0
  %v511 = vpop.f32.mrb[0].mxu0
  %512 = vdwg.mxu0
  %513 = vmatprep.subr.bf16.mxu0 %v470
  %514 = vmatpush1.bf16.msra.mxu0 %v467
  %515 = vmatprep.subr.bf16.mxu0 0
  %516 = vmatpush1.bf16.msra.mxu0 0
  %517 = vmatprep.subr.bf16.mxu0 0
  %518 = vmatpush1.bf16.msra.mxu0 0
  %519 = vmatprep.subr.bf16.mxu0 0
  %520 = vmatpush1.bf16.msra.mxu0 0
  %521 = vmatprep.subr.bf16.mxu0 0
  %522 = vmatpush1.bf16.msra.mxu0 0
  %523 = vmatprep.subr.bf16.mxu0 0
  %524 = vmatpush1.bf16.msra.mxu0 0
  %525 = vmatprep.subr.bf16.mxu0 0
  %526 = vmatpush1.bf16.msra.mxu0 0
  %527 = vmatprep.subr.bf16.mxu0 0
  %528 = vmatpush1.bf16.msra.mxu0 0
  %529 = vmatprep.subr.bf16.mxu0 0
  %530 = vmatpush1.bf16.msra.mxu0 0
  %531 = vmatprep.subr.bf16.mxu0 0
  %532 = vmatpush1.bf16.msra.mxu0 0
  %533 = vmatprep.subr.bf16.mxu0 0
  %534 = vmatpush1.bf16.msra.mxu0 0
  %535 = vmatprep.subr.bf16.mxu0 0
  %536 = vmatpush1.bf16.msra.mxu0 0
  %537 = vmatprep.subr.bf16.mxu0 0
  %538 = vmatpush1.bf16.msra.mxu0 0
  %539 = vmatprep.subr.bf16.mxu0 0
  %540 = vmatpush1.bf16.msra.mxu0 0
  %541 = vmatprep.subr.bf16.mxu0 0
  %542 = vmatpush1.bf16.msra.mxu0 0
  %543 = vmatprep.subr.bf16.mxu0 0
  %544 = vmatpush1.bf16.msra.mxu0 0
  %545 = vmatprep.mubr.bf16.mxu0 0
  %546 = vmatmul.mubr.bf16.gmra.mrb[0].mxu0 %v458
  %v547 = vpop.f32.mrb[0].mxu0
  %v548 = vadd.f32 0.0, %v547
  %v549 = vpop.f32.mrb[0].mxu0
  %v550 = vadd.f32 0.0, %v549
  %v551 = vpop.f32.mrb[0].mxu0
  %v552 = vpop.f32.mrb[0].mxu0
  %553 = vdwg.mxu0
  %v554 = vadd.f32 %v363, %v507
  %v555 = vadd.f32 %v365, %v509
  %v556 = vadd.f32 %v404, %v548
  %v557 = vadd.f32 %v406, %v550
  %vm558 = vcmp.ge.s32.totalorder %v99, 0
  %vm559 = vcmp.ge.s32.totalorder %v100, 0
  %vm560 = vcmp.ge.s32.totalorder %v101, 0
  %vm561 = vcmp.ge.s32.totalorder %v102, 0
  %vm562 = vcmp.lt.s32.totalorder %v99, 16
  %vm563 = vcmp.lt.s32.totalorder %v100, 16
  %vm564 = vcmp.lt.s32.totalorder %v101, 16
  %vm565 = vcmp.lt.s32.totalorder %v102, 16
  %vm566 = vmand %vm558, %vm562
  %vm567 = vmand %vm559, %vm563
  %vm568 = vmand %vm560, %vm564
  %vm569 = vmand %vm561, %vm565
  %vm570 = vmand %vm566, %vm123
  %vm571 = vmand %vm567, %vm124
  %vm572 = vmand %vm568, %vm125
  %vm573 = vmand %vm569, %vm126
  %vm574 = vmand %vm570, %vm131
  %vm575 = vmand %vm571, %vm132
  %vm576 = vmand %vm572, %vm133
  %vm577 = vmand %vm573, %vm134
  %v578 = vsel %vm574, 1.0, 0.0
  %v579 = vsel %vm575, 1.0, 0.0
  %v580 = vsel %vm576, 1.0, 0.0
  %v581 = vsel %vm577, 1.0, 0.0
  %582 = vrot.lane.b32.xlu0 %v84, 1
  %v583 = vpop.permute.xlu0 %582
  %584 = vrot.lane.b32.xlu0 %v145, 1
  %v585 = vpop.permute.xlu0 %584
  %586 = vrot.lane.b32.xlu0 %v85, 1
  %v587 = vpop.permute.xlu0 %586
  %588 = vrot.lane.b32.xlu0 %v146, 1
  %v589 = vpop.permute.xlu0 %588
  %vm590 = vcmp.lt.s32.totalorder %v87, 1
  %v591 = vsel %vm590, %v587, %v589
  %v592 = vsel %vm590, %v585, %v587
  %v593 = vsel %vm590, %v583, %v585
  %v594 = vsel %vm590, %v589, %v583
  %s595 = scalar_lea.vmem %s4, 12
  %v596 = vld [vmem:[%s595] sm:$0xf]
  %v597 = vmul.f32 %v594, %v578
  %v598 = vmul.f32 %v593, %v579
  %v599 = vmul.f32 %v592, %v580
  %v600 = vmul.f32 %v591, %v581
  %v601 = vpack.c.bf16 %v597, %v597
  %v602 = vpack.c.bf16 %v598, %v598
  %v603 = vpack.c.bf16 %v599, %v599
  %v604 = vpack.c.bf16 %v600, %v600
  %v606 = vsel %vm214, %v596, 0
  %v609 = vsel %vm218, %v601, 0
  %v612 = vsel %vm218, %v602, 0
  %v615 = vsel %vm218, %v603, 0
  %v618 = vsel %vm218, %v604, 0
  %620 = vmatprep.subr.bf16.mxu0 %v612
  %621 = vmatpush1.bf16.msra.mxu0 %v609
  %622 = vmatprep.subr.bf16.mxu0 0
  %623 = vmatpush1.bf16.msra.mxu0 0
  %624 = vmatprep.subr.bf16.mxu0 0
  %625 = vmatpush1.bf16.msra.mxu0 0
  %626 = vmatprep.subr.bf16.mxu0 0
  %627 = vmatpush1.bf16.msra.mxu0 0
  %628 = vmatprep.subr.bf16.mxu0 0
  %629 = vmatpush1.bf16.msra.mxu0 0
  %630 = vmatprep.subr.bf16.mxu0 0
  %631 = vmatpush1.bf16.msra.mxu0 0
  %632 = vmatprep.subr.bf16.mxu0 0
  %633 = vmatpush1.bf16.msra.mxu0 0
  %634 = vmatprep.subr.bf16.mxu0 0
  %635 = vmatpush1.bf16.msra.mxu0 0
  %636 = vmatprep.subr.bf16.mxu0 0
  %637 = vmatpush1.bf16.msra.mxu0 0
  %638 = vmatprep.subr.bf16.mxu0 0
  %639 = vmatpush1.bf16.msra.mxu0 0
  %640 = vmatprep.subr.bf16.mxu0 0
  %641 = vmatpush1.bf16.msra.mxu0 0
  %642 = vmatprep.subr.bf16.mxu0 0
  %643 = vmatpush1.bf16.msra.mxu0 0
  %644 = vmatprep.subr.bf16.mxu0 0
  %645 = vmatpush1.bf16.msra.mxu0 0
  %646 = vmatprep.subr.bf16.mxu0 0
  %647 = vmatpush1.bf16.msra.mxu0 0
  %648 = vmatprep.subr.bf16.mxu0 0
  %649 = vmatpush1.bf16.msra.mxu0 0
  %650 = vmatprep.subr.bf16.mxu0 0
  %651 = vmatpush1.bf16.msra.mxu0 0
  %652 = vmatprep.mubr.bf16.mxu0 0
  %653 = vmatmul.mubr.bf16.gmra.mrb[0].mxu0 %v606
  %v654 = vpop.f32.mrb[0].mxu0
  %v655 = vadd.f32 0.0, %v654
  %v656 = vpop.f32.mrb[0].mxu0
  %v657 = vadd.f32 0.0, %v656
  %v658 = vpop.f32.mrb[0].mxu0
  %v659 = vpop.f32.mrb[0].mxu0
  %660 = vdwg.mxu0
  %661 = vmatprep.subr.bf16.mxu0 %v618
  %662 = vmatpush1.bf16.msra.mxu0 %v615
  %663 = vmatprep.subr.bf16.mxu0 0
  %664 = vmatpush1.bf16.msra.mxu0 0
  %665 = vmatprep.subr.bf16.mxu0 0
  %666 = vmatpush1.bf16.msra.mxu0 0
  %667 = vmatprep.subr.bf16.mxu0 0
  %668 = vmatpush1.bf16.msra.mxu0 0
  %669 = vmatprep.subr.bf16.mxu0 0
  %670 = vmatpush1.bf16.msra.mxu0 0
  %671 = vmatprep.subr.bf16.mxu0 0
  %672 = vmatpush1.bf16.msra.mxu0 0
  %673 = vmatprep.subr.bf16.mxu0 0
  %674 = vmatpush1.bf16.msra.mxu0 0
  %675 = vmatprep.subr.bf16.mxu0 0
  %676 = vmatpush1.bf16.msra.mxu0 0
  %677 = vmatprep.subr.bf16.mxu0 0
  %678 = vmatpush1.bf16.msra.mxu0 0
  %679 = vmatprep.subr.bf16.mxu0 0
  %680 = vmatpush1.bf16.msra.mxu0 0
  %681 = vmatprep.subr.bf16.mxu0 0
  %682 = vmatpush1.bf16.msra.mxu0 0
  %683 = vmatprep.subr.bf16.mxu0 0
  %684 = vmatpush1.bf16.msra.mxu0 0
  %685 = vmatprep.subr.bf16.mxu0 0
  %686 = vmatpush1.bf16.msra.mxu0 0
  %687 = vmatprep.subr.bf16.mxu0 0
  %688 = vmatpush1.bf16.msra.mxu0 0
  %689 = vmatprep.subr.bf16.mxu0 0
  %690 = vmatpush1.bf16.msra.mxu0 0
  %691 = vmatprep.subr.bf16.mxu0 0
  %692 = vmatpush1.bf16.msra.mxu0 0
  %693 = vmatprep.mubr.bf16.mxu0 0
  %694 = vmatmul.mubr.bf16.gmra.mrb[0].mxu0 %v606
  %v695 = vpop.f32.mrb[0].mxu0
  %v696 = vadd.f32 0.0, %v695
  %v697 = vpop.f32.mrb[0].mxu0
  %v698 = vadd.f32 0.0, %v697
  %v699 = vpop.f32.mrb[0].mxu0
  %v700 = vpop.f32.mrb[0].mxu0
  %701 = vdwg.mxu0
  %v702 = vadd.f32 %v554, %v655
  %v703 = vadd.f32 %v555, %v657
  %v704 = vadd.f32 %v556, %v696
  %v705 = vadd.f32 %v557, %v698
  %vm706 = vmand %vm566, %vm171
  %vm707 = vmand %vm567, %vm172
  %vm708 = vmand %vm568, %vm173
  %vm709 = vmand %vm569, %vm174
  %vm710 = vmand %vm706, %vm179
  %vm711 = vmand %vm707, %vm180
  %vm712 = vmand %vm708, %vm181
  %vm713 = vmand %vm709, %vm182
  %v714 = vsel %vm710, 1.0, 0.0
  %v715 = vsel %vm711, 1.0, 0.0
  %v716 = vsel %vm712, 1.0, 0.0
  %v717 = vsel %vm713, 1.0, 0.0
  %s718 = scalar_lea.vmem %s4, 16
  %v719 = vld [vmem:[%s718] sm:$0xf]
  %v724 = vcombine.low %v714, %v715
  %v725 = vcombine.low %v716, %v717
  %v728 = vmul.f32 %v84, %v724
  %v729 = vmul.f32 %v85, %v725
  %v732 = vcombine.high %v728, %v728
  %v733 = vcombine.high %v729, %v729
  %v736 = vpack.c.bf16 %v728, %v728
  %v737 = vpack.c.bf16 %v732, %v732
  %v738 = vpack.c.bf16 %v729, %v729
  %v739 = vpack.c.bf16 %v733, %v733
  %v741 = vsel %vm214, %v719, 0
  %v744 = vsel %vm218, %v736, 0
  %v747 = vsel %vm218, %v737, 0
  %v750 = vsel %vm218, %v738, 0
  %v753 = vsel %vm218, %v739, 0
  %755 = vmatprep.subr.bf16.mxu0 %v747
  %756 = vmatpush1.bf16.msra.mxu0 %v744
  %757 = vmatprep.subr.bf16.mxu0 0
  %758 = vmatpush1.bf16.msra.mxu0 0
  %759 = vmatprep.subr.bf16.mxu0 0
  %760 = vmatpush1.bf16.msra.mxu0 0
  %761 = vmatprep.subr.bf16.mxu0 0
  %762 = vmatpush1.bf16.msra.mxu0 0
  %763 = vmatprep.subr.bf16.mxu0 0
  %764 = vmatpush1.bf16.msra.mxu0 0
  %765 = vmatprep.subr.bf16.mxu0 0
  %766 = vmatpush1.bf16.msra.mxu0 0
  %767 = vmatprep.subr.bf16.mxu0 0
  %768 = vmatpush1.bf16.msra.mxu0 0
  %769 = vmatprep.subr.bf16.mxu0 0
  %770 = vmatpush1.bf16.msra.mxu0 0
  %771 = vmatprep.subr.bf16.mxu0 0
  %772 = vmatpush1.bf16.msra.mxu0 0
  %773 = vmatprep.subr.bf16.mxu0 0
  %774 = vmatpush1.bf16.msra.mxu0 0
  %775 = vmatprep.subr.bf16.mxu0 0
  %776 = vmatpush1.bf16.msra.mxu0 0
  %777 = vmatprep.subr.bf16.mxu0 0
  %778 = vmatpush1.bf16.msra.mxu0 0
  %779 = vmatprep.subr.bf16.mxu0 0
  %780 = vmatpush1.bf16.msra.mxu0 0
  %781 = vmatprep.subr.bf16.mxu0 0
  %782 = vmatpush1.bf16.msra.mxu0 0
  %783 = vmatprep.subr.bf16.mxu0 0
  %784 = vmatpush1.bf16.msra.mxu0 0
  %785 = vmatprep.subr.bf16.mxu0 0
  %786 = vmatpush1.bf16.msra.mxu0 0
  %787 = vmatprep.mubr.bf16.mxu0 0
  %788 = vmatmul.mubr.bf16.gmra.mrb[0].mxu0 %v741
  %v789 = vpop.f32.mrb[0].mxu0
  %v790 = vadd.f32 0.0, %v789
  %v791 = vpop.f32.mrb[0].mxu0
  %v792 = vadd.f32 0.0, %v791
  %v793 = vpop.f32.mrb[0].mxu0
  %v794 = vpop.f32.mrb[0].mxu0
  %795 = vdwg.mxu0
  %796 = vmatprep.subr.bf16.mxu0 %v753
  %797 = vmatpush1.bf16.msra.mxu0 %v750
  %798 = vmatprep.subr.bf16.mxu0 0
  %799 = vmatpush1.bf16.msra.mxu0 0
  %800 = vmatprep.subr.bf16.mxu0 0
  %801 = vmatpush1.bf16.msra.mxu0 0
  %802 = vmatprep.subr.bf16.mxu0 0
  %803 = vmatpush1.bf16.msra.mxu0 0
  %804 = vmatprep.subr.bf16.mxu0 0
  %805 = vmatpush1.bf16.msra.mxu0 0
  %806 = vmatprep.subr.bf16.mxu0 0
  %807 = vmatpush1.bf16.msra.mxu0 0
  %808 = vmatprep.subr.bf16.mxu0 0
  %809 = vmatpush1.bf16.msra.mxu0 0
  %810 = vmatprep.subr.bf16.mxu0 0
  %811 = vmatpush1.bf16.msra.mxu0 0
  %812 = vmatprep.subr.bf16.mxu0 0
  %813 = vmatpush1.bf16.msra.mxu0 0
  %814 = vmatprep.subr.bf16.mxu0 0
  %815 = vmatpush1.bf16.msra.mxu0 0
  %816 = vmatprep.subr.bf16.mxu0 0
  %817 = vmatpush1.bf16.msra.mxu0 0
  %818 = vmatprep.subr.bf16.mxu0 0
  %819 = vmatpush1.bf16.msra.mxu0 0
  %820 = vmatprep.subr.bf16.mxu0 0
  %821 = vmatpush1.bf16.msra.mxu0 0
  %822 = vmatprep.subr.bf16.mxu0 0
  %823 = vmatpush1.bf16.msra.mxu0 0
  %824 = vmatprep.subr.bf16.mxu0 0
  %825 = vmatpush1.bf16.msra.mxu0 0
  %826 = vmatprep.subr.bf16.mxu0 0
  %827 = vmatpush1.bf16.msra.mxu0 0
  %828 = vmatprep.mubr.bf16.mxu0 0
  %829 = vmatmul.mubr.bf16.gmra.mrb[0].mxu0 %v741
  %v830 = vpop.f32.mrb[0].mxu0
  %v831 = vadd.f32 0.0, %v830
  %v832 = vpop.f32.mrb[0].mxu0
  %v833 = vadd.f32 0.0, %v832
  %v834 = vpop.f32.mrb[0].mxu0
  %v835 = vpop.f32.mrb[0].mxu0
  %836 = vdwg.mxu0
  %v837 = vadd.f32 %v702, %v790
  %v838 = vadd.f32 %v703, %v792
  %v839 = vadd.f32 %v704, %v831
  %v840 = vadd.f32 %v705, %v833
  %vm841 = vmand %vm566, %vm414
  %vm842 = vmand %vm567, %vm415
  %vm843 = vmand %vm568, %vm416
  %vm844 = vmand %vm569, %vm417
  %vm845 = vmand %vm841, %vm422
  %vm846 = vmand %vm842, %vm423
  %vm847 = vmand %vm843, %vm424
  %vm848 = vmand %vm844, %vm425
  %v849 = vsel %vm845, 1.0, 0.0
  %v850 = vsel %vm846, 1.0, 0.0
  %v851 = vsel %vm847, 1.0, 0.0
  %v852 = vsel %vm848, 1.0, 0.0
  %853 = vrot.lane.b32.xlu0 %v84, 127
  %v854 = vpop.permute.xlu0 %853
  %855 = vrot.lane.b32.xlu0 %v145, 127
  %v856 = vpop.permute.xlu0 %855
  %857 = vrot.lane.b32.xlu0 %v85, 127
  %v858 = vpop.permute.xlu0 %857
  %859 = vrot.lane.b32.xlu0 %v146, 127
  %v860 = vpop.permute.xlu0 %859
  %vm861 = vcmp.lt.s32.totalorder %v87, 127
  %v862 = vsel %vm861, %v858, %v860
  %v863 = vsel %vm861, %v856, %v858
  %v864 = vsel %vm861, %v854, %v856
  %v865 = vsel %vm861, %v860, %v854
  %s866 = scalar_lea.vmem %s4, 20
  %v867 = vld [vmem:[%s866] sm:$0xf]
  %v868 = vmul.f32 %v864, %v849
  %v869 = vmul.f32 %v863, %v850
  %v870 = vmul.f32 %v862, %v851
  %v871 = vmul.f32 %v865, %v852
  %v872 = vpack.c.bf16 %v868, %v868
  %v873 = vpack.c.bf16 %v869, %v869
  %v874 = vpack.c.bf16 %v870, %v870
  %v875 = vpack.c.bf16 %v871, %v871
  %v877 = vsel %vm214, %v867, 0
  %v880 = vsel %vm218, %v872, 0
  %v883 = vsel %vm218, %v873, 0
  %v886 = vsel %vm218, %v874, 0
  %v889 = vsel %vm218, %v875, 0
  %891 = vmatprep.subr.bf16.mxu0 %v883
  %892 = vmatpush1.bf16.msra.mxu0 %v880
  %893 = vmatprep.subr.bf16.mxu0 0
  %894 = vmatpush1.bf16.msra.mxu0 0
  %895 = vmatprep.subr.bf16.mxu0 0
  %896 = vmatpush1.bf16.msra.mxu0 0
  %897 = vmatprep.subr.bf16.mxu0 0
  %898 = vmatpush1.bf16.msra.mxu0 0
  %899 = vmatprep.subr.bf16.mxu0 0
  %900 = vmatpush1.bf16.msra.mxu0 0
  %901 = vmatprep.subr.bf16.mxu0 0
  %902 = vmatpush1.bf16.msra.mxu0 0
  %903 = vmatprep.subr.bf16.mxu0 0
  %904 = vmatpush1.bf16.msra.mxu0 0
  %905 = vmatprep.subr.bf16.mxu0 0
  %906 = vmatpush1.bf16.msra.mxu0 0
  %907 = vmatprep.subr.bf16.mxu0 0
  %908 = vmatpush1.bf16.msra.mxu0 0
  %909 = vmatprep.subr.bf16.mxu0 0
  %910 = vmatpush1.bf16.msra.mxu0 0
  %911 = vmatprep.subr.bf16.mxu0 0
  %912 = vmatpush1.bf16.msra.mxu0 0
  %913 = vmatprep.subr.bf16.mxu0 0
  %914 = vmatpush1.bf16.msra.mxu0 0
  %915 = vmatprep.subr.bf16.mxu0 0
  %916 = vmatpush1.bf16.msra.mxu0 0
  %917 = vmatprep.subr.bf16.mxu0 0
  %918 = vmatpush1.bf16.msra.mxu0 0
  %919 = vmatprep.subr.bf16.mxu0 0
  %920 = vmatpush1.bf16.msra.mxu0 0
  %921 = vmatprep.subr.bf16.mxu0 0
  %922 = vmatpush1.bf16.msra.mxu0 0
  %923 = vmatprep.mubr.bf16.mxu0 0
  %924 = vmatmul.mubr.bf16.gmra.mrb[0].mxu0 %v877
  %v925 = vpop.f32.mrb[0].mxu0
  %v926 = vadd.f32 0.0, %v925
  %v927 = vpop.f32.mrb[0].mxu0
  %v928 = vadd.f32 0.0, %v927
  %v929 = vpop.f32.mrb[0].mxu0
  %v930 = vpop.f32.mrb[0].mxu0
  %931 = vdwg.mxu0
  %932 = vmatprep.subr.bf16.mxu0 %v889
  %933 = vmatpush1.bf16.msra.mxu0 %v886
  %934 = vmatprep.subr.bf16.mxu0 0
  %935 = vmatpush1.bf16.msra.mxu0 0
  %936 = vmatprep.subr.bf16.mxu0 0
  %937 = vmatpush1.bf16.msra.mxu0 0
  %938 = vmatprep.subr.bf16.mxu0 0
  %939 = vmatpush1.bf16.msra.mxu0 0
  %940 = vmatprep.subr.bf16.mxu0 0
  %941 = vmatpush1.bf16.msra.mxu0 0
  %942 = vmatprep.subr.bf16.mxu0 0
  %943 = vmatpush1.bf16.msra.mxu0 0
  %944 = vmatprep.subr.bf16.mxu0 0
  %945 = vmatpush1.bf16.msra.mxu0 0
  %946 = vmatprep.subr.bf16.mxu0 0
  %947 = vmatpush1.bf16.msra.mxu0 0
  %948 = vmatprep.subr.bf16.mxu0 0
  %949 = vmatpush1.bf16.msra.mxu0 0
  %950 = vmatprep.subr.bf16.mxu0 0
  %951 = vmatpush1.bf16.msra.mxu0 0
  %952 = vmatprep.subr.bf16.mxu0 0
  %953 = vmatpush1.bf16.msra.mxu0 0
  %954 = vmatprep.subr.bf16.mxu0 0
  %955 = vmatpush1.bf16.msra.mxu0 0
  %956 = vmatprep.subr.bf16.mxu0 0
  %957 = vmatpush1.bf16.msra.mxu0 0
  %958 = vmatprep.subr.bf16.mxu0 0
  %959 = vmatpush1.bf16.msra.mxu0 0
  %960 = vmatprep.subr.bf16.mxu0 0
  %961 = vmatpush1.bf16.msra.mxu0 0
  %962 = vmatprep.subr.bf16.mxu0 0
  %963 = vmatpush1.bf16.msra.mxu0 0
  %964 = vmatprep.mubr.bf16.mxu0 0
  %965 = vmatmul.mubr.bf16.gmra.mrb[0].mxu0 %v877
  %v966 = vpop.f32.mrb[0].mxu0
  %v967 = vadd.f32 0.0, %v966
  %v968 = vpop.f32.mrb[0].mxu0
  %v969 = vadd.f32 0.0, %v968
  %v970 = vpop.f32.mrb[0].mxu0
  %v971 = vpop.f32.mrb[0].mxu0
  %972 = vdwg.mxu0
  %v973 = vadd.f32 %v837, %v926
  %v974 = vadd.f32 %v838, %v928
  %v975 = vadd.f32 %v839, %v967
  %v976 = vadd.f32 %v840, %v969
  %v977 = vadd.s32 %v99, 1
  %v978 = vadd.s32 %v100, 1
  %v979 = vadd.s32 %v101, 1
  %v980 = vadd.s32 %v102, 1
  %vm981 = vcmp.ge.s32.totalorder %v977, 0
  %vm982 = vcmp.ge.s32.totalorder %v978, 0
  %vm983 = vcmp.ge.s32.totalorder %v979, 0
  %vm984 = vcmp.ge.s32.totalorder %v980, 0
  %vm985 = vcmp.lt.s32.totalorder %v977, 16
  %vm986 = vcmp.lt.s32.totalorder %v978, 16
  %vm987 = vcmp.lt.s32.totalorder %v979, 16
  %vm988 = vcmp.lt.s32.totalorder %v980, 16
  %vm989 = vmand %vm981, %vm985
  %vm990 = vmand %vm982, %vm986
  %vm991 = vmand %vm983, %vm987
  %vm992 = vmand %vm984, %vm988
  %vm993 = vmand %vm989, %vm123
  %vm994 = vmand %vm990, %vm124
  %vm995 = vmand %vm991, %vm125
  %vm996 = vmand %vm992, %vm126
  %vm997 = vmand %vm993, %vm131
  %vm998 = vmand %vm994, %vm132
  %vm999 = vmand %vm995, %vm133
  %vm1000 = vmand %vm996, %vm134
  %v1001 = vsel %vm997, 1.0, 0.0
  %v1002 = vsel %vm998, 1.0, 0.0
  %v1003 = vsel %vm999, 1.0, 0.0
  %v1004 = vsel %vm1000, 1.0, 0.0
  %1005 = vrot.lane.b32.xlu0 %v84, 113
  %v1006 = vpop.permute.xlu0 %1005
  %1007 = vrot.lane.b32.xlu0 %v145, 113
  %v1008 = vpop.permute.xlu0 %1007
  %1009 = vrot.lane.b32.xlu0 %v85, 113
  %v1010 = vpop.permute.xlu0 %1009
  %1011 = vrot.lane.b32.xlu0 %v146, 113
  %v1012 = vpop.permute.xlu0 %1011
  %vm1013 = vcmp.lt.s32.totalorder %v87, 113
  %v1014 = vsel %vm1013, %v1010, %v1012
  %v1015 = vsel %vm1013, %v1008, %v1010
  %v1016 = vsel %vm1013, %v1006, %v1008
  %v1017 = vsel %vm1013, %v1012, %v1006
  %s1018 = scalar_lea.vmem %s4, 24
  %v1019 = vld [vmem:[%s1018] sm:$0xf]
  %v1020 = vmul.f32 %v1016, %v1001
  %v1021 = vmul.f32 %v1015, %v1002
  %v1022 = vmul.f32 %v1014, %v1003
  %v1023 = vmul.f32 %v1017, %v1004
  %v1024 = vpack.c.bf16 %v1020, %v1020
  %v1025 = vpack.c.bf16 %v1021, %v1021
  %v1026 = vpack.c.bf16 %v1022, %v1022
  %v1027 = vpack.c.bf16 %v1023, %v1023
  %v1029 = vsel %vm214, %v1019, 0
  %v1032 = vsel %vm218, %v1024, 0
  %v1035 = vsel %vm218, %v1025, 0
  %v1038 = vsel %vm218, %v1026, 0
  %v1041 = vsel %vm218, %v1027, 0
  %1043 = vmatprep.subr.bf16.mxu0 %v1035
  %1044 = vmatpush1.bf16.msra.mxu0 %v1032
  %1045 = vmatprep.subr.bf16.mxu0 0
  %1046 = vmatpush1.bf16.msra.mxu0 0
  %1047 = vmatprep.subr.bf16.mxu0 0
  %1048 = vmatpush1.bf16.msra.mxu0 0
  %1049 = vmatprep.subr.bf16.mxu0 0
  %1050 = vmatpush1.bf16.msra.mxu0 0
  %1051 = vmatprep.subr.bf16.mxu0 0
  %1052 = vmatpush1.bf16.msra.mxu0 0
  %1053 = vmatprep.subr.bf16.mxu0 0
  %1054 = vmatpush1.bf16.msra.mxu0 0
  %1055 = vmatprep.subr.bf16.mxu0 0
  %1056 = vmatpush1.bf16.msra.mxu0 0
  %1057 = vmatprep.subr.bf16.mxu0 0
  %1058 = vmatpush1.bf16.msra.mxu0 0
  %1059 = vmatprep.subr.bf16.mxu0 0
  %1060 = vmatpush1.bf16.msra.mxu0 0
  %1061 = vmatprep.subr.bf16.mxu0 0
  %1062 = vmatpush1.bf16.msra.mxu0 0
  %1063 = vmatprep.subr.bf16.mxu0 0
  %1064 = vmatpush1.bf16.msra.mxu0 0
  %1065 = vmatprep.subr.bf16.mxu0 0
  %1066 = vmatpush1.bf16.msra.mxu0 0
  %1067 = vmatprep.subr.bf16.mxu0 0
  %1068 = vmatpush1.bf16.msra.mxu0 0
  %1069 = vmatprep.subr.bf16.mxu0 0
  %1070 = vmatpush1.bf16.msra.mxu0 0
  %1071 = vmatprep.subr.bf16.mxu0 0
  %1072 = vmatpush1.bf16.msra.mxu0 0
  %1073 = vmatprep.subr.bf16.mxu0 0
  %1074 = vmatpush1.bf16.msra.mxu0 0
  %1075 = vmatprep.mubr.bf16.mxu0 0
  %1076 = vmatmul.mubr.bf16.gmra.mrb[0].mxu0 %v1029
  %v1077 = vpop.f32.mrb[0].mxu0
  %v1078 = vadd.f32 0.0, %v1077
  %v1079 = vpop.f32.mrb[0].mxu0
  %v1080 = vadd.f32 0.0, %v1079
  %v1081 = vpop.f32.mrb[0].mxu0
  %v1082 = vpop.f32.mrb[0].mxu0
  %1083 = vdwg.mxu0
  %1084 = vmatprep.subr.bf16.mxu0 %v1041
  %1085 = vmatpush1.bf16.msra.mxu0 %v1038
  %1086 = vmatprep.subr.bf16.mxu0 0
  %1087 = vmatpush1.bf16.msra.mxu0 0
  %1088 = vmatprep.subr.bf16.mxu0 0
  %1089 = vmatpush1.bf16.msra.mxu0 0
  %1090 = vmatprep.subr.bf16.mxu0 0
  %1091 = vmatpush1.bf16.msra.mxu0 0
  %1092 = vmatprep.subr.bf16.mxu0 0
  %1093 = vmatpush1.bf16.msra.mxu0 0
  %1094 = vmatprep.subr.bf16.mxu0 0
  %1095 = vmatpush1.bf16.msra.mxu0 0
  %1096 = vmatprep.subr.bf16.mxu0 0
  %1097 = vmatpush1.bf16.msra.mxu0 0
  %1098 = vmatprep.subr.bf16.mxu0 0
  %1099 = vmatpush1.bf16.msra.mxu0 0
  %1100 = vmatprep.subr.bf16.mxu0 0
  %1101 = vmatpush1.bf16.msra.mxu0 0
  %1102 = vmatprep.subr.bf16.mxu0 0
  %1103 = vmatpush1.bf16.msra.mxu0 0
  %1104 = vmatprep.subr.bf16.mxu0 0
  %1105 = vmatpush1.bf16.msra.mxu0 0
  %1106 = vmatprep.subr.bf16.mxu0 0
  %1107 = vmatpush1.bf16.msra.mxu0 0
  %1108 = vmatprep.subr.bf16.mxu0 0
  %1109 = vmatpush1.bf16.msra.mxu0 0
  %1110 = vmatprep.subr.bf16.mxu0 0
  %1111 = vmatpush1.bf16.msra.mxu0 0
  %1112 = vmatprep.subr.bf16.mxu0 0
  %1113 = vmatpush1.bf16.msra.mxu0 0
  %1114 = vmatprep.subr.bf16.mxu0 0
  %1115 = vmatpush1.bf16.msra.mxu0 0
  %1116 = vmatprep.mubr.bf16.mxu0 0
  %1117 = vmatmul.mubr.bf16.gmra.mrb[0].mxu0 %v1029
  %v1118 = vpop.f32.mrb[0].mxu0
  %v1119 = vadd.f32 0.0, %v1118
  %v1120 = vpop.f32.mrb[0].mxu0
  %v1121 = vadd.f32 0.0, %v1120
  %v1122 = vpop.f32.mrb[0].mxu0
  %v1123 = vpop.f32.mrb[0].mxu0
  %1124 = vdwg.mxu0
  %v1125 = vadd.f32 %v973, %v1078
  %v1126 = vadd.f32 %v974, %v1080
  %v1127 = vadd.f32 %v975, %v1119
  %v1128 = vadd.f32 %v976, %v1121
  %vm1129 = vmand %vm989, %vm171
  %vm1130 = vmand %vm990, %vm172
  %vm1131 = vmand %vm991, %vm173
  %vm1132 = vmand %vm992, %vm174
  %vm1133 = vmand %vm1129, %vm179
  %vm1134 = vmand %vm1130, %vm180
  %vm1135 = vmand %vm1131, %vm181
  %vm1136 = vmand %vm1132, %vm182
  %v1137 = vsel %vm1133, 1.0, 0.0
  %v1138 = vsel %vm1134, 1.0, 0.0
  %v1139 = vsel %vm1135, 1.0, 0.0
  %v1140 = vsel %vm1136, 1.0, 0.0
  %1141 = vrot.lane.b32.xlu0 %v84, 112
  %v1142 = vpop.permute.xlu0 %1141
  %1143 = vrot.lane.b32.xlu0 %v145, 112
  %v1144 = vpop.permute.xlu0 %1143
  %1145 = vrot.lane.b32.xlu0 %v85, 112
  %v1146 = vpop.permute.xlu0 %1145
  %1147 = vrot.lane.b32.xlu0 %v146, 112
  %v1148 = vpop.permute.xlu0 %1147
  %vm1149 = vcmp.lt.s32.totalorder %v87, 112
  %v1150 = vsel %vm1149, %v1146, %v1148
  %v1151 = vsel %vm1149, %v1144, %v1146
  %v1152 = vsel %vm1149, %v1142, %v1144
  %v1153 = vsel %vm1149, %v1148, %v1142
  %s1154 = scalar_lea.vmem %s4, 28
  %v1155 = vld [vmem:[%s1154] sm:$0xf]
  %v1156 = vmul.f32 %v1152, %v1137
  %v1157 = vmul.f32 %v1151, %v1138
  %v1158 = vmul.f32 %v1150, %v1139
  %v1159 = vmul.f32 %v1153, %v1140
  %v1160 = vpack.c.bf16 %v1156, %v1156
  %v1161 = vpack.c.bf16 %v1157, %v1157
  %v1162 = vpack.c.bf16 %v1158, %v1158
  %v1163 = vpack.c.bf16 %v1159, %v1159
  %v1165 = vsel %vm214, %v1155, 0
  %v1168 = vsel %vm218, %v1160, 0
  %v1171 = vsel %vm218, %v1161, 0
  %v1174 = vsel %vm218, %v1162, 0
  %v1177 = vsel %vm218, %v1163, 0
  %1179 = vmatprep.subr.bf16.mxu0 %v1171
  %1180 = vmatpush1.bf16.msra.mxu0 %v1168
  %1181 = vmatprep.subr.bf16.mxu0 0
  %1182 = vmatpush1.bf16.msra.mxu0 0
  %1183 = vmatprep.subr.bf16.mxu0 0
  %1184 = vmatpush1.bf16.msra.mxu0 0
  %1185 = vmatprep.subr.bf16.mxu0 0
  %1186 = vmatpush1.bf16.msra.mxu0 0
  %1187 = vmatprep.subr.bf16.mxu0 0
  %1188 = vmatpush1.bf16.msra.mxu0 0
  %1189 = vmatprep.subr.bf16.mxu0 0
  %1190 = vmatpush1.bf16.msra.mxu0 0
  %1191 = vmatprep.subr.bf16.mxu0 0
  %1192 = vmatpush1.bf16.msra.mxu0 0
  %1193 = vmatprep.subr.bf16.mxu0 0
  %1194 = vmatpush1.bf16.msra.mxu0 0
  %1195 = vmatprep.subr.bf16.mxu0 0
  %1196 = vmatpush1.bf16.msra.mxu0 0
  %1197 = vmatprep.subr.bf16.mxu0 0
  %1198 = vmatpush1.bf16.msra.mxu0 0
  %1199 = vmatprep.subr.bf16.mxu0 0
  %1200 = vmatpush1.bf16.msra.mxu0 0
  %1201 = vmatprep.subr.bf16.mxu0 0
  %1202 = vmatpush1.bf16.msra.mxu0 0
  %1203 = vmatprep.subr.bf16.mxu0 0
  %1204 = vmatpush1.bf16.msra.mxu0 0
  %1205 = vmatprep.subr.bf16.mxu0 0
  %1206 = vmatpush1.bf16.msra.mxu0 0
  %1207 = vmatprep.subr.bf16.mxu0 0
  %1208 = vmatpush1.bf16.msra.mxu0 0
  %1209 = vmatprep.subr.bf16.mxu0 0
  %1210 = vmatpush1.bf16.msra.mxu0 0
  %1211 = vmatprep.mubr.bf16.mxu0 0
  %1212 = vmatmul.mubr.bf16.gmra.mrb[0].mxu0 %v1165
  %v1213 = vpop.f32.mrb[0].mxu0
  %v1214 = vadd.f32 0.0, %v1213
  %v1215 = vpop.f32.mrb[0].mxu0
  %v1216 = vadd.f32 0.0, %v1215
  %v1217 = vpop.f32.mrb[0].mxu0
  %v1218 = vpop.f32.mrb[0].mxu0
  %1219 = vdwg.mxu0
  %1220 = vmatprep.subr.bf16.mxu0 %v1177
  %1221 = vmatpush1.bf16.msra.mxu0 %v1174
  %1222 = vmatprep.subr.bf16.mxu0 0
  %1223 = vmatpush1.bf16.msra.mxu0 0
  %1224 = vmatprep.subr.bf16.mxu0 0
  %1225 = vmatpush1.bf16.msra.mxu0 0
  %1226 = vmatprep.subr.bf16.mxu0 0
  %1227 = vmatpush1.bf16.msra.mxu0 0
  %1228 = vmatprep.subr.bf16.mxu0 0
  %1229 = vmatpush1.bf16.msra.mxu0 0
  %1230 = vmatprep.subr.bf16.mxu0 0
  %1231 = vmatpush1.bf16.msra.mxu0 0
  %1232 = vmatprep.subr.bf16.mxu0 0
  %1233 = vmatpush1.bf16.msra.mxu0 0
  %1234 = vmatprep.subr.bf16.mxu0 0
  %1235 = vmatpush1.bf16.msra.mxu0 0
  %1236 = vmatprep.subr.bf16.mxu0 0
  %1237 = vmatpush1.bf16.msra.mxu0 0
  %1238 = vmatprep.subr.bf16.mxu0 0
  %1239 = vmatpush1.bf16.msra.mxu0 0
  %1240 = vmatprep.subr.bf16.mxu0 0
  %1241 = vmatpush1.bf16.msra.mxu0 0
  %1242 = vmatprep.subr.bf16.mxu0 0
  %1243 = vmatpush1.bf16.msra.mxu0 0
  %1244 = vmatprep.subr.bf16.mxu0 0
  %1245 = vmatpush1.bf16.msra.mxu0 0
  %1246 = vmatprep.subr.bf16.mxu0 0
  %1247 = vmatpush1.bf16.msra.mxu0 0
  %1248 = vmatprep.subr.bf16.mxu0 0
  %1249 = vmatpush1.bf16.msra.mxu0 0
  %1250 = vmatprep.subr.bf16.mxu0 0
  %1251 = vmatpush1.bf16.msra.mxu0 0
  %1252 = vmatprep.mubr.bf16.mxu0 0
  %1253 = vmatmul.mubr.bf16.gmra.mrb[0].mxu0 %v1165
  %v1254 = vpop.f32.mrb[0].mxu0
  %v1255 = vadd.f32 0.0, %v1254
  %v1256 = vpop.f32.mrb[0].mxu0
  %v1257 = vadd.f32 0.0, %v1256
  %v1258 = vpop.f32.mrb[0].mxu0
  %v1259 = vpop.f32.mrb[0].mxu0
  %1260 = vdwg.mxu0
  %v1261 = vadd.f32 %v1125, %v1214
  %v1262 = vadd.f32 %v1126, %v1216
  %v1263 = vadd.f32 %v1127, %v1255
  %v1264 = vadd.f32 %v1128, %v1257
  %vm1265 = vmand %vm989, %vm414
  %vm1266 = vmand %vm990, %vm415
  %vm1267 = vmand %vm991, %vm416
  %vm1268 = vmand %vm992, %vm417
  %vm1269 = vmand %vm1265, %vm422
  %vm1270 = vmand %vm1266, %vm423
  %vm1271 = vmand %vm1267, %vm424
  %vm1272 = vmand %vm1268, %vm425
  %v1273 = vsel %vm1269, 1.0, 0.0
  %v1274 = vsel %vm1270, 1.0, 0.0
  %v1275 = vsel %vm1271, 1.0, 0.0
  %v1276 = vsel %vm1272, 1.0, 0.0
  %1277 = vrot.lane.b32.xlu0 %v84, 111
  %v1278 = vpop.permute.xlu0 %1277
  %1279 = vrot.lane.b32.xlu0 %v145, 111
  %v1280 = vpop.permute.xlu0 %1279
  %1281 = vrot.lane.b32.xlu0 %v85, 111
  %v1282 = vpop.permute.xlu0 %1281
  %1283 = vrot.lane.b32.xlu0 %v146, 111
  %v1284 = vpop.permute.xlu0 %1283
  %vm1285 = vcmp.lt.s32.totalorder %v87, 111
  %v1286 = vsel %vm1285, %v1282, %v1284
  %v1287 = vsel %vm1285, %v1280, %v1282
  %v1288 = vsel %vm1285, %v1278, %v1280
  %v1289 = vsel %vm1285, %v1284, %v1278
  %s1290 = scalar_lea.vmem %s4, 32
  %v1291 = vld [vmem:[%s1290] sm:$0xf]
  %v1292 = vmul.f32 %v1288, %v1273
  %v1293 = vmul.f32 %v1287, %v1274
  %v1294 = vmul.f32 %v1286, %v1275
  %v1295 = vmul.f32 %v1289, %v1276
  %v1296 = vpack.c.bf16 %v1292, %v1292
  %v1297 = vpack.c.bf16 %v1293, %v1293
  %v1298 = vpack.c.bf16 %v1294, %v1294
  %v1299 = vpack.c.bf16 %v1295, %v1295
  %v1301 = vsel %vm214, %v1291, 0
  %v1304 = vsel %vm218, %v1296, 0
  %v1307 = vsel %vm218, %v1297, 0
  %v1310 = vsel %vm218, %v1298, 0
  %v1313 = vsel %vm218, %v1299, 0
  %1315 = vmatprep.subr.bf16.mxu0 %v1307
  %1316 = vmatpush1.bf16.msra.mxu0 %v1304
  %1317 = vmatprep.subr.bf16.mxu0 0
  %1318 = vmatpush1.bf16.msra.mxu0 0
  %1319 = vmatprep.subr.bf16.mxu0 0
  %1320 = vmatpush1.bf16.msra.mxu0 0
  %1321 = vmatprep.subr.bf16.mxu0 0
  %1322 = vmatpush1.bf16.msra.mxu0 0
  %1323 = vmatprep.subr.bf16.mxu0 0
  %1324 = vmatpush1.bf16.msra.mxu0 0
  %1325 = vmatprep.subr.bf16.mxu0 0
  %1326 = vmatpush1.bf16.msra.mxu0 0
  %1327 = vmatprep.subr.bf16.mxu0 0
  %1328 = vmatpush1.bf16.msra.mxu0 0
  %1329 = vmatprep.subr.bf16.mxu0 0
  %1330 = vmatpush1.bf16.msra.mxu0 0
  %1331 = vmatprep.subr.bf16.mxu0 0
  %1332 = vmatpush1.bf16.msra.mxu0 0
  %1333 = vmatprep.subr.bf16.mxu0 0
  %1334 = vmatpush1.bf16.msra.mxu0 0
  %1335 = vmatprep.subr.bf16.mxu0 0
  %1336 = vmatpush1.bf16.msra.mxu0 0
  %1337 = vmatprep.subr.bf16.mxu0 0
  %1338 = vmatpush1.bf16.msra.mxu0 0
  %1339 = vmatprep.subr.bf16.mxu0 0
  %1340 = vmatpush1.bf16.msra.mxu0 0
  %1341 = vmatprep.subr.bf16.mxu0 0
  %1342 = vmatpush1.bf16.msra.mxu0 0
  %1343 = vmatprep.subr.bf16.mxu0 0
  %1344 = vmatpush1.bf16.msra.mxu0 0
  %1345 = vmatprep.subr.bf16.mxu0 0
  %1346 = vmatpush1.bf16.msra.mxu0 0
  %1347 = vmatprep.mubr.bf16.mxu0 0
  %1348 = vmatmul.mubr.bf16.gmra.mrb[0].mxu0 %v1301
  %v1349 = vpop.f32.mrb[0].mxu0
  %v1350 = vadd.f32 0.0, %v1349
  %v1351 = vpop.f32.mrb[0].mxu0
  %v1352 = vadd.f32 0.0, %v1351
  %v1353 = vpop.f32.mrb[0].mxu0
  %v1354 = vpop.f32.mrb[0].mxu0
  %1355 = vdwg.mxu0
  %1356 = vmatprep.subr.bf16.mxu0 %v1313
  %1357 = vmatpush1.bf16.msra.mxu0 %v1310
  %1358 = vmatprep.subr.bf16.mxu0 0
  %1359 = vmatpush1.bf16.msra.mxu0 0
  %1360 = vmatprep.subr.bf16.mxu0 0
  %1361 = vmatpush1.bf16.msra.mxu0 0
  %1362 = vmatprep.subr.bf16.mxu0 0
  %1363 = vmatpush1.bf16.msra.mxu0 0
  %1364 = vmatprep.subr.bf16.mxu0 0
  %1365 = vmatpush1.bf16.msra.mxu0 0
  %1366 = vmatprep.subr.bf16.mxu0 0
  %1367 = vmatpush1.bf16.msra.mxu0 0
  %1368 = vmatprep.subr.bf16.mxu0 0
  %1369 = vmatpush1.bf16.msra.mxu0 0
  %1370 = vmatprep.subr.bf16.mxu0 0
  %1371 = vmatpush1.bf16.msra.mxu0 0
  %1372 = vmatprep.subr.bf16.mxu0 0
  %1373 = vmatpush1.bf16.msra.mxu0 0
  %1374 = vmatprep.subr.bf16.mxu0 0
  %1375 = vmatpush1.bf16.msra.mxu0 0
  %1376 = vmatprep.subr.bf16.mxu0 0
  %1377 = vmatpush1.bf16.msra.mxu0 0
  %1378 = vmatprep.subr.bf16.mxu0 0
  %1379 = vmatpush1.bf16.msra.mxu0 0
  %1380 = vmatprep.subr.bf16.mxu0 0
  %1381 = vmatpush1.bf16.msra.mxu0 0
  %1382 = vmatprep.subr.bf16.mxu0 0
  %1383 = vmatpush1.bf16.msra.mxu0 0
  %1384 = vmatprep.subr.bf16.mxu0 0
  %1385 = vmatpush1.bf16.msra.mxu0 0
  %1386 = vmatprep.subr.bf16.mxu0 0
  %1387 = vmatpush1.bf16.msra.mxu0 0
  %1388 = vmatprep.mubr.bf16.mxu0 0
  %1389 = vmatmul.mubr.bf16.gmra.mrb[0].mxu0 %v1301
  %v1390 = vpop.f32.mrb[0].mxu0
  %v1391 = vadd.f32 0.0, %v1390
  %v1392 = vpop.f32.mrb[0].mxu0
  %v1393 = vadd.f32 0.0, %v1392
  %v1394 = vpop.f32.mrb[0].mxu0
  %v1395 = vpop.f32.mrb[0].mxu0
  %1396 = vdwg.mxu0
  %v1397 = vadd.f32 %v1261, %v1350
  %v1398 = vadd.f32 %v1262, %v1352
  %v1399 = vadd.f32 %v1263, %v1391
  %v1400 = vadd.f32 %v1264, %v1393
  %v1401 = vld [vmem:[%s5] sm:$0xff]
  %1403 = vset.pattern.permute.xlu0 0
  %1404 = vperm.xlu0 %1403, %v1401
  %v1405 = vpop.permute.xlu0 %1404
  %v1407 = vmul.f32 %v1397, %v1405
  %v1408 = vmul.f32 %v1398, %v1405
  %v1409 = vmul.f32 %v1399, %v1405
  %v1410 = vmul.f32 %v1400, %v1405
  %v1411 = vld [vmem:[%s6] sm:$0xff]
  %1413 = vset.pattern.permute.xlu0 0
  %1414 = vperm.xlu0 %1413, %v1411
  %v1415 = vpop.permute.xlu0 %1414
  %v1417 = vadd.f32 %v1407, %v1415
  %v1418 = vadd.f32 %v1408, %v1415
  %v1419 = vadd.f32 %v1409, %v1415
  %v1420 = vadd.f32 %v1410, %v1415
  %v1421 = vmax.f32 %v1417, 0.0
  %v1422 = vmax.f32 %v1418, 0.0
  %v1423 = vmax.f32 %v1419, 0.0
  %v1424 = vmax.f32 %v1420, 0.0
  %1425 = vrot.lane.b32.xlu0 %v1421, 127
  %v1426 = vpop.permute.xlu0 %1425
  %1427 = vrot.lane.b32.xlu0 %v1422, 127
  %v1428 = vpop.permute.xlu0 %1427
  %1429 = vrot.lane.b32.xlu0 %v1423, 127
  %v1430 = vpop.permute.xlu0 %1429
  %1431 = vrot.lane.b32.xlu0 %v1424, 127
  %v1432 = vpop.permute.xlu0 %1431
  %v1433 = vsel %vm861, %v1430, %v1432
  %v1434 = vsel %vm861, %v1428, %v1430
  %v1435 = vsel %vm861, %v1426, %v1428
  %v1436 = vsel %vm861, %v1432, %v1426
  %v1437 = vmax.f32 %v1421, %v1435
  %v1438 = vmax.f32 %v1422, %v1434
  %v1439 = vmax.f32 %v1423, %v1433
  %v1440 = vmax.f32 %v1424, %v1436
  %1441 = vrot.lane.b32.xlu0 %v1421, 112
  %v1442 = vpop.permute.xlu0 %1441
  %1443 = vrot.lane.b32.xlu0 %v1422, 112
  %v1444 = vpop.permute.xlu0 %1443
  %1445 = vrot.lane.b32.xlu0 %v1423, 112
  %v1446 = vpop.permute.xlu0 %1445
  %1447 = vrot.lane.b32.xlu0 %v1424, 112
  %v1448 = vpop.permute.xlu0 %1447
  %v1449 = vsel %vm1149, %v1446, %v1448
  %v1450 = vsel %vm1149, %v1444, %v1446
  %v1451 = vsel %vm1149, %v1442, %v1444
  %v1452 = vsel %vm1149, %v1448, %v1442
  %1453 = vrot.lane.b32.xlu0 %v1421, 111
  %v1454 = vpop.permute.xlu0 %1453
  %1455 = vrot.lane.b32.xlu0 %v1422, 111
  %v1456 = vpop.permute.xlu0 %1455
  %1457 = vrot.lane.b32.xlu0 %v1423, 111
  %v1458 = vpop.permute.xlu0 %1457
  %1459 = vrot.lane.b32.xlu0 %v1424, 111
  %v1460 = vpop.permute.xlu0 %1459
  %v1461 = vsel %vm1285, %v1458, %v1460
  %v1462 = vsel %vm1285, %v1456, %v1458
  %v1463 = vsel %vm1285, %v1454, %v1456
  %v1464 = vsel %vm1285, %v1460, %v1454
  %v1465 = vmax.f32 %v1451, %v1463
  %v1466 = vmax.f32 %v1450, %v1462
  %v1467 = vmax.f32 %v1449, %v1461
  %v1468 = vmax.f32 %v1452, %v1464
  %v1469 = vmax.f32 %v1437, %v1465
  %v1470 = vmax.f32 %v1438, %v1466
  %v1471 = vmax.f32 %v1439, %v1467
  %v1472 = vmax.f32 %v1440, %v1468
  %v1473 = vld [vmem:[%s1] sm:$0xff]
  %v1474 = vld [vmem:[%s1 + $0x8] sm:$0xff]
  %v1475 = vld [vmem:[%s1 + $0x10] sm:$0xff]
  %v1476 = vld [vmem:[%s1 + $0x18] sm:$0xff]
  %v1477 = vld [vmem:[%s1 + $0x20] sm:$0xff]
  %v1478 = vld [vmem:[%s1 + $0x28] sm:$0xff]
  %v1479 = vld [vmem:[%s1 + $0x30] sm:$0xff]
  %v1480 = vld [vmem:[%s1 + $0x38] sm:$0xff]
  %v1481 = vld [vmem:[%s1 + $0x40] sm:$0xff]
  %v1482 = vld [vmem:[%s1 + $0x48] sm:$0xff]
  %v1483 = vld [vmem:[%s1 + $0x50] sm:$0xff]
  %v1484 = vld [vmem:[%s1 + $0x58] sm:$0xff]
  %v1485 = vld [vmem:[%s1 + $0x60] sm:$0xff]
  %v1486 = vld [vmem:[%s1 + $0x68] sm:$0xff]
  %v1487 = vld [vmem:[%s1 + $0x70] sm:$0xff]
  %v1488 = vld [vmem:[%s1 + $0x78] sm:$0xff]
  %v1489 = vld [vmem:[%s1 + $0x80] sm:$0xff]
  %v1490 = vld [vmem:[%s1 + $0x88] sm:$0xff]
  %v1491 = vld [vmem:[%s1 + $0x90] sm:$0xff]
  %v1492 = vld [vmem:[%s1 + $0x98] sm:$0xff]
  %v1493 = vld [vmem:[%s1 + $0xa0] sm:$0xff]
  %v1494 = vld [vmem:[%s1 + $0xa8] sm:$0xff]
  %v1495 = vld [vmem:[%s1 + $0xb0] sm:$0xff]
  %v1496 = vld [vmem:[%s1 + $0xb8] sm:$0xff]
  %v1497 = vld [vmem:[%s1 + $0xc0] sm:$0xff]
  %v1498 = vld [vmem:[%s1 + $0xc8] sm:$0xff]
  %v1499 = vld [vmem:[%s1 + $0xd0] sm:$0xff]
  %v1500 = vld [vmem:[%s1 + $0xd8] sm:$0xff]
  %v1501 = vld [vmem:[%s1 + $0xe0] sm:$0xff]
  %v1502 = vld [vmem:[%s1 + $0xe8] sm:$0xff]
  %v1503 = vld [vmem:[%s1 + $0xf0] sm:$0xff]
  %v1504 = vld [vmem:[%s1 + $0xf8] sm:$0xff]
  %v1505 = vld [vmem:[%s1 + $0x100] sm:$0xff]
  %v1506 = vld [vmem:[%s1 + $0x108] sm:$0xff]
  %v1507 = vld [vmem:[%s1 + $0x110] sm:$0xff]
  %v1508 = vld [vmem:[%s1 + $0x118] sm:$0xff]
  %v1509 = vld [vmem:[%s1 + $0x120] sm:$0xff]
  %v1510 = vld [vmem:[%s1 + $0x128] sm:$0xff]
  %v1511 = vld [vmem:[%s1 + $0x130] sm:$0xff]
  %v1512 = vld [vmem:[%s1 + $0x138] sm:$0xff]
  %v1513 = vld [vmem:[%s1 + $0x140] sm:$0xff]
  %v1514 = vld [vmem:[%s1 + $0x148] sm:$0xff]
  %v1515 = vld [vmem:[%s1 + $0x150] sm:$0xff]
  %v1516 = vld [vmem:[%s1 + $0x158] sm:$0xff]
  %v1517 = vld [vmem:[%s1 + $0x160] sm:$0xff]
  %v1518 = vld [vmem:[%s1 + $0x168] sm:$0xff]
  %v1519 = vld [vmem:[%s1 + $0x170] sm:$0xff]
  %v1520 = vld [vmem:[%s1 + $0x178] sm:$0xff]
  %v1521 = vld [vmem:[%s1 + $0x180] sm:$0xff]
  %v1522 = vld [vmem:[%s1 + $0x188] sm:$0xff]
  %v1523 = vld [vmem:[%s1 + $0x190] sm:$0xff]
  %v1524 = vld [vmem:[%s1 + $0x198] sm:$0xff]
  %v1525 = vld [vmem:[%s1 + $0x1a0] sm:$0xff]
  %v1526 = vld [vmem:[%s1 + $0x1a8] sm:$0xff]
  %v1527 = vld [vmem:[%s1 + $0x1b0] sm:$0xff]
  %v1528 = vld [vmem:[%s1 + $0x1b8] sm:$0xff]
  %v1529 = vld [vmem:[%s1 + $0x1c0] sm:$0xff]
  %v1530 = vld [vmem:[%s1 + $0x1c8] sm:$0xff]
  %v1531 = vld [vmem:[%s1 + $0x1d0] sm:$0xff]
  %v1532 = vld [vmem:[%s1 + $0x1d8] sm:$0xff]
  %v1533 = vld [vmem:[%s1 + $0x1e0] sm:$0xff]
  %v1534 = vld [vmem:[%s1 + $0x1e8] sm:$0xff]
  %v1535 = vld [vmem:[%s1 + $0x1f0] sm:$0xff]
  %v1536 = vld [vmem:[%s1 + $0x1f8] sm:$0xff]
  %1537 = vmatprep.subr.mxu0 0.0
  %1538 = vmatpush1.msra.mxu0 %v1473
  %1539 = vmatprep.subr.mxu0 0.0
  %1540 = vmatpush1.msra.mxu0 %v1474
  %1541 = vmatprep.subr.mxu0 0.0
  %1542 = vmatpush1.msra.mxu0 %v1475
  %1543 = vmatprep.subr.mxu0 0.0
  %1544 = vmatpush1.msra.mxu0 %v1476
  %1545 = vmatprep.subr.mxu0 0.0
  %1546 = vmatpush1.msra.mxu0 %v1477
  %1547 = vmatprep.subr.mxu0 0.0
  %1548 = vmatpush1.msra.mxu0 %v1478
  %1549 = vmatprep.subr.mxu0 0.0
  %1550 = vmatpush1.msra.mxu0 %v1479
  %1551 = vmatprep.subr.mxu0 0.0
  %1552 = vmatpush1.msra.mxu0 %v1480
  %1553 = vmatprep.subr.mxu0 0.0
  %1554 = vmatpush1.msra.mxu0 %v1481
  %1555 = vmatprep.subr.mxu0 0.0
  %1556 = vmatpush1.msra.mxu0 %v1482
  %1557 = vmatprep.subr.mxu0 0.0
  %1558 = vmatpush1.msra.mxu0 %v1483
  %1559 = vmatprep.subr.mxu0 0.0
  %1560 = vmatpush1.msra.mxu0 %v1484
  %1561 = vmatprep.subr.mxu0 0.0
  %1562 = vmatpush1.msra.mxu0 %v1485
  %1563 = vmatprep.subr.mxu0 0.0
  %1564 = vmatpush1.msra.mxu0 %v1486
  %1565 = vmatprep.subr.mxu0 0.0
  %1566 = vmatpush1.msra.mxu0 %v1487
  %1567 = vmatprep.subr.mxu0 0.0
  %1568 = vmatpush1.msra.mxu0 %v1488
  %1569 = vmatprep.subr.mxu0 0.0
  %1570 = vmatpush1.msra.mxu0 %v1489
  %1571 = vmatprep.subr.mxu0 0.0
  %1572 = vmatpush1.msra.mxu0 %v1490
  %1573 = vmatprep.subr.mxu0 0.0
  %1574 = vmatpush1.msra.mxu0 %v1491
  %1575 = vmatprep.subr.mxu0 0.0
  %1576 = vmatpush1.msra.mxu0 %v1492
  %1577 = vmatprep.subr.mxu0 0.0
  %1578 = vmatpush1.msra.mxu0 %v1493
  %1579 = vmatprep.subr.mxu0 0.0
  %1580 = vmatpush1.msra.mxu0 %v1494
  %1581 = vmatprep.subr.mxu0 0.0
  %1582 = vmatpush1.msra.mxu0 %v1495
  %1583 = vmatprep.subr.mxu0 0.0
  %1584 = vmatpush1.msra.mxu0 %v1496
  %1585 = vmatprep.subr.mxu0 0.0
  %1586 = vmatpush1.msra.mxu0 %v1497
  %1587 = vmatprep.subr.mxu0 0.0
  %1588 = vmatpush1.msra.mxu0 %v1498
  %1589 = vmatprep.subr.mxu0 0.0
  %1590 = vmatpush1.msra.mxu0 %v1499
  %1591 = vmatprep.subr.mxu0 0.0
  %1592 = vmatpush1.msra.mxu0 %v1500
  %1593 = vmatprep.subr.mxu0 0.0
  %1594 = vmatpush1.msra.mxu0 %v1501
  %1595 = vmatprep.subr.mxu0 0.0
  %1596 = vmatpush1.msra.mxu0 %v1502
  %1597 = vmatprep.subr.mxu0 0.0
  %1598 = vmatpush1.msra.mxu0 %v1503
  %1599 = vmatprep.subr.mxu0 0.0
  %1600 = vmatpush1.msra.mxu0 %v1504
  %1601 = vmatprep.mubr.f32.mxu0 %v1470
  %1602 = vmatmul.mubr.f32.gmra.mrb[0].mxu0 %v1469
  %v1603 = vpop.f32.mrb[0].mxu0
  %v1604 = vadd.f32 0.0, %v1603
  %v1605 = vpop.f32.mrb[0].mxu0
  %1606 = vdwg.mxu0
  %1607 = vmatprep.subr.mxu0 0.0
  %1608 = vmatpush1.msra.mxu0 %v1505
  %1609 = vmatprep.subr.mxu0 0.0
  %1610 = vmatpush1.msra.mxu0 %v1506
  %1611 = vmatprep.subr.mxu0 0.0
  %1612 = vmatpush1.msra.mxu0 %v1507
  %1613 = vmatprep.subr.mxu0 0.0
  %1614 = vmatpush1.msra.mxu0 %v1508
  %1615 = vmatprep.subr.mxu0 0.0
  %1616 = vmatpush1.msra.mxu0 %v1509
  %1617 = vmatprep.subr.mxu0 0.0
  %1618 = vmatpush1.msra.mxu0 %v1510
  %1619 = vmatprep.subr.mxu0 0.0
  %1620 = vmatpush1.msra.mxu0 %v1511
  %1621 = vmatprep.subr.mxu0 0.0
  %1622 = vmatpush1.msra.mxu0 %v1512
  %1623 = vmatprep.subr.mxu0 0.0
  %1624 = vmatpush1.msra.mxu0 %v1513
  %1625 = vmatprep.subr.mxu0 0.0
  %1626 = vmatpush1.msra.mxu0 %v1514
  %1627 = vmatprep.subr.mxu0 0.0
  %1628 = vmatpush1.msra.mxu0 %v1515
  %1629 = vmatprep.subr.mxu0 0.0
  %1630 = vmatpush1.msra.mxu0 %v1516
  %1631 = vmatprep.subr.mxu0 0.0
  %1632 = vmatpush1.msra.mxu0 %v1517
  %1633 = vmatprep.subr.mxu0 0.0
  %1634 = vmatpush1.msra.mxu0 %v1518
  %1635 = vmatprep.subr.mxu0 0.0
  %1636 = vmatpush1.msra.mxu0 %v1519
  %1637 = vmatprep.subr.mxu0 0.0
  %1638 = vmatpush1.msra.mxu0 %v1520
  %1639 = vmatprep.subr.mxu0 0.0
  %1640 = vmatpush1.msra.mxu0 %v1521
  %1641 = vmatprep.subr.mxu0 0.0
  %1642 = vmatpush1.msra.mxu0 %v1522
  %1643 = vmatprep.subr.mxu0 0.0
  %1644 = vmatpush1.msra.mxu0 %v1523
  %1645 = vmatprep.subr.mxu0 0.0
  %1646 = vmatpush1.msra.mxu0 %v1524
  %1647 = vmatprep.subr.mxu0 0.0
  %1648 = vmatpush1.msra.mxu0 %v1525
  %1649 = vmatprep.subr.mxu0 0.0
  %1650 = vmatpush1.msra.mxu0 %v1526
  %1651 = vmatprep.subr.mxu0 0.0
  %1652 = vmatpush1.msra.mxu0 %v1527
  %1653 = vmatprep.subr.mxu0 0.0
  %1654 = vmatpush1.msra.mxu0 %v1528
  %1655 = vmatprep.subr.mxu0 0.0
  %1656 = vmatpush1.msra.mxu0 %v1529
  %1657 = vmatprep.subr.mxu0 0.0
  %1658 = vmatpush1.msra.mxu0 %v1530
  %1659 = vmatprep.subr.mxu0 0.0
  %1660 = vmatpush1.msra.mxu0 %v1531
  %1661 = vmatprep.subr.mxu0 0.0
  %1662 = vmatpush1.msra.mxu0 %v1532
  %1663 = vmatprep.subr.mxu0 0.0
  %1664 = vmatpush1.msra.mxu0 %v1533
  %1665 = vmatprep.subr.mxu0 0.0
  %1666 = vmatpush1.msra.mxu0 %v1534
  %1667 = vmatprep.subr.mxu0 0.0
  %1668 = vmatpush1.msra.mxu0 %v1535
  %1669 = vmatprep.subr.mxu0 0.0
  %1670 = vmatpush1.msra.mxu0 %v1536
  %1671 = vmatprep.mubr.f32.mxu0 %v1472
  %1672 = vmatmul.mubr.f32.gmra.mrb[0].mxu0 %v1471
  %v1673 = vpop.f32.mrb[0].mxu0
  %v1674 = vadd.f32 %v1604, %v1673
  %v1675 = vpop.f32.mrb[0].mxu0
  %1676 = vdwg.mxu0
  %v1677 = vand.u32 %v87, 7
  %v1678 = vshra.s32 %v87, 3
  %v1679 = vand.u32 %v1678, 7
  %v1680 = vadd.s32 %v1679, 4294967295
  %vm1681 = vcmp.ge.s32.totalorder %v1680, 0
  %vm1682 = vcmp.lt.s32.totalorder %v1680, 8
  %vm1683 = vmand %vm1681, %vm1682
  %v1684 = vadd.s32 %v1677, 4294967295
  %vm1685 = vcmp.ge.s32.totalorder %v1684, 0
  %vm1686 = vmand %vm1683, %vm1685
  %vm1687 = vcmp.lt.s32.totalorder %v1684, 8
  %vm1688 = vmand %vm1686, %vm1687
  %v1689 = vsel %vm1688, 1.0, 0.0
  %1690 = vrot.lane.b32.xlu0 %v1674, 9
  %v1691 = vpop.permute.xlu0 %1690
  %v1692 = vld [vmem:[%s7] sm:$0xf]
  %v1693 = vld [vmem:[%s7 + $0x4] sm:$0xf]
  %v1694 = vmul.f32 %v1691, %v1689
  %v1695 = vpack.c.bf16 %v1694, %v1694
  %vm1696 = vcmp.ge.s32.totalorder %v1677, 0
  %vm1697 = vmand %vm1683, %vm1696
  %vm1698 = vcmp.lt.s32.totalorder %v1677, 8
  %vm1699 = vmand %vm1697, %vm1698
  %v1700 = vsel %vm1699, 1.0, 0.0
  %1701 = vrot.lane.b32.xlu0 %v1674, 8
  %v1702 = vpop.permute.xlu0 %1701
  %s1703 = scalar_lea.vmem %s7, 8
  %v1704 = vld [vmem:[%s1703] sm:$0xf]
  %v1705 = vld [vmem:[%s1703 + $0x4] sm:$0xf]
  %v1706 = vmul.f32 %v1702, %v1700
  %v1707 = vpack.c.bf16 %v1706, %v1706
  %v1710 = vunpack.c.l.b16 %v1704
  %v1711 = vunpack.c.l.b16 %v1705
  %v1712 = vpack.c.b16 %v1711, %v1710
  %vm1713 = vcmask 64512
  %v1715 = vsel %vm1713, %v1712, 0
  %vm1717 = vcmask 1043456
  %v1719 = vsel %vm1717, %v1707, 0
  %1721 = vmatprep.subr.bf16.mxu0 0
  %1722 = vmatpush1.bf16.msra.mxu0 %v1719
  %1723 = vmatprep.subr.bf16.mxu0 0
  %1724 = vmatpush1.bf16.msra.mxu0 0
  %1725 = vmatprep.subr.bf16.mxu0 0
  %1726 = vmatpush1.bf16.msra.mxu0 0
  %1727 = vmatprep.subr.bf16.mxu0 0
  %1728 = vmatpush1.bf16.msra.mxu0 0
  %1729 = vmatprep.subr.bf16.mxu0 0
  %1730 = vmatpush1.bf16.msra.mxu0 0
  %1731 = vmatprep.subr.bf16.mxu0 0
  %1732 = vmatpush1.bf16.msra.mxu0 0
  %1733 = vmatprep.subr.bf16.mxu0 0
  %1734 = vmatpush1.bf16.msra.mxu0 0
  %1735 = vmatprep.subr.bf16.mxu0 0
  %1736 = vmatpush1.bf16.msra.mxu0 0
  %1737 = vmatprep.subr.bf16.mxu0 0
  %1738 = vmatpush1.bf16.msra.mxu0 0
  %1739 = vmatprep.subr.bf16.mxu0 0
  %1740 = vmatpush1.bf16.msra.mxu0 0
  %1741 = vmatprep.subr.bf16.mxu0 0
  %1742 = vmatpush1.bf16.msra.mxu0 0
  %1743 = vmatprep.subr.bf16.mxu0 0
  %1744 = vmatpush1.bf16.msra.mxu0 0
  %1745 = vmatprep.subr.bf16.mxu0 0
  %1746 = vmatpush1.bf16.msra.mxu0 0
  %1747 = vmatprep.subr.bf16.mxu0 0
  %1748 = vmatpush1.bf16.msra.mxu0 0
  %1749 = vmatprep.subr.bf16.mxu0 0
  %1750 = vmatpush1.bf16.msra.mxu0 0
  %1751 = vmatprep.subr.bf16.mxu0 0
  %1752 = vmatpush1.bf16.msra.mxu0 0
  %1753 = vmatprep.mubr.bf16.mxu0 0
  %1754 = vmatmul.mubr.bf16.gmra.mrb[0].mxu0 %v1715
  %v1755 = vpop.f32.mrb[0].mxu0
  %v1756 = vadd.f32 0.0, %v1755
  %v1757 = vpop.f32.mrb[0].mxu0
  %v1758 = vpop.f32.mrb[0].mxu0
  %v1759 = vadd.f32 0.0, %v1758
  %v1760 = vpop.f32.mrb[0].mxu0
  %1761 = vdwg.mxu0
  %v1764 = vunpack.c.l.b16 %v1692
  %v1765 = vunpack.c.l.b16 %v1693
  %v1766 = vpack.c.b16 %v1765, %v1764
  %v1768 = vsel %vm1713, %v1766, 0
  %v1771 = vsel %vm1717, %v1695, 0
  %1773 = vmatprep.subr.bf16.mxu0 0
  %1774 = vmatpush1.bf16.msra.mxu0 %v1771
  %1775 = vmatprep.subr.bf16.mxu0 0
  %1776 = vmatpush1.bf16.msra.mxu0 0
  %1777 = vmatprep.subr.bf16.mxu0 0
  %1778 = vmatpush1.bf16.msra.mxu0 0
  %1779 = vmatprep.subr.bf16.mxu0 0
  %1780 = vmatpush1.bf16.msra.mxu0 0
  %1781 = vmatprep.subr.bf16.mxu0 0
  %1782 = vmatpush1.bf16.msra.mxu0 0
  %1783 = vmatprep.subr.bf16.mxu0 0
  %1784 = vmatpush1.bf16.msra.mxu0 0
  %1785 = vmatprep.subr.bf16.mxu0 0
  %1786 = vmatpush1.bf16.msra.mxu0 0
  %1787 = vmatprep.subr.bf16.mxu0 0
  %1788 = vmatpush1.bf16.msra.mxu0 0
  %1789 = vmatprep.subr.bf16.mxu0 0
  %1790 = vmatpush1.bf16.msra.mxu0 0
  %1791 = vmatprep.subr.bf16.mxu0 0
  %1792 = vmatpush1.bf16.msra.mxu0 0
  %1793 = vmatprep.subr.bf16.mxu0 0
  %1794 = vmatpush1.bf16.msra.mxu0 0
  %1795 = vmatprep.subr.bf16.mxu0 0
  %1796 = vmatpush1.bf16.msra.mxu0 0
  %1797 = vmatprep.subr.bf16.mxu0 0
  %1798 = vmatpush1.bf16.msra.mxu0 0
  %1799 = vmatprep.subr.bf16.mxu0 0
  %1800 = vmatpush1.bf16.msra.mxu0 0
  %1801 = vmatprep.subr.bf16.mxu0 0
  %1802 = vmatpush1.bf16.msra.mxu0 0
  %1803 = vmatprep.subr.bf16.mxu0 0
  %1804 = vmatpush1.bf16.msra.mxu0 0
  %1805 = vmatprep.mubr.bf16.mxu0 0
  %1806 = vmatmul.mubr.bf16.gmra.mrb[0].mxu0 %v1768
  %v1807 = vpop.f32.mrb[0].mxu0
  %v1808 = vadd.f32 %v1756, %v1807
  %v1809 = vpop.f32.mrb[0].mxu0
  %v1810 = vpop.f32.mrb[0].mxu0
  %v1811 = vadd.f32 %v1759, %v1810
  %v1812 = vpop.f32.mrb[0].mxu0
  %1813 = vdwg.mxu0
  %v1814 = vadd.s32 %v1677, 1
  %vm1815 = vcmp.ge.s32.totalorder %v1814, 0
  %vm1816 = vmand %vm1683, %vm1815
  %vm1817 = vcmp.lt.s32.totalorder %v1814, 8
  %vm1818 = vmand %vm1816, %vm1817
  %v1819 = vsel %vm1818, 1.0, 0.0
  %1820 = vrot.lane.b32.xlu0 %v1674, 7
  %v1821 = vpop.permute.xlu0 %1820
  %s1822 = scalar_lea.vmem %s7, 16
  %v1823 = vld [vmem:[%s1822] sm:$0xf]
  %v1824 = vld [vmem:[%s1822 + $0x4] sm:$0xf]
  %v1825 = vmul.f32 %v1821, %v1819
  %v1826 = vpack.c.bf16 %v1825, %v1825
  %v1829 = vunpack.c.l.b16 %v1823
  %v1830 = vunpack.c.l.b16 %v1824
  %v1831 = vpack.c.b16 %v1830, %v1829
  %v1833 = vsel %vm1713, %v1831, 0
  %v1836 = vsel %vm1717, %v1826, 0
  %1838 = vmatprep.subr.bf16.mxu0 0
  %1839 = vmatpush1.bf16.msra.mxu0 %v1836
  %1840 = vmatprep.subr.bf16.mxu0 0
  %1841 = vmatpush1.bf16.msra.mxu0 0
  %1842 = vmatprep.subr.bf16.mxu0 0
  %1843 = vmatpush1.bf16.msra.mxu0 0
  %1844 = vmatprep.subr.bf16.mxu0 0
  %1845 = vmatpush1.bf16.msra.mxu0 0
  %1846 = vmatprep.subr.bf16.mxu0 0
  %1847 = vmatpush1.bf16.msra.mxu0 0
  %1848 = vmatprep.subr.bf16.mxu0 0
  %1849 = vmatpush1.bf16.msra.mxu0 0
  %1850 = vmatprep.subr.bf16.mxu0 0
  %1851 = vmatpush1.bf16.msra.mxu0 0
  %1852 = vmatprep.subr.bf16.mxu0 0
  %1853 = vmatpush1.bf16.msra.mxu0 0
  %1854 = vmatprep.subr.bf16.mxu0 0
  %1855 = vmatpush1.bf16.msra.mxu0 0
  %1856 = vmatprep.subr.bf16.mxu0 0
  %1857 = vmatpush1.bf16.msra.mxu0 0
  %1858 = vmatprep.subr.bf16.mxu0 0
  %1859 = vmatpush1.bf16.msra.mxu0 0
  %1860 = vmatprep.subr.bf16.mxu0 0
  %1861 = vmatpush1.bf16.msra.mxu0 0
  %1862 = vmatprep.subr.bf16.mxu0 0
  %1863 = vmatpush1.bf16.msra.mxu0 0
  %1864 = vmatprep.subr.bf16.mxu0 0
  %1865 = vmatpush1.bf16.msra.mxu0 0
  %1866 = vmatprep.subr.bf16.mxu0 0
  %1867 = vmatpush1.bf16.msra.mxu0 0
  %1868 = vmatprep.subr.bf16.mxu0 0
  %1869 = vmatpush1.bf16.msra.mxu0 0
  %1870 = vmatprep.mubr.bf16.mxu0 0
  %1871 = vmatmul.mubr.bf16.gmra.mrb[0].mxu0 %v1833
  %v1872 = vpop.f32.mrb[0].mxu0
  %v1873 = vadd.f32 0.0, %v1872
  %v1874 = vpop.f32.mrb[0].mxu0
  %v1875 = vpop.f32.mrb[0].mxu0
  %v1876 = vadd.f32 0.0, %v1875
  %v1877 = vpop.f32.mrb[0].mxu0
  %1878 = vdwg.mxu0
  %v1879 = vadd.f32 %v1808, %v1873
  %v1880 = vadd.f32 %v1811, %v1876
  %vm1881 = vcmp.ge.s32.totalorder %v1679, 0
  %vm1882 = vcmp.lt.s32.totalorder %v1679, 8
  %vm1883 = vmand %vm1881, %vm1882
  %vm1884 = vmand %vm1883, %vm1685
  %vm1885 = vmand %vm1884, %vm1687
  %v1886 = vsel %vm1885, 1.0, 0.0
  %1887 = vrot.lane.b32.xlu0 %v1674, 1
  %v1888 = vpop.permute.xlu0 %1887
  %s1889 = scalar_lea.vmem %s7, 24
  %v1890 = vld [vmem:[%s1889] sm:$0xf]
  %v1891 = vld [vmem:[%s1889 + $0x4] sm:$0xf]
  %v1892 = vmul.f32 %v1888, %v1886
  %v1893 = vpack.c.bf16 %v1892, %v1892
  %v1896 = vunpack.c.l.b16 %v1890
  %v1897 = vunpack.c.l.b16 %v1891
  %v1898 = vpack.c.b16 %v1897, %v1896
  %v1900 = vsel %vm1713, %v1898, 0
  %v1903 = vsel %vm1717, %v1893, 0
  %1905 = vmatprep.subr.bf16.mxu0 0
  %1906 = vmatpush1.bf16.msra.mxu0 %v1903
  %1907 = vmatprep.subr.bf16.mxu0 0
  %1908 = vmatpush1.bf16.msra.mxu0 0
  %1909 = vmatprep.subr.bf16.mxu0 0
  %1910 = vmatpush1.bf16.msra.mxu0 0
  %1911 = vmatprep.subr.bf16.mxu0 0
  %1912 = vmatpush1.bf16.msra.mxu0 0
  %1913 = vmatprep.subr.bf16.mxu0 0
  %1914 = vmatpush1.bf16.msra.mxu0 0
  %1915 = vmatprep.subr.bf16.mxu0 0
  %1916 = vmatpush1.bf16.msra.mxu0 0
  %1917 = vmatprep.subr.bf16.mxu0 0
  %1918 = vmatpush1.bf16.msra.mxu0 0
  %1919 = vmatprep.subr.bf16.mxu0 0
  %1920 = vmatpush1.bf16.msra.mxu0 0
  %1921 = vmatprep.subr.bf16.mxu0 0
  %1922 = vmatpush1.bf16.msra.mxu0 0
  %1923 = vmatprep.subr.bf16.mxu0 0
  %1924 = vmatpush1.bf16.msra.mxu0 0
  %1925 = vmatprep.subr.bf16.mxu0 0
  %1926 = vmatpush1.bf16.msra.mxu0 0
  %1927 = vmatprep.subr.bf16.mxu0 0
  %1928 = vmatpush1.bf16.msra.mxu0 0
  %1929 = vmatprep.subr.bf16.mxu0 0
  %1930 = vmatpush1.bf16.msra.mxu0 0
  %1931 = vmatprep.subr.bf16.mxu0 0
  %1932 = vmatpush1.bf16.msra.mxu0 0
  %1933 = vmatprep.subr.bf16.mxu0 0
  %1934 = vmatpush1.bf16.msra.mxu0 0
  %1935 = vmatprep.subr.bf16.mxu0 0
  %1936 = vmatpush1.bf16.msra.mxu0 0
  %1937 = vmatprep.mubr.bf16.mxu0 0
  %1938 = vmatmul.mubr.bf16.gmra.mrb[0].mxu0 %v1900
  %v1939 = vpop.f32.mrb[0].mxu0
  %v1940 = vadd.f32 0.0, %v1939
  %v1941 = vpop.f32.mrb[0].mxu0
  %v1942 = vpop.f32.mrb[0].mxu0
  %v1943 = vadd.f32 0.0, %v1942
  %v1944 = vpop.f32.mrb[0].mxu0
  %1945 = vdwg.mxu0
  %v1946 = vadd.f32 %v1879, %v1940
  %v1947 = vadd.f32 %v1880, %v1943
  %vm1948 = vmand %vm1883, %vm1696
  %vm1949 = vmand %vm1948, %vm1698
  %v1950 = vsel %vm1949, 1.0, 0.0
  %s1951 = scalar_lea.vmem %s7, 32
  %v1952 = vld [vmem:[%s1951] sm:$0xf]
  %v1953 = vld [vmem:[%s1951 + $0x4] sm:$0xf]
  %v1954 = vmul.f32 %v1674, %v1950
  %v1955 = vpack.c.bf16 %v1954, %v1954
  %v1958 = vunpack.c.l.b16 %v1952
  %v1959 = vunpack.c.l.b16 %v1953
  %v1960 = vpack.c.b16 %v1959, %v1958
  %v1962 = vsel %vm1713, %v1960, 0
  %v1965 = vsel %vm1717, %v1955, 0
  %1967 = vmatprep.subr.bf16.mxu0 0
  %1968 = vmatpush1.bf16.msra.mxu0 %v1965
  %1969 = vmatprep.subr.bf16.mxu0 0
  %1970 = vmatpush1.bf16.msra.mxu0 0
  %1971 = vmatprep.subr.bf16.mxu0 0
  %1972 = vmatpush1.bf16.msra.mxu0 0
  %1973 = vmatprep.subr.bf16.mxu0 0
  %1974 = vmatpush1.bf16.msra.mxu0 0
  %1975 = vmatprep.subr.bf16.mxu0 0
  %1976 = vmatpush1.bf16.msra.mxu0 0
  %1977 = vmatprep.subr.bf16.mxu0 0
  %1978 = vmatpush1.bf16.msra.mxu0 0
  %1979 = vmatprep.subr.bf16.mxu0 0
  %1980 = vmatpush1.bf16.msra.mxu0 0
  %1981 = vmatprep.subr.bf16.mxu0 0
  %1982 = vmatpush1.bf16.msra.mxu0 0
  %1983 = vmatprep.subr.bf16.mxu0 0
  %1984 = vmatpush1.bf16.msra.mxu0 0
  %1985 = vmatprep.subr.bf16.mxu0 0
  %1986 = vmatpush1.bf16.msra.mxu0 0
  %1987 = vmatprep.subr.bf16.mxu0 0
  %1988 = vmatpush1.bf16.msra.mxu0 0
  %1989 = vmatprep.subr.bf16.mxu0 0
  %1990 = vmatpush1.bf16.msra.mxu0 0
  %1991 = vmatprep.subr.bf16.mxu0 0
  %1992 = vmatpush1.bf16.msra.mxu0 0
  %1993 = vmatprep.subr.bf16.mxu0 0
  %1994 = vmatpush1.bf16.msra.mxu0 0
  %1995 = vmatprep.subr.bf16.mxu0 0
  %1996 = vmatpush1.bf16.msra.mxu0 0
  %1997 = vmatprep.subr.bf16.mxu0 0
  %1998 = vmatpush1.bf16.msra.mxu0 0
  %1999 = vmatprep.mubr.bf16.mxu0 0
  %2000 = vmatmul.mubr.bf16.gmra.mrb[0].mxu0 %v1962
  %v2001 = vpop.f32.mrb[0].mxu0
  %v2002 = vadd.f32 0.0, %v2001
  %v2003 = vpop.f32.mrb[0].mxu0
  %v2004 = vpop.f32.mrb[0].mxu0
  %v2005 = vadd.f32 0.0, %v2004
  %v2006 = vpop.f32.mrb[0].mxu0
  %2007 = vdwg.mxu0
  %v2008 = vadd.f32 %v1946, %v2002
  %v2009 = vadd.f32 %v1947, %v2005
  %vm2010 = vmand %vm1883, %vm1815
  %vm2011 = vmand %vm2010, %vm1817
  %v2012 = vsel %vm2011, 1.0, 0.0
  %2013 = vrot.lane.b32.xlu0 %v1674, 127
  %v2014 = vpop.permute.xlu0 %2013
  %s2015 = scalar_lea.vmem %s7, 40
  %v2016 = vld [vmem:[%s2015] sm:$0xf]
  %v2017 = vld [vmem:[%s2015 + $0x4] sm:$0xf]
  %v2018 = vmul.f32 %v2014, %v2012
  %v2019 = vpack.c.bf16 %v2018, %v2018
  %v2022 = vunpack.c.l.b16 %v2016
  %v2023 = vunpack.c.l.b16 %v2017
  %v2024 = vpack.c.b16 %v2023, %v2022
  %v2026 = vsel %vm1713, %v2024, 0
  %v2029 = vsel %vm1717, %v2019, 0
  %2031 = vmatprep.subr.bf16.mxu0 0
  %2032 = vmatpush1.bf16.msra.mxu0 %v2029
  %2033 = vmatprep.subr.bf16.mxu0 0
  %2034 = vmatpush1.bf16.msra.mxu0 0
  %2035 = vmatprep.subr.bf16.mxu0 0
  %2036 = vmatpush1.bf16.msra.mxu0 0
  %2037 = vmatprep.subr.bf16.mxu0 0
  %2038 = vmatpush1.bf16.msra.mxu0 0
  %2039 = vmatprep.subr.bf16.mxu0 0
  %2040 = vmatpush1.bf16.msra.mxu0 0
  %2041 = vmatprep.subr.bf16.mxu0 0
  %2042 = vmatpush1.bf16.msra.mxu0 0
  %2043 = vmatprep.subr.bf16.mxu0 0
  %2044 = vmatpush1.bf16.msra.mxu0 0
  %2045 = vmatprep.subr.bf16.mxu0 0
  %2046 = vmatpush1.bf16.msra.mxu0 0
  %2047 = vmatprep.subr.bf16.mxu0 0
  %2048 = vmatpush1.bf16.msra.mxu0 0
  %2049 = vmatprep.subr.bf16.mxu0 0
  %2050 = vmatpush1.bf16.msra.mxu0 0
  %2051 = vmatprep.subr.bf16.mxu0 0
  %2052 = vmatpush1.bf16.msra.mxu0 0
  %2053 = vmatprep.subr.bf16.mxu0 0
  %2054 = vmatpush1.bf16.msra.mxu0 0
  %2055 = vmatprep.subr.bf16.mxu0 0
  %2056 = vmatpush1.bf16.msra.mxu0 0
  %2057 = vmatprep.subr.bf16.mxu0 0
  %2058 = vmatpush1.bf16.msra.mxu0 0
  %2059 = vmatprep.subr.bf16.mxu0 0
  %2060 = vmatpush1.bf16.msra.mxu0 0
  %2061 = vmatprep.subr.bf16.mxu0 0
  %2062 = vmatpush1.bf16.msra.mxu0 0
  %2063 = vmatprep.mubr.bf16.mxu0 0
  %2064 = vmatmul.mubr.bf16.gmra.mrb[0].mxu0 %v2026
  %v2065 = vpop.f32.mrb[0].mxu0
  %v2066 = vadd.f32 0.0, %v2065
  %v2067 = vpop.f32.mrb[0].mxu0
  %v2068 = vpop.f32.mrb[0].mxu0
  %v2069 = vadd.f32 0.0, %v2068
  %v2070 = vpop.f32.mrb[0].mxu0
  %2071 = vdwg.mxu0
  %v2072 = vadd.f32 %v2008, %v2066
  %v2073 = vadd.f32 %v2009, %v2069
  %v2074 = vadd.s32 %v1679, 1
  %vm2075 = vcmp.ge.s32.totalorder %v2074, 0
  %vm2076 = vcmp.lt.s32.totalorder %v2074, 8
  %vm2077 = vmand %vm2075, %vm2076
  %vm2078 = vmand %vm2077, %vm1685
  %vm2079 = vmand %vm2078, %vm1687
  %v2080 = vsel %vm2079, 1.0, 0.0
  %2081 = vrot.lane.b32.xlu0 %v1674, 121
  %v2082 = vpop.permute.xlu0 %2081
  %s2083 = scalar_lea.vmem %s7, 48
  %v2084 = vld [vmem:[%s2083] sm:$0xf]
  %v2085 = vld [vmem:[%s2083 + $0x4] sm:$0xf]
  %v2086 = vmul.f32 %v2082, %v2080
  %v2087 = vpack.c.bf16 %v2086, %v2086
  %v2090 = vunpack.c.l.b16 %v2084
  %v2091 = vunpack.c.l.b16 %v2085
  %v2092 = vpack.c.b16 %v2091, %v2090
  %v2094 = vsel %vm1713, %v2092, 0
  %v2097 = vsel %vm1717, %v2087, 0
  %2099 = vmatprep.subr.bf16.mxu0 0
  %2100 = vmatpush1.bf16.msra.mxu0 %v2097
  %2101 = vmatprep.subr.bf16.mxu0 0
  %2102 = vmatpush1.bf16.msra.mxu0 0
  %2103 = vmatprep.subr.bf16.mxu0 0
  %2104 = vmatpush1.bf16.msra.mxu0 0
  %2105 = vmatprep.subr.bf16.mxu0 0
  %2106 = vmatpush1.bf16.msra.mxu0 0
  %2107 = vmatprep.subr.bf16.mxu0 0
  %2108 = vmatpush1.bf16.msra.mxu0 0
  %2109 = vmatprep.subr.bf16.mxu0 0
  %2110 = vmatpush1.bf16.msra.mxu0 0
  %2111 = vmatprep.subr.bf16.mxu0 0
  %2112 = vmatpush1.bf16.msra.mxu0 0
  %2113 = vmatprep.subr.bf16.mxu0 0
  %2114 = vmatpush1.bf16.msra.mxu0 0
  %2115 = vmatprep.subr.bf16.mxu0 0
  %2116 = vmatpush1.bf16.msra.mxu0 0
  %2117 = vmatprep.subr.bf16.mxu0 0
  %2118 = vmatpush1.bf16.msra.mxu0 0
  %2119 = vmatprep.subr.bf16.mxu0 0
  %2120 = vmatpush1.bf16.msra.mxu0 0
  %2121 = vmatprep.subr.bf16.mxu0 0
  %2122 = vmatpush1.bf16.msra.mxu0 0
  %2123 = vmatprep.subr.bf16.mxu0 0
  %2124 = vmatpush1.bf16.msra.mxu0 0
  %2125 = vmatprep.subr.bf16.mxu0 0
  %2126 = vmatpush1.bf16.msra.mxu0 0
  %2127 = vmatprep.subr.bf16.mxu0 0
  %2128 = vmatpush1.bf16.msra.mxu0 0
  %2129 = vmatprep.subr.bf16.mxu0 0
  %2130 = vmatpush1.bf16.msra.mxu0 0
  %2131 = vmatprep.mubr.bf16.mxu0 0
  %2132 = vmatmul.mubr.bf16.gmra.mrb[0].mxu0 %v2094
  %v2133 = vpop.f32.mrb[0].mxu0
  %v2134 = vadd.f32 0.0, %v2133
  %v2135 = vpop.f32.mrb[0].mxu0
  %v2136 = vpop.f32.mrb[0].mxu0
  %v2137 = vadd.f32 0.0, %v2136
  %v2138 = vpop.f32.mrb[0].mxu0
  %2139 = vdwg.mxu0
  %v2140 = vadd.f32 %v2072, %v2134
  %v2141 = vadd.f32 %v2073, %v2137
  %vm2142 = vmand %vm2077, %vm1696
  %vm2143 = vmand %vm2142, %vm1698
  %v2144 = vsel %vm2143, 1.0, 0.0
  %2145 = vrot.lane.b32.xlu0 %v1674, 120
  %v2146 = vpop.permute.xlu0 %2145
  %s2147 = scalar_lea.vmem %s7, 56
  %v2148 = vld [vmem:[%s2147] sm:$0xf]
  %v2149 = vld [vmem:[%s2147 + $0x4] sm:$0xf]
  %v2150 = vmul.f32 %v2146, %v2144
  %v2151 = vpack.c.bf16 %v2150, %v2150
  %v2154 = vunpack.c.l.b16 %v2148
  %v2155 = vunpack.c.l.b16 %v2149
  %v2156 = vpack.c.b16 %v2155, %v2154
  %v2158 = vsel %vm1713, %v2156, 0
  %v2161 = vsel %vm1717, %v2151, 0
  %2163 = vmatprep.subr.bf16.mxu0 0
  %2164 = vmatpush1.bf16.msra.mxu0 %v2161
  %2165 = vmatprep.subr.bf16.mxu0 0
  %2166 = vmatpush1.bf16.msra.mxu0 0
  %2167 = vmatprep.subr.bf16.mxu0 0
  %2168 = vmatpush1.bf16.msra.mxu0 0
  %2169 = vmatprep.subr.bf16.mxu0 0
  %2170 = vmatpush1.bf16.msra.mxu0 0
  %2171 = vmatprep.subr.bf16.mxu0 0
  %2172 = vmatpush1.bf16.msra.mxu0 0
  %2173 = vmatprep.subr.bf16.mxu0 0
  %2174 = vmatpush1.bf16.msra.mxu0 0
  %2175 = vmatprep.subr.bf16.mxu0 0
  %2176 = vmatpush1.bf16.msra.mxu0 0
  %2177 = vmatprep.subr.bf16.mxu0 0
  %2178 = vmatpush1.bf16.msra.mxu0 0
  %2179 = vmatprep.subr.bf16.mxu0 0
  %2180 = vmatpush1.bf16.msra.mxu0 0
  %2181 = vmatprep.subr.bf16.mxu0 0
  %2182 = vmatpush1.bf16.msra.mxu0 0
  %2183 = vmatprep.subr.bf16.mxu0 0
  %2184 = vmatpush1.bf16.msra.mxu0 0
  %2185 = vmatprep.subr.bf16.mxu0 0
  %2186 = vmatpush1.bf16.msra.mxu0 0
  %2187 = vmatprep.subr.bf16.mxu0 0
  %2188 = vmatpush1.bf16.msra.mxu0 0
  %2189 = vmatprep.subr.bf16.mxu0 0
  %2190 = vmatpush1.bf16.msra.mxu0 0
  %2191 = vmatprep.subr.bf16.mxu0 0
  %2192 = vmatpush1.bf16.msra.mxu0 0
  %2193 = vmatprep.subr.bf16.mxu0 0
  %2194 = vmatpush1.bf16.msra.mxu0 0
  %2195 = vmatprep.mubr.bf16.mxu0 0
  %2196 = vmatmul.mubr.bf16.gmra.mrb[0].mxu0 %v2158
  %v2197 = vpop.f32.mrb[0].mxu0
  %v2198 = vadd.f32 0.0, %v2197
  %v2199 = vpop.f32.mrb[0].mxu0
  %v2200 = vpop.f32.mrb[0].mxu0
  %v2201 = vadd.f32 0.0, %v2200
  %v2202 = vpop.f32.mrb[0].mxu0
  %2203 = vdwg.mxu0
  %v2204 = vadd.f32 %v2140, %v2198
  %v2205 = vadd.f32 %v2141, %v2201
  %vm2206 = vmand %vm2077, %vm1815
  %vm2207 = vmand %vm2206, %vm1817
  %v2208 = vsel %vm2207, 1.0, 0.0
  %2209 = vrot.lane.b32.xlu0 %v1674, 119
  %v2210 = vpop.permute.xlu0 %2209
  %s2211 = scalar_lea.vmem %s7, 64
  %v2212 = vld [vmem:[%s2211] sm:$0xf]
  %v2213 = vld [vmem:[%s2211 + $0x4] sm:$0xf]
  %v2214 = vmul.f32 %v2210, %v2208
  %v2215 = vpack.c.bf16 %v2214, %v2214
  %v2218 = vunpack.c.l.b16 %v2212
  %v2219 = vunpack.c.l.b16 %v2213
  %v2220 = vpack.c.b16 %v2219, %v2218
  %v2222 = vsel %vm1713, %v2220, 0
  %v2225 = vsel %vm1717, %v2215, 0
  %2227 = vmatprep.subr.bf16.mxu0 0
  %2228 = vmatpush1.bf16.msra.mxu0 %v2225
  %2229 = vmatprep.subr.bf16.mxu0 0
  %2230 = vmatpush1.bf16.msra.mxu0 0
  %2231 = vmatprep.subr.bf16.mxu0 0
  %2232 = vmatpush1.bf16.msra.mxu0 0
  %2233 = vmatprep.subr.bf16.mxu0 0
  %2234 = vmatpush1.bf16.msra.mxu0 0
  %2235 = vmatprep.subr.bf16.mxu0 0
  %2236 = vmatpush1.bf16.msra.mxu0 0
  %2237 = vmatprep.subr.bf16.mxu0 0
  %2238 = vmatpush1.bf16.msra.mxu0 0
  %2239 = vmatprep.subr.bf16.mxu0 0
  %2240 = vmatpush1.bf16.msra.mxu0 0
  %2241 = vmatprep.subr.bf16.mxu0 0
  %2242 = vmatpush1.bf16.msra.mxu0 0
  %2243 = vmatprep.subr.bf16.mxu0 0
  %2244 = vmatpush1.bf16.msra.mxu0 0
  %2245 = vmatprep.subr.bf16.mxu0 0
  %2246 = vmatpush1.bf16.msra.mxu0 0
  %2247 = vmatprep.subr.bf16.mxu0 0
  %2248 = vmatpush1.bf16.msra.mxu0 0
  %2249 = vmatprep.subr.bf16.mxu0 0
  %2250 = vmatpush1.bf16.msra.mxu0 0
  %2251 = vmatprep.subr.bf16.mxu0 0
  %2252 = vmatpush1.bf16.msra.mxu0 0
  %2253 = vmatprep.subr.bf16.mxu0 0
  %2254 = vmatpush1.bf16.msra.mxu0 0
  %2255 = vmatprep.subr.bf16.mxu0 0
  %2256 = vmatpush1.bf16.msra.mxu0 0
  %2257 = vmatprep.subr.bf16.mxu0 0
  %2258 = vmatpush1.bf16.msra.mxu0 0
  %2259 = vmatprep.mubr.bf16.mxu0 0
  %2260 = vmatmul.mubr.bf16.gmra.mrb[0].mxu0 %v2222
  %v2261 = vpop.f32.mrb[0].mxu0
  %v2262 = vadd.f32 0.0, %v2261
  %v2263 = vpop.f32.mrb[0].mxu0
  %v2264 = vpop.f32.mrb[0].mxu0
  %v2265 = vadd.f32 0.0, %v2264
  %v2266 = vpop.f32.mrb[0].mxu0
  %2267 = vdwg.mxu0
  %v2268 = vadd.f32 %v2204, %v2262
  %v2269 = vadd.f32 %v2205, %v2265
  %v2270 = vld [vmem:[%s8] sm:$0xff]
  %v2271 = vld [vmem:[%s8 + $0x8] sm:$0xff]
  %2273 = vset.pattern.permute.xlu0 0
  %2274 = vperm.xlu0 %2273, %v2270
  %v2275 = vpop.permute.xlu0 %2274
  %2278 = vset.pattern.permute.xlu0 0
  %2279 = vperm.xlu0 %2278, %v2271
  %v2280 = vpop.permute.xlu0 %2279
  %v2282 = vmul.f32 %v2268, %v2275
  %v2283 = vmul.f32 %v2269, %v2280
  %v2284 = vld [vmem:[%s9] sm:$0xff]
  %v2285 = vld [vmem:[%s9 + $0x8] sm:$0xff]
  %2287 = vset.pattern.permute.xlu0 0
  %2288 = vperm.xlu0 %2287, %v2284
  %v2289 = vpop.permute.xlu0 %2288
  %2292 = vset.pattern.permute.xlu0 0
  %2293 = vperm.xlu0 %2292, %v2285
  %v2294 = vpop.permute.xlu0 %2293
  %v2296 = vadd.f32 %v2282, %v2289
  %v2297 = vadd.f32 %v2283, %v2294
  %v2298 = vmax.f32 %v2296, 0.0
  %v2299 = vmax.f32 %v2297, 0.0
  %v2300 = vld [vmem:[%s2] sm:$0xff]
  %v2301 = vld [vmem:[%s2 + $0x8] sm:$0xff]
  %v2302 = vld [vmem:[%s2 + $0x10] sm:$0xff]
  %v2303 = vld [vmem:[%s2 + $0x18] sm:$0xff]
  %v2304 = vld [vmem:[%s2 + $0x20] sm:$0xff]
  %v2305 = vld [vmem:[%s2 + $0x28] sm:$0xff]
  %v2306 = vld [vmem:[%s2 + $0x30] sm:$0xff]
  %v2307 = vld [vmem:[%s2 + $0x38] sm:$0xff]
  %v2308 = vld [vmem:[%s2 + $0x40] sm:$0xff]
  %v2309 = vld [vmem:[%s2 + $0x48] sm:$0xff]
  %v2310 = vld [vmem:[%s2 + $0x50] sm:$0xff]
  %v2311 = vld [vmem:[%s2 + $0x58] sm:$0xff]
  %v2312 = vld [vmem:[%s2 + $0x60] sm:$0xff]
  %v2313 = vld [vmem:[%s2 + $0x68] sm:$0xff]
  %v2314 = vld [vmem:[%s2 + $0x70] sm:$0xff]
  %v2315 = vld [vmem:[%s2 + $0x78] sm:$0xff]
  %v2316 = vld [vmem:[%s2 + $0x80] sm:$0xff]
  %v2317 = vld [vmem:[%s2 + $0x88] sm:$0xff]
  %v2318 = vld [vmem:[%s2 + $0x90] sm:$0xff]
  %v2319 = vld [vmem:[%s2 + $0x98] sm:$0xff]
  %v2320 = vld [vmem:[%s2 + $0xa0] sm:$0xff]
  %v2321 = vld [vmem:[%s2 + $0xa8] sm:$0xff]
  %v2322 = vld [vmem:[%s2 + $0xb0] sm:$0xff]
  %v2323 = vld [vmem:[%s2 + $0xb8] sm:$0xff]
  %v2324 = vld [vmem:[%s2 + $0xc0] sm:$0xff]
  %v2325 = vld [vmem:[%s2 + $0xc8] sm:$0xff]
  %v2326 = vld [vmem:[%s2 + $0xd0] sm:$0xff]
  %v2327 = vld [vmem:[%s2 + $0xd8] sm:$0xff]
  %v2328 = vld [vmem:[%s2 + $0xe0] sm:$0xff]
  %v2329 = vld [vmem:[%s2 + $0xe8] sm:$0xff]
  %v2330 = vld [vmem:[%s2 + $0xf0] sm:$0xff]
  %v2331 = vld [vmem:[%s2 + $0xf8] sm:$0xff]
  %v2332 = vld [vmem:[%s2 + $0x100] sm:$0xff]
  %v2333 = vld [vmem:[%s2 + $0x108] sm:$0xff]
  %v2334 = vld [vmem:[%s2 + $0x110] sm:$0xff]
  %v2335 = vld [vmem:[%s2 + $0x118] sm:$0xff]
  %v2336 = vld [vmem:[%s2 + $0x120] sm:$0xff]
  %v2337 = vld [vmem:[%s2 + $0x128] sm:$0xff]
  %v2338 = vld [vmem:[%s2 + $0x130] sm:$0xff]
  %v2339 = vld [vmem:[%s2 + $0x138] sm:$0xff]
  %v2340 = vld [vmem:[%s2 + $0x140] sm:$0xff]
  %v2341 = vld [vmem:[%s2 + $0x148] sm:$0xff]
  %v2342 = vld [vmem:[%s2 + $0x150] sm:$0xff]
  %v2343 = vld [vmem:[%s2 + $0x158] sm:$0xff]
  %v2344 = vld [vmem:[%s2 + $0x160] sm:$0xff]
  %v2345 = vld [vmem:[%s2 + $0x168] sm:$0xff]
  %v2346 = vld [vmem:[%s2 + $0x170] sm:$0xff]
  %v2347 = vld [vmem:[%s2 + $0x178] sm:$0xff]
  %v2348 = vld [vmem:[%s2 + $0x180] sm:$0xff]
  %v2349 = vld [vmem:[%s2 + $0x188] sm:$0xff]
  %v2350 = vld [vmem:[%s2 + $0x190] sm:$0xff]
  %v2351 = vld [vmem:[%s2 + $0x198] sm:$0xff]
  %v2352 = vld [vmem:[%s2 + $0x1a0] sm:$0xff]
  %v2353 = vld [vmem:[%s2 + $0x1a8] sm:$0xff]
  %v2354 = vld [vmem:[%s2 + $0x1b0] sm:$0xff]
  %v2355 = vld [vmem:[%s2 + $0x1b8] sm:$0xff]
  %v2356 = vld [vmem:[%s2 + $0x1c0] sm:$0xff]
  %v2357 = vld [vmem:[%s2 + $0x1c8] sm:$0xff]
  %v2358 = vld [vmem:[%s2 + $0x1d0] sm:$0xff]
  %v2359 = vld [vmem:[%s2 + $0x1d8] sm:$0xff]
  %v2360 = vld [vmem:[%s2 + $0x1e0] sm:$0xff]
  %v2361 = vld [vmem:[%s2 + $0x1e8] sm:$0xff]
  %v2362 = vld [vmem:[%s2 + $0x1f0] sm:$0xff]
  %v2363 = vld [vmem:[%s2 + $0x1f8] sm:$0xff]
  %2364 = vmatprep.subr.mxu0 %v2301
  %2365 = vmatpush1.msra.mxu0 %v2300
  %2366 = vmatprep.subr.mxu0 %v2305
  %2367 = vmatpush1.msra.mxu0 %v2304
  %2368 = vmatprep.subr.mxu0 %v2309
  %2369 = vmatpush1.msra.mxu0 %v2308
  %2370 = vmatprep.subr.mxu0 %v2313
  %2371 = vmatpush1.msra.mxu0 %v2312
  %2372 = vmatprep.subr.mxu0 %v2317
  %2373 = vmatpush1.msra.mxu0 %v2316
  %2374 = vmatprep.subr.mxu0 %v2321
  %2375 = vmatpush1.msra.mxu0 %v2320
  %2376 = vmatprep.subr.mxu0 %v2325
  %2377 = vmatpush1.msra.mxu0 %v2324
  %2378 = vmatprep.subr.mxu0 %v2329
  %2379 = vmatpush1.msra.mxu0 %v2328
  %2380 = vmatprep.subr.mxu0 %v2333
  %2381 = vmatpush1.msra.mxu0 %v2332
  %2382 = vmatprep.subr.mxu0 %v2337
  %2383 = vmatpush1.msra.mxu0 %v2336
  %2384 = vmatprep.subr.mxu0 %v2341
  %2385 = vmatpush1.msra.mxu0 %v2340
  %2386 = vmatprep.subr.mxu0 %v2345
  %2387 = vmatpush1.msra.mxu0 %v2344
  %2388 = vmatprep.subr.mxu0 %v2349
  %2389 = vmatpush1.msra.mxu0 %v2348
  %2390 = vmatprep.subr.mxu0 %v2353
  %2391 = vmatpush1.msra.mxu0 %v2352
  %2392 = vmatprep.subr.mxu0 %v2357
  %2393 = vmatpush1.msra.mxu0 %v2356
  %2394 = vmatprep.subr.mxu0 %v2361
  %2395 = vmatpush1.msra.mxu0 %v2360
  %2396 = vmatprep.subr.mxu0 0.0
  %2397 = vmatpush1.msra.mxu0 0.0
  %2398 = vmatprep.subr.mxu0 0.0
  %2399 = vmatpush1.msra.mxu0 0.0
  %2400 = vmatprep.subr.mxu0 0.0
  %2401 = vmatpush1.msra.mxu0 0.0
  %2402 = vmatprep.subr.mxu0 0.0
  %2403 = vmatpush1.msra.mxu0 0.0
  %2404 = vmatprep.subr.mxu0 0.0
  %2405 = vmatpush1.msra.mxu0 0.0
  %2406 = vmatprep.subr.mxu0 0.0
  %2407 = vmatpush1.msra.mxu0 0.0
  %2408 = vmatprep.subr.mxu0 0.0
  %2409 = vmatpush1.msra.mxu0 0.0
  %2410 = vmatprep.subr.mxu0 0.0
  %2411 = vmatpush1.msra.mxu0 0.0
  %2412 = vmatprep.subr.mxu0 0.0
  %2413 = vmatpush1.msra.mxu0 0.0
  %2414 = vmatprep.subr.mxu0 0.0
  %2415 = vmatpush1.msra.mxu0 0.0
  %2416 = vmatprep.subr.mxu0 0.0
  %2417 = vmatpush1.msra.mxu0 0.0
  %2418 = vmatprep.subr.mxu0 0.0
  %2419 = vmatpush1.msra.mxu0 0.0
  %2420 = vmatprep.subr.mxu0 0.0
  %2421 = vmatpush1.msra.mxu0 0.0
  %2422 = vmatprep.subr.mxu0 0.0
  %2423 = vmatpush1.msra.mxu0 0.0
  %2424 = vmatprep.subr.mxu0 0.0
  %2425 = vmatpush1.msra.mxu0 0.0
  %2426 = vmatprep.subr.mxu0 0.0
  %2427 = vmatpush1.msra.mxu0 0.0
  %2428 = vmatprep.mubr.f32.mxu0 0.0
  %2429 = vmatmul.mubr.f32.gmra.mrb[0].mxu0 %v2298
  %v2430 = vpop.f32.mrb[0].mxu0
  %v2431 = vadd.f32 0.0, %v2430
  %v2432 = vpop.f32.mrb[0].mxu0
  %v2433 = vadd.f32 0.0, %v2432
  %2434 = vmatprep.mubr.f32.mxu0 0.0
  %2435 = vmatmul.mubr.f32.gmra.mrb[0].mxu0 %v2299
  %v2436 = vpop.f32.mrb[0].mxu0
  %v2437 = vadd.f32 0.0, %v2436
  %v2438 = vpop.f32.mrb[0].mxu0
  %v2439 = vadd.f32 0.0, %v2438
  %2440 = vdwg.mxu0
  %2441 = vmatprep.subr.mxu0 %v2303
  %2442 = vmatpush1.msra.mxu0 %v2302
  %2443 = vmatprep.subr.mxu0 %v2307
  %2444 = vmatpush1.msra.mxu0 %v2306
  %2445 = vmatprep.subr.mxu0 %v2311
  %2446 = vmatpush1.msra.mxu0 %v2310
  %2447 = vmatprep.subr.mxu0 %v2315
  %2448 = vmatpush1.msra.mxu0 %v2314
  %2449 = vmatprep.subr.mxu0 %v2319
  %2450 = vmatpush1.msra.mxu0 %v2318
  %2451 = vmatprep.subr.mxu0 %v2323
  %2452 = vmatpush1.msra.mxu0 %v2322
  %2453 = vmatprep.subr.mxu0 %v2327
  %2454 = vmatpush1.msra.mxu0 %v2326
  %2455 = vmatprep.subr.mxu0 %v2331
  %2456 = vmatpush1.msra.mxu0 %v2330
  %2457 = vmatprep.subr.mxu0 %v2335
  %2458 = vmatpush1.msra.mxu0 %v2334
  %2459 = vmatprep.subr.mxu0 %v2339
  %2460 = vmatpush1.msra.mxu0 %v2338
  %2461 = vmatprep.subr.mxu0 %v2343
  %2462 = vmatpush1.msra.mxu0 %v2342
  %2463 = vmatprep.subr.mxu0 %v2347
  %2464 = vmatpush1.msra.mxu0 %v2346
  %2465 = vmatprep.subr.mxu0 %v2351
  %2466 = vmatpush1.msra.mxu0 %v2350
  %2467 = vmatprep.subr.mxu0 %v2355
  %2468 = vmatpush1.msra.mxu0 %v2354
  %2469 = vmatprep.subr.mxu0 %v2359
  %2470 = vmatpush1.msra.mxu0 %v2358
  %2471 = vmatprep.subr.mxu0 %v2363
  %2472 = vmatpush1.msra.mxu0 %v2362
  %2473 = vmatprep.subr.mxu0 0.0
  %2474 = vmatpush1.msra.mxu0 0.0
  %2475 = vmatprep.subr.mxu0 0.0
  %2476 = vmatpush1.msra.mxu0 0.0
  %2477 = vmatprep.subr.mxu0 0.0
  %2478 = vmatpush1.msra.mxu0 0.0
  %2479 = vmatprep.subr.mxu0 0.0
  %2480 = vmatpush1.msra.mxu0 0.0
  %2481 = vmatprep.subr.mxu0 0.0
  %2482 = vmatpush1.msra.mxu0 0.0
  %2483 = vmatprep.subr.mxu0 0.0
  %2484 = vmatpush1.msra.mxu0 0.0
  %2485 = vmatprep.subr.mxu0 0.0
  %2486 = vmatpush1.msra.mxu0 0.0
  %2487 = vmatprep.subr.mxu0 0.0
  %2488 = vmatpush1.msra.mxu0 0.0
  %2489 = vmatprep.subr.mxu0 0.0
  %2490 = vmatpush1.msra.mxu0 0.0
  %2491 = vmatprep.subr.mxu0 0.0
  %2492 = vmatpush1.msra.mxu0 0.0
  %2493 = vmatprep.subr.mxu0 0.0
  %2494 = vmatpush1.msra.mxu0 0.0
  %2495 = vmatprep.subr.mxu0 0.0
  %2496 = vmatpush1.msra.mxu0 0.0
  %2497 = vmatprep.subr.mxu0 0.0
  %2498 = vmatpush1.msra.mxu0 0.0
  %2499 = vmatprep.subr.mxu0 0.0
  %2500 = vmatpush1.msra.mxu0 0.0
  %2501 = vmatprep.subr.mxu0 0.0
  %2502 = vmatpush1.msra.mxu0 0.0
  %2503 = vmatprep.subr.mxu0 0.0
  %2504 = vmatpush1.msra.mxu0 0.0
  %2505 = vmatprep.mubr.f32.mxu0 0.0
  %2506 = vmatmul.mubr.f32.gmra.mrb[0].mxu0 %v2298
  %v2507 = vpop.f32.mrb[0].mxu0
  %v2508 = vadd.f32 0.0, %v2507
  %v2509 = vpop.f32.mrb[0].mxu0
  %v2510 = vadd.f32 0.0, %v2509
  %2511 = vmatprep.mubr.f32.mxu0 0.0
  %2512 = vmatmul.mubr.f32.gmra.mrb[0].mxu0 %v2299
  %v2513 = vpop.f32.mrb[0].mxu0
  %v2514 = vadd.f32 0.0, %v2513
  %v2515 = vpop.f32.mrb[0].mxu0
  %v2516 = vadd.f32 0.0, %v2515
  %2517 = vdwg.mxu0
  %2518 = vrot.lane.b32.xlu0 %v1421, 17
  %v2519 = vpop.permute.xlu0 %2518
  %2520 = vrot.lane.b32.xlu0 %v1422, 17
  %v2521 = vpop.permute.xlu0 %2520
  %2522 = vrot.lane.b32.xlu0 %v1423, 17
  %v2523 = vpop.permute.xlu0 %2522
  %2524 = vrot.lane.b32.xlu0 %v1424, 17
  %v2525 = vpop.permute.xlu0 %2524
  %v2526 = vsel %vm157, %v2523, %v2525
  %v2527 = vsel %vm157, %v2521, %v2523
  %v2528 = vsel %vm157, %v2519, %v2521
  %v2529 = vsel %vm157, %v2525, %v2519
  %v2530 = vld [vmem:[%s10] sm:$0xf]
  %v2531 = vmul.f32 %v2529, %v139
  %v2532 = vmul.f32 %v2528, %v140
  %v2533 = vmul.f32 %v2527, %v141
  %v2534 = vmul.f32 %v2526, %v142
  %v2535 = vpack.c.bf16 %v2531, %v2531
  %v2536 = vpack.c.bf16 %v2532, %v2532
  %v2537 = vpack.c.bf16 %v2533, %v2533
  %v2538 = vpack.c.bf16 %v2534, %v2534
  %2539 = vrot.lane.b32.xlu0 %v2431, 17
  %v2540 = vpop.permute.xlu0 %2539
  %2541 = vrot.lane.b32.xlu0 %v2437, 17
  %v2542 = vpop.permute.xlu0 %2541
  %2543 = vrot.lane.b32.xlu0 %v2433, 17
  %v2544 = vpop.permute.xlu0 %2543
  %2545 = vrot.lane.b32.xlu0 %v2439, 17
  %v2546 = vpop.permute.xlu0 %2545
  %2547 = vrot.lane.b32.xlu0 %v2508, 17
  %v2548 = vpop.permute.xlu0 %2547
  %2549 = vrot.lane.b32.xlu0 %v2514, 17
  %v2550 = vpop.permute.xlu0 %2549
  %2551 = vrot.lane.b32.xlu0 %v2510, 17
  %v2552 = vpop.permute.xlu0 %2551
  %2553 = vrot.lane.b32.xlu0 %v2516, 17
  %v2554 = vpop.permute.xlu0 %2553
  %v2555 = vsel %vm157, %v2548, %v2552
  %v2556 = vsel %vm157, %v2550, %v2554
  %v2557 = vsel %vm157, %v2544, %v2548
  %v2558 = vsel %vm157, %v2546, %v2550
  %v2559 = vsel %vm157, %v2540, %v2544
  %v2560 = vsel %vm157, %v2542, %v2546
  %v2561 = vsel %vm157, %v2552, %v2540
  %v2562 = vsel %vm157, %v2554, %v2542
  %v2563 = vld [vmem:[%s11] sm:$0xf]
  %v2564 = vmul.f32 %v2561, %v139
  %v2565 = vmul.f32 %v2559, %v140
  %v2566 = vmul.f32 %v2557, %v141
  %v2567 = vmul.f32 %v2555, %v142
  %v2568 = vmul.f32 %v2562, %v139
  %v2569 = vmul.f32 %v2560, %v140
  %v2570 = vmul.f32 %v2558, %v141
  %v2571 = vmul.f32 %v2556, %v142
  %v2572 = vpack.c.bf16 %v2568, %v2564
  %v2573 = vpack.c.bf16 %v2569, %v2565
  %v2574 = vpack.c.bf16 %v2570, %v2566
  %v2575 = vpack.c.bf16 %v2571, %v2567
  %vm2576 = vcmask 130048
  %v2578 = vsel %vm2576, %v2563, 0
  %2580 = vmatprep.subr.bf16.mxu0 %v2573
  %2581 = vmatpush1.bf16.msra.mxu0 %v2572
  %2582 = vmatprep.subr.bf16.mxu0 0
  %2583 = vmatpush1.bf16.msra.mxu0 0
  %2584 = vmatprep.subr.bf16.mxu0 0
  %2585 = vmatpush1.bf16.msra.mxu0 0
  %2586 = vmatprep.subr.bf16.mxu0 0
  %2587 = vmatpush1.bf16.msra.mxu0 0
  %2588 = vmatprep.subr.bf16.mxu0 0
  %2589 = vmatpush1.bf16.msra.mxu0 0
  %2590 = vmatprep.subr.bf16.mxu0 0
  %2591 = vmatpush1.bf16.msra.mxu0 0
  %2592 = vmatprep.subr.bf16.mxu0 0
  %2593 = vmatpush1.bf16.msra.mxu0 0
  %2594 = vmatprep.subr.bf16.mxu0 0
  %2595 = vmatpush1.bf16.msra.mxu0 0
  %2596 = vmatprep.subr.bf16.mxu0 0
  %2597 = vmatpush1.bf16.msra.mxu0 0
  %2598 = vmatprep.subr.bf16.mxu0 0
  %2599 = vmatpush1.bf16.msra.mxu0 0
  %2600 = vmatprep.subr.bf16.mxu0 0
  %2601 = vmatpush1.bf16.msra.mxu0 0
  %2602 = vmatprep.subr.bf16.mxu0 0
  %2603 = vmatpush1.bf16.msra.mxu0 0
  %2604 = vmatprep.subr.bf16.mxu0 0
  %2605 = vmatpush1.bf16.msra.mxu0 0
  %2606 = vmatprep.subr.bf16.mxu0 0
  %2607 = vmatpush1.bf16.msra.mxu0 0
  %2608 = vmatprep.subr.bf16.mxu0 0
  %2609 = vmatpush1.bf16.msra.mxu0 0
  %2610 = vmatprep.subr.bf16.mxu0 0
  %2611 = vmatpush1.bf16.msra.mxu0 0
  %2612 = vmatprep.mubr.bf16.mxu0 0
  %2613 = vmatmul.mubr.bf16.gmra.mrb[0].mxu0 %v2578
  %v2614 = vpop.f32.mrb[0].mxu0
  %v2615 = vadd.f32 0.0, %v2614
  %v2616 = vpop.f32.mrb[0].mxu0
  %v2617 = vadd.f32 0.0, %v2616
  %v2618 = vpop.f32.mrb[0].mxu0
  %v2619 = vpop.f32.mrb[0].mxu0
  %2620 = vdwg.mxu0
  %2621 = vmatprep.subr.bf16.mxu0 %v2575
  %2622 = vmatpush1.bf16.msra.mxu0 %v2574
  %2623 = vmatprep.subr.bf16.mxu0 0
  %2624 = vmatpush1.bf16.msra.mxu0 0
  %2625 = vmatprep.subr.bf16.mxu0 0
  %2626 = vmatpush1.bf16.msra.mxu0 0
  %2627 = vmatprep.subr.bf16.mxu0 0
  %2628 = vmatpush1.bf16.msra.mxu0 0
  %2629 = vmatprep.subr.bf16.mxu0 0
  %2630 = vmatpush1.bf16.msra.mxu0 0
  %2631 = vmatprep.subr.bf16.mxu0 0
  %2632 = vmatpush1.bf16.msra.mxu0 0
  %2633 = vmatprep.subr.bf16.mxu0 0
  %2634 = vmatpush1.bf16.msra.mxu0 0
  %2635 = vmatprep.subr.bf16.mxu0 0
  %2636 = vmatpush1.bf16.msra.mxu0 0
  %2637 = vmatprep.subr.bf16.mxu0 0
  %2638 = vmatpush1.bf16.msra.mxu0 0
  %2639 = vmatprep.subr.bf16.mxu0 0
  %2640 = vmatpush1.bf16.msra.mxu0 0
  %2641 = vmatprep.subr.bf16.mxu0 0
  %2642 = vmatpush1.bf16.msra.mxu0 0
  %2643 = vmatprep.subr.bf16.mxu0 0
  %2644 = vmatpush1.bf16.msra.mxu0 0
  %2645 = vmatprep.subr.bf16.mxu0 0
  %2646 = vmatpush1.bf16.msra.mxu0 0
  %2647 = vmatprep.subr.bf16.mxu0 0
  %2648 = vmatpush1.bf16.msra.mxu0 0
  %2649 = vmatprep.subr.bf16.mxu0 0
  %2650 = vmatpush1.bf16.msra.mxu0 0
  %2651 = vmatprep.subr.bf16.mxu0 0
  %2652 = vmatpush1.bf16.msra.mxu0 0
  %2653 = vmatprep.mubr.bf16.mxu0 0
  %2654 = vmatmul.mubr.bf16.gmra.mrb[0].mxu0 %v2578
  %v2655 = vpop.f32.mrb[0].mxu0
  %v2656 = vadd.f32 0.0, %v2655
  %v2657 = vpop.f32.mrb[0].mxu0
  %v2658 = vadd.f32 0.0, %v2657
  %v2659 = vpop.f32.mrb[0].mxu0
  %v2660 = vpop.f32.mrb[0].mxu0
  %2661 = vdwg.mxu0
  %v2663 = vsel %vm1713, %v2530, 0
  %v2666 = vsel %vm1717, %v2535, 0
  %v2669 = vsel %vm1717, %v2536, 0
  %v2672 = vsel %vm1717, %v2537, 0
  %v2675 = vsel %vm1717, %v2538, 0
  %2677 = vmatprep.subr.bf16.mxu0 %v2669
  %2678 = vmatpush1.bf16.msra.mxu0 %v2666
  %2679 = vmatprep.subr.bf16.mxu0 0
  %2680 = vmatpush1.bf16.msra.mxu0 0
  %2681 = vmatprep.subr.bf16.mxu0 0
  %2682 = vmatpush1.bf16.msra.mxu0 0
  %2683 = vmatprep.subr.bf16.mxu0 0
  %2684 = vmatpush1.bf16.msra.mxu0 0
  %2685 = vmatprep.subr.bf16.mxu0 0
  %2686 = vmatpush1.bf16.msra.mxu0 0
  %2687 = vmatprep.subr.bf16.mxu0 0
  %2688 = vmatpush1.bf16.msra.mxu0 0
  %2689 = vmatprep.subr.bf16.mxu0 0
  %2690 = vmatpush1.bf16.msra.mxu0 0
  %2691 = vmatprep.subr.bf16.mxu0 0
  %2692 = vmatpush1.bf16.msra.mxu0 0
  %2693 = vmatprep.subr.bf16.mxu0 0
  %2694 = vmatpush1.bf16.msra.mxu0 0
  %2695 = vmatprep.subr.bf16.mxu0 0
  %2696 = vmatpush1.bf16.msra.mxu0 0
  %2697 = vmatprep.subr.bf16.mxu0 0
  %2698 = vmatpush1.bf16.msra.mxu0 0
  %2699 = vmatprep.subr.bf16.mxu0 0
  %2700 = vmatpush1.bf16.msra.mxu0 0
  %2701 = vmatprep.subr.bf16.mxu0 0
  %2702 = vmatpush1.bf16.msra.mxu0 0
  %2703 = vmatprep.subr.bf16.mxu0 0
  %2704 = vmatpush1.bf16.msra.mxu0 0
  %2705 = vmatprep.subr.bf16.mxu0 0
  %2706 = vmatpush1.bf16.msra.mxu0 0
  %2707 = vmatprep.subr.bf16.mxu0 0
  %2708 = vmatpush1.bf16.msra.mxu0 0
  %2709 = vmatprep.mubr.bf16.mxu0 0
  %2710 = vmatmul.mubr.bf16.gmra.mrb[0].mxu0 %v2663
  %v2711 = vpop.f32.mrb[0].mxu0
  %v2712 = vadd.f32 %v2615, %v2711
  %v2713 = vpop.f32.mrb[0].mxu0
  %v2714 = vadd.f32 %v2617, %v2713
  %v2715 = vpop.f32.mrb[0].mxu0
  %v2716 = vpop.f32.mrb[0].mxu0
  %2717 = vdwg.mxu0
  %2718 = vmatprep.subr.bf16.mxu0 %v2675
  %2719 = vmatpush1.bf16.msra.mxu0 %v2672
  %2720 = vmatprep.subr.bf16.mxu0 0
  %2721 = vmatpush1.bf16.msra.mxu0 0
  %2722 = vmatprep.subr.bf16.mxu0 0
  %2723 = vmatpush1.bf16.msra.mxu0 0
  %2724 = vmatprep.subr.bf16.mxu0 0
  %2725 = vmatpush1.bf16.msra.mxu0 0
  %2726 = vmatprep.subr.bf16.mxu0 0
  %2727 = vmatpush1.bf16.msra.mxu0 0
  %2728 = vmatprep.subr.bf16.mxu0 0
  %2729 = vmatpush1.bf16.msra.mxu0 0
  %2730 = vmatprep.subr.bf16.mxu0 0
  %2731 = vmatpush1.bf16.msra.mxu0 0
  %2732 = vmatprep.subr.bf16.mxu0 0
  %2733 = vmatpush1.bf16.msra.mxu0 0
  %2734 = vmatprep.subr.bf16.mxu0 0
  %2735 = vmatpush1.bf16.msra.mxu0 0
  %2736 = vmatprep.subr.bf16.mxu0 0
  %2737 = vmatpush1.bf16.msra.mxu0 0
  %2738 = vmatprep.subr.bf16.mxu0 0
  %2739 = vmatpush1.bf16.msra.mxu0 0
  %2740 = vmatprep.subr.bf16.mxu0 0
  %2741 = vmatpush1.bf16.msra.mxu0 0
  %2742 = vmatprep.subr.bf16.mxu0 0
  %2743 = vmatpush1.bf16.msra.mxu0 0
  %2744 = vmatprep.subr.bf16.mxu0 0
  %2745 = vmatpush1.bf16.msra.mxu0 0
  %2746 = vmatprep.subr.bf16.mxu0 0
  %2747 = vmatpush1.bf16.msra.mxu0 0
  %2748 = vmatprep.subr.bf16.mxu0 0
  %2749 = vmatpush1.bf16.msra.mxu0 0
  %2750 = vmatprep.mubr.bf16.mxu0 0
  %2751 = vmatmul.mubr.bf16.gmra.mrb[0].mxu0 %v2663
  %v2752 = vpop.f32.mrb[0].mxu0
  %v2753 = vadd.f32 %v2656, %v2752
  %v2754 = vpop.f32.mrb[0].mxu0
  %v2755 = vadd.f32 %v2658, %v2754
  %v2756 = vpop.f32.mrb[0].mxu0
  %v2757 = vpop.f32.mrb[0].mxu0
  %2758 = vdwg.mxu0
  %2759 = vrot.lane.b32.xlu0 %v1421, 16
  %v2760 = vpop.permute.xlu0 %2759
  %2761 = vrot.lane.b32.xlu0 %v1422, 16
  %v2762 = vpop.permute.xlu0 %2761
  %2763 = vrot.lane.b32.xlu0 %v1423, 16
  %v2764 = vpop.permute.xlu0 %2763
  %2765 = vrot.lane.b32.xlu0 %v1424, 16
  %v2766 = vpop.permute.xlu0 %2765
  %v2767 = vsel %vm199, %v2764, %v2766
  %v2768 = vsel %vm199, %v2762, %v2764
  %v2769 = vsel %vm199, %v2760, %v2762
  %v2770 = vsel %vm199, %v2766, %v2760
  %s2771 = scalar_lea.vmem %s10, 4
  %v2772 = vld [vmem:[%s2771] sm:$0xf]
  %v2773 = vmul.f32 %v2770, %v187
  %v2774 = vmul.f32 %v2769, %v188
  %v2775 = vmul.f32 %v2768, %v189
  %v2776 = vmul.f32 %v2767, %v190
  %v2777 = vpack.c.bf16 %v2773, %v2773
  %v2778 = vpack.c.bf16 %v2774, %v2774
  %v2779 = vpack.c.bf16 %v2775, %v2775
  %v2780 = vpack.c.bf16 %v2776, %v2776
  %v2782 = vsel %vm1713, %v2772, 0
  %v2785 = vsel %vm1717, %v2777, 0
  %v2788 = vsel %vm1717, %v2778, 0
  %v2791 = vsel %vm1717, %v2779, 0
  %v2794 = vsel %vm1717, %v2780, 0
  %2796 = vmatprep.subr.bf16.mxu0 %v2788
  %2797 = vmatpush1.bf16.msra.mxu0 %v2785
  %2798 = vmatprep.subr.bf16.mxu0 0
  %2799 = vmatpush1.bf16.msra.mxu0 0
  %2800 = vmatprep.subr.bf16.mxu0 0
  %2801 = vmatpush1.bf16.msra.mxu0 0
  %2802 = vmatprep.subr.bf16.mxu0 0
  %2803 = vmatpush1.bf16.msra.mxu0 0
  %2804 = vmatprep.subr.bf16.mxu0 0
  %2805 = vmatpush1.bf16.msra.mxu0 0
  %2806 = vmatprep.subr.bf16.mxu0 0
  %2807 = vmatpush1.bf16.msra.mxu0 0
  %2808 = vmatprep.subr.bf16.mxu0 0
  %2809 = vmatpush1.bf16.msra.mxu0 0
  %2810 = vmatprep.subr.bf16.mxu0 0
  %2811 = vmatpush1.bf16.msra.mxu0 0
  %2812 = vmatprep.subr.bf16.mxu0 0
  %2813 = vmatpush1.bf16.msra.mxu0 0
  %2814 = vmatprep.subr.bf16.mxu0 0
  %2815 = vmatpush1.bf16.msra.mxu0 0
  %2816 = vmatprep.subr.bf16.mxu0 0
  %2817 = vmatpush1.bf16.msra.mxu0 0
  %2818 = vmatprep.subr.bf16.mxu0 0
  %2819 = vmatpush1.bf16.msra.mxu0 0
  %2820 = vmatprep.subr.bf16.mxu0 0
  %2821 = vmatpush1.bf16.msra.mxu0 0
  %2822 = vmatprep.subr.bf16.mxu0 0
  %2823 = vmatpush1.bf16.msra.mxu0 0
  %2824 = vmatprep.subr.bf16.mxu0 0
  %2825 = vmatpush1.bf16.msra.mxu0 0
  %2826 = vmatprep.subr.bf16.mxu0 0
  %2827 = vmatpush1.bf16.msra.mxu0 0
  %2828 = vmatprep.mubr.bf16.mxu0 0
  %2829 = vmatmul.mubr.bf16.gmra.mrb[0].mxu0 %v2782
  %v2830 = vpop.f32.mrb[0].mxu0
  %v2831 = vadd.f32 0.0, %v2830
  %v2832 = vpop.f32.mrb[0].mxu0
  %v2833 = vadd.f32 0.0, %v2832
  %v2834 = vpop.f32.mrb[0].mxu0
  %v2835 = vpop.f32.mrb[0].mxu0
  %2836 = vdwg.mxu0
  %2837 = vmatprep.subr.bf16.mxu0 %v2794
  %2838 = vmatpush1.bf16.msra.mxu0 %v2791
  %2839 = vmatprep.subr.bf16.mxu0 0
  %2840 = vmatpush1.bf16.msra.mxu0 0
  %2841 = vmatprep.subr.bf16.mxu0 0
  %2842 = vmatpush1.bf16.msra.mxu0 0
  %2843 = vmatprep.subr.bf16.mxu0 0
  %2844 = vmatpush1.bf16.msra.mxu0 0
  %2845 = vmatprep.subr.bf16.mxu0 0
  %2846 = vmatpush1.bf16.msra.mxu0 0
  %2847 = vmatprep.subr.bf16.mxu0 0
  %2848 = vmatpush1.bf16.msra.mxu0 0
  %2849 = vmatprep.subr.bf16.mxu0 0
  %2850 = vmatpush1.bf16.msra.mxu0 0
  %2851 = vmatprep.subr.bf16.mxu0 0
  %2852 = vmatpush1.bf16.msra.mxu0 0
  %2853 = vmatprep.subr.bf16.mxu0 0
  %2854 = vmatpush1.bf16.msra.mxu0 0
  %2855 = vmatprep.subr.bf16.mxu0 0
  %2856 = vmatpush1.bf16.msra.mxu0 0
  %2857 = vmatprep.subr.bf16.mxu0 0
  %2858 = vmatpush1.bf16.msra.mxu0 0
  %2859 = vmatprep.subr.bf16.mxu0 0
  %2860 = vmatpush1.bf16.msra.mxu0 0
  %2861 = vmatprep.subr.bf16.mxu0 0
  %2862 = vmatpush1.bf16.msra.mxu0 0
  %2863 = vmatprep.subr.bf16.mxu0 0
  %2864 = vmatpush1.bf16.msra.mxu0 0
  %2865 = vmatprep.subr.bf16.mxu0 0
  %2866 = vmatpush1.bf16.msra.mxu0 0
  %2867 = vmatprep.subr.bf16.mxu0 0
  %2868 = vmatpush1.bf16.msra.mxu0 0
  %2869 = vmatprep.mubr.bf16.mxu0 0
  %2870 = vmatmul.mubr.bf16.gmra.mrb[0].mxu0 %v2782
  %v2871 = vpop.f32.mrb[0].mxu0
  %v2872 = vadd.f32 0.0, %v2871
  %v2873 = vpop.f32.mrb[0].mxu0
  %v2874 = vadd.f32 0.0, %v2873
  %v2875 = vpop.f32.mrb[0].mxu0
  %v2876 = vpop.f32.mrb[0].mxu0
  %2877 = vdwg.mxu0
  %v2878 = vadd.f32 %v2712, %v2831
  %v2879 = vadd.f32 %v2714, %v2833
  %v2880 = vadd.f32 %v2753, %v2872
  %v2881 = vadd.f32 %v2755, %v2874
  %2882 = vrot.lane.b32.xlu0 %v2431, 16
  %v2883 = vpop.permute.xlu0 %2882
  %2884 = vrot.lane.b32.xlu0 %v2437, 16
  %v2885 = vpop.permute.xlu0 %2884
  %2886 = vrot.lane.b32.xlu0 %v2433, 16
  %v2887 = vpop.permute.xlu0 %2886
  %2888 = vrot.lane.b32.xlu0 %v2439, 16
  %v2889 = vpop.permute.xlu0 %2888
  %2890 = vrot.lane.b32.xlu0 %v2508, 16
  %v2891 = vpop.permute.xlu0 %2890
  %2892 = vrot.lane.b32.xlu0 %v2514, 16
  %v2893 = vpop.permute.xlu0 %2892
  %2894 = vrot.lane.b32.xlu0 %v2510, 16
  %v2895 = vpop.permute.xlu0 %2894
  %2896 = vrot.lane.b32.xlu0 %v2516, 16
  %v2897 = vpop.permute.xlu0 %2896
  %v2898 = vsel %vm199, %v2891, %v2895
  %v2899 = vsel %vm199, %v2893, %v2897
  %v2900 = vsel %vm199, %v2887, %v2891
  %v2901 = vsel %vm199, %v2889, %v2893
  %v2902 = vsel %vm199, %v2883, %v2887
  %v2903 = vsel %vm199, %v2885, %v2889
  %v2904 = vsel %vm199, %v2895, %v2883
  %v2905 = vsel %vm199, %v2897, %v2885
  %s2906 = scalar_lea.vmem %s11, 4
  %v2907 = vld [vmem:[%s2906] sm:$0xf]
  %v2908 = vmul.f32 %v2904, %v187
  %v2909 = vmul.f32 %v2902, %v188
  %v2910 = vmul.f32 %v2900, %v189
  %v2911 = vmul.f32 %v2898, %v190
  %v2912 = vmul.f32 %v2905, %v187
  %v2913 = vmul.f32 %v2903, %v188
  %v2914 = vmul.f32 %v2901, %v189
  %v2915 = vmul.f32 %v2899, %v190
  %v2916 = vpack.c.bf16 %v2912, %v2908
  %v2917 = vpack.c.bf16 %v2913, %v2909
  %v2918 = vpack.c.bf16 %v2914, %v2910
  %v2919 = vpack.c.bf16 %v2915, %v2911
  %v2921 = vsel %vm2576, %v2907, 0
  %2923 = vmatprep.subr.bf16.mxu0 %v2917
  %2924 = vmatpush1.bf16.msra.mxu0 %v2916
  %2925 = vmatprep.subr.bf16.mxu0 0
  %2926 = vmatpush1.bf16.msra.mxu0 0
  %2927 = vmatprep.subr.bf16.mxu0 0
  %2928 = vmatpush1.bf16.msra.mxu0 0
  %2929 = vmatprep.subr.bf16.mxu0 0
  %2930 = vmatpush1.bf16.msra.mxu0 0
  %2931 = vmatprep.subr.bf16.mxu0 0
  %2932 = vmatpush1.bf16.msra.mxu0 0
  %2933 = vmatprep.subr.bf16.mxu0 0
  %2934 = vmatpush1.bf16.msra.mxu0 0
  %2935 = vmatprep.subr.bf16.mxu0 0
  %2936 = vmatpush1.bf16.msra.mxu0 0
  %2937 = vmatprep.subr.bf16.mxu0 0
  %2938 = vmatpush1.bf16.msra.mxu0 0
  %2939 = vmatprep.subr.bf16.mxu0 0
  %2940 = vmatpush1.bf16.msra.mxu0 0
  %2941 = vmatprep.subr.bf16.mxu0 0
  %2942 = vmatpush1.bf16.msra.mxu0 0
  %2943 = vmatprep.subr.bf16.mxu0 0
  %2944 = vmatpush1.bf16.msra.mxu0 0
  %2945 = vmatprep.subr.bf16.mxu0 0
  %2946 = vmatpush1.bf16.msra.mxu0 0
  %2947 = vmatprep.subr.bf16.mxu0 0
  %2948 = vmatpush1.bf16.msra.mxu0 0
  %2949 = vmatprep.subr.bf16.mxu0 0
  %2950 = vmatpush1.bf16.msra.mxu0 0
  %2951 = vmatprep.subr.bf16.mxu0 0
  %2952 = vmatpush1.bf16.msra.mxu0 0
  %2953 = vmatprep.subr.bf16.mxu0 0
  %2954 = vmatpush1.bf16.msra.mxu0 0
  %2955 = vmatprep.mubr.bf16.mxu0 0
  %2956 = vmatmul.mubr.bf16.gmra.mrb[0].mxu0 %v2921
  %v2957 = vpop.f32.mrb[0].mxu0
  %v2958 = vadd.f32 0.0, %v2957
  %v2959 = vpop.f32.mrb[0].mxu0
  %v2960 = vadd.f32 0.0, %v2959
  %v2961 = vpop.f32.mrb[0].mxu0
  %v2962 = vpop.f32.mrb[0].mxu0
  %2963 = vdwg.mxu0
  %2964 = vmatprep.subr.bf16.mxu0 %v2919
  %2965 = vmatpush1.bf16.msra.mxu0 %v2918
  %2966 = vmatprep.subr.bf16.mxu0 0
  %2967 = vmatpush1.bf16.msra.mxu0 0
  %2968 = vmatprep.subr.bf16.mxu0 0
  %2969 = vmatpush1.bf16.msra.mxu0 0
  %2970 = vmatprep.subr.bf16.mxu0 0
  %2971 = vmatpush1.bf16.msra.mxu0 0
  %2972 = vmatprep.subr.bf16.mxu0 0
  %2973 = vmatpush1.bf16.msra.mxu0 0
  %2974 = vmatprep.subr.bf16.mxu0 0
  %2975 = vmatpush1.bf16.msra.mxu0 0
  %2976 = vmatprep.subr.bf16.mxu0 0
  %2977 = vmatpush1.bf16.msra.mxu0 0
  %2978 = vmatprep.subr.bf16.mxu0 0
  %2979 = vmatpush1.bf16.msra.mxu0 0
  %2980 = vmatprep.subr.bf16.mxu0 0
  %2981 = vmatpush1.bf16.msra.mxu0 0
  %2982 = vmatprep.subr.bf16.mxu0 0
  %2983 = vmatpush1.bf16.msra.mxu0 0
  %2984 = vmatprep.subr.bf16.mxu0 0
  %2985 = vmatpush1.bf16.msra.mxu0 0
  %2986 = vmatprep.subr.bf16.mxu0 0
  %2987 = vmatpush1.bf16.msra.mxu0 0
  %2988 = vmatprep.subr.bf16.mxu0 0
  %2989 = vmatpush1.bf16.msra.mxu0 0
  %2990 = vmatprep.subr.bf16.mxu0 0
  %2991 = vmatpush1.bf16.msra.mxu0 0
  %2992 = vmatprep.subr.bf16.mxu0 0
  %2993 = vmatpush1.bf16.msra.mxu0 0
  %2994 = vmatprep.subr.bf16.mxu0 0
  %2995 = vmatpush1.bf16.msra.mxu0 0
  %2996 = vmatprep.mubr.bf16.mxu0 0
  %2997 = vmatmul.mubr.bf16.gmra.mrb[0].mxu0 %v2921
  %v2998 = vpop.f32.mrb[0].mxu0
  %v2999 = vadd.f32 0.0, %v2998
  %v3000 = vpop.f32.mrb[0].mxu0
  %v3001 = vadd.f32 0.0, %v3000
  %v3002 = vpop.f32.mrb[0].mxu0
  %v3003 = vpop.f32.mrb[0].mxu0
  %3004 = vdwg.mxu0
  %v3005 = vadd.f32 %v2878, %v2958
  %v3006 = vadd.f32 %v2879, %v2960
  %v3007 = vadd.f32 %v2880, %v2999
  %v3008 = vadd.f32 %v2881, %v3001
  %3009 = vrot.lane.b32.xlu0 %v1421, 15
  %v3010 = vpop.permute.xlu0 %3009
  %3011 = vrot.lane.b32.xlu0 %v1422, 15
  %v3012 = vpop.permute.xlu0 %3011
  %3013 = vrot.lane.b32.xlu0 %v1423, 15
  %v3014 = vpop.permute.xlu0 %3013
  %3015 = vrot.lane.b32.xlu0 %v1424, 15
  %v3016 = vpop.permute.xlu0 %3015
  %v3017 = vsel %vm442, %v3014, %v3016
  %v3018 = vsel %vm442, %v3012, %v3014
  %v3019 = vsel %vm442, %v3010, %v3012
  %v3020 = vsel %vm442, %v3016, %v3010
  %s3021 = scalar_lea.vmem %s10, 8
  %v3022 = vld [vmem:[%s3021] sm:$0xf]
  %v3023 = vmul.f32 %v3020, %v430
  %v3024 = vmul.f32 %v3019, %v431
  %v3025 = vmul.f32 %v3018, %v432
  %v3026 = vmul.f32 %v3017, %v433
  %v3027 = vpack.c.bf16 %v3023, %v3023
  %v3028 = vpack.c.bf16 %v3024, %v3024
  %v3029 = vpack.c.bf16 %v3025, %v3025
  %v3030 = vpack.c.bf16 %v3026, %v3026
  %v3032 = vsel %vm1713, %v3022, 0
  %v3035 = vsel %vm1717, %v3027, 0
  %v3038 = vsel %vm1717, %v3028, 0
  %v3041 = vsel %vm1717, %v3029, 0
  %v3044 = vsel %vm1717, %v3030, 0
  %3046 = vmatprep.subr.bf16.mxu0 %v3038
  %3047 = vmatpush1.bf16.msra.mxu0 %v3035
  %3048 = vmatprep.subr.bf16.mxu0 0
  %3049 = vmatpush1.bf16.msra.mxu0 0
  %3050 = vmatprep.subr.bf16.mxu0 0
  %3051 = vmatpush1.bf16.msra.mxu0 0
  %3052 = vmatprep.subr.bf16.mxu0 0
  %3053 = vmatpush1.bf16.msra.mxu0 0
  %3054 = vmatprep.subr.bf16.mxu0 0
  %3055 = vmatpush1.bf16.msra.mxu0 0
  %3056 = vmatprep.subr.bf16.mxu0 0
  %3057 = vmatpush1.bf16.msra.mxu0 0
  %3058 = vmatprep.subr.bf16.mxu0 0
  %3059 = vmatpush1.bf16.msra.mxu0 0
  %3060 = vmatprep.subr.bf16.mxu0 0
  %3061 = vmatpush1.bf16.msra.mxu0 0
  %3062 = vmatprep.subr.bf16.mxu0 0
  %3063 = vmatpush1.bf16.msra.mxu0 0
  %3064 = vmatprep.subr.bf16.mxu0 0
  %3065 = vmatpush1.bf16.msra.mxu0 0
  %3066 = vmatprep.subr.bf16.mxu0 0
  %3067 = vmatpush1.bf16.msra.mxu0 0
  %3068 = vmatprep.subr.bf16.mxu0 0
  %3069 = vmatpush1.bf16.msra.mxu0 0
  %3070 = vmatprep.subr.bf16.mxu0 0
  %3071 = vmatpush1.bf16.msra.mxu0 0
  %3072 = vmatprep.subr.bf16.mxu0 0
  %3073 = vmatpush1.bf16.msra.mxu0 0
  %3074 = vmatprep.subr.bf16.mxu0 0
  %3075 = vmatpush1.bf16.msra.mxu0 0
  %3076 = vmatprep.subr.bf16.mxu0 0
  %3077 = vmatpush1.bf16.msra.mxu0 0
  %3078 = vmatprep.mubr.bf16.mxu0 0
  %3079 = vmatmul.mubr.bf16.gmra.mrb[0].mxu0 %v3032
  %v3080 = vpop.f32.mrb[0].mxu0
  %v3081 = vadd.f32 0.0, %v3080
  %v3082 = vpop.f32.mrb[0].mxu0
  %v3083 = vadd.f32 0.0, %v3082
  %v3084 = vpop.f32.mrb[0].mxu0
  %v3085 = vpop.f32.mrb[0].mxu0
  %3086 = vdwg.mxu0
  %3087 = vmatprep.subr.bf16.mxu0 %v3044
  %3088 = vmatpush1.bf16.msra.mxu0 %v3041
  %3089 = vmatprep.subr.bf16.mxu0 0
  %3090 = vmatpush1.bf16.msra.mxu0 0
  %3091 = vmatprep.subr.bf16.mxu0 0
  %3092 = vmatpush1.bf16.msra.mxu0 0
  %3093 = vmatprep.subr.bf16.mxu0 0
  %3094 = vmatpush1.bf16.msra.mxu0 0
  %3095 = vmatprep.subr.bf16.mxu0 0
  %3096 = vmatpush1.bf16.msra.mxu0 0
  %3097 = vmatprep.subr.bf16.mxu0 0
  %3098 = vmatpush1.bf16.msra.mxu0 0
  %3099 = vmatprep.subr.bf16.mxu0 0
  %3100 = vmatpush1.bf16.msra.mxu0 0
  %3101 = vmatprep.subr.bf16.mxu0 0
  %3102 = vmatpush1.bf16.msra.mxu0 0
  %3103 = vmatprep.subr.bf16.mxu0 0
  %3104 = vmatpush1.bf16.msra.mxu0 0
  %3105 = vmatprep.subr.bf16.mxu0 0
  %3106 = vmatpush1.bf16.msra.mxu0 0
  %3107 = vmatprep.subr.bf16.mxu0 0
  %3108 = vmatpush1.bf16.msra.mxu0 0
  %3109 = vmatprep.subr.bf16.mxu0 0
  %3110 = vmatpush1.bf16.msra.mxu0 0
  %3111 = vmatprep.subr.bf16.mxu0 0
  %3112 = vmatpush1.bf16.msra.mxu0 0
  %3113 = vmatprep.subr.bf16.mxu0 0
  %3114 = vmatpush1.bf16.msra.mxu0 0
  %3115 = vmatprep.subr.bf16.mxu0 0
  %3116 = vmatpush1.bf16.msra.mxu0 0
  %3117 = vmatprep.subr.bf16.mxu0 0
  %3118 = vmatpush1.bf16.msra.mxu0 0
  %3119 = vmatprep.mubr.bf16.mxu0 0
  %3120 = vmatmul.mubr.bf16.gmra.mrb[0].mxu0 %v3032
  %v3121 = vpop.f32.mrb[0].mxu0
  %v3122 = vadd.f32 0.0, %v3121
  %v3123 = vpop.f32.mrb[0].mxu0
  %v3124 = vadd.f32 0.0, %v3123
  %v3125 = vpop.f32.mrb[0].mxu0
  %v3126 = vpop.f32.mrb[0].mxu0
  %3127 = vdwg.mxu0
  %v3128 = vadd.f32 %v3005, %v3081
  %v3129 = vadd.f32 %v3006, %v3083
  %v3130 = vadd.f32 %v3007, %v3122
  %v3131 = vadd.f32 %v3008, %v3124
  %3132 = vrot.lane.b32.xlu0 %v2431, 15
  %v3133 = vpop.permute.xlu0 %3132
  %3134 = vrot.lane.b32.xlu0 %v2437, 15
  %v3135 = vpop.permute.xlu0 %3134
  %3136 = vrot.lane.b32.xlu0 %v2433, 15
  %v3137 = vpop.permute.xlu0 %3136
  %3138 = vrot.lane.b32.xlu0 %v2439, 15
  %v3139 = vpop.permute.xlu0 %3138
  %3140 = vrot.lane.b32.xlu0 %v2508, 15
  %v3141 = vpop.permute.xlu0 %3140
  %3142 = vrot.lane.b32.xlu0 %v2514, 15
  %v3143 = vpop.permute.xlu0 %3142
  %3144 = vrot.lane.b32.xlu0 %v2510, 15
  %v3145 = vpop.permute.xlu0 %3144
  %3146 = vrot.lane.b32.xlu0 %v2516, 15
  %v3147 = vpop.permute.xlu0 %3146
  %v3148 = vsel %vm442, %v3141, %v3145
  %v3149 = vsel %vm442, %v3143, %v3147
  %v3150 = vsel %vm442, %v3137, %v3141
  %v3151 = vsel %vm442, %v3139, %v3143
  %v3152 = vsel %vm442, %v3133, %v3137
  %v3153 = vsel %vm442, %v3135, %v3139
  %v3154 = vsel %vm442, %v3145, %v3133
  %v3155 = vsel %vm442, %v3147, %v3135
  %s3156 = scalar_lea.vmem %s11, 8
  %v3157 = vld [vmem:[%s3156] sm:$0xf]
  %v3158 = vmul.f32 %v3154, %v430
  %v3159 = vmul.f32 %v3152, %v431
  %v3160 = vmul.f32 %v3150, %v432
  %v3161 = vmul.f32 %v3148, %v433
  %v3162 = vmul.f32 %v3155, %v430
  %v3163 = vmul.f32 %v3153, %v431
  %v3164 = vmul.f32 %v3151, %v432
  %v3165 = vmul.f32 %v3149, %v433
  %v3166 = vpack.c.bf16 %v3162, %v3158
  %v3167 = vpack.c.bf16 %v3163, %v3159
  %v3168 = vpack.c.bf16 %v3164, %v3160
  %v3169 = vpack.c.bf16 %v3165, %v3161
  %v3171 = vsel %vm2576, %v3157, 0
  %3173 = vmatprep.subr.bf16.mxu0 %v3167
  %3174 = vmatpush1.bf16.msra.mxu0 %v3166
  %3175 = vmatprep.subr.bf16.mxu0 0
  %3176 = vmatpush1.bf16.msra.mxu0 0
  %3177 = vmatprep.subr.bf16.mxu0 0
  %3178 = vmatpush1.bf16.msra.mxu0 0
  %3179 = vmatprep.subr.bf16.mxu0 0
  %3180 = vmatpush1.bf16.msra.mxu0 0
  %3181 = vmatprep.subr.bf16.mxu0 0
  %3182 = vmatpush1.bf16.msra.mxu0 0
  %3183 = vmatprep.subr.bf16.mxu0 0
  %3184 = vmatpush1.bf16.msra.mxu0 0
  %3185 = vmatprep.subr.bf16.mxu0 0
  %3186 = vmatpush1.bf16.msra.mxu0 0
  %3187 = vmatprep.subr.bf16.mxu0 0
  %3188 = vmatpush1.bf16.msra.mxu0 0
  %3189 = vmatprep.subr.bf16.mxu0 0
  %3190 = vmatpush1.bf16.msra.mxu0 0
  %3191 = vmatprep.subr.bf16.mxu0 0
  %3192 = vmatpush1.bf16.msra.mxu0 0
  %3193 = vmatprep.subr.bf16.mxu0 0
  %3194 = vmatpush1.bf16.msra.mxu0 0
  %3195 = vmatprep.subr.bf16.mxu0 0
  %3196 = vmatpush1.bf16.msra.mxu0 0
  %3197 = vmatprep.subr.bf16.mxu0 0
  %3198 = vmatpush1.bf16.msra.mxu0 0
  %3199 = vmatprep.subr.bf16.mxu0 0
  %3200 = vmatpush1.bf16.msra.mxu0 0
  %3201 = vmatprep.subr.bf16.mxu0 0
  %3202 = vmatpush1.bf16.msra.mxu0 0
  %3203 = vmatprep.subr.bf16.mxu0 0
  %3204 = vmatpush1.bf16.msra.mxu0 0
  %3205 = vmatprep.mubr.bf16.mxu0 0
  %3206 = vmatmul.mubr.bf16.gmra.mrb[0].mxu0 %v3171
  %v3207 = vpop.f32.mrb[0].mxu0
  %v3208 = vadd.f32 0.0, %v3207
  %v3209 = vpop.f32.mrb[0].mxu0
  %v3210 = vadd.f32 0.0, %v3209
  %v3211 = vpop.f32.mrb[0].mxu0
  %v3212 = vpop.f32.mrb[0].mxu0
  %3213 = vdwg.mxu0
  %3214 = vmatprep.subr.bf16.mxu0 %v3169
  %3215 = vmatpush1.bf16.msra.mxu0 %v3168
  %3216 = vmatprep.subr.bf16.mxu0 0
  %3217 = vmatpush1.bf16.msra.mxu0 0
  %3218 = vmatprep.subr.bf16.mxu0 0
  %3219 = vmatpush1.bf16.msra.mxu0 0
  %3220 = vmatprep.subr.bf16.mxu0 0
  %3221 = vmatpush1.bf16.msra.mxu0 0
  %3222 = vmatprep.subr.bf16.mxu0 0
  %3223 = vmatpush1.bf16.msra.mxu0 0
  %3224 = vmatprep.subr.bf16.mxu0 0
  %3225 = vmatpush1.bf16.msra.mxu0 0
  %3226 = vmatprep.subr.bf16.mxu0 0
  %3227 = vmatpush1.bf16.msra.mxu0 0
  %3228 = vmatprep.subr.bf16.mxu0 0
  %3229 = vmatpush1.bf16.msra.mxu0 0
  %3230 = vmatprep.subr.bf16.mxu0 0
  %3231 = vmatpush1.bf16.msra.mxu0 0
  %3232 = vmatprep.subr.bf16.mxu0 0
  %3233 = vmatpush1.bf16.msra.mxu0 0
  %3234 = vmatprep.subr.bf16.mxu0 0
  %3235 = vmatpush1.bf16.msra.mxu0 0
  %3236 = vmatprep.subr.bf16.mxu0 0
  %3237 = vmatpush1.bf16.msra.mxu0 0
  %3238 = vmatprep.subr.bf16.mxu0 0
  %3239 = vmatpush1.bf16.msra.mxu0 0
  %3240 = vmatprep.subr.bf16.mxu0 0
  %3241 = vmatpush1.bf16.msra.mxu0 0
  %3242 = vmatprep.subr.bf16.mxu0 0
  %3243 = vmatpush1.bf16.msra.mxu0 0
  %3244 = vmatprep.subr.bf16.mxu0 0
  %3245 = vmatpush1.bf16.msra.mxu0 0
  %3246 = vmatprep.mubr.bf16.mxu0 0
  %3247 = vmatmul.mubr.bf16.gmra.mrb[0].mxu0 %v3171
  %v3248 = vpop.f32.mrb[0].mxu0
  %v3249 = vadd.f32 0.0, %v3248
  %v3250 = vpop.f32.mrb[0].mxu0
  %v3251 = vadd.f32 0.0, %v3250
  %v3252 = vpop.f32.mrb[0].mxu0
  %v3253 = vpop.f32.mrb[0].mxu0
  %3254 = vdwg.mxu0
  %v3255 = vadd.f32 %v3128, %v3208
  %v3256 = vadd.f32 %v3129, %v3210
  %v3257 = vadd.f32 %v3130, %v3249
  %v3258 = vadd.f32 %v3131, %v3251
  %3259 = vrot.lane.b32.xlu0 %v1421, 1
  %v3260 = vpop.permute.xlu0 %3259
  %3261 = vrot.lane.b32.xlu0 %v1422, 1
  %v3262 = vpop.permute.xlu0 %3261
  %3263 = vrot.lane.b32.xlu0 %v1423, 1
  %v3264 = vpop.permute.xlu0 %3263
  %3265 = vrot.lane.b32.xlu0 %v1424, 1
  %v3266 = vpop.permute.xlu0 %3265
  %v3267 = vsel %vm590, %v3264, %v3266
  %v3268 = vsel %vm590, %v3262, %v3264
  %v3269 = vsel %vm590, %v3260, %v3262
  %v3270 = vsel %vm590, %v3266, %v3260
  %s3271 = scalar_lea.vmem %s10, 12
  %v3272 = vld [vmem:[%s3271] sm:$0xf]
  %v3273 = vmul.f32 %v3270, %v578
  %v3274 = vmul.f32 %v3269, %v579
  %v3275 = vmul.f32 %v3268, %v580
  %v3276 = vmul.f32 %v3267, %v581
  %v3277 = vpack.c.bf16 %v3273, %v3273
  %v3278 = vpack.c.bf16 %v3274, %v3274
  %v3279 = vpack.c.bf16 %v3275, %v3275
  %v3280 = vpack.c.bf16 %v3276, %v3276
  %v3282 = vsel %vm1713, %v3272, 0
  %v3285 = vsel %vm1717, %v3277, 0
  %v3288 = vsel %vm1717, %v3278, 0
  %v3291 = vsel %vm1717, %v3279, 0
  %v3294 = vsel %vm1717, %v3280, 0
  %3296 = vmatprep.subr.bf16.mxu0 %v3288
  %3297 = vmatpush1.bf16.msra.mxu0 %v3285
  %3298 = vmatprep.subr.bf16.mxu0 0
  %3299 = vmatpush1.bf16.msra.mxu0 0
  %3300 = vmatprep.subr.bf16.mxu0 0
  %3301 = vmatpush1.bf16.msra.mxu0 0
  %3302 = vmatprep.subr.bf16.mxu0 0
  %3303 = vmatpush1.bf16.msra.mxu0 0
  %3304 = vmatprep.subr.bf16.mxu0 0
  %3305 = vmatpush1.bf16.msra.mxu0 0
  %3306 = vmatprep.subr.bf16.mxu0 0
  %3307 = vmatpush1.bf16.msra.mxu0 0
  %3308 = vmatprep.subr.bf16.mxu0 0
  %3309 = vmatpush1.bf16.msra.mxu0 0
  %3310 = vmatprep.subr.bf16.mxu0 0
  %3311 = vmatpush1.bf16.msra.mxu0 0
  %3312 = vmatprep.subr.bf16.mxu0 0
  %3313 = vmatpush1.bf16.msra.mxu0 0
  %3314 = vmatprep.subr.bf16.mxu0 0
  %3315 = vmatpush1.bf16.msra.mxu0 0
  %3316 = vmatprep.subr.bf16.mxu0 0
  %3317 = vmatpush1.bf16.msra.mxu0 0
  %3318 = vmatprep.subr.bf16.mxu0 0
  %3319 = vmatpush1.bf16.msra.mxu0 0
  %3320 = vmatprep.subr.bf16.mxu0 0
  %3321 = vmatpush1.bf16.msra.mxu0 0
  %3322 = vmatprep.subr.bf16.mxu0 0
  %3323 = vmatpush1.bf16.msra.mxu0 0
  %3324 = vmatprep.subr.bf16.mxu0 0
  %3325 = vmatpush1.bf16.msra.mxu0 0
  %3326 = vmatprep.subr.bf16.mxu0 0
  %3327 = vmatpush1.bf16.msra.mxu0 0
  %3328 = vmatprep.mubr.bf16.mxu0 0
  %3329 = vmatmul.mubr.bf16.gmra.mrb[0].mxu0 %v3282
  %v3330 = vpop.f32.mrb[0].mxu0
  %v3331 = vadd.f32 0.0, %v3330
  %v3332 = vpop.f32.mrb[0].mxu0
  %v3333 = vadd.f32 0.0, %v3332
  %v3334 = vpop.f32.mrb[0].mxu0
  %v3335 = vpop.f32.mrb[0].mxu0
  %3336 = vdwg.mxu0
  %3337 = vmatprep.subr.bf16.mxu0 %v3294
  %3338 = vmatpush1.bf16.msra.mxu0 %v3291
  %3339 = vmatprep.subr.bf16.mxu0 0
  %3340 = vmatpush1.bf16.msra.mxu0 0
  %3341 = vmatprep.subr.bf16.mxu0 0
  %3342 = vmatpush1.bf16.msra.mxu0 0
  %3343 = vmatprep.subr.bf16.mxu0 0
  %3344 = vmatpush1.bf16.msra.mxu0 0
  %3345 = vmatprep.subr.bf16.mxu0 0
  %3346 = vmatpush1.bf16.msra.mxu0 0
  %3347 = vmatprep.subr.bf16.mxu0 0
  %3348 = vmatpush1.bf16.msra.mxu0 0
  %3349 = vmatprep.subr.bf16.mxu0 0
  %3350 = vmatpush1.bf16.msra.mxu0 0
  %3351 = vmatprep.subr.bf16.mxu0 0
  %3352 = vmatpush1.bf16.msra.mxu0 0
  %3353 = vmatprep.subr.bf16.mxu0 0
  %3354 = vmatpush1.bf16.msra.mxu0 0
  %3355 = vmatprep.subr.bf16.mxu0 0
  %3356 = vmatpush1.bf16.msra.mxu0 0
  %3357 = vmatprep.subr.bf16.mxu0 0
  %3358 = vmatpush1.bf16.msra.mxu0 0
  %3359 = vmatprep.subr.bf16.mxu0 0
  %3360 = vmatpush1.bf16.msra.mxu0 0
  %3361 = vmatprep.subr.bf16.mxu0 0
  %3362 = vmatpush1.bf16.msra.mxu0 0
  %3363 = vmatprep.subr.bf16.mxu0 0
  %3364 = vmatpush1.bf16.msra.mxu0 0
  %3365 = vmatprep.subr.bf16.mxu0 0
  %3366 = vmatpush1.bf16.msra.mxu0 0
  %3367 = vmatprep.subr.bf16.mxu0 0
  %3368 = vmatpush1.bf16.msra.mxu0 0
  %3369 = vmatprep.mubr.bf16.mxu0 0
  %3370 = vmatmul.mubr.bf16.gmra.mrb[0].mxu0 %v3282
  %v3371 = vpop.f32.mrb[0].mxu0
  %v3372 = vadd.f32 0.0, %v3371
  %v3373 = vpop.f32.mrb[0].mxu0
  %v3374 = vadd.f32 0.0, %v3373
  %v3375 = vpop.f32.mrb[0].mxu0
  %v3376 = vpop.f32.mrb[0].mxu0
  %3377 = vdwg.mxu0
  %v3378 = vadd.f32 %v3255, %v3331
  %v3379 = vadd.f32 %v3256, %v3333
  %v3380 = vadd.f32 %v3257, %v3372
  %v3381 = vadd.f32 %v3258, %v3374
  %3382 = vrot.lane.b32.xlu0 %v2431, 1
  %v3383 = vpop.permute.xlu0 %3382
  %3384 = vrot.lane.b32.xlu0 %v2437, 1
  %v3385 = vpop.permute.xlu0 %3384
  %3386 = vrot.lane.b32.xlu0 %v2433, 1
  %v3387 = vpop.permute.xlu0 %3386
  %3388 = vrot.lane.b32.xlu0 %v2439, 1
  %v3389 = vpop.permute.xlu0 %3388
  %3390 = vrot.lane.b32.xlu0 %v2508, 1
  %v3391 = vpop.permute.xlu0 %3390
  %3392 = vrot.lane.b32.xlu0 %v2514, 1
  %v3393 = vpop.permute.xlu0 %3392
  %3394 = vrot.lane.b32.xlu0 %v2510, 1
  %v3395 = vpop.permute.xlu0 %3394
  %3396 = vrot.lane.b32.xlu0 %v2516, 1
  %v3397 = vpop.permute.xlu0 %3396
  %v3398 = vsel %vm590, %v3391, %v3395
  %v3399 = vsel %vm590, %v3393, %v3397
  %v3400 = vsel %vm590, %v3387, %v3391
  %v3401 = vsel %vm590, %v3389, %v3393
  %v3402 = vsel %vm590, %v3383, %v3387
  %v3403 = vsel %vm590, %v3385, %v3389
  %v3404 = vsel %vm590, %v3395, %v3383
  %v3405 = vsel %vm590, %v3397, %v3385
  %s3406 = scalar_lea.vmem %s11, 12
  %v3407 = vld [vmem:[%s3406] sm:$0xf]
  %v3408 = vmul.f32 %v3404, %v578
  %v3409 = vmul.f32 %v3402, %v579
  %v3410 = vmul.f32 %v3400, %v580
  %v3411 = vmul.f32 %v3398, %v581
  %v3412 = vmul.f32 %v3405, %v578
  %v3413 = vmul.f32 %v3403, %v579
  %v3414 = vmul.f32 %v3401, %v580
  %v3415 = vmul.f32 %v3399, %v581
  %v3416 = vpack.c.bf16 %v3412, %v3408
  %v3417 = vpack.c.bf16 %v3413, %v3409
  %v3418 = vpack.c.bf16 %v3414, %v3410
  %v3419 = vpack.c.bf16 %v3415, %v3411
  %v3421 = vsel %vm2576, %v3407, 0
  %3423 = vmatprep.subr.bf16.mxu0 %v3417
  %3424 = vmatpush1.bf16.msra.mxu0 %v3416
  %3425 = vmatprep.subr.bf16.mxu0 0
  %3426 = vmatpush1.bf16.msra.mxu0 0
  %3427 = vmatprep.subr.bf16.mxu0 0
  %3428 = vmatpush1.bf16.msra.mxu0 0
  %3429 = vmatprep.subr.bf16.mxu0 0
  %3430 = vmatpush1.bf16.msra.mxu0 0
  %3431 = vmatprep.subr.bf16.mxu0 0
  %3432 = vmatpush1.bf16.msra.mxu0 0
  %3433 = vmatprep.subr.bf16.mxu0 0
  %3434 = vmatpush1.bf16.msra.mxu0 0
  %3435 = vmatprep.subr.bf16.mxu0 0
  %3436 = vmatpush1.bf16.msra.mxu0 0
  %3437 = vmatprep.subr.bf16.mxu0 0
  %3438 = vmatpush1.bf16.msra.mxu0 0
  %3439 = vmatprep.subr.bf16.mxu0 0
  %3440 = vmatpush1.bf16.msra.mxu0 0
  %3441 = vmatprep.subr.bf16.mxu0 0
  %3442 = vmatpush1.bf16.msra.mxu0 0
  %3443 = vmatprep.subr.bf16.mxu0 0
  %3444 = vmatpush1.bf16.msra.mxu0 0
  %3445 = vmatprep.subr.bf16.mxu0 0
  %3446 = vmatpush1.bf16.msra.mxu0 0
  %3447 = vmatprep.subr.bf16.mxu0 0
  %3448 = vmatpush1.bf16.msra.mxu0 0
  %3449 = vmatprep.subr.bf16.mxu0 0
  %3450 = vmatpush1.bf16.msra.mxu0 0
  %3451 = vmatprep.subr.bf16.mxu0 0
  %3452 = vmatpush1.bf16.msra.mxu0 0
  %3453 = vmatprep.subr.bf16.mxu0 0
  %3454 = vmatpush1.bf16.msra.mxu0 0
  %3455 = vmatprep.mubr.bf16.mxu0 0
  %3456 = vmatmul.mubr.bf16.gmra.mrb[0].mxu0 %v3421
  %v3457 = vpop.f32.mrb[0].mxu0
  %v3458 = vadd.f32 0.0, %v3457
  %v3459 = vpop.f32.mrb[0].mxu0
  %v3460 = vadd.f32 0.0, %v3459
  %v3461 = vpop.f32.mrb[0].mxu0
  %v3462 = vpop.f32.mrb[0].mxu0
  %3463 = vdwg.mxu0
  %3464 = vmatprep.subr.bf16.mxu0 %v3419
  %3465 = vmatpush1.bf16.msra.mxu0 %v3418
  %3466 = vmatprep.subr.bf16.mxu0 0
  %3467 = vmatpush1.bf16.msra.mxu0 0
  %3468 = vmatprep.subr.bf16.mxu0 0
  %3469 = vmatpush1.bf16.msra.mxu0 0
  %3470 = vmatprep.subr.bf16.mxu0 0
  %3471 = vmatpush1.bf16.msra.mxu0 0
  %3472 = vmatprep.subr.bf16.mxu0 0
  %3473 = vmatpush1.bf16.msra.mxu0 0
  %3474 = vmatprep.subr.bf16.mxu0 0
  %3475 = vmatpush1.bf16.msra.mxu0 0
  %3476 = vmatprep.subr.bf16.mxu0 0
  %3477 = vmatpush1.bf16.msra.mxu0 0
  %3478 = vmatprep.subr.bf16.mxu0 0
  %3479 = vmatpush1.bf16.msra.mxu0 0
  %3480 = vmatprep.subr.bf16.mxu0 0
  %3481 = vmatpush1.bf16.msra.mxu0 0
  %3482 = vmatprep.subr.bf16.mxu0 0
  %3483 = vmatpush1.bf16.msra.mxu0 0
  %3484 = vmatprep.subr.bf16.mxu0 0
  %3485 = vmatpush1.bf16.msra.mxu0 0
  %3486 = vmatprep.subr.bf16.mxu0 0
  %3487 = vmatpush1.bf16.msra.mxu0 0
  %3488 = vmatprep.subr.bf16.mxu0 0
  %3489 = vmatpush1.bf16.msra.mxu0 0
  %3490 = vmatprep.subr.bf16.mxu0 0
  %3491 = vmatpush1.bf16.msra.mxu0 0
  %3492 = vmatprep.subr.bf16.mxu0 0
  %3493 = vmatpush1.bf16.msra.mxu0 0
  %3494 = vmatprep.subr.bf16.mxu0 0
  %3495 = vmatpush1.bf16.msra.mxu0 0
  %3496 = vmatprep.mubr.bf16.mxu0 0
  %3497 = vmatmul.mubr.bf16.gmra.mrb[0].mxu0 %v3421
  %v3498 = vpop.f32.mrb[0].mxu0
  %v3499 = vadd.f32 0.0, %v3498
  %v3500 = vpop.f32.mrb[0].mxu0
  %v3501 = vadd.f32 0.0, %v3500
  %v3502 = vpop.f32.mrb[0].mxu0
  %v3503 = vpop.f32.mrb[0].mxu0
  %3504 = vdwg.mxu0
  %v3505 = vadd.f32 %v3378, %v3458
  %v3506 = vadd.f32 %v3379, %v3460
  %v3507 = vadd.f32 %v3380, %v3499
  %v3508 = vadd.f32 %v3381, %v3501
  %s3509 = scalar_lea.vmem %s10, 16
  %v3510 = vld [vmem:[%s3509] sm:$0xf]
  %v3511 = vmul.f32 %v1421, %v714
  %v3512 = vmul.f32 %v1422, %v715
  %v3513 = vmul.f32 %v1423, %v716
  %v3514 = vmul.f32 %v1424, %v717
  %v3515 = vpack.c.bf16 %v3511, %v3511
  %v3516 = vpack.c.bf16 %v3512, %v3512
  %v3517 = vpack.c.bf16 %v3513, %v3513
  %v3518 = vpack.c.bf16 %v3514, %v3514
  %v3520 = vsel %vm1713, %v3510, 0
  %v3523 = vsel %vm1717, %v3515, 0
  %v3526 = vsel %vm1717, %v3516, 0
  %v3529 = vsel %vm1717, %v3517, 0
  %v3532 = vsel %vm1717, %v3518, 0
  %3534 = vmatprep.subr.bf16.mxu0 %v3526
  %3535 = vmatpush1.bf16.msra.mxu0 %v3523
  %3536 = vmatprep.subr.bf16.mxu0 0
  %3537 = vmatpush1.bf16.msra.mxu0 0
  %3538 = vmatprep.subr.bf16.mxu0 0
  %3539 = vmatpush1.bf16.msra.mxu0 0
  %3540 = vmatprep.subr.bf16.mxu0 0
  %3541 = vmatpush1.bf16.msra.mxu0 0
  %3542 = vmatprep.subr.bf16.mxu0 0
  %3543 = vmatpush1.bf16.msra.mxu0 0
  %3544 = vmatprep.subr.bf16.mxu0 0
  %3545 = vmatpush1.bf16.msra.mxu0 0
  %3546 = vmatprep.subr.bf16.mxu0 0
  %3547 = vmatpush1.bf16.msra.mxu0 0
  %3548 = vmatprep.subr.bf16.mxu0 0
  %3549 = vmatpush1.bf16.msra.mxu0 0
  %3550 = vmatprep.subr.bf16.mxu0 0
  %3551 = vmatpush1.bf16.msra.mxu0 0
  %3552 = vmatprep.subr.bf16.mxu0 0
  %3553 = vmatpush1.bf16.msra.mxu0 0
  %3554 = vmatprep.subr.bf16.mxu0 0
  %3555 = vmatpush1.bf16.msra.mxu0 0
  %3556 = vmatprep.subr.bf16.mxu0 0
  %3557 = vmatpush1.bf16.msra.mxu0 0
  %3558 = vmatprep.subr.bf16.mxu0 0
  %3559 = vmatpush1.bf16.msra.mxu0 0
  %3560 = vmatprep.subr.bf16.mxu0 0
  %3561 = vmatpush1.bf16.msra.mxu0 0
  %3562 = vmatprep.subr.bf16.mxu0 0
  %3563 = vmatpush1.bf16.msra.mxu0 0
  %3564 = vmatprep.subr.bf16.mxu0 0
  %3565 = vmatpush1.bf16.msra.mxu0 0
  %3566 = vmatprep.mubr.bf16.mxu0 0
  %3567 = vmatmul.mubr.bf16.gmra.mrb[0].mxu0 %v3520
  %v3568 = vpop.f32.mrb[0].mxu0
  %v3569 = vadd.f32 0.0, %v3568
  %v3570 = vpop.f32.mrb[0].mxu0
  %v3571 = vadd.f32 0.0, %v3570
  %v3572 = vpop.f32.mrb[0].mxu0
  %v3573 = vpop.f32.mrb[0].mxu0
  %3574 = vdwg.mxu0
  %3575 = vmatprep.subr.bf16.mxu0 %v3532
  %3576 = vmatpush1.bf16.msra.mxu0 %v3529
  %3577 = vmatprep.subr.bf16.mxu0 0
  %3578 = vmatpush1.bf16.msra.mxu0 0
  %3579 = vmatprep.subr.bf16.mxu0 0
  %3580 = vmatpush1.bf16.msra.mxu0 0
  %3581 = vmatprep.subr.bf16.mxu0 0
  %3582 = vmatpush1.bf16.msra.mxu0 0
  %3583 = vmatprep.subr.bf16.mxu0 0
  %3584 = vmatpush1.bf16.msra.mxu0 0
  %3585 = vmatprep.subr.bf16.mxu0 0
  %3586 = vmatpush1.bf16.msra.mxu0 0
  %3587 = vmatprep.subr.bf16.mxu0 0
  %3588 = vmatpush1.bf16.msra.mxu0 0
  %3589 = vmatprep.subr.bf16.mxu0 0
  %3590 = vmatpush1.bf16.msra.mxu0 0
  %3591 = vmatprep.subr.bf16.mxu0 0
  %3592 = vmatpush1.bf16.msra.mxu0 0
  %3593 = vmatprep.subr.bf16.mxu0 0
  %3594 = vmatpush1.bf16.msra.mxu0 0
  %3595 = vmatprep.subr.bf16.mxu0 0
  %3596 = vmatpush1.bf16.msra.mxu0 0
  %3597 = vmatprep.subr.bf16.mxu0 0
  %3598 = vmatpush1.bf16.msra.mxu0 0
  %3599 = vmatprep.subr.bf16.mxu0 0
  %3600 = vmatpush1.bf16.msra.mxu0 0
  %3601 = vmatprep.subr.bf16.mxu0 0
  %3602 = vmatpush1.bf16.msra.mxu0 0
  %3603 = vmatprep.subr.bf16.mxu0 0
  %3604 = vmatpush1.bf16.msra.mxu0 0
  %3605 = vmatprep.subr.bf16.mxu0 0
  %3606 = vmatpush1.bf16.msra.mxu0 0
  %3607 = vmatprep.mubr.bf16.mxu0 0
  %3608 = vmatmul.mubr.bf16.gmra.mrb[0].mxu0 %v3520
  %v3609 = vpop.f32.mrb[0].mxu0
  %v3610 = vadd.f32 0.0, %v3609
  %v3611 = vpop.f32.mrb[0].mxu0
  %v3612 = vadd.f32 0.0, %v3611
  %v3613 = vpop.f32.mrb[0].mxu0
  %v3614 = vpop.f32.mrb[0].mxu0
  %3615 = vdwg.mxu0
  %v3616 = vadd.f32 %v3505, %v3569
  %v3617 = vadd.f32 %v3506, %v3571
  %v3618 = vadd.f32 %v3507, %v3610
  %v3619 = vadd.f32 %v3508, %v3612
  %s3620 = scalar_lea.vmem %s11, 16
  %v3621 = vld [vmem:[%s3620] sm:$0xf]
  %v3622 = vmul.f32 %v2431, %v714
  %v3623 = vmul.f32 %v2433, %v715
  %v3624 = vmul.f32 %v2508, %v716
  %v3625 = vmul.f32 %v2510, %v717
  %v3626 = vmul.f32 %v2437, %v714
  %v3627 = vmul.f32 %v2439, %v715
  %v3628 = vmul.f32 %v2514, %v716
  %v3629 = vmul.f32 %v2516, %v717
  %v3630 = vpack.c.bf16 %v3626, %v3622
  %v3631 = vpack.c.bf16 %v3627, %v3623
  %v3632 = vpack.c.bf16 %v3628, %v3624
  %v3633 = vpack.c.bf16 %v3629, %v3625
  %v3635 = vsel %vm2576, %v3621, 0
  %3637 = vmatprep.subr.bf16.mxu0 %v3631
  %3638 = vmatpush1.bf16.msra.mxu0 %v3630
  %3639 = vmatprep.subr.bf16.mxu0 0
  %3640 = vmatpush1.bf16.msra.mxu0 0
  %3641 = vmatprep.subr.bf16.mxu0 0
  %3642 = vmatpush1.bf16.msra.mxu0 0
  %3643 = vmatprep.subr.bf16.mxu0 0
  %3644 = vmatpush1.bf16.msra.mxu0 0
  %3645 = vmatprep.subr.bf16.mxu0 0
  %3646 = vmatpush1.bf16.msra.mxu0 0
  %3647 = vmatprep.subr.bf16.mxu0 0
  %3648 = vmatpush1.bf16.msra.mxu0 0
  %3649 = vmatprep.subr.bf16.mxu0 0
  %3650 = vmatpush1.bf16.msra.mxu0 0
  %3651 = vmatprep.subr.bf16.mxu0 0
  %3652 = vmatpush1.bf16.msra.mxu0 0
  %3653 = vmatprep.subr.bf16.mxu0 0
  %3654 = vmatpush1.bf16.msra.mxu0 0
  %3655 = vmatprep.subr.bf16.mxu0 0
  %3656 = vmatpush1.bf16.msra.mxu0 0
  %3657 = vmatprep.subr.bf16.mxu0 0
  %3658 = vmatpush1.bf16.msra.mxu0 0
  %3659 = vmatprep.subr.bf16.mxu0 0
  %3660 = vmatpush1.bf16.msra.mxu0 0
  %3661 = vmatprep.subr.bf16.mxu0 0
  %3662 = vmatpush1.bf16.msra.mxu0 0
  %3663 = vmatprep.subr.bf16.mxu0 0
  %3664 = vmatpush1.bf16.msra.mxu0 0
  %3665 = vmatprep.subr.bf16.mxu0 0
  %3666 = vmatpush1.bf16.msra.mxu0 0
  %3667 = vmatprep.subr.bf16.mxu0 0
  %3668 = vmatpush1.bf16.msra.mxu0 0
  %3669 = vmatprep.mubr.bf16.mxu0 0
  %3670 = vmatmul.mubr.bf16.gmra.mrb[0].mxu0 %v3635
  %v3671 = vpop.f32.mrb[0].mxu0
  %v3672 = vadd.f32 0.0, %v3671
  %v3673 = vpop.f32.mrb[0].mxu0
  %v3674 = vadd.f32 0.0, %v3673
  %v3675 = vpop.f32.mrb[0].mxu0
  %v3676 = vpop.f32.mrb[0].mxu0
  %3677 = vdwg.mxu0
  %3678 = vmatprep.subr.bf16.mxu0 %v3633
  %3679 = vmatpush1.bf16.msra.mxu0 %v3632
  %3680 = vmatprep.subr.bf16.mxu0 0
  %3681 = vmatpush1.bf16.msra.mxu0 0
  %3682 = vmatprep.subr.bf16.mxu0 0
  %3683 = vmatpush1.bf16.msra.mxu0 0
  %3684 = vmatprep.subr.bf16.mxu0 0
  %3685 = vmatpush1.bf16.msra.mxu0 0
  %3686 = vmatprep.subr.bf16.mxu0 0
  %3687 = vmatpush1.bf16.msra.mxu0 0
  %3688 = vmatprep.subr.bf16.mxu0 0
  %3689 = vmatpush1.bf16.msra.mxu0 0
  %3690 = vmatprep.subr.bf16.mxu0 0
  %3691 = vmatpush1.bf16.msra.mxu0 0
  %3692 = vmatprep.subr.bf16.mxu0 0
  %3693 = vmatpush1.bf16.msra.mxu0 0
  %3694 = vmatprep.subr.bf16.mxu0 0
  %3695 = vmatpush1.bf16.msra.mxu0 0
  %3696 = vmatprep.subr.bf16.mxu0 0
  %3697 = vmatpush1.bf16.msra.mxu0 0
  %3698 = vmatprep.subr.bf16.mxu0 0
  %3699 = vmatpush1.bf16.msra.mxu0 0
  %3700 = vmatprep.subr.bf16.mxu0 0
  %3701 = vmatpush1.bf16.msra.mxu0 0
  %3702 = vmatprep.subr.bf16.mxu0 0
  %3703 = vmatpush1.bf16.msra.mxu0 0
  %3704 = vmatprep.subr.bf16.mxu0 0
  %3705 = vmatpush1.bf16.msra.mxu0 0
  %3706 = vmatprep.subr.bf16.mxu0 0
  %3707 = vmatpush1.bf16.msra.mxu0 0
  %3708 = vmatprep.subr.bf16.mxu0 0
  %3709 = vmatpush1.bf16.msra.mxu0 0
  %3710 = vmatprep.mubr.bf16.mxu0 0
  %3711 = vmatmul.mubr.bf16.gmra.mrb[0].mxu0 %v3635
  %v3712 = vpop.f32.mrb[0].mxu0
  %v3713 = vadd.f32 0.0, %v3712
  %v3714 = vpop.f32.mrb[0].mxu0
  %v3715 = vadd.f32 0.0, %v3714
  %v3716 = vpop.f32.mrb[0].mxu0
  %v3717 = vpop.f32.mrb[0].mxu0
  %3718 = vdwg.mxu0
  %v3719 = vadd.f32 %v3616, %v3672
  %v3720 = vadd.f32 %v3617, %v3674
  %v3721 = vadd.f32 %v3618, %v3713
  %v3722 = vadd.f32 %v3619, %v3715
  %s3723 = scalar_lea.vmem %s10, 20
  %v3724 = vld [vmem:[%s3723] sm:$0xf]
  %v3725 = vmul.f32 %v1435, %v849
  %v3726 = vmul.f32 %v1434, %v850
  %v3727 = vmul.f32 %v1433, %v851
  %v3728 = vmul.f32 %v1436, %v852
  %v3729 = vpack.c.bf16 %v3725, %v3725
  %v3730 = vpack.c.bf16 %v3726, %v3726
  %v3731 = vpack.c.bf16 %v3727, %v3727
  %v3732 = vpack.c.bf16 %v3728, %v3728
  %v3734 = vsel %vm1713, %v3724, 0
  %v3737 = vsel %vm1717, %v3729, 0
  %v3740 = vsel %vm1717, %v3730, 0
  %v3743 = vsel %vm1717, %v3731, 0
  %v3746 = vsel %vm1717, %v3732, 0
  %3748 = vmatprep.subr.bf16.mxu0 %v3740
  %3749 = vmatpush1.bf16.msra.mxu0 %v3737
  %3750 = vmatprep.subr.bf16.mxu0 0
  %3751 = vmatpush1.bf16.msra.mxu0 0
  %3752 = vmatprep.subr.bf16.mxu0 0
  %3753 = vmatpush1.bf16.msra.mxu0 0
  %3754 = vmatprep.subr.bf16.mxu0 0
  %3755 = vmatpush1.bf16.msra.mxu0 0
  %3756 = vmatprep.subr.bf16.mxu0 0
  %3757 = vmatpush1.bf16.msra.mxu0 0
  %3758 = vmatprep.subr.bf16.mxu0 0
  %3759 = vmatpush1.bf16.msra.mxu0 0
  %3760 = vmatprep.subr.bf16.mxu0 0
  %3761 = vmatpush1.bf16.msra.mxu0 0
  %3762 = vmatprep.subr.bf16.mxu0 0
  %3763 = vmatpush1.bf16.msra.mxu0 0
  %3764 = vmatprep.subr.bf16.mxu0 0
  %3765 = vmatpush1.bf16.msra.mxu0 0
  %3766 = vmatprep.subr.bf16.mxu0 0
  %3767 = vmatpush1.bf16.msra.mxu0 0
  %3768 = vmatprep.subr.bf16.mxu0 0
  %3769 = vmatpush1.bf16.msra.mxu0 0
  %3770 = vmatprep.subr.bf16.mxu0 0
  %3771 = vmatpush1.bf16.msra.mxu0 0
  %3772 = vmatprep.subr.bf16.mxu0 0
  %3773 = vmatpush1.bf16.msra.mxu0 0
  %3774 = vmatprep.subr.bf16.mxu0 0
  %3775 = vmatpush1.bf16.msra.mxu0 0
  %3776 = vmatprep.subr.bf16.mxu0 0
  %3777 = vmatpush1.bf16.msra.mxu0 0
  %3778 = vmatprep.subr.bf16.mxu0 0
  %3779 = vmatpush1.bf16.msra.mxu0 0
  %3780 = vmatprep.mubr.bf16.mxu0 0
  %3781 = vmatmul.mubr.bf16.gmra.mrb[0].mxu0 %v3734
  %v3782 = vpop.f32.mrb[0].mxu0
  %v3783 = vadd.f32 0.0, %v3782
  %v3784 = vpop.f32.mrb[0].mxu0
  %v3785 = vadd.f32 0.0, %v3784
  %v3786 = vpop.f32.mrb[0].mxu0
  %v3787 = vpop.f32.mrb[0].mxu0
  %3788 = vdwg.mxu0
  %3789 = vmatprep.subr.bf16.mxu0 %v3746
  %3790 = vmatpush1.bf16.msra.mxu0 %v3743
  %3791 = vmatprep.subr.bf16.mxu0 0
  %3792 = vmatpush1.bf16.msra.mxu0 0
  %3793 = vmatprep.subr.bf16.mxu0 0
  %3794 = vmatpush1.bf16.msra.mxu0 0
  %3795 = vmatprep.subr.bf16.mxu0 0
  %3796 = vmatpush1.bf16.msra.mxu0 0
  %3797 = vmatprep.subr.bf16.mxu0 0
  %3798 = vmatpush1.bf16.msra.mxu0 0
  %3799 = vmatprep.subr.bf16.mxu0 0
  %3800 = vmatpush1.bf16.msra.mxu0 0
  %3801 = vmatprep.subr.bf16.mxu0 0
  %3802 = vmatpush1.bf16.msra.mxu0 0
  %3803 = vmatprep.subr.bf16.mxu0 0
  %3804 = vmatpush1.bf16.msra.mxu0 0
  %3805 = vmatprep.subr.bf16.mxu0 0
  %3806 = vmatpush1.bf16.msra.mxu0 0
  %3807 = vmatprep.subr.bf16.mxu0 0
  %3808 = vmatpush1.bf16.msra.mxu0 0
  %3809 = vmatprep.subr.bf16.mxu0 0
  %3810 = vmatpush1.bf16.msra.mxu0 0
  %3811 = vmatprep.subr.bf16.mxu0 0
  %3812 = vmatpush1.bf16.msra.mxu0 0
  %3813 = vmatprep.subr.bf16.mxu0 0
  %3814 = vmatpush1.bf16.msra.mxu0 0
  %3815 = vmatprep.subr.bf16.mxu0 0
  %3816 = vmatpush1.bf16.msra.mxu0 0
  %3817 = vmatprep.subr.bf16.mxu0 0
  %3818 = vmatpush1.bf16.msra.mxu0 0
  %3819 = vmatprep.subr.bf16.mxu0 0
  %3820 = vmatpush1.bf16.msra.mxu0 0
  %3821 = vmatprep.mubr.bf16.mxu0 0
  %3822 = vmatmul.mubr.bf16.gmra.mrb[0].mxu0 %v3734
  %v3823 = vpop.f32.mrb[0].mxu0
  %v3824 = vadd.f32 0.0, %v3823
  %v3825 = vpop.f32.mrb[0].mxu0
  %v3826 = vadd.f32 0.0, %v3825
  %v3827 = vpop.f32.mrb[0].mxu0
  %v3828 = vpop.f32.mrb[0].mxu0
  %3829 = vdwg.mxu0
  %v3830 = vadd.f32 %v3719, %v3783
  %v3831 = vadd.f32 %v3720, %v3785
  %v3832 = vadd.f32 %v3721, %v3824
  %v3833 = vadd.f32 %v3722, %v3826
  %3834 = vrot.lane.b32.xlu0 %v2431, 127
  %v3835 = vpop.permute.xlu0 %3834
  %3836 = vrot.lane.b32.xlu0 %v2437, 127
  %v3837 = vpop.permute.xlu0 %3836
  %3838 = vrot.lane.b32.xlu0 %v2433, 127
  %v3839 = vpop.permute.xlu0 %3838
  %3840 = vrot.lane.b32.xlu0 %v2439, 127
  %v3841 = vpop.permute.xlu0 %3840
  %3842 = vrot.lane.b32.xlu0 %v2508, 127
  %v3843 = vpop.permute.xlu0 %3842
  %3844 = vrot.lane.b32.xlu0 %v2514, 127
  %v3845 = vpop.permute.xlu0 %3844
  %3846 = vrot.lane.b32.xlu0 %v2510, 127
  %v3847 = vpop.permute.xlu0 %3846
  %3848 = vrot.lane.b32.xlu0 %v2516, 127
  %v3849 = vpop.permute.xlu0 %3848
  %v3850 = vsel %vm861, %v3843, %v3847
  %v3851 = vsel %vm861, %v3845, %v3849
  %v3852 = vsel %vm861, %v3839, %v3843
  %v3853 = vsel %vm861, %v3841, %v3845
  %v3854 = vsel %vm861, %v3835, %v3839
  %v3855 = vsel %vm861, %v3837, %v3841
  %v3856 = vsel %vm861, %v3847, %v3835
  %v3857 = vsel %vm861, %v3849, %v3837
  %s3858 = scalar_lea.vmem %s11, 20
  %v3859 = vld [vmem:[%s3858] sm:$0xf]
  %v3860 = vmul.f32 %v3854, %v849
  %v3861 = vmul.f32 %v3852, %v850
  %v3862 = vmul.f32 %v3850, %v851
  %v3863 = vmul.f32 %v3856, %v852
  %v3864 = vmul.f32 %v3855, %v849
  %v3865 = vmul.f32 %v3853, %v850
  %v3866 = vmul.f32 %v3851, %v851
  %v3867 = vmul.f32 %v3857, %v852
  %v3868 = vpack.c.bf16 %v3864, %v3860
  %v3869 = vpack.c.bf16 %v3865, %v3861
  %v3870 = vpack.c.bf16 %v3866, %v3862
  %v3871 = vpack.c.bf16 %v3867, %v3863
  %v3873 = vsel %vm2576, %v3859, 0
  %3875 = vmatprep.subr.bf16.mxu0 %v3869
  %3876 = vmatpush1.bf16.msra.mxu0 %v3868
  %3877 = vmatprep.subr.bf16.mxu0 0
  %3878 = vmatpush1.bf16.msra.mxu0 0
  %3879 = vmatprep.subr.bf16.mxu0 0
  %3880 = vmatpush1.bf16.msra.mxu0 0
  %3881 = vmatprep.subr.bf16.mxu0 0
  %3882 = vmatpush1.bf16.msra.mxu0 0
  %3883 = vmatprep.subr.bf16.mxu0 0
  %3884 = vmatpush1.bf16.msra.mxu0 0
  %3885 = vmatprep.subr.bf16.mxu0 0
  %3886 = vmatpush1.bf16.msra.mxu0 0
  %3887 = vmatprep.subr.bf16.mxu0 0
  %3888 = vmatpush1.bf16.msra.mxu0 0
  %3889 = vmatprep.subr.bf16.mxu0 0
  %3890 = vmatpush1.bf16.msra.mxu0 0
  %3891 = vmatprep.subr.bf16.mxu0 0
  %3892 = vmatpush1.bf16.msra.mxu0 0
  %3893 = vmatprep.subr.bf16.mxu0 0
  %3894 = vmatpush1.bf16.msra.mxu0 0
  %3895 = vmatprep.subr.bf16.mxu0 0
  %3896 = vmatpush1.bf16.msra.mxu0 0
  %3897 = vmatprep.subr.bf16.mxu0 0
  %3898 = vmatpush1.bf16.msra.mxu0 0
  %3899 = vmatprep.subr.bf16.mxu0 0
  %3900 = vmatpush1.bf16.msra.mxu0 0
  %3901 = vmatprep.subr.bf16.mxu0 0
  %3902 = vmatpush1.bf16.msra.mxu0 0
  %3903 = vmatprep.subr.bf16.mxu0 0
  %3904 = vmatpush1.bf16.msra.mxu0 0
  %3905 = vmatprep.subr.bf16.mxu0 0
  %3906 = vmatpush1.bf16.msra.mxu0 0
  %3907 = vmatprep.mubr.bf16.mxu0 0
  %3908 = vmatmul.mubr.bf16.gmra.mrb[0].mxu0 %v3873
  %v3909 = vpop.f32.mrb[0].mxu0
  %v3910 = vadd.f32 0.0, %v3909
  %v3911 = vpop.f32.mrb[0].mxu0
  %v3912 = vadd.f32 0.0, %v3911
  %v3913 = vpop.f32.mrb[0].mxu0
  %v3914 = vpop.f32.mrb[0].mxu0
  %3915 = vdwg.mxu0
  %3916 = vmatprep.subr.bf16.mxu0 %v3871
  %3917 = vmatpush1.bf16.msra.mxu0 %v3870
  %3918 = vmatprep.subr.bf16.mxu0 0
  %3919 = vmatpush1.bf16.msra.mxu0 0
  %3920 = vmatprep.subr.bf16.mxu0 0
  %3921 = vmatpush1.bf16.msra.mxu0 0
  %3922 = vmatprep.subr.bf16.mxu0 0
  %3923 = vmatpush1.bf16.msra.mxu0 0
  %3924 = vmatprep.subr.bf16.mxu0 0
  %3925 = vmatpush1.bf16.msra.mxu0 0
  %3926 = vmatprep.subr.bf16.mxu0 0
  %3927 = vmatpush1.bf16.msra.mxu0 0
  %3928 = vmatprep.subr.bf16.mxu0 0
  %3929 = vmatpush1.bf16.msra.mxu0 0
  %3930 = vmatprep.subr.bf16.mxu0 0
  %3931 = vmatpush1.bf16.msra.mxu0 0
  %3932 = vmatprep.subr.bf16.mxu0 0
  %3933 = vmatpush1.bf16.msra.mxu0 0
  %3934 = vmatprep.subr.bf16.mxu0 0
  %3935 = vmatpush1.bf16.msra.mxu0 0
  %3936 = vmatprep.subr.bf16.mxu0 0
  %3937 = vmatpush1.bf16.msra.mxu0 0
  %3938 = vmatprep.subr.bf16.mxu0 0
  %3939 = vmatpush1.bf16.msra.mxu0 0
  %3940 = vmatprep.subr.bf16.mxu0 0
  %3941 = vmatpush1.bf16.msra.mxu0 0
  %3942 = vmatprep.subr.bf16.mxu0 0
  %3943 = vmatpush1.bf16.msra.mxu0 0
  %3944 = vmatprep.subr.bf16.mxu0 0
  %3945 = vmatpush1.bf16.msra.mxu0 0
  %3946 = vmatprep.subr.bf16.mxu0 0
  %3947 = vmatpush1.bf16.msra.mxu0 0
  %3948 = vmatprep.mubr.bf16.mxu0 0
  %3949 = vmatmul.mubr.bf16.gmra.mrb[0].mxu0 %v3873
  %v3950 = vpop.f32.mrb[0].mxu0
  %v3951 = vadd.f32 0.0, %v3950
  %v3952 = vpop.f32.mrb[0].mxu0
  %v3953 = vadd.f32 0.0, %v3952
  %v3954 = vpop.f32.mrb[0].mxu0
  %v3955 = vpop.f32.mrb[0].mxu0
  %3956 = vdwg.mxu0
  %v3957 = vadd.f32 %v3830, %v3910
  %v3958 = vadd.f32 %v3831, %v3912
  %v3959 = vadd.f32 %v3832, %v3951
  %v3960 = vadd.f32 %v3833, %v3953
  %3961 = vrot.lane.b32.xlu0 %v1421, 113
  %v3962 = vpop.permute.xlu0 %3961
  %3963 = vrot.lane.b32.xlu0 %v1422, 113
  %v3964 = vpop.permute.xlu0 %3963
  %3965 = vrot.lane.b32.xlu0 %v1423, 113
  %v3966 = vpop.permute.xlu0 %3965
  %3967 = vrot.lane.b32.xlu0 %v1424, 113
  %v3968 = vpop.permute.xlu0 %3967
  %v3969 = vsel %vm1013, %v3966, %v3968
  %v3970 = vsel %vm1013, %v3964, %v3966
  %v3971 = vsel %vm1013, %v3962, %v3964
  %v3972 = vsel %vm1013, %v3968, %v3962
  %s3973 = scalar_lea.vmem %s10, 24
  %v3974 = vld [vmem:[%s3973] sm:$0xf]
  %v3975 = vmul.f32 %v3971, %v1001
  %v3976 = vmul.f32 %v3970, %v1002
  %v3977 = vmul.f32 %v3969, %v1003
  %v3978 = vmul.f32 %v3972, %v1004
  %v3979 = vpack.c.bf16 %v3975, %v3975
  %v3980 = vpack.c.bf16 %v3976, %v3976
  %v3981 = vpack.c.bf16 %v3977, %v3977
  %v3982 = vpack.c.bf16 %v3978, %v3978
  %v3984 = vsel %vm1713, %v3974, 0
  %v3987 = vsel %vm1717, %v3979, 0
  %v3990 = vsel %vm1717, %v3980, 0
  %v3993 = vsel %vm1717, %v3981, 0
  %v3996 = vsel %vm1717, %v3982, 0
  %3998 = vmatprep.subr.bf16.mxu0 %v3990
  %3999 = vmatpush1.bf16.msra.mxu0 %v3987
  %4000 = vmatprep.subr.bf16.mxu0 0
  %4001 = vmatpush1.bf16.msra.mxu0 0
  %4002 = vmatprep.subr.bf16.mxu0 0
  %4003 = vmatpush1.bf16.msra.mxu0 0
  %4004 = vmatprep.subr.bf16.mxu0 0
  %4005 = vmatpush1.bf16.msra.mxu0 0
  %4006 = vmatprep.subr.bf16.mxu0 0
  %4007 = vmatpush1.bf16.msra.mxu0 0
  %4008 = vmatprep.subr.bf16.mxu0 0
  %4009 = vmatpush1.bf16.msra.mxu0 0
  %4010 = vmatprep.subr.bf16.mxu0 0
  %4011 = vmatpush1.bf16.msra.mxu0 0
  %4012 = vmatprep.subr.bf16.mxu0 0
  %4013 = vmatpush1.bf16.msra.mxu0 0
  %4014 = vmatprep.subr.bf16.mxu0 0
  %4015 = vmatpush1.bf16.msra.mxu0 0
  %4016 = vmatprep.subr.bf16.mxu0 0
  %4017 = vmatpush1.bf16.msra.mxu0 0
  %4018 = vmatprep.subr.bf16.mxu0 0
  %4019 = vmatpush1.bf16.msra.mxu0 0
  %4020 = vmatprep.subr.bf16.mxu0 0
  %4021 = vmatpush1.bf16.msra.mxu0 0
  %4022 = vmatprep.subr.bf16.mxu0 0
  %4023 = vmatpush1.bf16.msra.mxu0 0
  %4024 = vmatprep.subr.bf16.mxu0 0
  %4025 = vmatpush1.bf16.msra.mxu0 0
  %4026 = vmatprep.subr.bf16.mxu0 0
  %4027 = vmatpush1.bf16.msra.mxu0 0
  %4028 = vmatprep.subr.bf16.mxu0 0
  %4029 = vmatpush1.bf16.msra.mxu0 0
  %4030 = vmatprep.mubr.bf16.mxu0 0
  %4031 = vmatmul.mubr.bf16.gmra.mrb[0].mxu0 %v3984
  %v4032 = vpop.f32.mrb[0].mxu0
  %v4033 = vadd.f32 0.0, %v4032
  %v4034 = vpop.f32.mrb[0].mxu0
  %v4035 = vadd.f32 0.0, %v4034
  %v4036 = vpop.f32.mrb[0].mxu0
  %v4037 = vpop.f32.mrb[0].mxu0
  %4038 = vdwg.mxu0
  %4039 = vmatprep.subr.bf16.mxu0 %v3996
  %4040 = vmatpush1.bf16.msra.mxu0 %v3993
  %4041 = vmatprep.subr.bf16.mxu0 0
  %4042 = vmatpush1.bf16.msra.mxu0 0
  %4043 = vmatprep.subr.bf16.mxu0 0
  %4044 = vmatpush1.bf16.msra.mxu0 0
  %4045 = vmatprep.subr.bf16.mxu0 0
  %4046 = vmatpush1.bf16.msra.mxu0 0
  %4047 = vmatprep.subr.bf16.mxu0 0
  %4048 = vmatpush1.bf16.msra.mxu0 0
  %4049 = vmatprep.subr.bf16.mxu0 0
  %4050 = vmatpush1.bf16.msra.mxu0 0
  %4051 = vmatprep.subr.bf16.mxu0 0
  %4052 = vmatpush1.bf16.msra.mxu0 0
  %4053 = vmatprep.subr.bf16.mxu0 0
  %4054 = vmatpush1.bf16.msra.mxu0 0
  %4055 = vmatprep.subr.bf16.mxu0 0
  %4056 = vmatpush1.bf16.msra.mxu0 0
  %4057 = vmatprep.subr.bf16.mxu0 0
  %4058 = vmatpush1.bf16.msra.mxu0 0
  %4059 = vmatprep.subr.bf16.mxu0 0
  %4060 = vmatpush1.bf16.msra.mxu0 0
  %4061 = vmatprep.subr.bf16.mxu0 0
  %4062 = vmatpush1.bf16.msra.mxu0 0
  %4063 = vmatprep.subr.bf16.mxu0 0
  %4064 = vmatpush1.bf16.msra.mxu0 0
  %4065 = vmatprep.subr.bf16.mxu0 0
  %4066 = vmatpush1.bf16.msra.mxu0 0
  %4067 = vmatprep.subr.bf16.mxu0 0
  %4068 = vmatpush1.bf16.msra.mxu0 0
  %4069 = vmatprep.subr.bf16.mxu0 0
  %4070 = vmatpush1.bf16.msra.mxu0 0
  %4071 = vmatprep.mubr.bf16.mxu0 0
  %4072 = vmatmul.mubr.bf16.gmra.mrb[0].mxu0 %v3984
  %v4073 = vpop.f32.mrb[0].mxu0
  %v4074 = vadd.f32 0.0, %v4073
  %v4075 = vpop.f32.mrb[0].mxu0
  %v4076 = vadd.f32 0.0, %v4075
  %v4077 = vpop.f32.mrb[0].mxu0
  %v4078 = vpop.f32.mrb[0].mxu0
  %4079 = vdwg.mxu0
  %v4080 = vadd.f32 %v3957, %v4033
  %v4081 = vadd.f32 %v3958, %v4035
  %v4082 = vadd.f32 %v3959, %v4074
  %v4083 = vadd.f32 %v3960, %v4076
  %4084 = vrot.lane.b32.xlu0 %v2431, 113
  %v4085 = vpop.permute.xlu0 %4084
  %4086 = vrot.lane.b32.xlu0 %v2437, 113
  %v4087 = vpop.permute.xlu0 %4086
  %4088 = vrot.lane.b32.xlu0 %v2433, 113
  %v4089 = vpop.permute.xlu0 %4088
  %4090 = vrot.lane.b32.xlu0 %v2439, 113
  %v4091 = vpop.permute.xlu0 %4090
  %4092 = vrot.lane.b32.xlu0 %v2508, 113
  %v4093 = vpop.permute.xlu0 %4092
  %4094 = vrot.lane.b32.xlu0 %v2514, 113
  %v4095 = vpop.permute.xlu0 %4094
  %4096 = vrot.lane.b32.xlu0 %v2510, 113
  %v4097 = vpop.permute.xlu0 %4096
  %4098 = vrot.lane.b32.xlu0 %v2516, 113
  %v4099 = vpop.permute.xlu0 %4098
  %v4100 = vsel %vm1013, %v4093, %v4097
  %v4101 = vsel %vm1013, %v4095, %v4099
  %v4102 = vsel %vm1013, %v4089, %v4093
  %v4103 = vsel %vm1013, %v4091, %v4095
  %v4104 = vsel %vm1013, %v4085, %v4089
  %v4105 = vsel %vm1013, %v4087, %v4091
  %v4106 = vsel %vm1013, %v4097, %v4085
  %v4107 = vsel %vm1013, %v4099, %v4087
  %s4108 = scalar_lea.vmem %s11, 24
  %v4109 = vld [vmem:[%s4108] sm:$0xf]
  %v4110 = vmul.f32 %v4104, %v1001
  %v4111 = vmul.f32 %v4102, %v1002
  %v4112 = vmul.f32 %v4100, %v1003
  %v4113 = vmul.f32 %v4106, %v1004
  %v4114 = vmul.f32 %v4105, %v1001
  %v4115 = vmul.f32 %v4103, %v1002
  %v4116 = vmul.f32 %v4101, %v1003
  %v4117 = vmul.f32 %v4107, %v1004
  %v4118 = vpack.c.bf16 %v4114, %v4110
  %v4119 = vpack.c.bf16 %v4115, %v4111
  %v4120 = vpack.c.bf16 %v4116, %v4112
  %v4121 = vpack.c.bf16 %v4117, %v4113
  %v4123 = vsel %vm2576, %v4109, 0
  %4125 = vmatprep.subr.bf16.mxu0 %v4119
  %4126 = vmatpush1.bf16.msra.mxu0 %v4118
  %4127 = vmatprep.subr.bf16.mxu0 0
  %4128 = vmatpush1.bf16.msra.mxu0 0
  %4129 = vmatprep.subr.bf16.mxu0 0
  %4130 = vmatpush1.bf16.msra.mxu0 0
  %4131 = vmatprep.subr.bf16.mxu0 0
  %4132 = vmatpush1.bf16.msra.mxu0 0
  %4133 = vmatprep.subr.bf16.mxu0 0
  %4134 = vmatpush1.bf16.msra.mxu0 0
  %4135 = vmatprep.subr.bf16.mxu0 0
  %4136 = vmatpush1.bf16.msra.mxu0 0
  %4137 = vmatprep.subr.bf16.mxu0 0
  %4138 = vmatpush1.bf16.msra.mxu0 0
  %4139 = vmatprep.subr.bf16.mxu0 0
  %4140 = vmatpush1.bf16.msra.mxu0 0
  %4141 = vmatprep.subr.bf16.mxu0 0
  %4142 = vmatpush1.bf16.msra.mxu0 0
  %4143 = vmatprep.subr.bf16.mxu0 0
  %4144 = vmatpush1.bf16.msra.mxu0 0
  %4145 = vmatprep.subr.bf16.mxu0 0
  %4146 = vmatpush1.bf16.msra.mxu0 0
  %4147 = vmatprep.subr.bf16.mxu0 0
  %4148 = vmatpush1.bf16.msra.mxu0 0
  %4149 = vmatprep.subr.bf16.mxu0 0
  %4150 = vmatpush1.bf16.msra.mxu0 0
  %4151 = vmatprep.subr.bf16.mxu0 0
  %4152 = vmatpush1.bf16.msra.mxu0 0
  %4153 = vmatprep.subr.bf16.mxu0 0
  %4154 = vmatpush1.bf16.msra.mxu0 0
  %4155 = vmatprep.subr.bf16.mxu0 0
  %4156 = vmatpush1.bf16.msra.mxu0 0
  %4157 = vmatprep.mubr.bf16.mxu0 0
  %4158 = vmatmul.mubr.bf16.gmra.mrb[0].mxu0 %v4123
  %v4159 = vpop.f32.mrb[0].mxu0
  %v4160 = vadd.f32 0.0, %v4159
  %v4161 = vpop.f32.mrb[0].mxu0
  %v4162 = vadd.f32 0.0, %v4161
  %v4163 = vpop.f32.mrb[0].mxu0
  %v4164 = vpop.f32.mrb[0].mxu0
  %4165 = vdwg.mxu0
  %4166 = vmatprep.subr.bf16.mxu0 %v4121
  %4167 = vmatpush1.bf16.msra.mxu0 %v4120
  %4168 = vmatprep.subr.bf16.mxu0 0
  %4169 = vmatpush1.bf16.msra.mxu0 0
  %4170 = vmatprep.subr.bf16.mxu0 0
  %4171 = vmatpush1.bf16.msra.mxu0 0
  %4172 = vmatprep.subr.bf16.mxu0 0
  %4173 = vmatpush1.bf16.msra.mxu0 0
  %4174 = vmatprep.subr.bf16.mxu0 0
  %4175 = vmatpush1.bf16.msra.mxu0 0
  %4176 = vmatprep.subr.bf16.mxu0 0
  %4177 = vmatpush1.bf16.msra.mxu0 0
  %4178 = vmatprep.subr.bf16.mxu0 0
  %4179 = vmatpush1.bf16.msra.mxu0 0
  %4180 = vmatprep.subr.bf16.mxu0 0
  %4181 = vmatpush1.bf16.msra.mxu0 0
  %4182 = vmatprep.subr.bf16.mxu0 0
  %4183 = vmatpush1.bf16.msra.mxu0 0
  %4184 = vmatprep.subr.bf16.mxu0 0
  %4185 = vmatpush1.bf16.msra.mxu0 0
  %4186 = vmatprep.subr.bf16.mxu0 0
  %4187 = vmatpush1.bf16.msra.mxu0 0
  %4188 = vmatprep.subr.bf16.mxu0 0
  %4189 = vmatpush1.bf16.msra.mxu0 0
  %4190 = vmatprep.subr.bf16.mxu0 0
  %4191 = vmatpush1.bf16.msra.mxu0 0
  %4192 = vmatprep.subr.bf16.mxu0 0
  %4193 = vmatpush1.bf16.msra.mxu0 0
  %4194 = vmatprep.subr.bf16.mxu0 0
  %4195 = vmatpush1.bf16.msra.mxu0 0
  %4196 = vmatprep.subr.bf16.mxu0 0
  %4197 = vmatpush1.bf16.msra.mxu0 0
  %4198 = vmatprep.mubr.bf16.mxu0 0
  %4199 = vmatmul.mubr.bf16.gmra.mrb[0].mxu0 %v4123
  %v4200 = vpop.f32.mrb[0].mxu0
  %v4201 = vadd.f32 0.0, %v4200
  %v4202 = vpop.f32.mrb[0].mxu0
  %v4203 = vadd.f32 0.0, %v4202
  %v4204 = vpop.f32.mrb[0].mxu0
  %v4205 = vpop.f32.mrb[0].mxu0
  %4206 = vdwg.mxu0
  %v4207 = vadd.f32 %v4080, %v4160
  %v4208 = vadd.f32 %v4081, %v4162
  %v4209 = vadd.f32 %v4082, %v4201
  %v4210 = vadd.f32 %v4083, %v4203
  %s4211 = scalar_lea.vmem %s10, 28
  %v4212 = vld [vmem:[%s4211] sm:$0xf]
  %v4213 = vmul.f32 %v1451, %v1137
  %v4214 = vmul.f32 %v1450, %v1138
  %v4215 = vmul.f32 %v1449, %v1139
  %v4216 = vmul.f32 %v1452, %v1140
  %v4217 = vpack.c.bf16 %v4213, %v4213
  %v4218 = vpack.c.bf16 %v4214, %v4214
  %v4219 = vpack.c.bf16 %v4215, %v4215
  %v4220 = vpack.c.bf16 %v4216, %v4216
  %v4222 = vsel %vm1713, %v4212, 0
  %v4225 = vsel %vm1717, %v4217, 0
  %v4228 = vsel %vm1717, %v4218, 0
  %v4231 = vsel %vm1717, %v4219, 0
  %v4234 = vsel %vm1717, %v4220, 0
  %4236 = vmatprep.subr.bf16.mxu0 %v4228
  %4237 = vmatpush1.bf16.msra.mxu0 %v4225
  %4238 = vmatprep.subr.bf16.mxu0 0
  %4239 = vmatpush1.bf16.msra.mxu0 0
  %4240 = vmatprep.subr.bf16.mxu0 0
  %4241 = vmatpush1.bf16.msra.mxu0 0
  %4242 = vmatprep.subr.bf16.mxu0 0
  %4243 = vmatpush1.bf16.msra.mxu0 0
  %4244 = vmatprep.subr.bf16.mxu0 0
  %4245 = vmatpush1.bf16.msra.mxu0 0
  %4246 = vmatprep.subr.bf16.mxu0 0
  %4247 = vmatpush1.bf16.msra.mxu0 0
  %4248 = vmatprep.subr.bf16.mxu0 0
  %4249 = vmatpush1.bf16.msra.mxu0 0
  %4250 = vmatprep.subr.bf16.mxu0 0
  %4251 = vmatpush1.bf16.msra.mxu0 0
  %4252 = vmatprep.subr.bf16.mxu0 0
  %4253 = vmatpush1.bf16.msra.mxu0 0
  %4254 = vmatprep.subr.bf16.mxu0 0
  %4255 = vmatpush1.bf16.msra.mxu0 0
  %4256 = vmatprep.subr.bf16.mxu0 0
  %4257 = vmatpush1.bf16.msra.mxu0 0
  %4258 = vmatprep.subr.bf16.mxu0 0
  %4259 = vmatpush1.bf16.msra.mxu0 0
  %4260 = vmatprep.subr.bf16.mxu0 0
  %4261 = vmatpush1.bf16.msra.mxu0 0
  %4262 = vmatprep.subr.bf16.mxu0 0
  %4263 = vmatpush1.bf16.msra.mxu0 0
  %4264 = vmatprep.subr.bf16.mxu0 0
  %4265 = vmatpush1.bf16.msra.mxu0 0
  %4266 = vmatprep.subr.bf16.mxu0 0
  %4267 = vmatpush1.bf16.msra.mxu0 0
  %4268 = vmatprep.mubr.bf16.mxu0 0
  %4269 = vmatmul.mubr.bf16.gmra.mrb[0].mxu0 %v4222
  %v4270 = vpop.f32.mrb[0].mxu0
  %v4271 = vadd.f32 0.0, %v4270
  %v4272 = vpop.f32.mrb[0].mxu0
  %v4273 = vadd.f32 0.0, %v4272
  %v4274 = vpop.f32.mrb[0].mxu0
  %v4275 = vpop.f32.mrb[0].mxu0
  %4276 = vdwg.mxu0
  %4277 = vmatprep.subr.bf16.mxu0 %v4234
  %4278 = vmatpush1.bf16.msra.mxu0 %v4231
  %4279 = vmatprep.subr.bf16.mxu0 0
  %4280 = vmatpush1.bf16.msra.mxu0 0
  %4281 = vmatprep.subr.bf16.mxu0 0
  %4282 = vmatpush1.bf16.msra.mxu0 0
  %4283 = vmatprep.subr.bf16.mxu0 0
  %4284 = vmatpush1.bf16.msra.mxu0 0
  %4285 = vmatprep.subr.bf16.mxu0 0
  %4286 = vmatpush1.bf16.msra.mxu0 0
  %4287 = vmatprep.subr.bf16.mxu0 0
  %4288 = vmatpush1.bf16.msra.mxu0 0
  %4289 = vmatprep.subr.bf16.mxu0 0
  %4290 = vmatpush1.bf16.msra.mxu0 0
  %4291 = vmatprep.subr.bf16.mxu0 0
  %4292 = vmatpush1.bf16.msra.mxu0 0
  %4293 = vmatprep.subr.bf16.mxu0 0
  %4294 = vmatpush1.bf16.msra.mxu0 0
  %4295 = vmatprep.subr.bf16.mxu0 0
  %4296 = vmatpush1.bf16.msra.mxu0 0
  %4297 = vmatprep.subr.bf16.mxu0 0
  %4298 = vmatpush1.bf16.msra.mxu0 0
  %4299 = vmatprep.subr.bf16.mxu0 0
  %4300 = vmatpush1.bf16.msra.mxu0 0
  %4301 = vmatprep.subr.bf16.mxu0 0
  %4302 = vmatpush1.bf16.msra.mxu0 0
  %4303 = vmatprep.subr.bf16.mxu0 0
  %4304 = vmatpush1.bf16.msra.mxu0 0
  %4305 = vmatprep.subr.bf16.mxu0 0
  %4306 = vmatpush1.bf16.msra.mxu0 0
  %4307 = vmatprep.subr.bf16.mxu0 0
  %4308 = vmatpush1.bf16.msra.mxu0 0
  %4309 = vmatprep.mubr.bf16.mxu0 0
  %4310 = vmatmul.mubr.bf16.gmra.mrb[0].mxu0 %v4222
  %v4311 = vpop.f32.mrb[0].mxu0
  %v4312 = vadd.f32 0.0, %v4311
  %v4313 = vpop.f32.mrb[0].mxu0
  %v4314 = vadd.f32 0.0, %v4313
  %v4315 = vpop.f32.mrb[0].mxu0
  %v4316 = vpop.f32.mrb[0].mxu0
  %4317 = vdwg.mxu0
  %v4318 = vadd.f32 %v4207, %v4271
  %v4319 = vadd.f32 %v4208, %v4273
  %v4320 = vadd.f32 %v4209, %v4312
  %v4321 = vadd.f32 %v4210, %v4314
  %4322 = vrot.lane.b32.xlu0 %v2431, 112
  %v4323 = vpop.permute.xlu0 %4322
  %4324 = vrot.lane.b32.xlu0 %v2437, 112
  %v4325 = vpop.permute.xlu0 %4324
  %4326 = vrot.lane.b32.xlu0 %v2433, 112
  %v4327 = vpop.permute.xlu0 %4326
  %4328 = vrot.lane.b32.xlu0 %v2439, 112
  %v4329 = vpop.permute.xlu0 %4328
  %4330 = vrot.lane.b32.xlu0 %v2508, 112
  %v4331 = vpop.permute.xlu0 %4330
  %4332 = vrot.lane.b32.xlu0 %v2514, 112
  %v4333 = vpop.permute.xlu0 %4332
  %4334 = vrot.lane.b32.xlu0 %v2510, 112
  %v4335 = vpop.permute.xlu0 %4334
  %4336 = vrot.lane.b32.xlu0 %v2516, 112
  %v4337 = vpop.permute.xlu0 %4336
  %v4338 = vsel %vm1149, %v4331, %v4335
  %v4339 = vsel %vm1149, %v4333, %v4337
  %v4340 = vsel %vm1149, %v4327, %v4331
  %v4341 = vsel %vm1149, %v4329, %v4333
  %v4342 = vsel %vm1149, %v4323, %v4327
  %v4343 = vsel %vm1149, %v4325, %v4329
  %v4344 = vsel %vm1149, %v4335, %v4323
  %v4345 = vsel %vm1149, %v4337, %v4325
  %s4346 = scalar_lea.vmem %s11, 28
  %v4347 = vld [vmem:[%s4346] sm:$0xf]
  %v4348 = vmul.f32 %v4342, %v1137
  %v4349 = vmul.f32 %v4340, %v1138
  %v4350 = vmul.f32 %v4338, %v1139
  %v4351 = vmul.f32 %v4344, %v1140
  %v4352 = vmul.f32 %v4343, %v1137
  %v4353 = vmul.f32 %v4341, %v1138
  %v4354 = vmul.f32 %v4339, %v1139
  %v4355 = vmul.f32 %v4345, %v1140
  %v4356 = vpack.c.bf16 %v4352, %v4348
  %v4357 = vpack.c.bf16 %v4353, %v4349
  %v4358 = vpack.c.bf16 %v4354, %v4350
  %v4359 = vpack.c.bf16 %v4355, %v4351
  %v4361 = vsel %vm2576, %v4347, 0
  %4363 = vmatprep.subr.bf16.mxu0 %v4357
  %4364 = vmatpush1.bf16.msra.mxu0 %v4356
  %4365 = vmatprep.subr.bf16.mxu0 0
  %4366 = vmatpush1.bf16.msra.mxu0 0
  %4367 = vmatprep.subr.bf16.mxu0 0
  %4368 = vmatpush1.bf16.msra.mxu0 0
  %4369 = vmatprep.subr.bf16.mxu0 0
  %4370 = vmatpush1.bf16.msra.mxu0 0
  %4371 = vmatprep.subr.bf16.mxu0 0
  %4372 = vmatpush1.bf16.msra.mxu0 0
  %4373 = vmatprep.subr.bf16.mxu0 0
  %4374 = vmatpush1.bf16.msra.mxu0 0
  %4375 = vmatprep.subr.bf16.mxu0 0
  %4376 = vmatpush1.bf16.msra.mxu0 0
  %4377 = vmatprep.subr.bf16.mxu0 0
  %4378 = vmatpush1.bf16.msra.mxu0 0
  %4379 = vmatprep.subr.bf16.mxu0 0
  %4380 = vmatpush1.bf16.msra.mxu0 0
  %4381 = vmatprep.subr.bf16.mxu0 0
  %4382 = vmatpush1.bf16.msra.mxu0 0
  %4383 = vmatprep.subr.bf16.mxu0 0
  %4384 = vmatpush1.bf16.msra.mxu0 0
  %4385 = vmatprep.subr.bf16.mxu0 0
  %4386 = vmatpush1.bf16.msra.mxu0 0
  %4387 = vmatprep.subr.bf16.mxu0 0
  %4388 = vmatpush1.bf16.msra.mxu0 0
  %4389 = vmatprep.subr.bf16.mxu0 0
  %4390 = vmatpush1.bf16.msra.mxu0 0
  %4391 = vmatprep.subr.bf16.mxu0 0
  %4392 = vmatpush1.bf16.msra.mxu0 0
  %4393 = vmatprep.subr.bf16.mxu0 0
  %4394 = vmatpush1.bf16.msra.mxu0 0
  %4395 = vmatprep.mubr.bf16.mxu0 0
  %4396 = vmatmul.mubr.bf16.gmra.mrb[0].mxu0 %v4361
  %v4397 = vpop.f32.mrb[0].mxu0
  %v4398 = vadd.f32 0.0, %v4397
  %v4399 = vpop.f32.mrb[0].mxu0
  %v4400 = vadd.f32 0.0, %v4399
  %v4401 = vpop.f32.mrb[0].mxu0
  %v4402 = vpop.f32.mrb[0].mxu0
  %4403 = vdwg.mxu0
  %4404 = vmatprep.subr.bf16.mxu0 %v4359
  %4405 = vmatpush1.bf16.msra.mxu0 %v4358
  %4406 = vmatprep.subr.bf16.mxu0 0
  %4407 = vmatpush1.bf16.msra.mxu0 0
  %4408 = vmatprep.subr.bf16.mxu0 0
  %4409 = vmatpush1.bf16.msra.mxu0 0
  %4410 = vmatprep.subr.bf16.mxu0 0
  %4411 = vmatpush1.bf16.msra.mxu0 0
  %4412 = vmatprep.subr.bf16.mxu0 0
  %4413 = vmatpush1.bf16.msra.mxu0 0
  %4414 = vmatprep.subr.bf16.mxu0 0
  %4415 = vmatpush1.bf16.msra.mxu0 0
  %4416 = vmatprep.subr.bf16.mxu0 0
  %4417 = vmatpush1.bf16.msra.mxu0 0
  %4418 = vmatprep.subr.bf16.mxu0 0
  %4419 = vmatpush1.bf16.msra.mxu0 0
  %4420 = vmatprep.subr.bf16.mxu0 0
  %4421 = vmatpush1.bf16.msra.mxu0 0
  %4422 = vmatprep.subr.bf16.mxu0 0
  %4423 = vmatpush1.bf16.msra.mxu0 0
  %4424 = vmatprep.subr.bf16.mxu0 0
  %4425 = vmatpush1.bf16.msra.mxu0 0
  %4426 = vmatprep.subr.bf16.mxu0 0
  %4427 = vmatpush1.bf16.msra.mxu0 0
  %4428 = vmatprep.subr.bf16.mxu0 0
  %4429 = vmatpush1.bf16.msra.mxu0 0
  %4430 = vmatprep.subr.bf16.mxu0 0
  %4431 = vmatpush1.bf16.msra.mxu0 0
  %4432 = vmatprep.subr.bf16.mxu0 0
  %4433 = vmatpush1.bf16.msra.mxu0 0
  %4434 = vmatprep.subr.bf16.mxu0 0
  %4435 = vmatpush1.bf16.msra.mxu0 0
  %4436 = vmatprep.mubr.bf16.mxu0 0
  %4437 = vmatmul.mubr.bf16.gmra.mrb[0].mxu0 %v4361
  %v4438 = vpop.f32.mrb[0].mxu0
  %v4439 = vadd.f32 0.0, %v4438
  %v4440 = vpop.f32.mrb[0].mxu0
  %v4441 = vadd.f32 0.0, %v4440
  %v4442 = vpop.f32.mrb[0].mxu0
  %v4443 = vpop.f32.mrb[0].mxu0
  %4444 = vdwg.mxu0
  %v4445 = vadd.f32 %v4318, %v4398
  %v4446 = vadd.f32 %v4319, %v4400
  %v4447 = vadd.f32 %v4320, %v4439
  %v4448 = vadd.f32 %v4321, %v4441
  %s4449 = scalar_lea.vmem %s10, 32
  %v4450 = vld [vmem:[%s4449] sm:$0xf]
  %v4451 = vmul.f32 %v1463, %v1273
  %v4452 = vmul.f32 %v1462, %v1274
  %v4453 = vmul.f32 %v1461, %v1275
  %v4454 = vmul.f32 %v1464, %v1276
  %v4455 = vpack.c.bf16 %v4451, %v4451
  %v4456 = vpack.c.bf16 %v4452, %v4452
  %v4457 = vpack.c.bf16 %v4453, %v4453
  %v4458 = vpack.c.bf16 %v4454, %v4454
  %v4460 = vsel %vm1713, %v4450, 0
  %v4463 = vsel %vm1717, %v4455, 0
  %v4466 = vsel %vm1717, %v4456, 0
  %v4469 = vsel %vm1717, %v4457, 0
  %v4472 = vsel %vm1717, %v4458, 0
  %4474 = vmatprep.subr.bf16.mxu0 %v4466
  %4475 = vmatpush1.bf16.msra.mxu0 %v4463
  %4476 = vmatprep.subr.bf16.mxu0 0
  %4477 = vmatpush1.bf16.msra.mxu0 0
  %4478 = vmatprep.subr.bf16.mxu0 0
  %4479 = vmatpush1.bf16.msra.mxu0 0
  %4480 = vmatprep.subr.bf16.mxu0 0
  %4481 = vmatpush1.bf16.msra.mxu0 0
  %4482 = vmatprep.subr.bf16.mxu0 0
  %4483 = vmatpush1.bf16.msra.mxu0 0
  %4484 = vmatprep.subr.bf16.mxu0 0
  %4485 = vmatpush1.bf16.msra.mxu0 0
  %4486 = vmatprep.subr.bf16.mxu0 0
  %4487 = vmatpush1.bf16.msra.mxu0 0
  %4488 = vmatprep.subr.bf16.mxu0 0
  %4489 = vmatpush1.bf16.msra.mxu0 0
  %4490 = vmatprep.subr.bf16.mxu0 0
  %4491 = vmatpush1.bf16.msra.mxu0 0
  %4492 = vmatprep.subr.bf16.mxu0 0
  %4493 = vmatpush1.bf16.msra.mxu0 0
  %4494 = vmatprep.subr.bf16.mxu0 0
  %4495 = vmatpush1.bf16.msra.mxu0 0
  %4496 = vmatprep.subr.bf16.mxu0 0
  %4497 = vmatpush1.bf16.msra.mxu0 0
  %4498 = vmatprep.subr.bf16.mxu0 0
  %4499 = vmatpush1.bf16.msra.mxu0 0
  %4500 = vmatprep.subr.bf16.mxu0 0
  %4501 = vmatpush1.bf16.msra.mxu0 0
  %4502 = vmatprep.subr.bf16.mxu0 0
  %4503 = vmatpush1.bf16.msra.mxu0 0
  %4504 = vmatprep.subr.bf16.mxu0 0
  %4505 = vmatpush1.bf16.msra.mxu0 0
  %4506 = vmatprep.mubr.bf16.mxu0 0
  %4507 = vmatmul.mubr.bf16.gmra.mrb[0].mxu0 %v4460
  %v4508 = vpop.f32.mrb[0].mxu0
  %v4509 = vadd.f32 0.0, %v4508
  %v4510 = vpop.f32.mrb[0].mxu0
  %v4511 = vadd.f32 0.0, %v4510
  %v4512 = vpop.f32.mrb[0].mxu0
  %v4513 = vpop.f32.mrb[0].mxu0
  %4514 = vdwg.mxu0
  %4515 = vmatprep.subr.bf16.mxu0 %v4472
  %4516 = vmatpush1.bf16.msra.mxu0 %v4469
  %4517 = vmatprep.subr.bf16.mxu0 0
  %4518 = vmatpush1.bf16.msra.mxu0 0
  %4519 = vmatprep.subr.bf16.mxu0 0
  %4520 = vmatpush1.bf16.msra.mxu0 0
  %4521 = vmatprep.subr.bf16.mxu0 0
  %4522 = vmatpush1.bf16.msra.mxu0 0
  %4523 = vmatprep.subr.bf16.mxu0 0
  %4524 = vmatpush1.bf16.msra.mxu0 0
  %4525 = vmatprep.subr.bf16.mxu0 0
  %4526 = vmatpush1.bf16.msra.mxu0 0
  %4527 = vmatprep.subr.bf16.mxu0 0
  %4528 = vmatpush1.bf16.msra.mxu0 0
  %4529 = vmatprep.subr.bf16.mxu0 0
  %4530 = vmatpush1.bf16.msra.mxu0 0
  %4531 = vmatprep.subr.bf16.mxu0 0
  %4532 = vmatpush1.bf16.msra.mxu0 0
  %4533 = vmatprep.subr.bf16.mxu0 0
  %4534 = vmatpush1.bf16.msra.mxu0 0
  %4535 = vmatprep.subr.bf16.mxu0 0
  %4536 = vmatpush1.bf16.msra.mxu0 0
  %4537 = vmatprep.subr.bf16.mxu0 0
  %4538 = vmatpush1.bf16.msra.mxu0 0
  %4539 = vmatprep.subr.bf16.mxu0 0
  %4540 = vmatpush1.bf16.msra.mxu0 0
  %4541 = vmatprep.subr.bf16.mxu0 0
  %4542 = vmatpush1.bf16.msra.mxu0 0
  %4543 = vmatprep.subr.bf16.mxu0 0
  %4544 = vmatpush1.bf16.msra.mxu0 0
  %4545 = vmatprep.subr.bf16.mxu0 0
  %4546 = vmatpush1.bf16.msra.mxu0 0
  %4547 = vmatprep.mubr.bf16.mxu0 0
  %4548 = vmatmul.mubr.bf16.gmra.mrb[0].mxu0 %v4460
  %v4549 = vpop.f32.mrb[0].mxu0
  %v4550 = vadd.f32 0.0, %v4549
  %v4551 = vpop.f32.mrb[0].mxu0
  %v4552 = vadd.f32 0.0, %v4551
  %v4553 = vpop.f32.mrb[0].mxu0
  %v4554 = vpop.f32.mrb[0].mxu0
  %4555 = vdwg.mxu0
  %v4556 = vadd.f32 %v4445, %v4509
  %v4557 = vadd.f32 %v4446, %v4511
  %v4558 = vadd.f32 %v4447, %v4550
  %v4559 = vadd.f32 %v4448, %v4552
  %4560 = vrot.lane.b32.xlu0 %v2431, 111
  %v4561 = vpop.permute.xlu0 %4560
  %4562 = vrot.lane.b32.xlu0 %v2437, 111
  %v4563 = vpop.permute.xlu0 %4562
  %4564 = vrot.lane.b32.xlu0 %v2433, 111
  %v4565 = vpop.permute.xlu0 %4564
  %4566 = vrot.lane.b32.xlu0 %v2439, 111
  %v4567 = vpop.permute.xlu0 %4566
  %4568 = vrot.lane.b32.xlu0 %v2508, 111
  %v4569 = vpop.permute.xlu0 %4568
  %4570 = vrot.lane.b32.xlu0 %v2514, 111
  %v4571 = vpop.permute.xlu0 %4570
  %4572 = vrot.lane.b32.xlu0 %v2510, 111
  %v4573 = vpop.permute.xlu0 %4572
  %4574 = vrot.lane.b32.xlu0 %v2516, 111
  %v4575 = vpop.permute.xlu0 %4574
  %v4576 = vsel %vm1285, %v4569, %v4573
  %v4577 = vsel %vm1285, %v4571, %v4575
  %v4578 = vsel %vm1285, %v4565, %v4569
  %v4579 = vsel %vm1285, %v4567, %v4571
  %v4580 = vsel %vm1285, %v4561, %v4565
  %v4581 = vsel %vm1285, %v4563, %v4567
  %v4582 = vsel %vm1285, %v4573, %v4561
  %v4583 = vsel %vm1285, %v4575, %v4563
  %s4584 = scalar_lea.vmem %s11, 32
  %v4585 = vld [vmem:[%s4584] sm:$0xf]
  %v4586 = vmul.f32 %v4580, %v1273
  %v4587 = vmul.f32 %v4578, %v1274
  %v4588 = vmul.f32 %v4576, %v1275
  %v4589 = vmul.f32 %v4582, %v1276
  %v4590 = vmul.f32 %v4581, %v1273
  %v4591 = vmul.f32 %v4579, %v1274
  %v4592 = vmul.f32 %v4577, %v1275
  %v4593 = vmul.f32 %v4583, %v1276
  %v4594 = vpack.c.bf16 %v4590, %v4586
  %v4595 = vpack.c.bf16 %v4591, %v4587
  %v4596 = vpack.c.bf16 %v4592, %v4588
  %v4597 = vpack.c.bf16 %v4593, %v4589
  %v4599 = vsel %vm2576, %v4585, 0
  %4601 = vmatprep.subr.bf16.mxu0 %v4595
  %4602 = vmatpush1.bf16.msra.mxu0 %v4594
  %4603 = vmatprep.subr.bf16.mxu0 0
  %4604 = vmatpush1.bf16.msra.mxu0 0
  %4605 = vmatprep.subr.bf16.mxu0 0
  %4606 = vmatpush1.bf16.msra.mxu0 0
  %4607 = vmatprep.subr.bf16.mxu0 0
  %4608 = vmatpush1.bf16.msra.mxu0 0
  %4609 = vmatprep.subr.bf16.mxu0 0
  %4610 = vmatpush1.bf16.msra.mxu0 0
  %4611 = vmatprep.subr.bf16.mxu0 0
  %4612 = vmatpush1.bf16.msra.mxu0 0
  %4613 = vmatprep.subr.bf16.mxu0 0
  %4614 = vmatpush1.bf16.msra.mxu0 0
  %4615 = vmatprep.subr.bf16.mxu0 0
  %4616 = vmatpush1.bf16.msra.mxu0 0
  %4617 = vmatprep.subr.bf16.mxu0 0
  %4618 = vmatpush1.bf16.msra.mxu0 0
  %4619 = vmatprep.subr.bf16.mxu0 0
  %4620 = vmatpush1.bf16.msra.mxu0 0
  %4621 = vmatprep.subr.bf16.mxu0 0
  %4622 = vmatpush1.bf16.msra.mxu0 0
  %4623 = vmatprep.subr.bf16.mxu0 0
  %4624 = vmatpush1.bf16.msra.mxu0 0
  %4625 = vmatprep.subr.bf16.mxu0 0
  %4626 = vmatpush1.bf16.msra.mxu0 0
  %4627 = vmatprep.subr.bf16.mxu0 0
  %4628 = vmatpush1.bf16.msra.mxu0 0
  %4629 = vmatprep.subr.bf16.mxu0 0
  %4630 = vmatpush1.bf16.msra.mxu0 0
  %4631 = vmatprep.subr.bf16.mxu0 0
  %4632 = vmatpush1.bf16.msra.mxu0 0
  %4633 = vmatprep.mubr.bf16.mxu0 0
  %4634 = vmatmul.mubr.bf16.gmra.mrb[0].mxu0 %v4599
  %v4635 = vpop.f32.mrb[0].mxu0
  %v4636 = vadd.f32 0.0, %v4635
  %v4637 = vpop.f32.mrb[0].mxu0
  %v4638 = vadd.f32 0.0, %v4637
  %v4639 = vpop.f32.mrb[0].mxu0
  %v4640 = vpop.f32.mrb[0].mxu0
  %4641 = vdwg.mxu0
  %4642 = vmatprep.subr.bf16.mxu0 %v4597
  %4643 = vmatpush1.bf16.msra.mxu0 %v4596
  %4644 = vmatprep.subr.bf16.mxu0 0
  %4645 = vmatpush1.bf16.msra.mxu0 0
  %4646 = vmatprep.subr.bf16.mxu0 0
  %4647 = vmatpush1.bf16.msra.mxu0 0
  %4648 = vmatprep.subr.bf16.mxu0 0
  %4649 = vmatpush1.bf16.msra.mxu0 0
  %4650 = vmatprep.subr.bf16.mxu0 0
  %4651 = vmatpush1.bf16.msra.mxu0 0
  %4652 = vmatprep.subr.bf16.mxu0 0
  %4653 = vmatpush1.bf16.msra.mxu0 0
  %4654 = vmatprep.subr.bf16.mxu0 0
  %4655 = vmatpush1.bf16.msra.mxu0 0
  %4656 = vmatprep.subr.bf16.mxu0 0
  %4657 = vmatpush1.bf16.msra.mxu0 0
  %4658 = vmatprep.subr.bf16.mxu0 0
  %4659 = vmatpush1.bf16.msra.mxu0 0
  %4660 = vmatprep.subr.bf16.mxu0 0
  %4661 = vmatpush1.bf16.msra.mxu0 0
  %4662 = vmatprep.subr.bf16.mxu0 0
  %4663 = vmatpush1.bf16.msra.mxu0 0
  %4664 = vmatprep.subr.bf16.mxu0 0
  %4665 = vmatpush1.bf16.msra.mxu0 0
  %4666 = vmatprep.subr.bf16.mxu0 0
  %4667 = vmatpush1.bf16.msra.mxu0 0
  %4668 = vmatprep.subr.bf16.mxu0 0
  %4669 = vmatpush1.bf16.msra.mxu0 0
  %4670 = vmatprep.subr.bf16.mxu0 0
  %4671 = vmatpush1.bf16.msra.mxu0 0
  %4672 = vmatprep.subr.bf16.mxu0 0
  %4673 = vmatpush1.bf16.msra.mxu0 0
  %4674 = vmatprep.mubr.bf16.mxu0 0
  %4675 = vmatmul.mubr.bf16.gmra.mrb[0].mxu0 %v4599
  %v4676 = vpop.f32.mrb[0].mxu0
  %v4677 = vadd.f32 0.0, %v4676
  %v4678 = vpop.f32.mrb[0].mxu0
  %v4679 = vadd.f32 0.0, %v4678
  %v4680 = vpop.f32.mrb[0].mxu0
  %v4681 = vpop.f32.mrb[0].mxu0
  %4682 = vdwg.mxu0
  %v4683 = vadd.f32 %v4556, %v4636
  %v4684 = vadd.f32 %v4557, %v4638
  %v4685 = vadd.f32 %v4558, %v4677
  %v4686 = vadd.f32 %v4559, %v4679
  %v4687 = vld [vmem:[%s12] sm:$0xff]
  %4689 = vset.pattern.permute.xlu0 0
  %4690 = vperm.xlu0 %4689, %v4687
  %v4691 = vpop.permute.xlu0 %4690
  %v4693 = vmul.f32 %v4683, %v4691
  %v4694 = vmul.f32 %v4684, %v4691
  %v4695 = vmul.f32 %v4685, %v4691
  %v4696 = vmul.f32 %v4686, %v4691
  %v4697 = vld [vmem:[%s13] sm:$0xff]
  %4699 = vset.pattern.permute.xlu0 0
  %4700 = vperm.xlu0 %4699, %v4697
  %v4701 = vpop.permute.xlu0 %4700
  %v4703 = vadd.f32 %v4693, %v4701
  %v4704 = vadd.f32 %v4694, %v4701
  %v4705 = vadd.f32 %v4695, %v4701
  %v4706 = vadd.f32 %v4696, %v4701
  %v4707 = vmax.f32 %v4703, 0.0
  %v4708 = vmax.f32 %v4704, 0.0
  %v4709 = vmax.f32 %v4705, 0.0
  %v4710 = vmax.f32 %v4706, 0.0
  %v4711 = vld [vmem:[%s14] sm:$0x3]
  %v4712 = vpack.c.bf16 %v4707, %v4707
  %v4713 = vpack.c.bf16 %v4708, %v4708
  %v4714 = vpack.c.bf16 %v4709, %v4709
  %v4715 = vpack.c.bf16 %v4710, %v4710
  %v4716 = vld [vmem:[%s15] sm:$0xf]
  %4718 = vset.pattern.permute.xlu0 0
  %4719 = vperm.xlu0 %4718, %v4716
  %v4720 = vpop.permute.xlu0 %4719
  %v4723 = vsel %vm1713, %v4711, 0
  %v4726 = vsel %vm1717, %v4712, 0
  %v4729 = vsel %vm1717, %v4713, 0
  %v4732 = vsel %vm1717, %v4714, 0
  %v4735 = vsel %vm1717, %v4715, 0
  %4737 = vmatprep.subr.bf16.mxu0 %v4729
  %4738 = vmatpush1.bf16.msra.mxu0 %v4726
  %4739 = vmatprep.subr.bf16.mxu0 0
  %4740 = vmatpush1.bf16.msra.mxu0 0
  %4741 = vmatprep.subr.bf16.mxu0 0
  %4742 = vmatpush1.bf16.msra.mxu0 0
  %4743 = vmatprep.subr.bf16.mxu0 0
  %4744 = vmatpush1.bf16.msra.mxu0 0
  %4745 = vmatprep.subr.bf16.mxu0 0
  %4746 = vmatpush1.bf16.msra.mxu0 0
  %4747 = vmatprep.subr.bf16.mxu0 0
  %4748 = vmatpush1.bf16.msra.mxu0 0
  %4749 = vmatprep.subr.bf16.mxu0 0
  %4750 = vmatpush1.bf16.msra.mxu0 0
  %4751 = vmatprep.subr.bf16.mxu0 0
  %4752 = vmatpush1.bf16.msra.mxu0 0
  %4753 = vmatprep.subr.bf16.mxu0 0
  %4754 = vmatpush1.bf16.msra.mxu0 0
  %4755 = vmatprep.subr.bf16.mxu0 0
  %4756 = vmatpush1.bf16.msra.mxu0 0
  %4757 = vmatprep.subr.bf16.mxu0 0
  %4758 = vmatpush1.bf16.msra.mxu0 0
  %4759 = vmatprep.subr.bf16.mxu0 0
  %4760 = vmatpush1.bf16.msra.mxu0 0
  %4761 = vmatprep.subr.bf16.mxu0 0
  %4762 = vmatpush1.bf16.msra.mxu0 0
  %4763 = vmatprep.subr.bf16.mxu0 0
  %4764 = vmatpush1.bf16.msra.mxu0 0
  %4765 = vmatprep.subr.bf16.mxu0 0
  %4766 = vmatpush1.bf16.msra.mxu0 0
  %4767 = vmatprep.subr.bf16.mxu0 0
  %4768 = vmatpush1.bf16.msra.mxu0 0
  %4769 = vmatprep.mubr.bf16.mxu0 0
  %4770 = vmatmul.mubr.bf16.gmra.mrb[0].mxu0 %v4723
  %v4771 = vpop.f32.mrb[0].mxu0
  %v4772 = vadd.f32 %v4720, %v4771
  %v4773 = vpop.f32.mrb[0].mxu0
  %v4774 = vadd.f32 %v4720, %v4773
  %v4775 = vpop.f32.mrb[0].mxu0
  %v4776 = vpop.f32.mrb[0].mxu0
  %4777 = vdwg.mxu0
  %4778 = vmatprep.subr.bf16.mxu0 %v4735
  %4779 = vmatpush1.bf16.msra.mxu0 %v4732
  %4780 = vmatprep.subr.bf16.mxu0 0
  %4781 = vmatpush1.bf16.msra.mxu0 0
  %4782 = vmatprep.subr.bf16.mxu0 0
  %4783 = vmatpush1.bf16.msra.mxu0 0
  %4784 = vmatprep.subr.bf16.mxu0 0
  %4785 = vmatpush1.bf16.msra.mxu0 0
  %4786 = vmatprep.subr.bf16.mxu0 0
  %4787 = vmatpush1.bf16.msra.mxu0 0
  %4788 = vmatprep.subr.bf16.mxu0 0
  %4789 = vmatpush1.bf16.msra.mxu0 0
  %4790 = vmatprep.subr.bf16.mxu0 0
  %4791 = vmatpush1.bf16.msra.mxu0 0
  %4792 = vmatprep.subr.bf16.mxu0 0
  %4793 = vmatpush1.bf16.msra.mxu0 0
  %4794 = vmatprep.subr.bf16.mxu0 0
  %4795 = vmatpush1.bf16.msra.mxu0 0
  %4796 = vmatprep.subr.bf16.mxu0 0
  %4797 = vmatpush1.bf16.msra.mxu0 0
  %4798 = vmatprep.subr.bf16.mxu0 0
  %4799 = vmatpush1.bf16.msra.mxu0 0
  %4800 = vmatprep.subr.bf16.mxu0 0
  %4801 = vmatpush1.bf16.msra.mxu0 0
  %4802 = vmatprep.subr.bf16.mxu0 0
  %4803 = vmatpush1.bf16.msra.mxu0 0
  %4804 = vmatprep.subr.bf16.mxu0 0
  %4805 = vmatpush1.bf16.msra.mxu0 0
  %4806 = vmatprep.subr.bf16.mxu0 0
  %4807 = vmatpush1.bf16.msra.mxu0 0
  %4808 = vmatprep.subr.bf16.mxu0 0
  %4809 = vmatpush1.bf16.msra.mxu0 0
  %4810 = vmatprep.mubr.bf16.mxu0 0
  %4811 = vmatmul.mubr.bf16.gmra.mrb[0].mxu0 %v4723
  %v4812 = vpop.f32.mrb[0].mxu0
  %v4813 = vadd.f32 %v4720, %v4812
  %v4814 = vpop.f32.mrb[0].mxu0
  %v4815 = vadd.f32 %v4720, %v4814
  %v4816 = vpop.f32.mrb[0].mxu0
  %v4817 = vpop.f32.mrb[0].mxu0
  %4818 = vdwg.mxu0
  %v4819 = vld [vmem:[%s16] sm:$0xf]
  %v4820 = vld [vmem:[%s16 + $0x4] sm:$0xf]
  %4821 = vrot.lane.b32.xlu0 %v4772, 17
  %v4822 = vpop.permute.xlu0 %4821
  %4823 = vrot.lane.b32.xlu0 %v4774, 17
  %v4824 = vpop.permute.xlu0 %4823
  %4825 = vrot.lane.b32.xlu0 %v4813, 17
  %v4826 = vpop.permute.xlu0 %4825
  %4827 = vrot.lane.b32.xlu0 %v4815, 17
  %v4828 = vpop.permute.xlu0 %4827
  %v4829 = vsel %vm157, %v4826, %v4828
  %v4830 = vsel %vm157, %v4824, %v4826
  %v4831 = vsel %vm157, %v4822, %v4824
  %v4832 = vsel %vm157, %v4828, %v4822
  %v4833 = vld [vmem:[%s17] sm:$0xf]
  %v4834 = vld [vmem:[%s17 + $0x4] sm:$0xf]
  %v4835 = vmul.f32 %v4832, %v139
  %v4836 = vmul.f32 %v4831, %v140
  %v4837 = vmul.f32 %v4830, %v141
  %v4838 = vmul.f32 %v4829, %v142
  %v4839 = vpack.c.bf16 %v4835, %v4835
  %v4840 = vpack.c.bf16 %v4836, %v4836
  %v4841 = vpack.c.bf16 %v4837, %v4837
  %v4842 = vpack.c.bf16 %v4838, %v4838
  %v4845 = vunpack.c.l.b16 %v4833
  %v4846 = vunpack.c.l.b16 %v4834
  %v4847 = vpack.c.b16 %v4846, %v4845
  %v4849 = vsel %vm214, %v4847, 0
  %v4852 = vsel %vm218, %v4839, 0
  %v4855 = vsel %vm218, %v4840, 0
  %v4858 = vsel %vm218, %v4841, 0
  %v4861 = vsel %vm218, %v4842, 0
  %4863 = vmatprep.subr.bf16.mxu0 %v4855
  %4864 = vmatpush1.bf16.msra.mxu0 %v4852
  %4865 = vmatprep.subr.bf16.mxu0 0
  %4866 = vmatpush1.bf16.msra.mxu0 0
  %4867 = vmatprep.subr.bf16.mxu0 0
  %4868 = vmatpush1.bf16.msra.mxu0 0
  %4869 = vmatprep.subr.bf16.mxu0 0
  %4870 = vmatpush1.bf16.msra.mxu0 0
  %4871 = vmatprep.subr.bf16.mxu0 0
  %4872 = vmatpush1.bf16.msra.mxu0 0
  %4873 = vmatprep.subr.bf16.mxu0 0
  %4874 = vmatpush1.bf16.msra.mxu0 0
  %4875 = vmatprep.subr.bf16.mxu0 0
  %4876 = vmatpush1.bf16.msra.mxu0 0
  %4877 = vmatprep.subr.bf16.mxu0 0
  %4878 = vmatpush1.bf16.msra.mxu0 0
  %4879 = vmatprep.subr.bf16.mxu0 0
  %4880 = vmatpush1.bf16.msra.mxu0 0
  %4881 = vmatprep.subr.bf16.mxu0 0
  %4882 = vmatpush1.bf16.msra.mxu0 0
  %4883 = vmatprep.subr.bf16.mxu0 0
  %4884 = vmatpush1.bf16.msra.mxu0 0
  %4885 = vmatprep.subr.bf16.mxu0 0
  %4886 = vmatpush1.bf16.msra.mxu0 0
  %4887 = vmatprep.subr.bf16.mxu0 0
  %4888 = vmatpush1.bf16.msra.mxu0 0
  %4889 = vmatprep.subr.bf16.mxu0 0
  %4890 = vmatpush1.bf16.msra.mxu0 0
  %4891 = vmatprep.subr.bf16.mxu0 0
  %4892 = vmatpush1.bf16.msra.mxu0 0
  %4893 = vmatprep.subr.bf16.mxu0 0
  %4894 = vmatpush1.bf16.msra.mxu0 0
  %4895 = vmatprep.mubr.bf16.mxu0 0
  %4896 = vmatmul.mubr.bf16.gmra.mrb[0].mxu0 %v4849
  %v4897 = vpop.f32.mrb[0].mxu0
  %v4898 = vadd.f32 0.0, %v4897
  %v4899 = vpop.f32.mrb[0].mxu0
  %v4900 = vadd.f32 0.0, %v4899
  %v4901 = vpop.f32.mrb[0].mxu0
  %v4902 = vadd.f32 0.0, %v4901
  %v4903 = vpop.f32.mrb[0].mxu0
  %v4904 = vadd.f32 0.0, %v4903
  %4905 = vdwg.mxu0
  %4906 = vmatprep.subr.bf16.mxu0 %v4861
  %4907 = vmatpush1.bf16.msra.mxu0 %v4858
  %4908 = vmatprep.subr.bf16.mxu0 0
  %4909 = vmatpush1.bf16.msra.mxu0 0
  %4910 = vmatprep.subr.bf16.mxu0 0
  %4911 = vmatpush1.bf16.msra.mxu0 0
  %4912 = vmatprep.subr.bf16.mxu0 0
  %4913 = vmatpush1.bf16.msra.mxu0 0
  %4914 = vmatprep.subr.bf16.mxu0 0
  %4915 = vmatpush1.bf16.msra.mxu0 0
  %4916 = vmatprep.subr.bf16.mxu0 0
  %4917 = vmatpush1.bf16.msra.mxu0 0
  %4918 = vmatprep.subr.bf16.mxu0 0
  %4919 = vmatpush1.bf16.msra.mxu0 0
  %4920 = vmatprep.subr.bf16.mxu0 0
  %4921 = vmatpush1.bf16.msra.mxu0 0
  %4922 = vmatprep.subr.bf16.mxu0 0
  %4923 = vmatpush1.bf16.msra.mxu0 0
  %4924 = vmatprep.subr.bf16.mxu0 0
  %4925 = vmatpush1.bf16.msra.mxu0 0
  %4926 = vmatprep.subr.bf16.mxu0 0
  %4927 = vmatpush1.bf16.msra.mxu0 0
  %4928 = vmatprep.subr.bf16.mxu0 0
  %4929 = vmatpush1.bf16.msra.mxu0 0
  %4930 = vmatprep.subr.bf16.mxu0 0
  %4931 = vmatpush1.bf16.msra.mxu0 0
  %4932 = vmatprep.subr.bf16.mxu0 0
  %4933 = vmatpush1.bf16.msra.mxu0 0
  %4934 = vmatprep.subr.bf16.mxu0 0
  %4935 = vmatpush1.bf16.msra.mxu0 0
  %4936 = vmatprep.subr.bf16.mxu0 0
  %4937 = vmatpush1.bf16.msra.mxu0 0
  %4938 = vmatprep.mubr.bf16.mxu0 0
  %4939 = vmatmul.mubr.bf16.gmra.mrb[0].mxu0 %v4849
  %v4940 = vpop.f32.mrb[0].mxu0
  %v4941 = vadd.f32 0.0, %v4940
  %v4942 = vpop.f32.mrb[0].mxu0
  %v4943 = vadd.f32 0.0, %v4942
  %v4944 = vpop.f32.mrb[0].mxu0
  %v4945 = vadd.f32 0.0, %v4944
  %v4946 = vpop.f32.mrb[0].mxu0
  %v4947 = vadd.f32 0.0, %v4946
  %4948 = vdwg.mxu0
  %v4951 = vunpack.c.l.b16 %v4819
  %v4952 = vunpack.c.l.b16 %v4820
  %v4953 = vpack.c.b16 %v4952, %v4951
  %v4955 = vsel %vm214, %v4953, 0
  %4957 = vmatprep.subr.bf16.mxu0 %v320
  %4958 = vmatpush1.bf16.msra.mxu0 %v317
  %4959 = vmatprep.subr.bf16.mxu0 0
  %4960 = vmatpush1.bf16.msra.mxu0 0
  %4961 = vmatprep.subr.bf16.mxu0 0
  %4962 = vmatpush1.bf16.msra.mxu0 0
  %4963 = vmatprep.subr.bf16.mxu0 0
  %4964 = vmatpush1.bf16.msra.mxu0 0
  %4965 = vmatprep.subr.bf16.mxu0 0
  %4966 = vmatpush1.bf16.msra.mxu0 0
  %4967 = vmatprep.subr.bf16.mxu0 0
  %4968 = vmatpush1.bf16.msra.mxu0 0
  %4969 = vmatprep.subr.bf16.mxu0 0
  %4970 = vmatpush1.bf16.msra.mxu0 0
  %4971 = vmatprep.subr.bf16.mxu0 0
  %4972 = vmatpush1.bf16.msra.mxu0 0
  %4973 = vmatprep.subr.bf16.mxu0 0
  %4974 = vmatpush1.bf16.msra.mxu0 0
  %4975 = vmatprep.subr.bf16.mxu0 0
  %4976 = vmatpush1.bf16.msra.mxu0 0
  %4977 = vmatprep.subr.bf16.mxu0 0
  %4978 = vmatpush1.bf16.msra.mxu0 0
  %4979 = vmatprep.subr.bf16.mxu0 0
  %4980 = vmatpush1.bf16.msra.mxu0 0
  %4981 = vmatprep.subr.bf16.mxu0 0
  %4982 = vmatpush1.bf16.msra.mxu0 0
  %4983 = vmatprep.subr.bf16.mxu0 0
  %4984 = vmatpush1.bf16.msra.mxu0 0
  %4985 = vmatprep.subr.bf16.mxu0 0
  %4986 = vmatpush1.bf16.msra.mxu0 0
  %4987 = vmatprep.subr.bf16.mxu0 0
  %4988 = vmatpush1.bf16.msra.mxu0 0
  %4989 = vmatprep.mubr.bf16.mxu0 0
  %4990 = vmatmul.mubr.bf16.gmra.mrb[0].mxu0 %v4955
  %v4991 = vpop.f32.mrb[0].mxu0
  %v4992 = vadd.f32 %v4898, %v4991
  %v4993 = vpop.f32.mrb[0].mxu0
  %v4994 = vadd.f32 %v4900, %v4993
  %v4995 = vpop.f32.mrb[0].mxu0
  %v4996 = vadd.f32 %v4902, %v4995
  %v4997 = vpop.f32.mrb[0].mxu0
  %v4998 = vadd.f32 %v4904, %v4997
  %4999 = vdwg.mxu0
  %5000 = vmatprep.subr.bf16.mxu0 %v326
  %5001 = vmatpush1.bf16.msra.mxu0 %v323
  %5002 = vmatprep.subr.bf16.mxu0 0
  %5003 = vmatpush1.bf16.msra.mxu0 0
  %5004 = vmatprep.subr.bf16.mxu0 0
  %5005 = vmatpush1.bf16.msra.mxu0 0
  %5006 = vmatprep.subr.bf16.mxu0 0
  %5007 = vmatpush1.bf16.msra.mxu0 0
  %5008 = vmatprep.subr.bf16.mxu0 0
  %5009 = vmatpush1.bf16.msra.mxu0 0
  %5010 = vmatprep.subr.bf16.mxu0 0
  %5011 = vmatpush1.bf16.msra.mxu0 0
  %5012 = vmatprep.subr.bf16.mxu0 0
  %5013 = vmatpush1.bf16.msra.mxu0 0
  %5014 = vmatprep.subr.bf16.mxu0 0
  %5015 = vmatpush1.bf16.msra.mxu0 0
  %5016 = vmatprep.subr.bf16.mxu0 0
  %5017 = vmatpush1.bf16.msra.mxu0 0
  %5018 = vmatprep.subr.bf16.mxu0 0
  %5019 = vmatpush1.bf16.msra.mxu0 0
  %5020 = vmatprep.subr.bf16.mxu0 0
  %5021 = vmatpush1.bf16.msra.mxu0 0
  %5022 = vmatprep.subr.bf16.mxu0 0
  %5023 = vmatpush1.bf16.msra.mxu0 0
  %5024 = vmatprep.subr.bf16.mxu0 0
  %5025 = vmatpush1.bf16.msra.mxu0 0
  %5026 = vmatprep.subr.bf16.mxu0 0
  %5027 = vmatpush1.bf16.msra.mxu0 0
  %5028 = vmatprep.subr.bf16.mxu0 0
  %5029 = vmatpush1.bf16.msra.mxu0 0
  %5030 = vmatprep.subr.bf16.mxu0 0
  %5031 = vmatpush1.bf16.msra.mxu0 0
  %5032 = vmatprep.mubr.bf16.mxu0 0
  %5033 = vmatmul.mubr.bf16.gmra.mrb[0].mxu0 %v4955
  %v5034 = vpop.f32.mrb[0].mxu0
  %v5035 = vadd.f32 %v4941, %v5034
  %v5036 = vpop.f32.mrb[0].mxu0
  %v5037 = vadd.f32 %v4943, %v5036
  %v5038 = vpop.f32.mrb[0].mxu0
  %v5039 = vadd.f32 %v4945, %v5038
  %v5040 = vpop.f32.mrb[0].mxu0
  %v5041 = vadd.f32 %v4947, %v5040
  %5042 = vdwg.mxu0
  %s5043 = scalar_lea.vmem %s16, 8
  %v5044 = vld [vmem:[%s5043] sm:$0xf]
  %v5045 = vld [vmem:[%s5043 + $0x4] sm:$0xf]
  %v5048 = vunpack.c.l.b16 %v5044
  %v5049 = vunpack.c.l.b16 %v5045
  %v5050 = vpack.c.b16 %v5049, %v5048
  %v5052 = vsel %vm214, %v5050, 0
  %5054 = vmatprep.subr.bf16.mxu0 %v223
  %5055 = vmatpush1.bf16.msra.mxu0 %v220
  %5056 = vmatprep.subr.bf16.mxu0 0
  %5057 = vmatpush1.bf16.msra.mxu0 0
  %5058 = vmatprep.subr.bf16.mxu0 0
  %5059 = vmatpush1.bf16.msra.mxu0 0
  %5060 = vmatprep.subr.bf16.mxu0 0
  %5061 = vmatpush1.bf16.msra.mxu0 0
  %5062 = vmatprep.subr.bf16.mxu0 0
  %5063 = vmatpush1.bf16.msra.mxu0 0
  %5064 = vmatprep.subr.bf16.mxu0 0
  %5065 = vmatpush1.bf16.msra.mxu0 0
  %5066 = vmatprep.subr.bf16.mxu0 0
  %5067 = vmatpush1.bf16.msra.mxu0 0
  %5068 = vmatprep.subr.bf16.mxu0 0
  %5069 = vmatpush1.bf16.msra.mxu0 0
  %5070 = vmatprep.subr.bf16.mxu0 0
  %5071 = vmatpush1.bf16.msra.mxu0 0
  %5072 = vmatprep.subr.bf16.mxu0 0
  %5073 = vmatpush1.bf16.msra.mxu0 0
  %5074 = vmatprep.subr.bf16.mxu0 0
  %5075 = vmatpush1.bf16.msra.mxu0 0
  %5076 = vmatprep.subr.bf16.mxu0 0
  %5077 = vmatpush1.bf16.msra.mxu0 0
  %5078 = vmatprep.subr.bf16.mxu0 0
  %5079 = vmatpush1.bf16.msra.mxu0 0
  %5080 = vmatprep.subr.bf16.mxu0 0
  %5081 = vmatpush1.bf16.msra.mxu0 0
  %5082 = vmatprep.subr.bf16.mxu0 0
  %5083 = vmatpush1.bf16.msra.mxu0 0
  %5084 = vmatprep.subr.bf16.mxu0 0
  %5085 = vmatpush1.bf16.msra.mxu0 0
  %5086 = vmatprep.mubr.bf16.mxu0 0
  %5087 = vmatmul.mubr.bf16.gmra.mrb[0].mxu0 %v5052
  %v5088 = vpop.f32.mrb[0].mxu0
  %v5089 = vadd.f32 0.0, %v5088
  %v5090 = vpop.f32.mrb[0].mxu0
  %v5091 = vadd.f32 0.0, %v5090
  %v5092 = vpop.f32.mrb[0].mxu0
  %v5093 = vadd.f32 0.0, %v5092
  %v5094 = vpop.f32.mrb[0].mxu0
  %v5095 = vadd.f32 0.0, %v5094
  %5096 = vdwg.mxu0
  %5097 = vmatprep.subr.bf16.mxu0 %v229
  %5098 = vmatpush1.bf16.msra.mxu0 %v226
  %5099 = vmatprep.subr.bf16.mxu0 0
  %5100 = vmatpush1.bf16.msra.mxu0 0
  %5101 = vmatprep.subr.bf16.mxu0 0
  %5102 = vmatpush1.bf16.msra.mxu0 0
  %5103 = vmatprep.subr.bf16.mxu0 0
  %5104 = vmatpush1.bf16.msra.mxu0 0
  %5105 = vmatprep.subr.bf16.mxu0 0
  %5106 = vmatpush1.bf16.msra.mxu0 0
  %5107 = vmatprep.subr.bf16.mxu0 0
  %5108 = vmatpush1.bf16.msra.mxu0 0
  %5109 = vmatprep.subr.bf16.mxu0 0
  %5110 = vmatpush1.bf16.msra.mxu0 0
  %5111 = vmatprep.subr.bf16.mxu0 0
  %5112 = vmatpush1.bf16.msra.mxu0 0
  %5113 = vmatprep.subr.bf16.mxu0 0
  %5114 = vmatpush1.bf16.msra.mxu0 0
  %5115 = vmatprep.subr.bf16.mxu0 0
  %5116 = vmatpush1.bf16.msra.mxu0 0
  %5117 = vmatprep.subr.bf16.mxu0 0
  %5118 = vmatpush1.bf16.msra.mxu0 0
  %5119 = vmatprep.subr.bf16.mxu0 0
  %5120 = vmatpush1.bf16.msra.mxu0 0
  %5121 = vmatprep.subr.bf16.mxu0 0
  %5122 = vmatpush1.bf16.msra.mxu0 0
  %5123 = vmatprep.subr.bf16.mxu0 0
  %5124 = vmatpush1.bf16.msra.mxu0 0
  %5125 = vmatprep.subr.bf16.mxu0 0
  %5126 = vmatpush1.bf16.msra.mxu0 0
  %5127 = vmatprep.subr.bf16.mxu0 0
  %5128 = vmatpush1.bf16.msra.mxu0 0
  %5129 = vmatprep.mubr.bf16.mxu0 0
  %5130 = vmatmul.mubr.bf16.gmra.mrb[0].mxu0 %v5052
  %v5131 = vpop.f32.mrb[0].mxu0
  %v5132 = vadd.f32 0.0, %v5131
  %v5133 = vpop.f32.mrb[0].mxu0
  %v5134 = vadd.f32 0.0, %v5133
  %v5135 = vpop.f32.mrb[0].mxu0
  %v5136 = vadd.f32 0.0, %v5135
  %v5137 = vpop.f32.mrb[0].mxu0
  %v5138 = vadd.f32 0.0, %v5137
  %5139 = vdwg.mxu0
  %v5140 = vadd.f32 %v4992, %v5089
  %v5141 = vadd.f32 %v4994, %v5091
  %v5142 = vadd.f32 %v5035, %v5132
  %v5143 = vadd.f32 %v5037, %v5134
  %v5144 = vadd.f32 %v4996, %v5093
  %v5145 = vadd.f32 %v4998, %v5095
  %v5146 = vadd.f32 %v5039, %v5136
  %v5147 = vadd.f32 %v5041, %v5138
  %5148 = vrot.lane.b32.xlu0 %v4772, 16
  %v5149 = vpop.permute.xlu0 %5148
  %5150 = vrot.lane.b32.xlu0 %v4774, 16
  %v5151 = vpop.permute.xlu0 %5150
  %5152 = vrot.lane.b32.xlu0 %v4813, 16
  %v5153 = vpop.permute.xlu0 %5152
  %5154 = vrot.lane.b32.xlu0 %v4815, 16
  %v5155 = vpop.permute.xlu0 %5154
  %v5156 = vsel %vm199, %v5153, %v5155
  %v5157 = vsel %vm199, %v5151, %v5153
  %v5158 = vsel %vm199, %v5149, %v5151
  %v5159 = vsel %vm199, %v5155, %v5149
  %s5160 = scalar_lea.vmem %s17, 8
  %v5161 = vld [vmem:[%s5160] sm:$0xf]
  %v5162 = vld [vmem:[%s5160 + $0x4] sm:$0xf]
  %v5163 = vmul.f32 %v5159, %v187
  %v5164 = vmul.f32 %v5158, %v188
  %v5165 = vmul.f32 %v5157, %v189
  %v5166 = vmul.f32 %v5156, %v190
  %v5167 = vpack.c.bf16 %v5163, %v5163
  %v5168 = vpack.c.bf16 %v5164, %v5164
  %v5169 = vpack.c.bf16 %v5165, %v5165
  %v5170 = vpack.c.bf16 %v5166, %v5166
  %v5173 = vunpack.c.l.b16 %v5161
  %v5174 = vunpack.c.l.b16 %v5162
  %v5175 = vpack.c.b16 %v5174, %v5173
  %v5177 = vsel %vm214, %v5175, 0
  %v5180 = vsel %vm218, %v5167, 0
  %v5183 = vsel %vm218, %v5168, 0
  %v5186 = vsel %vm218, %v5169, 0
  %v5189 = vsel %vm218, %v5170, 0
  %5191 = vmatprep.subr.bf16.mxu0 %v5183
  %5192 = vmatpush1.bf16.msra.mxu0 %v5180
  %5193 = vmatprep.subr.bf16.mxu0 0
  %5194 = vmatpush1.bf16.msra.mxu0 0
  %5195 = vmatprep.subr.bf16.mxu0 0
  %5196 = vmatpush1.bf16.msra.mxu0 0
  %5197 = vmatprep.subr.bf16.mxu0 0
  %5198 = vmatpush1.bf16.msra.mxu0 0
  %5199 = vmatprep.subr.bf16.mxu0 0
  %5200 = vmatpush1.bf16.msra.mxu0 0
  %5201 = vmatprep.subr.bf16.mxu0 0
  %5202 = vmatpush1.bf16.msra.mxu0 0
  %5203 = vmatprep.subr.bf16.mxu0 0
  %5204 = vmatpush1.bf16.msra.mxu0 0
  %5205 = vmatprep.subr.bf16.mxu0 0
  %5206 = vmatpush1.bf16.msra.mxu0 0
  %5207 = vmatprep.subr.bf16.mxu0 0
  %5208 = vmatpush1.bf16.msra.mxu0 0
  %5209 = vmatprep.subr.bf16.mxu0 0
  %5210 = vmatpush1.bf16.msra.mxu0 0
  %5211 = vmatprep.subr.bf16.mxu0 0
  %5212 = vmatpush1.bf16.msra.mxu0 0
  %5213 = vmatprep.subr.bf16.mxu0 0
  %5214 = vmatpush1.bf16.msra.mxu0 0
  %5215 = vmatprep.subr.bf16.mxu0 0
  %5216 = vmatpush1.bf16.msra.mxu0 0
  %5217 = vmatprep.subr.bf16.mxu0 0
  %5218 = vmatpush1.bf16.msra.mxu0 0
  %5219 = vmatprep.subr.bf16.mxu0 0
  %5220 = vmatpush1.bf16.msra.mxu0 0
  %5221 = vmatprep.subr.bf16.mxu0 0
  %5222 = vmatpush1.bf16.msra.mxu0 0
  %5223 = vmatprep.mubr.bf16.mxu0 0
  %5224 = vmatmul.mubr.bf16.gmra.mrb[0].mxu0 %v5177
  %v5225 = vpop.f32.mrb[0].mxu0
  %v5226 = vadd.f32 0.0, %v5225
  %v5227 = vpop.f32.mrb[0].mxu0
  %v5228 = vadd.f32 0.0, %v5227
  %v5229 = vpop.f32.mrb[0].mxu0
  %v5230 = vadd.f32 0.0, %v5229
  %v5231 = vpop.f32.mrb[0].mxu0
  %v5232 = vadd.f32 0.0, %v5231
  %5233 = vdwg.mxu0
  %5234 = vmatprep.subr.bf16.mxu0 %v5189
  %5235 = vmatpush1.bf16.msra.mxu0 %v5186
  %5236 = vmatprep.subr.bf16.mxu0 0
  %5237 = vmatpush1.bf16.msra.mxu0 0
  %5238 = vmatprep.subr.bf16.mxu0 0
  %5239 = vmatpush1.bf16.msra.mxu0 0
  %5240 = vmatprep.subr.bf16.mxu0 0
  %5241 = vmatpush1.bf16.msra.mxu0 0
  %5242 = vmatprep.subr.bf16.mxu0 0
  %5243 = vmatpush1.bf16.msra.mxu0 0
  %5244 = vmatprep.subr.bf16.mxu0 0
  %5245 = vmatpush1.bf16.msra.mxu0 0
  %5246 = vmatprep.subr.bf16.mxu0 0
  %5247 = vmatpush1.bf16.msra.mxu0 0
  %5248 = vmatprep.subr.bf16.mxu0 0
  %5249 = vmatpush1.bf16.msra.mxu0 0
  %5250 = vmatprep.subr.bf16.mxu0 0
  %5251 = vmatpush1.bf16.msra.mxu0 0
  %5252 = vmatprep.subr.bf16.mxu0 0
  %5253 = vmatpush1.bf16.msra.mxu0 0
  %5254 = vmatprep.subr.bf16.mxu0 0
  %5255 = vmatpush1.bf16.msra.mxu0 0
  %5256 = vmatprep.subr.bf16.mxu0 0
  %5257 = vmatpush1.bf16.msra.mxu0 0
  %5258 = vmatprep.subr.bf16.mxu0 0
  %5259 = vmatpush1.bf16.msra.mxu0 0
  %5260 = vmatprep.subr.bf16.mxu0 0
  %5261 = vmatpush1.bf16.msra.mxu0 0
  %5262 = vmatprep.subr.bf16.mxu0 0
  %5263 = vmatpush1.bf16.msra.mxu0 0
  %5264 = vmatprep.subr.bf16.mxu0 0
  %5265 = vmatpush1.bf16.msra.mxu0 0
  %5266 = vmatprep.mubr.bf16.mxu0 0
  %5267 = vmatmul.mubr.bf16.gmra.mrb[0].mxu0 %v5177
  %v5268 = vpop.f32.mrb[0].mxu0
  %v5269 = vadd.f32 0.0, %v5268
  %v5270 = vpop.f32.mrb[0].mxu0
  %v5271 = vadd.f32 0.0, %v5270
  %v5272 = vpop.f32.mrb[0].mxu0
  %v5273 = vadd.f32 0.0, %v5272
  %v5274 = vpop.f32.mrb[0].mxu0
  %v5275 = vadd.f32 0.0, %v5274
  %5276 = vdwg.mxu0
  %v5277 = vadd.f32 %v5140, %v5226
  %v5278 = vadd.f32 %v5141, %v5228
  %v5279 = vadd.f32 %v5142, %v5269
  %v5280 = vadd.f32 %v5143, %v5271
  %v5281 = vadd.f32 %v5144, %v5230
  %v5282 = vadd.f32 %v5145, %v5232
  %v5283 = vadd.f32 %v5146, %v5273
  %v5284 = vadd.f32 %v5147, %v5275
  %s5285 = scalar_lea.vmem %s16, 16
  %v5286 = vld [vmem:[%s5285] sm:$0xf]
  %v5287 = vld [vmem:[%s5285 + $0x4] sm:$0xf]
  %v5290 = vunpack.c.l.b16 %v5286
  %v5291 = vunpack.c.l.b16 %v5287
  %v5292 = vpack.c.b16 %v5291, %v5290
  %v5294 = vsel %vm214, %v5292, 0
  %5296 = vmatprep.subr.bf16.mxu0 %v464
  %5297 = vmatpush1.bf16.msra.mxu0 %v461
  %5298 = vmatprep.subr.bf16.mxu0 0
  %5299 = vmatpush1.bf16.msra.mxu0 0
  %5300 = vmatprep.subr.bf16.mxu0 0
  %5301 = vmatpush1.bf16.msra.mxu0 0
  %5302 = vmatprep.subr.bf16.mxu0 0
  %5303 = vmatpush1.bf16.msra.mxu0 0
  %5304 = vmatprep.subr.bf16.mxu0 0
  %5305 = vmatpush1.bf16.msra.mxu0 0
  %5306 = vmatprep.subr.bf16.mxu0 0
  %5307 = vmatpush1.bf16.msra.mxu0 0
  %5308 = vmatprep.subr.bf16.mxu0 0
  %5309 = vmatpush1.bf16.msra.mxu0 0
  %5310 = vmatprep.subr.bf16.mxu0 0
  %5311 = vmatpush1.bf16.msra.mxu0 0
  %5312 = vmatprep.subr.bf16.mxu0 0
  %5313 = vmatpush1.bf16.msra.mxu0 0
  %5314 = vmatprep.subr.bf16.mxu0 0
  %5315 = vmatpush1.bf16.msra.mxu0 0
  %5316 = vmatprep.subr.bf16.mxu0 0
  %5317 = vmatpush1.bf16.msra.mxu0 0
  %5318 = vmatprep.subr.bf16.mxu0 0
  %5319 = vmatpush1.bf16.msra.mxu0 0
  %5320 = vmatprep.subr.bf16.mxu0 0
  %5321 = vmatpush1.bf16.msra.mxu0 0
  %5322 = vmatprep.subr.bf16.mxu0 0
  %5323 = vmatpush1.bf16.msra.mxu0 0
  %5324 = vmatprep.subr.bf16.mxu0 0
  %5325 = vmatpush1.bf16.msra.mxu0 0
  %5326 = vmatprep.subr.bf16.mxu0 0
  %5327 = vmatpush1.bf16.msra.mxu0 0
  %5328 = vmatprep.mubr.bf16.mxu0 0
  %5329 = vmatmul.mubr.bf16.gmra.mrb[0].mxu0 %v5294
  %v5330 = vpop.f32.mrb[0].mxu0
  %v5331 = vadd.f32 0.0, %v5330
  %v5332 = vpop.f32.mrb[0].mxu0
  %v5333 = vadd.f32 0.0, %v5332
  %v5334 = vpop.f32.mrb[0].mxu0
  %v5335 = vadd.f32 0.0, %v5334
  %v5336 = vpop.f32.mrb[0].mxu0
  %v5337 = vadd.f32 0.0, %v5336
  %5338 = vdwg.mxu0
  %5339 = vmatprep.subr.bf16.mxu0 %v470
  %5340 = vmatpush1.bf16.msra.mxu0 %v467
  %5341 = vmatprep.subr.bf16.mxu0 0
  %5342 = vmatpush1.bf16.msra.mxu0 0
  %5343 = vmatprep.subr.bf16.mxu0 0
  %5344 = vmatpush1.bf16.msra.mxu0 0
  %5345 = vmatprep.subr.bf16.mxu0 0
  %5346 = vmatpush1.bf16.msra.mxu0 0
  %5347 = vmatprep.subr.bf16.mxu0 0
  %5348 = vmatpush1.bf16.msra.mxu0 0
  %5349 = vmatprep.subr.bf16.mxu0 0
  %5350 = vmatpush1.bf16.msra.mxu0 0
  %5351 = vmatprep.subr.bf16.mxu0 0
  %5352 = vmatpush1.bf16.msra.mxu0 0
  %5353 = vmatprep.subr.bf16.mxu0 0
  %5354 = vmatpush1.bf16.msra.mxu0 0
  %5355 = vmatprep.subr.bf16.mxu0 0
  %5356 = vmatpush1.bf16.msra.mxu0 0
  %5357 = vmatprep.subr.bf16.mxu0 0
  %5358 = vmatpush1.bf16.msra.mxu0 0
  %5359 = vmatprep.subr.bf16.mxu0 0
  %5360 = vmatpush1.bf16.msra.mxu0 0
  %5361 = vmatprep.subr.bf16.mxu0 0
  %5362 = vmatpush1.bf16.msra.mxu0 0
  %5363 = vmatprep.subr.bf16.mxu0 0
  %5364 = vmatpush1.bf16.msra.mxu0 0
  %5365 = vmatprep.subr.bf16.mxu0 0
  %5366 = vmatpush1.bf16.msra.mxu0 0
  %5367 = vmatprep.subr.bf16.mxu0 0
  %5368 = vmatpush1.bf16.msra.mxu0 0
  %5369 = vmatprep.subr.bf16.mxu0 0
  %5370 = vmatpush1.bf16.msra.mxu0 0
  %5371 = vmatprep.mubr.bf16.mxu0 0
  %5372 = vmatmul.mubr.bf16.gmra.mrb[0].mxu0 %v5294
  %v5373 = vpop.f32.mrb[0].mxu0
  %v5374 = vadd.f32 0.0, %v5373
  %v5375 = vpop.f32.mrb[0].mxu0
  %v5376 = vadd.f32 0.0, %v5375
  %v5377 = vpop.f32.mrb[0].mxu0
  %v5378 = vadd.f32 0.0, %v5377
  %v5379 = vpop.f32.mrb[0].mxu0
  %v5380 = vadd.f32 0.0, %v5379
  %5381 = vdwg.mxu0
  %v5382 = vadd.f32 %v5277, %v5331
  %v5383 = vadd.f32 %v5278, %v5333
  %v5384 = vadd.f32 %v5279, %v5374
  %v5385 = vadd.f32 %v5280, %v5376
  %v5386 = vadd.f32 %v5281, %v5335
  %v5387 = vadd.f32 %v5282, %v5337
  %v5388 = vadd.f32 %v5283, %v5378
  %v5389 = vadd.f32 %v5284, %v5380
  %5390 = vrot.lane.b32.xlu0 %v4772, 15
  %v5391 = vpop.permute.xlu0 %5390
  %5392 = vrot.lane.b32.xlu0 %v4774, 15
  %v5393 = vpop.permute.xlu0 %5392
  %5394 = vrot.lane.b32.xlu0 %v4813, 15
  %v5395 = vpop.permute.xlu0 %5394
  %5396 = vrot.lane.b32.xlu0 %v4815, 15
  %v5397 = vpop.permute.xlu0 %5396
  %v5398 = vsel %vm442, %v5395, %v5397
  %v5399 = vsel %vm442, %v5393, %v5395
  %v5400 = vsel %vm442, %v5391, %v5393
  %v5401 = vsel %vm442, %v5397, %v5391
  %s5402 = scalar_lea.vmem %s17, 16
  %v5403 = vld [vmem:[%s5402] sm:$0xf]
  %v5404 = vld [vmem:[%s5402 + $0x4] sm:$0xf]
  %v5405 = vmul.f32 %v5401, %v430
  %v5406 = vmul.f32 %v5400, %v431
  %v5407 = vmul.f32 %v5399, %v432
  %v5408 = vmul.f32 %v5398, %v433
  %v5409 = vpack.c.bf16 %v5405, %v5405
  %v5410 = vpack.c.bf16 %v5406, %v5406
  %v5411 = vpack.c.bf16 %v5407, %v5407
  %v5412 = vpack.c.bf16 %v5408, %v5408
  %v5415 = vunpack.c.l.b16 %v5403
  %v5416 = vunpack.c.l.b16 %v5404
  %v5417 = vpack.c.b16 %v5416, %v5415
  %v5419 = vsel %vm214, %v5417, 0
  %v5422 = vsel %vm218, %v5409, 0
  %v5425 = vsel %vm218, %v5410, 0
  %v5428 = vsel %vm218, %v5411, 0
  %v5431 = vsel %vm218, %v5412, 0
  %5433 = vmatprep.subr.bf16.mxu0 %v5425
  %5434 = vmatpush1.bf16.msra.mxu0 %v5422
  %5435 = vmatprep.subr.bf16.mxu0 0
  %5436 = vmatpush1.bf16.msra.mxu0 0
  %5437 = vmatprep.subr.bf16.mxu0 0
  %5438 = vmatpush1.bf16.msra.mxu0 0
  %5439 = vmatprep.subr.bf16.mxu0 0
  %5440 = vmatpush1.bf16.msra.mxu0 0
  %5441 = vmatprep.subr.bf16.mxu0 0
  %5442 = vmatpush1.bf16.msra.mxu0 0
  %5443 = vmatprep.subr.bf16.mxu0 0
  %5444 = vmatpush1.bf16.msra.mxu0 0
  %5445 = vmatprep.subr.bf16.mxu0 0
  %5446 = vmatpush1.bf16.msra.mxu0 0
  %5447 = vmatprep.subr.bf16.mxu0 0
  %5448 = vmatpush1.bf16.msra.mxu0 0
  %5449 = vmatprep.subr.bf16.mxu0 0
  %5450 = vmatpush1.bf16.msra.mxu0 0
  %5451 = vmatprep.subr.bf16.mxu0 0
  %5452 = vmatpush1.bf16.msra.mxu0 0
  %5453 = vmatprep.subr.bf16.mxu0 0
  %5454 = vmatpush1.bf16.msra.mxu0 0
  %5455 = vmatprep.subr.bf16.mxu0 0
  %5456 = vmatpush1.bf16.msra.mxu0 0
  %5457 = vmatprep.subr.bf16.mxu0 0
  %5458 = vmatpush1.bf16.msra.mxu0 0
  %5459 = vmatprep.subr.bf16.mxu0 0
  %5460 = vmatpush1.bf16.msra.mxu0 0
  %5461 = vmatprep.subr.bf16.mxu0 0
  %5462 = vmatpush1.bf16.msra.mxu0 0
  %5463 = vmatprep.subr.bf16.mxu0 0
  %5464 = vmatpush1.bf16.msra.mxu0 0
  %5465 = vmatprep.mubr.bf16.mxu0 0
  %5466 = vmatmul.mubr.bf16.gmra.mrb[0].mxu0 %v5419
  %v5467 = vpop.f32.mrb[0].mxu0
  %v5468 = vadd.f32 0.0, %v5467
  %v5469 = vpop.f32.mrb[0].mxu0
  %v5470 = vadd.f32 0.0, %v5469
  %v5471 = vpop.f32.mrb[0].mxu0
  %v5472 = vadd.f32 0.0, %v5471
  %v5473 = vpop.f32.mrb[0].mxu0
  %v5474 = vadd.f32 0.0, %v5473
  %5475 = vdwg.mxu0
  %5476 = vmatprep.subr.bf16.mxu0 %v5431
  %5477 = vmatpush1.bf16.msra.mxu0 %v5428
  %5478 = vmatprep.subr.bf16.mxu0 0
  %5479 = vmatpush1.bf16.msra.mxu0 0
  %5480 = vmatprep.subr.bf16.mxu0 0
  %5481 = vmatpush1.bf16.msra.mxu0 0
  %5482 = vmatprep.subr.bf16.mxu0 0
  %5483 = vmatpush1.bf16.msra.mxu0 0
  %5484 = vmatprep.subr.bf16.mxu0 0
  %5485 = vmatpush1.bf16.msra.mxu0 0
  %5486 = vmatprep.subr.bf16.mxu0 0
  %5487 = vmatpush1.bf16.msra.mxu0 0
  %5488 = vmatprep.subr.bf16.mxu0 0
  %5489 = vmatpush1.bf16.msra.mxu0 0
  %5490 = vmatprep.subr.bf16.mxu0 0
  %5491 = vmatpush1.bf16.msra.mxu0 0
  %5492 = vmatprep.subr.bf16.mxu0 0
  %5493 = vmatpush1.bf16.msra.mxu0 0
  %5494 = vmatprep.subr.bf16.mxu0 0
  %5495 = vmatpush1.bf16.msra.mxu0 0
  %5496 = vmatprep.subr.bf16.mxu0 0
  %5497 = vmatpush1.bf16.msra.mxu0 0
  %5498 = vmatprep.subr.bf16.mxu0 0
  %5499 = vmatpush1.bf16.msra.mxu0 0
  %5500 = vmatprep.subr.bf16.mxu0 0
  %5501 = vmatpush1.bf16.msra.mxu0 0
  %5502 = vmatprep.subr.bf16.mxu0 0
  %5503 = vmatpush1.bf16.msra.mxu0 0
  %5504 = vmatprep.subr.bf16.mxu0 0
  %5505 = vmatpush1.bf16.msra.mxu0 0
  %5506 = vmatprep.subr.bf16.mxu0 0
  %5507 = vmatpush1.bf16.msra.mxu0 0
  %5508 = vmatprep.mubr.bf16.mxu0 0
  %5509 = vmatmul.mubr.bf16.gmra.mrb[0].mxu0 %v5419
  %v5510 = vpop.f32.mrb[0].mxu0
  %v5511 = vadd.f32 0.0, %v5510
  %v5512 = vpop.f32.mrb[0].mxu0
  %v5513 = vadd.f32 0.0, %v5512
  %v5514 = vpop.f32.mrb[0].mxu0
  %v5515 = vadd.f32 0.0, %v5514
  %v5516 = vpop.f32.mrb[0].mxu0
  %v5517 = vadd.f32 0.0, %v5516
  %5518 = vdwg.mxu0
  %v5519 = vadd.f32 %v5382, %v5468
  %v5520 = vadd.f32 %v5383, %v5470
  %v5521 = vadd.f32 %v5384, %v5511
  %v5522 = vadd.f32 %v5385, %v5513
  %v5523 = vadd.f32 %v5386, %v5472
  %v5524 = vadd.f32 %v5387, %v5474
  %v5525 = vadd.f32 %v5388, %v5515
  %v5526 = vadd.f32 %v5389, %v5517
  %s5527 = scalar_lea.vmem %s16, 24
  %v5528 = vld [vmem:[%s5527] sm:$0xf]
  %v5529 = vld [vmem:[%s5527 + $0x4] sm:$0xf]
  %v5532 = vunpack.c.l.b16 %v5528
  %v5533 = vunpack.c.l.b16 %v5529
  %v5534 = vpack.c.b16 %v5533, %v5532
  %v5536 = vsel %vm214, %v5534, 0
  %5538 = vmatprep.subr.bf16.mxu0 %v612
  %5539 = vmatpush1.bf16.msra.mxu0 %v609
  %5540 = vmatprep.subr.bf16.mxu0 0
  %5541 = vmatpush1.bf16.msra.mxu0 0
  %5542 = vmatprep.subr.bf16.mxu0 0
  %5543 = vmatpush1.bf16.msra.mxu0 0
  %5544 = vmatprep.subr.bf16.mxu0 0
  %5545 = vmatpush1.bf16.msra.mxu0 0
  %5546 = vmatprep.subr.bf16.mxu0 0
  %5547 = vmatpush1.bf16.msra.mxu0 0
  %5548 = vmatprep.subr.bf16.mxu0 0
  %5549 = vmatpush1.bf16.msra.mxu0 0
  %5550 = vmatprep.subr.bf16.mxu0 0
  %5551 = vmatpush1.bf16.msra.mxu0 0
  %5552 = vmatprep.subr.bf16.mxu0 0
  %5553 = vmatpush1.bf16.msra.mxu0 0
  %5554 = vmatprep.subr.bf16.mxu0 0
  %5555 = vmatpush1.bf16.msra.mxu0 0
  %5556 = vmatprep.subr.bf16.mxu0 0
  %5557 = vmatpush1.bf16.msra.mxu0 0
  %5558 = vmatprep.subr.bf16.mxu0 0
  %5559 = vmatpush1.bf16.msra.mxu0 0
  %5560 = vmatprep.subr.bf16.mxu0 0
  %5561 = vmatpush1.bf16.msra.mxu0 0
  %5562 = vmatprep.subr.bf16.mxu0 0
  %5563 = vmatpush1.bf16.msra.mxu0 0
  %5564 = vmatprep.subr.bf16.mxu0 0
  %5565 = vmatpush1.bf16.msra.mxu0 0
  %5566 = vmatprep.subr.bf16.mxu0 0
  %5567 = vmatpush1.bf16.msra.mxu0 0
  %5568 = vmatprep.subr.bf16.mxu0 0
  %5569 = vmatpush1.bf16.msra.mxu0 0
  %5570 = vmatprep.mubr.bf16.mxu0 0
  %5571 = vmatmul.mubr.bf16.gmra.mrb[0].mxu0 %v5536
  %v5572 = vpop.f32.mrb[0].mxu0
  %v5573 = vadd.f32 0.0, %v5572
  %v5574 = vpop.f32.mrb[0].mxu0
  %v5575 = vadd.f32 0.0, %v5574
  %v5576 = vpop.f32.mrb[0].mxu0
  %v5577 = vadd.f32 0.0, %v5576
  %v5578 = vpop.f32.mrb[0].mxu0
  %v5579 = vadd.f32 0.0, %v5578
  %5580 = vdwg.mxu0
  %5581 = vmatprep.subr.bf16.mxu0 %v618
  %5582 = vmatpush1.bf16.msra.mxu0 %v615
  %5583 = vmatprep.subr.bf16.mxu0 0
  %5584 = vmatpush1.bf16.msra.mxu0 0
  %5585 = vmatprep.subr.bf16.mxu0 0
  %5586 = vmatpush1.bf16.msra.mxu0 0
  %5587 = vmatprep.subr.bf16.mxu0 0
  %5588 = vmatpush1.bf16.msra.mxu0 0
  %5589 = vmatprep.subr.bf16.mxu0 0
  %5590 = vmatpush1.bf16.msra.mxu0 0
  %5591 = vmatprep.subr.bf16.mxu0 0
  %5592 = vmatpush1.bf16.msra.mxu0 0
  %5593 = vmatprep.subr.bf16.mxu0 0
  %5594 = vmatpush1.bf16.msra.mxu0 0
  %5595 = vmatprep.subr.bf16.mxu0 0
  %5596 = vmatpush1.bf16.msra.mxu0 0
  %5597 = vmatprep.subr.bf16.mxu0 0
  %5598 = vmatpush1.bf16.msra.mxu0 0
  %5599 = vmatprep.subr.bf16.mxu0 0
  %5600 = vmatpush1.bf16.msra.mxu0 0
  %5601 = vmatprep.subr.bf16.mxu0 0
  %5602 = vmatpush1.bf16.msra.mxu0 0
  %5603 = vmatprep.subr.bf16.mxu0 0
  %5604 = vmatpush1.bf16.msra.mxu0 0
  %5605 = vmatprep.subr.bf16.mxu0 0
  %5606 = vmatpush1.bf16.msra.mxu0 0
  %5607 = vmatprep.subr.bf16.mxu0 0
  %5608 = vmatpush1.bf16.msra.mxu0 0
  %5609 = vmatprep.subr.bf16.mxu0 0
  %5610 = vmatpush1.bf16.msra.mxu0 0
  %5611 = vmatprep.subr.bf16.mxu0 0
  %5612 = vmatpush1.bf16.msra.mxu0 0
  %5613 = vmatprep.mubr.bf16.mxu0 0
  %5614 = vmatmul.mubr.bf16.gmra.mrb[0].mxu0 %v5536
  %v5615 = vpop.f32.mrb[0].mxu0
  %v5616 = vadd.f32 0.0, %v5615
  %v5617 = vpop.f32.mrb[0].mxu0
  %v5618 = vadd.f32 0.0, %v5617
  %v5619 = vpop.f32.mrb[0].mxu0
  %v5620 = vadd.f32 0.0, %v5619
  %v5621 = vpop.f32.mrb[0].mxu0
  %v5622 = vadd.f32 0.0, %v5621
  %5623 = vdwg.mxu0
  %v5624 = vadd.f32 %v5519, %v5573
  %v5625 = vadd.f32 %v5520, %v5575
  %v5626 = vadd.f32 %v5521, %v5616
  %v5627 = vadd.f32 %v5522, %v5618
  %v5628 = vadd.f32 %v5523, %v5577
  %v5629 = vadd.f32 %v5524, %v5579
  %v5630 = vadd.f32 %v5525, %v5620
  %v5631 = vadd.f32 %v5526, %v5622
  %5632 = vrot.lane.b32.xlu0 %v4772, 1
  %v5633 = vpop.permute.xlu0 %5632
  %5634 = vrot.lane.b32.xlu0 %v4774, 1
  %v5635 = vpop.permute.xlu0 %5634
  %5636 = vrot.lane.b32.xlu0 %v4813, 1
  %v5637 = vpop.permute.xlu0 %5636
  %5638 = vrot.lane.b32.xlu0 %v4815, 1
  %v5639 = vpop.permute.xlu0 %5638
  %v5640 = vsel %vm590, %v5637, %v5639
  %v5641 = vsel %vm590, %v5635, %v5637
  %v5642 = vsel %vm590, %v5633, %v5635
  %v5643 = vsel %vm590, %v5639, %v5633
  %s5644 = scalar_lea.vmem %s17, 24
  %v5645 = vld [vmem:[%s5644] sm:$0xf]
  %v5646 = vld [vmem:[%s5644 + $0x4] sm:$0xf]
  %v5647 = vmul.f32 %v5643, %v578
  %v5648 = vmul.f32 %v5642, %v579
  %v5649 = vmul.f32 %v5641, %v580
  %v5650 = vmul.f32 %v5640, %v581
  %v5651 = vpack.c.bf16 %v5647, %v5647
  %v5652 = vpack.c.bf16 %v5648, %v5648
  %v5653 = vpack.c.bf16 %v5649, %v5649
  %v5654 = vpack.c.bf16 %v5650, %v5650
  %v5657 = vunpack.c.l.b16 %v5645
  %v5658 = vunpack.c.l.b16 %v5646
  %v5659 = vpack.c.b16 %v5658, %v5657
  %v5661 = vsel %vm214, %v5659, 0
  %v5664 = vsel %vm218, %v5651, 0
  %v5667 = vsel %vm218, %v5652, 0
  %v5670 = vsel %vm218, %v5653, 0
  %v5673 = vsel %vm218, %v5654, 0
  %5675 = vmatprep.subr.bf16.mxu0 %v5667
  %5676 = vmatpush1.bf16.msra.mxu0 %v5664
  %5677 = vmatprep.subr.bf16.mxu0 0
  %5678 = vmatpush1.bf16.msra.mxu0 0
  %5679 = vmatprep.subr.bf16.mxu0 0
  %5680 = vmatpush1.bf16.msra.mxu0 0
  %5681 = vmatprep.subr.bf16.mxu0 0
  %5682 = vmatpush1.bf16.msra.mxu0 0
  %5683 = vmatprep.subr.bf16.mxu0 0
  %5684 = vmatpush1.bf16.msra.mxu0 0
  %5685 = vmatprep.subr.bf16.mxu0 0
  %5686 = vmatpush1.bf16.msra.mxu0 0
  %5687 = vmatprep.subr.bf16.mxu0 0
  %5688 = vmatpush1.bf16.msra.mxu0 0
  %5689 = vmatprep.subr.bf16.mxu0 0
  %5690 = vmatpush1.bf16.msra.mxu0 0
  %5691 = vmatprep.subr.bf16.mxu0 0
  %5692 = vmatpush1.bf16.msra.mxu0 0
  %5693 = vmatprep.subr.bf16.mxu0 0
  %5694 = vmatpush1.bf16.msra.mxu0 0
  %5695 = vmatprep.subr.bf16.mxu0 0
  %5696 = vmatpush1.bf16.msra.mxu0 0
  %5697 = vmatprep.subr.bf16.mxu0 0
  %5698 = vmatpush1.bf16.msra.mxu0 0
  %5699 = vmatprep.subr.bf16.mxu0 0
  %5700 = vmatpush1.bf16.msra.mxu0 0
  %5701 = vmatprep.subr.bf16.mxu0 0
  %5702 = vmatpush1.bf16.msra.mxu0 0
  %5703 = vmatprep.subr.bf16.mxu0 0
  %5704 = vmatpush1.bf16.msra.mxu0 0
  %5705 = vmatprep.subr.bf16.mxu0 0
  %5706 = vmatpush1.bf16.msra.mxu0 0
  %5707 = vmatprep.mubr.bf16.mxu0 0
  %5708 = vmatmul.mubr.bf16.gmra.mrb[0].mxu0 %v5661
  %v5709 = vpop.f32.mrb[0].mxu0
  %v5710 = vadd.f32 0.0, %v5709
  %v5711 = vpop.f32.mrb[0].mxu0
  %v5712 = vadd.f32 0.0, %v5711
  %v5713 = vpop.f32.mrb[0].mxu0
  %v5714 = vadd.f32 0.0, %v5713
  %v5715 = vpop.f32.mrb[0].mxu0
  %v5716 = vadd.f32 0.0, %v5715
  %5717 = vdwg.mxu0
  %5718 = vmatprep.subr.bf16.mxu0 %v5673
  %5719 = vmatpush1.bf16.msra.mxu0 %v5670
  %5720 = vmatprep.subr.bf16.mxu0 0
  %5721 = vmatpush1.bf16.msra.mxu0 0
  %5722 = vmatprep.subr.bf16.mxu0 0
  %5723 = vmatpush1.bf16.msra.mxu0 0
  %5724 = vmatprep.subr.bf16.mxu0 0
  %5725 = vmatpush1.bf16.msra.mxu0 0
  %5726 = vmatprep.subr.bf16.mxu0 0
  %5727 = vmatpush1.bf16.msra.mxu0 0
  %5728 = vmatprep.subr.bf16.mxu0 0
  %5729 = vmatpush1.bf16.msra.mxu0 0
  %5730 = vmatprep.subr.bf16.mxu0 0
  %5731 = vmatpush1.bf16.msra.mxu0 0
  %5732 = vmatprep.subr.bf16.mxu0 0
  %5733 = vmatpush1.bf16.msra.mxu0 0
  %5734 = vmatprep.subr.bf16.mxu0 0
  %5735 = vmatpush1.bf16.msra.mxu0 0
  %5736 = vmatprep.subr.bf16.mxu0 0
  %5737 = vmatpush1.bf16.msra.mxu0 0
  %5738 = vmatprep.subr.bf16.mxu0 0
  %5739 = vmatpush1.bf16.msra.mxu0 0
  %5740 = vmatprep.subr.bf16.mxu0 0
  %5741 = vmatpush1.bf16.msra.mxu0 0
  %5742 = vmatprep.subr.bf16.mxu0 0
  %5743 = vmatpush1.bf16.msra.mxu0 0
  %5744 = vmatprep.subr.bf16.mxu0 0
  %5745 = vmatpush1.bf16.msra.mxu0 0
  %5746 = vmatprep.subr.bf16.mxu0 0
  %5747 = vmatpush1.bf16.msra.mxu0 0
  %5748 = vmatprep.subr.bf16.mxu0 0
  %5749 = vmatpush1.bf16.msra.mxu0 0
  %5750 = vmatprep.mubr.bf16.mxu0 0
  %5751 = vmatmul.mubr.bf16.gmra.mrb[0].mxu0 %v5661
  %v5752 = vpop.f32.mrb[0].mxu0
  %v5753 = vadd.f32 0.0, %v5752
  %v5754 = vpop.f32.mrb[0].mxu0
  %v5755 = vadd.f32 0.0, %v5754
  %v5756 = vpop.f32.mrb[0].mxu0
  %v5757 = vadd.f32 0.0, %v5756
  %v5758 = vpop.f32.mrb[0].mxu0
  %v5759 = vadd.f32 0.0, %v5758
  %5760 = vdwg.mxu0
  %v5761 = vadd.f32 %v5624, %v5710
  %v5762 = vadd.f32 %v5625, %v5712
  %v5763 = vadd.f32 %v5626, %v5753
  %v5764 = vadd.f32 %v5627, %v5755
  %v5765 = vadd.f32 %v5628, %v5714
  %v5766 = vadd.f32 %v5629, %v5716
  %v5767 = vadd.f32 %v5630, %v5757
  %v5768 = vadd.f32 %v5631, %v5759
  %s5769 = scalar_lea.vmem %s16, 32
  %v5770 = vld [vmem:[%s5769] sm:$0xf]
  %v5771 = vld [vmem:[%s5769 + $0x4] sm:$0xf]
  %v5774 = vunpack.c.l.b16 %v5770
  %v5775 = vunpack.c.l.b16 %v5771
  %v5776 = vpack.c.b16 %v5775, %v5774
  %v5778 = vsel %vm214, %v5776, 0
  %5780 = vmatprep.subr.bf16.mxu0 %v747
  %5781 = vmatpush1.bf16.msra.mxu0 %v744
  %5782 = vmatprep.subr.bf16.mxu0 0
  %5783 = vmatpush1.bf16.msra.mxu0 0
  %5784 = vmatprep.subr.bf16.mxu0 0
  %5785 = vmatpush1.bf16.msra.mxu0 0
  %5786 = vmatprep.subr.bf16.mxu0 0
  %5787 = vmatpush1.bf16.msra.mxu0 0
  %5788 = vmatprep.subr.bf16.mxu0 0
  %5789 = vmatpush1.bf16.msra.mxu0 0
  %5790 = vmatprep.subr.bf16.mxu0 0
  %5791 = vmatpush1.bf16.msra.mxu0 0
  %5792 = vmatprep.subr.bf16.mxu0 0
  %5793 = vmatpush1.bf16.msra.mxu0 0
  %5794 = vmatprep.subr.bf16.mxu0 0
  %5795 = vmatpush1.bf16.msra.mxu0 0
  %5796 = vmatprep.subr.bf16.mxu0 0
  %5797 = vmatpush1.bf16.msra.mxu0 0
  %5798 = vmatprep.subr.bf16.mxu0 0
  %5799 = vmatpush1.bf16.msra.mxu0 0
  %5800 = vmatprep.subr.bf16.mxu0 0
  %5801 = vmatpush1.bf16.msra.mxu0 0
  %5802 = vmatprep.subr.bf16.mxu0 0
  %5803 = vmatpush1.bf16.msra.mxu0 0
  %5804 = vmatprep.subr.bf16.mxu0 0
  %5805 = vmatpush1.bf16.msra.mxu0 0
  %5806 = vmatprep.subr.bf16.mxu0 0
  %5807 = vmatpush1.bf16.msra.mxu0 0
  %5808 = vmatprep.subr.bf16.mxu0 0
  %5809 = vmatpush1.bf16.msra.mxu0 0
  %5810 = vmatprep.subr.bf16.mxu0 0
  %5811 = vmatpush1.bf16.msra.mxu0 0
  %5812 = vmatprep.mubr.bf16.mxu0 0
  %5813 = vmatmul.mubr.bf16.gmra.mrb[0].mxu0 %v5778
  %v5814 = vpop.f32.mrb[0].mxu0
  %v5815 = vadd.f32 0.0, %v5814
  %v5816 = vpop.f32.mrb[0].mxu0
  %v5817 = vadd.f32 0.0, %v5816
  %v5818 = vpop.f32.mrb[0].mxu0
  %v5819 = vadd.f32 0.0, %v5818
  %v5820 = vpop.f32.mrb[0].mxu0
  %v5821 = vadd.f32 0.0, %v5820
  %5822 = vdwg.mxu0
  %5823 = vmatprep.subr.bf16.mxu0 %v753
  %5824 = vmatpush1.bf16.msra.mxu0 %v750
  %5825 = vmatprep.subr.bf16.mxu0 0
  %5826 = vmatpush1.bf16.msra.mxu0 0
  %5827 = vmatprep.subr.bf16.mxu0 0
  %5828 = vmatpush1.bf16.msra.mxu0 0
  %5829 = vmatprep.subr.bf16.mxu0 0
  %5830 = vmatpush1.bf16.msra.mxu0 0
  %5831 = vmatprep.subr.bf16.mxu0 0
  %5832 = vmatpush1.bf16.msra.mxu0 0
  %5833 = vmatprep.subr.bf16.mxu0 0
  %5834 = vmatpush1.bf16.msra.mxu0 0
  %5835 = vmatprep.subr.bf16.mxu0 0
  %5836 = vmatpush1.bf16.msra.mxu0 0
  %5837 = vmatprep.subr.bf16.mxu0 0
  %5838 = vmatpush1.bf16.msra.mxu0 0
  %5839 = vmatprep.subr.bf16.mxu0 0
  %5840 = vmatpush1.bf16.msra.mxu0 0
  %5841 = vmatprep.subr.bf16.mxu0 0
  %5842 = vmatpush1.bf16.msra.mxu0 0
  %5843 = vmatprep.subr.bf16.mxu0 0
  %5844 = vmatpush1.bf16.msra.mxu0 0
  %5845 = vmatprep.subr.bf16.mxu0 0
  %5846 = vmatpush1.bf16.msra.mxu0 0
  %5847 = vmatprep.subr.bf16.mxu0 0
  %5848 = vmatpush1.bf16.msra.mxu0 0
  %5849 = vmatprep.subr.bf16.mxu0 0
  %5850 = vmatpush1.bf16.msra.mxu0 0
  %5851 = vmatprep.subr.bf16.mxu0 0
  %5852 = vmatpush1.bf16.msra.mxu0 0
  %5853 = vmatprep.subr.bf16.mxu0 0
  %5854 = vmatpush1.bf16.msra.mxu0 0
  %5855 = vmatprep.mubr.bf16.mxu0 0
  %5856 = vmatmul.mubr.bf16.gmra.mrb[0].mxu0 %v5778
  %v5857 = vpop.f32.mrb[0].mxu0
  %v5858 = vadd.f32 0.0, %v5857
  %v5859 = vpop.f32.mrb[0].mxu0
  %v5860 = vadd.f32 0.0, %v5859
  %v5861 = vpop.f32.mrb[0].mxu0
  %v5862 = vadd.f32 0.0, %v5861
  %v5863 = vpop.f32.mrb[0].mxu0
  %v5864 = vadd.f32 0.0, %v5863
  %5865 = vdwg.mxu0
  %v5866 = vadd.f32 %v5761, %v5815
  %v5867 = vadd.f32 %v5762, %v5817
  %v5868 = vadd.f32 %v5763, %v5858
  %v5869 = vadd.f32 %v5764, %v5860
  %v5870 = vadd.f32 %v5765, %v5819
  %v5871 = vadd.f32 %v5766, %v5821
  %v5872 = vadd.f32 %v5767, %v5862
  %v5873 = vadd.f32 %v5768, %v5864
  %s5874 = scalar_lea.vmem %s17, 32
  %v5875 = vld [vmem:[%s5874] sm:$0xf]
  %v5876 = vld [vmem:[%s5874 + $0x4] sm:$0xf]
  %v5877 = vmul.f32 %v4772, %v714
  %v5878 = vmul.f32 %v4774, %v715
  %v5879 = vmul.f32 %v4813, %v716
  %v5880 = vmul.f32 %v4815, %v717
  %v5881 = vpack.c.bf16 %v5877, %v5877
  %v5882 = vpack.c.bf16 %v5878, %v5878
  %v5883 = vpack.c.bf16 %v5879, %v5879
  %v5884 = vpack.c.bf16 %v5880, %v5880
  %v5887 = vunpack.c.l.b16 %v5875
  %v5888 = vunpack.c.l.b16 %v5876
  %v5889 = vpack.c.b16 %v5888, %v5887
  %v5891 = vsel %vm214, %v5889, 0
  %v5894 = vsel %vm218, %v5881, 0
  %v5897 = vsel %vm218, %v5882, 0
  %v5900 = vsel %vm218, %v5883, 0
  %v5903 = vsel %vm218, %v5884, 0
  %5905 = vmatprep.subr.bf16.mxu0 %v5897
  %5906 = vmatpush1.bf16.msra.mxu0 %v5894
  %5907 = vmatprep.subr.bf16.mxu0 0
  %5908 = vmatpush1.bf16.msra.mxu0 0
  %5909 = vmatprep.subr.bf16.mxu0 0
  %5910 = vmatpush1.bf16.msra.mxu0 0
  %5911 = vmatprep.subr.bf16.mxu0 0
  %5912 = vmatpush1.bf16.msra.mxu0 0
  %5913 = vmatprep.subr.bf16.mxu0 0
  %5914 = vmatpush1.bf16.msra.mxu0 0
  %5915 = vmatprep.subr.bf16.mxu0 0
  %5916 = vmatpush1.bf16.msra.mxu0 0
  %5917 = vmatprep.subr.bf16.mxu0 0
  %5918 = vmatpush1.bf16.msra.mxu0 0
  %5919 = vmatprep.subr.bf16.mxu0 0
  %5920 = vmatpush1.bf16.msra.mxu0 0
  %5921 = vmatprep.subr.bf16.mxu0 0
  %5922 = vmatpush1.bf16.msra.mxu0 0
  %5923 = vmatprep.subr.bf16.mxu0 0
  %5924 = vmatpush1.bf16.msra.mxu0 0
  %5925 = vmatprep.subr.bf16.mxu0 0
  %5926 = vmatpush1.bf16.msra.mxu0 0
  %5927 = vmatprep.subr.bf16.mxu0 0
  %5928 = vmatpush1.bf16.msra.mxu0 0
  %5929 = vmatprep.subr.bf16.mxu0 0
  %5930 = vmatpush1.bf16.msra.mxu0 0
  %5931 = vmatprep.subr.bf16.mxu0 0
  %5932 = vmatpush1.bf16.msra.mxu0 0
  %5933 = vmatprep.subr.bf16.mxu0 0
  %5934 = vmatpush1.bf16.msra.mxu0 0
  %5935 = vmatprep.subr.bf16.mxu0 0
  %5936 = vmatpush1.bf16.msra.mxu0 0
  %5937 = vmatprep.mubr.bf16.mxu0 0
  %5938 = vmatmul.mubr.bf16.gmra.mrb[0].mxu0 %v5891
  %v5939 = vpop.f32.mrb[0].mxu0
  %v5940 = vadd.f32 0.0, %v5939
  %v5941 = vpop.f32.mrb[0].mxu0
  %v5942 = vadd.f32 0.0, %v5941
  %v5943 = vpop.f32.mrb[0].mxu0
  %v5944 = vadd.f32 0.0, %v5943
  %v5945 = vpop.f32.mrb[0].mxu0
  %v5946 = vadd.f32 0.0, %v5945
  %5947 = vdwg.mxu0
  %5948 = vmatprep.subr.bf16.mxu0 %v5903
  %5949 = vmatpush1.bf16.msra.mxu0 %v5900
  %5950 = vmatprep.subr.bf16.mxu0 0
  %5951 = vmatpush1.bf16.msra.mxu0 0
  %5952 = vmatprep.subr.bf16.mxu0 0
  %5953 = vmatpush1.bf16.msra.mxu0 0
  %5954 = vmatprep.subr.bf16.mxu0 0
  %5955 = vmatpush1.bf16.msra.mxu0 0
  %5956 = vmatprep.subr.bf16.mxu0 0
  %5957 = vmatpush1.bf16.msra.mxu0 0
  %5958 = vmatprep.subr.bf16.mxu0 0
  %5959 = vmatpush1.bf16.msra.mxu0 0
  %5960 = vmatprep.subr.bf16.mxu0 0
  %5961 = vmatpush1.bf16.msra.mxu0 0
  %5962 = vmatprep.subr.bf16.mxu0 0
  %5963 = vmatpush1.bf16.msra.mxu0 0
  %5964 = vmatprep.subr.bf16.mxu0 0
  %5965 = vmatpush1.bf16.msra.mxu0 0
  %5966 = vmatprep.subr.bf16.mxu0 0
  %5967 = vmatpush1.bf16.msra.mxu0 0
  %5968 = vmatprep.subr.bf16.mxu0 0
  %5969 = vmatpush1.bf16.msra.mxu0 0
  %5970 = vmatprep.subr.bf16.mxu0 0
  %5971 = vmatpush1.bf16.msra.mxu0 0
  %5972 = vmatprep.subr.bf16.mxu0 0
  %5973 = vmatpush1.bf16.msra.mxu0 0
  %5974 = vmatprep.subr.bf16.mxu0 0
  %5975 = vmatpush1.bf16.msra.mxu0 0
  %5976 = vmatprep.subr.bf16.mxu0 0
  %5977 = vmatpush1.bf16.msra.mxu0 0
  %5978 = vmatprep.subr.bf16.mxu0 0
  %5979 = vmatpush1.bf16.msra.mxu0 0
  %5980 = vmatprep.mubr.bf16.mxu0 0
  %5981 = vmatmul.mubr.bf16.gmra.mrb[0].mxu0 %v5891
  %v5982 = vpop.f32.mrb[0].mxu0
  %v5983 = vadd.f32 0.0, %v5982
  %v5984 = vpop.f32.mrb[0].mxu0
  %v5985 = vadd.f32 0.0, %v5984
  %v5986 = vpop.f32.mrb[0].mxu0
  %v5987 = vadd.f32 0.0, %v5986
  %v5988 = vpop.f32.mrb[0].mxu0
  %v5989 = vadd.f32 0.0, %v5988
  %5990 = vdwg.mxu0
  %v5991 = vadd.f32 %v5866, %v5940
  %v5992 = vadd.f32 %v5867, %v5942
  %v5993 = vadd.f32 %v5868, %v5983
  %v5994 = vadd.f32 %v5869, %v5985
  %v5995 = vadd.f32 %v5870, %v5944
  %v5996 = vadd.f32 %v5871, %v5946
  %v5997 = vadd.f32 %v5872, %v5987
  %v5998 = vadd.f32 %v5873, %v5989
  %s5999 = scalar_lea.vmem %s16, 40
  %v6000 = vld [vmem:[%s5999] sm:$0xf]
  %v6001 = vld [vmem:[%s5999 + $0x4] sm:$0xf]
  %v6004 = vunpack.c.l.b16 %v6000
  %v6005 = vunpack.c.l.b16 %v6001
  %v6006 = vpack.c.b16 %v6005, %v6004
  %v6008 = vsel %vm214, %v6006, 0
  %6010 = vmatprep.subr.bf16.mxu0 %v883
  %6011 = vmatpush1.bf16.msra.mxu0 %v880
  %6012 = vmatprep.subr.bf16.mxu0 0
  %6013 = vmatpush1.bf16.msra.mxu0 0
  %6014 = vmatprep.subr.bf16.mxu0 0
  %6015 = vmatpush1.bf16.msra.mxu0 0
  %6016 = vmatprep.subr.bf16.mxu0 0
  %6017 = vmatpush1.bf16.msra.mxu0 0
  %6018 = vmatprep.subr.bf16.mxu0 0
  %6019 = vmatpush1.bf16.msra.mxu0 0
  %6020 = vmatprep.subr.bf16.mxu0 0
  %6021 = vmatpush1.bf16.msra.mxu0 0
  %6022 = vmatprep.subr.bf16.mxu0 0
  %6023 = vmatpush1.bf16.msra.mxu0 0
  %6024 = vmatprep.subr.bf16.mxu0 0
  %6025 = vmatpush1.bf16.msra.mxu0 0
  %6026 = vmatprep.subr.bf16.mxu0 0
  %6027 = vmatpush1.bf16.msra.mxu0 0
  %6028 = vmatprep.subr.bf16.mxu0 0
  %6029 = vmatpush1.bf16.msra.mxu0 0
  %6030 = vmatprep.subr.bf16.mxu0 0
  %6031 = vmatpush1.bf16.msra.mxu0 0
  %6032 = vmatprep.subr.bf16.mxu0 0
  %6033 = vmatpush1.bf16.msra.mxu0 0
  %6034 = vmatprep.subr.bf16.mxu0 0
  %6035 = vmatpush1.bf16.msra.mxu0 0
  %6036 = vmatprep.subr.bf16.mxu0 0
  %6037 = vmatpush1.bf16.msra.mxu0 0
  %6038 = vmatprep.subr.bf16.mxu0 0
  %6039 = vmatpush1.bf16.msra.mxu0 0
  %6040 = vmatprep.subr.bf16.mxu0 0
  %6041 = vmatpush1.bf16.msra.mxu0 0
  %6042 = vmatprep.mubr.bf16.mxu0 0
  %6043 = vmatmul.mubr.bf16.gmra.mrb[0].mxu0 %v6008
  %v6044 = vpop.f32.mrb[0].mxu0
  %v6045 = vadd.f32 0.0, %v6044
  %v6046 = vpop.f32.mrb[0].mxu0
  %v6047 = vadd.f32 0.0, %v6046
  %v6048 = vpop.f32.mrb[0].mxu0
  %v6049 = vadd.f32 0.0, %v6048
  %v6050 = vpop.f32.mrb[0].mxu0
  %v6051 = vadd.f32 0.0, %v6050
  %6052 = vdwg.mxu0
  %6053 = vmatprep.subr.bf16.mxu0 %v889
  %6054 = vmatpush1.bf16.msra.mxu0 %v886
  %6055 = vmatprep.subr.bf16.mxu0 0
  %6056 = vmatpush1.bf16.msra.mxu0 0
  %6057 = vmatprep.subr.bf16.mxu0 0
  %6058 = vmatpush1.bf16.msra.mxu0 0
  %6059 = vmatprep.subr.bf16.mxu0 0
  %6060 = vmatpush1.bf16.msra.mxu0 0
  %6061 = vmatprep.subr.bf16.mxu0 0
  %6062 = vmatpush1.bf16.msra.mxu0 0
  %6063 = vmatprep.subr.bf16.mxu0 0
  %6064 = vmatpush1.bf16.msra.mxu0 0
  %6065 = vmatprep.subr.bf16.mxu0 0
  %6066 = vmatpush1.bf16.msra.mxu0 0
  %6067 = vmatprep.subr.bf16.mxu0 0
  %6068 = vmatpush1.bf16.msra.mxu0 0
  %6069 = vmatprep.subr.bf16.mxu0 0
  %6070 = vmatpush1.bf16.msra.mxu0 0
  %6071 = vmatprep.subr.bf16.mxu0 0
  %6072 = vmatpush1.bf16.msra.mxu0 0
  %6073 = vmatprep.subr.bf16.mxu0 0
  %6074 = vmatpush1.bf16.msra.mxu0 0
  %6075 = vmatprep.subr.bf16.mxu0 0
  %6076 = vmatpush1.bf16.msra.mxu0 0
  %6077 = vmatprep.subr.bf16.mxu0 0
  %6078 = vmatpush1.bf16.msra.mxu0 0
  %6079 = vmatprep.subr.bf16.mxu0 0
  %6080 = vmatpush1.bf16.msra.mxu0 0
  %6081 = vmatprep.subr.bf16.mxu0 0
  %6082 = vmatpush1.bf16.msra.mxu0 0
  %6083 = vmatprep.subr.bf16.mxu0 0
  %6084 = vmatpush1.bf16.msra.mxu0 0
  %6085 = vmatprep.mubr.bf16.mxu0 0
  %6086 = vmatmul.mubr.bf16.gmra.mrb[0].mxu0 %v6008
  %v6087 = vpop.f32.mrb[0].mxu0
  %v6088 = vadd.f32 0.0, %v6087
  %v6089 = vpop.f32.mrb[0].mxu0
  %v6090 = vadd.f32 0.0, %v6089
  %v6091 = vpop.f32.mrb[0].mxu0
  %v6092 = vadd.f32 0.0, %v6091
  %v6093 = vpop.f32.mrb[0].mxu0
  %v6094 = vadd.f32 0.0, %v6093
  %6095 = vdwg.mxu0
  %v6096 = vadd.f32 %v5991, %v6045
  %v6097 = vadd.f32 %v5992, %v6047
  %v6098 = vadd.f32 %v5993, %v6088
  %v6099 = vadd.f32 %v5994, %v6090
  %v6100 = vadd.f32 %v5995, %v6049
  %v6101 = vadd.f32 %v5996, %v6051
  %v6102 = vadd.f32 %v5997, %v6092
  %v6103 = vadd.f32 %v5998, %v6094
  %6104 = vrot.lane.b32.xlu0 %v4772, 127
  %v6105 = vpop.permute.xlu0 %6104
  %6106 = vrot.lane.b32.xlu0 %v4774, 127
  %v6107 = vpop.permute.xlu0 %6106
  %6108 = vrot.lane.b32.xlu0 %v4813, 127
  %v6109 = vpop.permute.xlu0 %6108
  %6110 = vrot.lane.b32.xlu0 %v4815, 127
  %v6111 = vpop.permute.xlu0 %6110
  %v6112 = vsel %vm861, %v6109, %v6111
  %v6113 = vsel %vm861, %v6107, %v6109
  %v6114 = vsel %vm861, %v6105, %v6107
  %v6115 = vsel %vm861, %v6111, %v6105
  %s6116 = scalar_lea.vmem %s17, 40
  %v6117 = vld [vmem:[%s6116] sm:$0xf]
  %v6118 = vld [vmem:[%s6116 + $0x4] sm:$0xf]
  %v6119 = vmul.f32 %v6114, %v849
  %v6120 = vmul.f32 %v6113, %v850
  %v6121 = vmul.f32 %v6112, %v851
  %v6122 = vmul.f32 %v6115, %v852
  %v6123 = vpack.c.bf16 %v6119, %v6119
  %v6124 = vpack.c.bf16 %v6120, %v6120
  %v6125 = vpack.c.bf16 %v6121, %v6121
  %v6126 = vpack.c.bf16 %v6122, %v6122
  %v6129 = vunpack.c.l.b16 %v6117
  %v6130 = vunpack.c.l.b16 %v6118
  %v6131 = vpack.c.b16 %v6130, %v6129
  %v6133 = vsel %vm214, %v6131, 0
  %v6136 = vsel %vm218, %v6123, 0
  %v6139 = vsel %vm218, %v6124, 0
  %v6142 = vsel %vm218, %v6125, 0
  %v6145 = vsel %vm218, %v6126, 0
  %6147 = vmatprep.subr.bf16.mxu0 %v6139
  %6148 = vmatpush1.bf16.msra.mxu0 %v6136
  %6149 = vmatprep.subr.bf16.mxu0 0
  %6150 = vmatpush1.bf16.msra.mxu0 0
  %6151 = vmatprep.subr.bf16.mxu0 0
  %6152 = vmatpush1.bf16.msra.mxu0 0
  %6153 = vmatprep.subr.bf16.mxu0 0
  %6154 = vmatpush1.bf16.msra.mxu0 0
  %6155 = vmatprep.subr.bf16.mxu0 0
  %6156 = vmatpush1.bf16.msra.mxu0 0
  %6157 = vmatprep.subr.bf16.mxu0 0
  %6158 = vmatpush1.bf16.msra.mxu0 0
  %6159 = vmatprep.subr.bf16.mxu0 0
  %6160 = vmatpush1.bf16.msra.mxu0 0
  %6161 = vmatprep.subr.bf16.mxu0 0
  %6162 = vmatpush1.bf16.msra.mxu0 0
  %6163 = vmatprep.subr.bf16.mxu0 0
  %6164 = vmatpush1.bf16.msra.mxu0 0
  %6165 = vmatprep.subr.bf16.mxu0 0
  %6166 = vmatpush1.bf16.msra.mxu0 0
  %6167 = vmatprep.subr.bf16.mxu0 0
  %6168 = vmatpush1.bf16.msra.mxu0 0
  %6169 = vmatprep.subr.bf16.mxu0 0
  %6170 = vmatpush1.bf16.msra.mxu0 0
  %6171 = vmatprep.subr.bf16.mxu0 0
  %6172 = vmatpush1.bf16.msra.mxu0 0
  %6173 = vmatprep.subr.bf16.mxu0 0
  %6174 = vmatpush1.bf16.msra.mxu0 0
  %6175 = vmatprep.subr.bf16.mxu0 0
  %6176 = vmatpush1.bf16.msra.mxu0 0
  %6177 = vmatprep.subr.bf16.mxu0 0
  %6178 = vmatpush1.bf16.msra.mxu0 0
  %6179 = vmatprep.mubr.bf16.mxu0 0
  %6180 = vmatmul.mubr.bf16.gmra.mrb[0].mxu0 %v6133
  %v6181 = vpop.f32.mrb[0].mxu0
  %v6182 = vadd.f32 0.0, %v6181
  %v6183 = vpop.f32.mrb[0].mxu0
  %v6184 = vadd.f32 0.0, %v6183
  %v6185 = vpop.f32.mrb[0].mxu0
  %v6186 = vadd.f32 0.0, %v6185
  %v6187 = vpop.f32.mrb[0].mxu0
  %v6188 = vadd.f32 0.0, %v6187
  %6189 = vdwg.mxu0
  %6190 = vmatprep.subr.bf16.mxu0 %v6145
  %6191 = vmatpush1.bf16.msra.mxu0 %v6142
  %6192 = vmatprep.subr.bf16.mxu0 0
  %6193 = vmatpush1.bf16.msra.mxu0 0
  %6194 = vmatprep.subr.bf16.mxu0 0
  %6195 = vmatpush1.bf16.msra.mxu0 0
  %6196 = vmatprep.subr.bf16.mxu0 0
  %6197 = vmatpush1.bf16.msra.mxu0 0
  %6198 = vmatprep.subr.bf16.mxu0 0
  %6199 = vmatpush1.bf16.msra.mxu0 0
  %6200 = vmatprep.subr.bf16.mxu0 0
  %6201 = vmatpush1.bf16.msra.mxu0 0
  %6202 = vmatprep.subr.bf16.mxu0 0
  %6203 = vmatpush1.bf16.msra.mxu0 0
  %6204 = vmatprep.subr.bf16.mxu0 0
  %6205 = vmatpush1.bf16.msra.mxu0 0
  %6206 = vmatprep.subr.bf16.mxu0 0
  %6207 = vmatpush1.bf16.msra.mxu0 0
  %6208 = vmatprep.subr.bf16.mxu0 0
  %6209 = vmatpush1.bf16.msra.mxu0 0
  %6210 = vmatprep.subr.bf16.mxu0 0
  %6211 = vmatpush1.bf16.msra.mxu0 0
  %6212 = vmatprep.subr.bf16.mxu0 0
  %6213 = vmatpush1.bf16.msra.mxu0 0
  %6214 = vmatprep.subr.bf16.mxu0 0
  %6215 = vmatpush1.bf16.msra.mxu0 0
  %6216 = vmatprep.subr.bf16.mxu0 0
  %6217 = vmatpush1.bf16.msra.mxu0 0
  %6218 = vmatprep.subr.bf16.mxu0 0
  %6219 = vmatpush1.bf16.msra.mxu0 0
  %6220 = vmatprep.subr.bf16.mxu0 0
  %6221 = vmatpush1.bf16.msra.mxu0 0
  %6222 = vmatprep.mubr.bf16.mxu0 0
  %6223 = vmatmul.mubr.bf16.gmra.mrb[0].mxu0 %v6133
  %v6224 = vpop.f32.mrb[0].mxu0
  %v6225 = vadd.f32 0.0, %v6224
  %v6226 = vpop.f32.mrb[0].mxu0
  %v6227 = vadd.f32 0.0, %v6226
  %v6228 = vpop.f32.mrb[0].mxu0
  %v6229 = vadd.f32 0.0, %v6228
  %v6230 = vpop.f32.mrb[0].mxu0
  %v6231 = vadd.f32 0.0, %v6230
  %6232 = vdwg.mxu0
  %v6233 = vadd.f32 %v6096, %v6182
  %v6234 = vadd.f32 %v6097, %v6184
  %v6235 = vadd.f32 %v6098, %v6225
  %v6236 = vadd.f32 %v6099, %v6227
  %v6237 = vadd.f32 %v6100, %v6186
  %v6238 = vadd.f32 %v6101, %v6188
  %v6239 = vadd.f32 %v6102, %v6229
  %v6240 = vadd.f32 %v6103, %v6231
  %s6241 = scalar_lea.vmem %s16, 48
  %v6242 = vld [vmem:[%s6241] sm:$0xf]
  %v6243 = vld [vmem:[%s6241 + $0x4] sm:$0xf]
  %v6246 = vunpack.c.l.b16 %v6242
  %v6247 = vunpack.c.l.b16 %v6243
  %v6248 = vpack.c.b16 %v6247, %v6246
  %v6250 = vsel %vm214, %v6248, 0
  %6252 = vmatprep.subr.bf16.mxu0 %v1035
  %6253 = vmatpush1.bf16.msra.mxu0 %v1032
  %6254 = vmatprep.subr.bf16.mxu0 0
  %6255 = vmatpush1.bf16.msra.mxu0 0
  %6256 = vmatprep.subr.bf16.mxu0 0
  %6257 = vmatpush1.bf16.msra.mxu0 0
  %6258 = vmatprep.subr.bf16.mxu0 0
  %6259 = vmatpush1.bf16.msra.mxu0 0
  %6260 = vmatprep.subr.bf16.mxu0 0
  %6261 = vmatpush1.bf16.msra.mxu0 0
  %6262 = vmatprep.subr.bf16.mxu0 0
  %6263 = vmatpush1.bf16.msra.mxu0 0
  %6264 = vmatprep.subr.bf16.mxu0 0
  %6265 = vmatpush1.bf16.msra.mxu0 0
  %6266 = vmatprep.subr.bf16.mxu0 0
  %6267 = vmatpush1.bf16.msra.mxu0 0
  %6268 = vmatprep.subr.bf16.mxu0 0
  %6269 = vmatpush1.bf16.msra.mxu0 0
  %6270 = vmatprep.subr.bf16.mxu0 0
  %6271 = vmatpush1.bf16.msra.mxu0 0
  %6272 = vmatprep.subr.bf16.mxu0 0
  %6273 = vmatpush1.bf16.msra.mxu0 0
  %6274 = vmatprep.subr.bf16.mxu0 0
  %6275 = vmatpush1.bf16.msra.mxu0 0
  %6276 = vmatprep.subr.bf16.mxu0 0
  %6277 = vmatpush1.bf16.msra.mxu0 0
  %6278 = vmatprep.subr.bf16.mxu0 0
  %6279 = vmatpush1.bf16.msra.mxu0 0
  %6280 = vmatprep.subr.bf16.mxu0 0
  %6281 = vmatpush1.bf16.msra.mxu0 0
  %6282 = vmatprep.subr.bf16.mxu0 0
  %6283 = vmatpush1.bf16.msra.mxu0 0
  %6284 = vmatprep.mubr.bf16.mxu0 0
  %6285 = vmatmul.mubr.bf16.gmra.mrb[0].mxu0 %v6250
  %v6286 = vpop.f32.mrb[0].mxu0
  %v6287 = vadd.f32 0.0, %v6286
  %v6288 = vpop.f32.mrb[0].mxu0
  %v6289 = vadd.f32 0.0, %v6288
  %v6290 = vpop.f32.mrb[0].mxu0
  %v6291 = vadd.f32 0.0, %v6290
  %v6292 = vpop.f32.mrb[0].mxu0
  %v6293 = vadd.f32 0.0, %v6292
  %6294 = vdwg.mxu0
  %6295 = vmatprep.subr.bf16.mxu0 %v1041
  %6296 = vmatpush1.bf16.msra.mxu0 %v1038
  %6297 = vmatprep.subr.bf16.mxu0 0
  %6298 = vmatpush1.bf16.msra.mxu0 0
  %6299 = vmatprep.subr.bf16.mxu0 0
  %6300 = vmatpush1.bf16.msra.mxu0 0
  %6301 = vmatprep.subr.bf16.mxu0 0
  %6302 = vmatpush1.bf16.msra.mxu0 0
  %6303 = vmatprep.subr.bf16.mxu0 0
  %6304 = vmatpush1.bf16.msra.mxu0 0
  %6305 = vmatprep.subr.bf16.mxu0 0
  %6306 = vmatpush1.bf16.msra.mxu0 0
  %6307 = vmatprep.subr.bf16.mxu0 0
  %6308 = vmatpush1.bf16.msra.mxu0 0
  %6309 = vmatprep.subr.bf16.mxu0 0
  %6310 = vmatpush1.bf16.msra.mxu0 0
  %6311 = vmatprep.subr.bf16.mxu0 0
  %6312 = vmatpush1.bf16.msra.mxu0 0
  %6313 = vmatprep.subr.bf16.mxu0 0
  %6314 = vmatpush1.bf16.msra.mxu0 0
  %6315 = vmatprep.subr.bf16.mxu0 0
  %6316 = vmatpush1.bf16.msra.mxu0 0
  %6317 = vmatprep.subr.bf16.mxu0 0
  %6318 = vmatpush1.bf16.msra.mxu0 0
  %6319 = vmatprep.subr.bf16.mxu0 0
  %6320 = vmatpush1.bf16.msra.mxu0 0
  %6321 = vmatprep.subr.bf16.mxu0 0
  %6322 = vmatpush1.bf16.msra.mxu0 0
  %6323 = vmatprep.subr.bf16.mxu0 0
  %6324 = vmatpush1.bf16.msra.mxu0 0
  %6325 = vmatprep.subr.bf16.mxu0 0
  %6326 = vmatpush1.bf16.msra.mxu0 0
  %6327 = vmatprep.mubr.bf16.mxu0 0
  %6328 = vmatmul.mubr.bf16.gmra.mrb[0].mxu0 %v6250
  %v6329 = vpop.f32.mrb[0].mxu0
  %v6330 = vadd.f32 0.0, %v6329
  %v6331 = vpop.f32.mrb[0].mxu0
  %v6332 = vadd.f32 0.0, %v6331
  %v6333 = vpop.f32.mrb[0].mxu0
  %v6334 = vadd.f32 0.0, %v6333
  %v6335 = vpop.f32.mrb[0].mxu0
  %v6336 = vadd.f32 0.0, %v6335
  %6337 = vdwg.mxu0
  %v6338 = vadd.f32 %v6233, %v6287
  %v6339 = vadd.f32 %v6234, %v6289
  %v6340 = vadd.f32 %v6235, %v6330
  %v6341 = vadd.f32 %v6236, %v6332
  %v6342 = vadd.f32 %v6237, %v6291
  %v6343 = vadd.f32 %v6238, %v6293
  %v6344 = vadd.f32 %v6239, %v6334
  %v6345 = vadd.f32 %v6240, %v6336
  %6346 = vrot.lane.b32.xlu0 %v4772, 113
  %v6347 = vpop.permute.xlu0 %6346
  %6348 = vrot.lane.b32.xlu0 %v4774, 113
  %v6349 = vpop.permute.xlu0 %6348
  %6350 = vrot.lane.b32.xlu0 %v4813, 113
  %v6351 = vpop.permute.xlu0 %6350
  %6352 = vrot.lane.b32.xlu0 %v4815, 113
  %v6353 = vpop.permute.xlu0 %6352
  %v6354 = vsel %vm1013, %v6351, %v6353
  %v6355 = vsel %vm1013, %v6349, %v6351
  %v6356 = vsel %vm1013, %v6347, %v6349
  %v6357 = vsel %vm1013, %v6353, %v6347
  %s6358 = scalar_lea.vmem %s17, 48
  %v6359 = vld [vmem:[%s6358] sm:$0xf]
  %v6360 = vld [vmem:[%s6358 + $0x4] sm:$0xf]
  %v6361 = vmul.f32 %v6356, %v1001
  %v6362 = vmul.f32 %v6355, %v1002
  %v6363 = vmul.f32 %v6354, %v1003
  %v6364 = vmul.f32 %v6357, %v1004
  %v6365 = vpack.c.bf16 %v6361, %v6361
  %v6366 = vpack.c.bf16 %v6362, %v6362
  %v6367 = vpack.c.bf16 %v6363, %v6363
  %v6368 = vpack.c.bf16 %v6364, %v6364
  %v6371 = vunpack.c.l.b16 %v6359
  %v6372 = vunpack.c.l.b16 %v6360
  %v6373 = vpack.c.b16 %v6372, %v6371
  %v6375 = vsel %vm214, %v6373, 0
  %v6378 = vsel %vm218, %v6365, 0
  %v6381 = vsel %vm218, %v6366, 0
  %v6384 = vsel %vm218, %v6367, 0
  %v6387 = vsel %vm218, %v6368, 0
  %6389 = vmatprep.subr.bf16.mxu0 %v6381
  %6390 = vmatpush1.bf16.msra.mxu0 %v6378
  %6391 = vmatprep.subr.bf16.mxu0 0
  %6392 = vmatpush1.bf16.msra.mxu0 0
  %6393 = vmatprep.subr.bf16.mxu0 0
  %6394 = vmatpush1.bf16.msra.mxu0 0
  %6395 = vmatprep.subr.bf16.mxu0 0
  %6396 = vmatpush1.bf16.msra.mxu0 0
  %6397 = vmatprep.subr.bf16.mxu0 0
  %6398 = vmatpush1.bf16.msra.mxu0 0
  %6399 = vmatprep.subr.bf16.mxu0 0
  %6400 = vmatpush1.bf16.msra.mxu0 0
  %6401 = vmatprep.subr.bf16.mxu0 0
  %6402 = vmatpush1.bf16.msra.mxu0 0
  %6403 = vmatprep.subr.bf16.mxu0 0
  %6404 = vmatpush1.bf16.msra.mxu0 0
  %6405 = vmatprep.subr.bf16.mxu0 0
  %6406 = vmatpush1.bf16.msra.mxu0 0
  %6407 = vmatprep.subr.bf16.mxu0 0
  %6408 = vmatpush1.bf16.msra.mxu0 0
  %6409 = vmatprep.subr.bf16.mxu0 0
  %6410 = vmatpush1.bf16.msra.mxu0 0
  %6411 = vmatprep.subr.bf16.mxu0 0
  %6412 = vmatpush1.bf16.msra.mxu0 0
  %6413 = vmatprep.subr.bf16.mxu0 0
  %6414 = vmatpush1.bf16.msra.mxu0 0
  %6415 = vmatprep.subr.bf16.mxu0 0
  %6416 = vmatpush1.bf16.msra.mxu0 0
  %6417 = vmatprep.subr.bf16.mxu0 0
  %6418 = vmatpush1.bf16.msra.mxu0 0
  %6419 = vmatprep.subr.bf16.mxu0 0
  %6420 = vmatpush1.bf16.msra.mxu0 0
  %6421 = vmatprep.mubr.bf16.mxu0 0
  %6422 = vmatmul.mubr.bf16.gmra.mrb[0].mxu0 %v6375
  %v6423 = vpop.f32.mrb[0].mxu0
  %v6424 = vadd.f32 0.0, %v6423
  %v6425 = vpop.f32.mrb[0].mxu0
  %v6426 = vadd.f32 0.0, %v6425
  %v6427 = vpop.f32.mrb[0].mxu0
  %v6428 = vadd.f32 0.0, %v6427
  %v6429 = vpop.f32.mrb[0].mxu0
  %v6430 = vadd.f32 0.0, %v6429
  %6431 = vdwg.mxu0
  %6432 = vmatprep.subr.bf16.mxu0 %v6387
  %6433 = vmatpush1.bf16.msra.mxu0 %v6384
  %6434 = vmatprep.subr.bf16.mxu0 0
  %6435 = vmatpush1.bf16.msra.mxu0 0
  %6436 = vmatprep.subr.bf16.mxu0 0
  %6437 = vmatpush1.bf16.msra.mxu0 0
  %6438 = vmatprep.subr.bf16.mxu0 0
  %6439 = vmatpush1.bf16.msra.mxu0 0
  %6440 = vmatprep.subr.bf16.mxu0 0
  %6441 = vmatpush1.bf16.msra.mxu0 0
  %6442 = vmatprep.subr.bf16.mxu0 0
  %6443 = vmatpush1.bf16.msra.mxu0 0
  %6444 = vmatprep.subr.bf16.mxu0 0
  %6445 = vmatpush1.bf16.msra.mxu0 0
  %6446 = vmatprep.subr.bf16.mxu0 0
  %6447 = vmatpush1.bf16.msra.mxu0 0
  %6448 = vmatprep.subr.bf16.mxu0 0
  %6449 = vmatpush1.bf16.msra.mxu0 0
  %6450 = vmatprep.subr.bf16.mxu0 0
  %6451 = vmatpush1.bf16.msra.mxu0 0
  %6452 = vmatprep.subr.bf16.mxu0 0
  %6453 = vmatpush1.bf16.msra.mxu0 0
  %6454 = vmatprep.subr.bf16.mxu0 0
  %6455 = vmatpush1.bf16.msra.mxu0 0
  %6456 = vmatprep.subr.bf16.mxu0 0
  %6457 = vmatpush1.bf16.msra.mxu0 0
  %6458 = vmatprep.subr.bf16.mxu0 0
  %6459 = vmatpush1.bf16.msra.mxu0 0
  %6460 = vmatprep.subr.bf16.mxu0 0
  %6461 = vmatpush1.bf16.msra.mxu0 0
  %6462 = vmatprep.subr.bf16.mxu0 0
  %6463 = vmatpush1.bf16.msra.mxu0 0
  %6464 = vmatprep.mubr.bf16.mxu0 0
  %6465 = vmatmul.mubr.bf16.gmra.mrb[0].mxu0 %v6375
  %v6466 = vpop.f32.mrb[0].mxu0
  %v6467 = vadd.f32 0.0, %v6466
  %v6468 = vpop.f32.mrb[0].mxu0
  %v6469 = vadd.f32 0.0, %v6468
  %v6470 = vpop.f32.mrb[0].mxu0
  %v6471 = vadd.f32 0.0, %v6470
  %v6472 = vpop.f32.mrb[0].mxu0
  %v6473 = vadd.f32 0.0, %v6472
  %6474 = vdwg.mxu0
  %v6475 = vadd.f32 %v6338, %v6424
  %v6476 = vadd.f32 %v6339, %v6426
  %v6477 = vadd.f32 %v6340, %v6467
  %v6478 = vadd.f32 %v6341, %v6469
  %v6479 = vadd.f32 %v6342, %v6428
  %v6480 = vadd.f32 %v6343, %v6430
  %v6481 = vadd.f32 %v6344, %v6471
  %v6482 = vadd.f32 %v6345, %v6473
  %s6483 = scalar_lea.vmem %s16, 56
  %v6484 = vld [vmem:[%s6483] sm:$0xf]
  %v6485 = vld [vmem:[%s6483 + $0x4] sm:$0xf]
  %v6488 = vunpack.c.l.b16 %v6484
  %v6489 = vunpack.c.l.b16 %v6485
  %v6490 = vpack.c.b16 %v6489, %v6488
  %v6492 = vsel %vm214, %v6490, 0
  %6494 = vmatprep.subr.bf16.mxu0 %v1171
  %6495 = vmatpush1.bf16.msra.mxu0 %v1168
  %6496 = vmatprep.subr.bf16.mxu0 0
  %6497 = vmatpush1.bf16.msra.mxu0 0
  %6498 = vmatprep.subr.bf16.mxu0 0
  %6499 = vmatpush1.bf16.msra.mxu0 0
  %6500 = vmatprep.subr.bf16.mxu0 0
  %6501 = vmatpush1.bf16.msra.mxu0 0
  %6502 = vmatprep.subr.bf16.mxu0 0
  %6503 = vmatpush1.bf16.msra.mxu0 0
  %6504 = vmatprep.subr.bf16.mxu0 0
  %6505 = vmatpush1.bf16.msra.mxu0 0
  %6506 = vmatprep.subr.bf16.mxu0 0
  %6507 = vmatpush1.bf16.msra.mxu0 0
  %6508 = vmatprep.subr.bf16.mxu0 0
  %6509 = vmatpush1.bf16.msra.mxu0 0
  %6510 = vmatprep.subr.bf16.mxu0 0
  %6511 = vmatpush1.bf16.msra.mxu0 0
  %6512 = vmatprep.subr.bf16.mxu0 0
  %6513 = vmatpush1.bf16.msra.mxu0 0
  %6514 = vmatprep.subr.bf16.mxu0 0
  %6515 = vmatpush1.bf16.msra.mxu0 0
  %6516 = vmatprep.subr.bf16.mxu0 0
  %6517 = vmatpush1.bf16.msra.mxu0 0
  %6518 = vmatprep.subr.bf16.mxu0 0
  %6519 = vmatpush1.bf16.msra.mxu0 0
  %6520 = vmatprep.subr.bf16.mxu0 0
  %6521 = vmatpush1.bf16.msra.mxu0 0
  %6522 = vmatprep.subr.bf16.mxu0 0
  %6523 = vmatpush1.bf16.msra.mxu0 0
  %6524 = vmatprep.subr.bf16.mxu0 0
  %6525 = vmatpush1.bf16.msra.mxu0 0
  %6526 = vmatprep.mubr.bf16.mxu0 0
  %6527 = vmatmul.mubr.bf16.gmra.mrb[0].mxu0 %v6492
  %v6528 = vpop.f32.mrb[0].mxu0
  %v6529 = vadd.f32 0.0, %v6528
  %v6530 = vpop.f32.mrb[0].mxu0
  %v6531 = vadd.f32 0.0, %v6530
  %v6532 = vpop.f32.mrb[0].mxu0
  %v6533 = vadd.f32 0.0, %v6532
  %v6534 = vpop.f32.mrb[0].mxu0
  %v6535 = vadd.f32 0.0, %v6534
  %6536 = vdwg.mxu0
  %6537 = vmatprep.subr.bf16.mxu0 %v1177
  %6538 = vmatpush1.bf16.msra.mxu0 %v1174
  %6539 = vmatprep.subr.bf16.mxu0 0
  %6540 = vmatpush1.bf16.msra.mxu0 0
  %6541 = vmatprep.subr.bf16.mxu0 0
  %6542 = vmatpush1.bf16.msra.mxu0 0
  %6543 = vmatprep.subr.bf16.mxu0 0
  %6544 = vmatpush1.bf16.msra.mxu0 0
  %6545 = vmatprep.subr.bf16.mxu0 0
  %6546 = vmatpush1.bf16.msra.mxu0 0
  %6547 = vmatprep.subr.bf16.mxu0 0
  %6548 = vmatpush1.bf16.msra.mxu0 0
  %6549 = vmatprep.subr.bf16.mxu0 0
  %6550 = vmatpush1.bf16.msra.mxu0 0
  %6551 = vmatprep.subr.bf16.mxu0 0
  %6552 = vmatpush1.bf16.msra.mxu0 0
  %6553 = vmatprep.subr.bf16.mxu0 0
  %6554 = vmatpush1.bf16.msra.mxu0 0
  %6555 = vmatprep.subr.bf16.mxu0 0
  %6556 = vmatpush1.bf16.msra.mxu0 0
  %6557 = vmatprep.subr.bf16.mxu0 0
  %6558 = vmatpush1.bf16.msra.mxu0 0
  %6559 = vmatprep.subr.bf16.mxu0 0
  %6560 = vmatpush1.bf16.msra.mxu0 0
  %6561 = vmatprep.subr.bf16.mxu0 0
  %6562 = vmatpush1.bf16.msra.mxu0 0
  %6563 = vmatprep.subr.bf16.mxu0 0
  %6564 = vmatpush1.bf16.msra.mxu0 0
  %6565 = vmatprep.subr.bf16.mxu0 0
  %6566 = vmatpush1.bf16.msra.mxu0 0
  %6567 = vmatprep.subr.bf16.mxu0 0
  %6568 = vmatpush1.bf16.msra.mxu0 0
  %6569 = vmatprep.mubr.bf16.mxu0 0
  %6570 = vmatmul.mubr.bf16.gmra.mrb[0].mxu0 %v6492
  %v6571 = vpop.f32.mrb[0].mxu0
  %v6572 = vadd.f32 0.0, %v6571
  %v6573 = vpop.f32.mrb[0].mxu0
  %v6574 = vadd.f32 0.0, %v6573
  %v6575 = vpop.f32.mrb[0].mxu0
  %v6576 = vadd.f32 0.0, %v6575
  %v6577 = vpop.f32.mrb[0].mxu0
  %v6578 = vadd.f32 0.0, %v6577
  %6579 = vdwg.mxu0
  %v6580 = vadd.f32 %v6475, %v6529
  %v6581 = vadd.f32 %v6476, %v6531
  %v6582 = vadd.f32 %v6477, %v6572
  %v6583 = vadd.f32 %v6478, %v6574
  %v6584 = vadd.f32 %v6479, %v6533
  %v6585 = vadd.f32 %v6480, %v6535
  %v6586 = vadd.f32 %v6481, %v6576
  %v6587 = vadd.f32 %v6482, %v6578
  %6588 = vrot.lane.b32.xlu0 %v4772, 112
  %v6589 = vpop.permute.xlu0 %6588
  %6590 = vrot.lane.b32.xlu0 %v4774, 112
  %v6591 = vpop.permute.xlu0 %6590
  %6592 = vrot.lane.b32.xlu0 %v4813, 112
  %v6593 = vpop.permute.xlu0 %6592
  %6594 = vrot.lane.b32.xlu0 %v4815, 112
  %v6595 = vpop.permute.xlu0 %6594
  %v6596 = vsel %vm1149, %v6593, %v6595
  %v6597 = vsel %vm1149, %v6591, %v6593
  %v6598 = vsel %vm1149, %v6589, %v6591
  %v6599 = vsel %vm1149, %v6595, %v6589
  %s6600 = scalar_lea.vmem %s17, 56
  %v6601 = vld [vmem:[%s6600] sm:$0xf]
  %v6602 = vld [vmem:[%s6600 + $0x4] sm:$0xf]
  %v6603 = vmul.f32 %v6598, %v1137
  %v6604 = vmul.f32 %v6597, %v1138
  %v6605 = vmul.f32 %v6596, %v1139
  %v6606 = vmul.f32 %v6599, %v1140
  %v6607 = vpack.c.bf16 %v6603, %v6603
  %v6608 = vpack.c.bf16 %v6604, %v6604
  %v6609 = vpack.c.bf16 %v6605, %v6605
  %v6610 = vpack.c.bf16 %v6606, %v6606
  %v6613 = vunpack.c.l.b16 %v6601
  %v6614 = vunpack.c.l.b16 %v6602
  %v6615 = vpack.c.b16 %v6614, %v6613
  %v6617 = vsel %vm214, %v6615, 0
  %v6620 = vsel %vm218, %v6607, 0
  %v6623 = vsel %vm218, %v6608, 0
  %v6626 = vsel %vm218, %v6609, 0
  %v6629 = vsel %vm218, %v6610, 0
  %6631 = vmatprep.subr.bf16.mxu0 %v6623
  %6632 = vmatpush1.bf16.msra.mxu0 %v6620
  %6633 = vmatprep.subr.bf16.mxu0 0
  %6634 = vmatpush1.bf16.msra.mxu0 0
  %6635 = vmatprep.subr.bf16.mxu0 0
  %6636 = vmatpush1.bf16.msra.mxu0 0
  %6637 = vmatprep.subr.bf16.mxu0 0
  %6638 = vmatpush1.bf16.msra.mxu0 0
  %6639 = vmatprep.subr.bf16.mxu0 0
  %6640 = vmatpush1.bf16.msra.mxu0 0
  %6641 = vmatprep.subr.bf16.mxu0 0
  %6642 = vmatpush1.bf16.msra.mxu0 0
  %6643 = vmatprep.subr.bf16.mxu0 0
  %6644 = vmatpush1.bf16.msra.mxu0 0
  %6645 = vmatprep.subr.bf16.mxu0 0
  %6646 = vmatpush1.bf16.msra.mxu0 0
  %6647 = vmatprep.subr.bf16.mxu0 0
  %6648 = vmatpush1.bf16.msra.mxu0 0
  %6649 = vmatprep.subr.bf16.mxu0 0
  %6650 = vmatpush1.bf16.msra.mxu0 0
  %6651 = vmatprep.subr.bf16.mxu0 0
  %6652 = vmatpush1.bf16.msra.mxu0 0
  %6653 = vmatprep.subr.bf16.mxu0 0
  %6654 = vmatpush1.bf16.msra.mxu0 0
  %6655 = vmatprep.subr.bf16.mxu0 0
  %6656 = vmatpush1.bf16.msra.mxu0 0
  %6657 = vmatprep.subr.bf16.mxu0 0
  %6658 = vmatpush1.bf16.msra.mxu0 0
  %6659 = vmatprep.subr.bf16.mxu0 0
  %6660 = vmatpush1.bf16.msra.mxu0 0
  %6661 = vmatprep.subr.bf16.mxu0 0
  %6662 = vmatpush1.bf16.msra.mxu0 0
  %6663 = vmatprep.mubr.bf16.mxu0 0
  %6664 = vmatmul.mubr.bf16.gmra.mrb[0].mxu0 %v6617
  %v6665 = vpop.f32.mrb[0].mxu0
  %v6666 = vadd.f32 0.0, %v6665
  %v6667 = vpop.f32.mrb[0].mxu0
  %v6668 = vadd.f32 0.0, %v6667
  %v6669 = vpop.f32.mrb[0].mxu0
  %v6670 = vadd.f32 0.0, %v6669
  %v6671 = vpop.f32.mrb[0].mxu0
  %v6672 = vadd.f32 0.0, %v6671
  %6673 = vdwg.mxu0
  %6674 = vmatprep.subr.bf16.mxu0 %v6629
  %6675 = vmatpush1.bf16.msra.mxu0 %v6626
  %6676 = vmatprep.subr.bf16.mxu0 0
  %6677 = vmatpush1.bf16.msra.mxu0 0
  %6678 = vmatprep.subr.bf16.mxu0 0
  %6679 = vmatpush1.bf16.msra.mxu0 0
  %6680 = vmatprep.subr.bf16.mxu0 0
  %6681 = vmatpush1.bf16.msra.mxu0 0
  %6682 = vmatprep.subr.bf16.mxu0 0
  %6683 = vmatpush1.bf16.msra.mxu0 0
  %6684 = vmatprep.subr.bf16.mxu0 0
  %6685 = vmatpush1.bf16.msra.mxu0 0
  %6686 = vmatprep.subr.bf16.mxu0 0
  %6687 = vmatpush1.bf16.msra.mxu0 0
  %6688 = vmatprep.subr.bf16.mxu0 0
  %6689 = vmatpush1.bf16.msra.mxu0 0
  %6690 = vmatprep.subr.bf16.mxu0 0
  %6691 = vmatpush1.bf16.msra.mxu0 0
  %6692 = vmatprep.subr.bf16.mxu0 0
  %6693 = vmatpush1.bf16.msra.mxu0 0
  %6694 = vmatprep.subr.bf16.mxu0 0
  %6695 = vmatpush1.bf16.msra.mxu0 0
  %6696 = vmatprep.subr.bf16.mxu0 0
  %6697 = vmatpush1.bf16.msra.mxu0 0
  %6698 = vmatprep.subr.bf16.mxu0 0
  %6699 = vmatpush1.bf16.msra.mxu0 0
  %6700 = vmatprep.subr.bf16.mxu0 0
  %6701 = vmatpush1.bf16.msra.mxu0 0
  %6702 = vmatprep.subr.bf16.mxu0 0
  %6703 = vmatpush1.bf16.msra.mxu0 0
  %6704 = vmatprep.subr.bf16.mxu0 0
  %6705 = vmatpush1.bf16.msra.mxu0 0
  %6706 = vmatprep.mubr.bf16.mxu0 0
  %6707 = vmatmul.mubr.bf16.gmra.mrb[0].mxu0 %v6617
  %v6708 = vpop.f32.mrb[0].mxu0
  %v6709 = vadd.f32 0.0, %v6708
  %v6710 = vpop.f32.mrb[0].mxu0
  %v6711 = vadd.f32 0.0, %v6710
  %v6712 = vpop.f32.mrb[0].mxu0
  %v6713 = vadd.f32 0.0, %v6712
  %v6714 = vpop.f32.mrb[0].mxu0
  %v6715 = vadd.f32 0.0, %v6714
  %6716 = vdwg.mxu0
  %v6717 = vadd.f32 %v6580, %v6666
  %v6718 = vadd.f32 %v6581, %v6668
  %v6719 = vadd.f32 %v6582, %v6709
  %v6720 = vadd.f32 %v6583, %v6711
  %v6721 = vadd.f32 %v6584, %v6670
  %v6722 = vadd.f32 %v6585, %v6672
  %v6723 = vadd.f32 %v6586, %v6713
  %v6724 = vadd.f32 %v6587, %v6715
  %s6725 = scalar_lea.vmem %s16, 64
  %v6726 = vld [vmem:[%s6725] sm:$0xf]
  %v6727 = vld [vmem:[%s6725 + $0x4] sm:$0xf]
  %v6730 = vunpack.c.l.b16 %v6726
  %v6731 = vunpack.c.l.b16 %v6727
  %v6732 = vpack.c.b16 %v6731, %v6730
  %v6734 = vsel %vm214, %v6732, 0
  %6736 = vmatprep.subr.bf16.mxu0 %v1307
  %6737 = vmatpush1.bf16.msra.mxu0 %v1304
  %6738 = vmatprep.subr.bf16.mxu0 0
  %6739 = vmatpush1.bf16.msra.mxu0 0
  %6740 = vmatprep.subr.bf16.mxu0 0
  %6741 = vmatpush1.bf16.msra.mxu0 0
  %6742 = vmatprep.subr.bf16.mxu0 0
  %6743 = vmatpush1.bf16.msra.mxu0 0
  %6744 = vmatprep.subr.bf16.mxu0 0
  %6745 = vmatpush1.bf16.msra.mxu0 0
  %6746 = vmatprep.subr.bf16.mxu0 0
  %6747 = vmatpush1.bf16.msra.mxu0 0
  %6748 = vmatprep.subr.bf16.mxu0 0
  %6749 = vmatpush1.bf16.msra.mxu0 0
  %6750 = vmatprep.subr.bf16.mxu0 0
  %6751 = vmatpush1.bf16.msra.mxu0 0
  %6752 = vmatprep.subr.bf16.mxu0 0
  %6753 = vmatpush1.bf16.msra.mxu0 0
  %6754 = vmatprep.subr.bf16.mxu0 0
  %6755 = vmatpush1.bf16.msra.mxu0 0
  %6756 = vmatprep.subr.bf16.mxu0 0
  %6757 = vmatpush1.bf16.msra.mxu0 0
  %6758 = vmatprep.subr.bf16.mxu0 0
  %6759 = vmatpush1.bf16.msra.mxu0 0
  %6760 = vmatprep.subr.bf16.mxu0 0
  %6761 = vmatpush1.bf16.msra.mxu0 0
  %6762 = vmatprep.subr.bf16.mxu0 0
  %6763 = vmatpush1.bf16.msra.mxu0 0
  %6764 = vmatprep.subr.bf16.mxu0 0
  %6765 = vmatpush1.bf16.msra.mxu0 0
  %6766 = vmatprep.subr.bf16.mxu0 0
  %6767 = vmatpush1.bf16.msra.mxu0 0
  %6768 = vmatprep.mubr.bf16.mxu0 0
  %6769 = vmatmul.mubr.bf16.gmra.mrb[0].mxu0 %v6734
  %v6770 = vpop.f32.mrb[0].mxu0
  %v6771 = vadd.f32 0.0, %v6770
  %v6772 = vpop.f32.mrb[0].mxu0
  %v6773 = vadd.f32 0.0, %v6772
  %v6774 = vpop.f32.mrb[0].mxu0
  %v6775 = vadd.f32 0.0, %v6774
  %v6776 = vpop.f32.mrb[0].mxu0
  %v6777 = vadd.f32 0.0, %v6776
  %6778 = vdwg.mxu0
  %6779 = vmatprep.subr.bf16.mxu0 %v1313
  %6780 = vmatpush1.bf16.msra.mxu0 %v1310
  %6781 = vmatprep.subr.bf16.mxu0 0
  %6782 = vmatpush1.bf16.msra.mxu0 0
  %6783 = vmatprep.subr.bf16.mxu0 0
  %6784 = vmatpush1.bf16.msra.mxu0 0
  %6785 = vmatprep.subr.bf16.mxu0 0
  %6786 = vmatpush1.bf16.msra.mxu0 0
  %6787 = vmatprep.subr.bf16.mxu0 0
  %6788 = vmatpush1.bf16.msra.mxu0 0
  %6789 = vmatprep.subr.bf16.mxu0 0
  %6790 = vmatpush1.bf16.msra.mxu0 0
  %6791 = vmatprep.subr.bf16.mxu0 0
  %6792 = vmatpush1.bf16.msra.mxu0 0
  %6793 = vmatprep.subr.bf16.mxu0 0
  %6794 = vmatpush1.bf16.msra.mxu0 0
  %6795 = vmatprep.subr.bf16.mxu0 0
  %6796 = vmatpush1.bf16.msra.mxu0 0
  %6797 = vmatprep.subr.bf16.mxu0 0
  %6798 = vmatpush1.bf16.msra.mxu0 0
  %6799 = vmatprep.subr.bf16.mxu0 0
  %6800 = vmatpush1.bf16.msra.mxu0 0
  %6801 = vmatprep.subr.bf16.mxu0 0
  %6802 = vmatpush1.bf16.msra.mxu0 0
  %6803 = vmatprep.subr.bf16.mxu0 0
  %6804 = vmatpush1.bf16.msra.mxu0 0
  %6805 = vmatprep.subr.bf16.mxu0 0
  %6806 = vmatpush1.bf16.msra.mxu0 0
  %6807 = vmatprep.subr.bf16.mxu0 0
  %6808 = vmatpush1.bf16.msra.mxu0 0
  %6809 = vmatprep.subr.bf16.mxu0 0
  %6810 = vmatpush1.bf16.msra.mxu0 0
  %6811 = vmatprep.mubr.bf16.mxu0 0
  %6812 = vmatmul.mubr.bf16.gmra.mrb[0].mxu0 %v6734
  %v6813 = vpop.f32.mrb[0].mxu0
  %v6814 = vadd.f32 0.0, %v6813
  %v6815 = vpop.f32.mrb[0].mxu0
  %v6816 = vadd.f32 0.0, %v6815
  %v6817 = vpop.f32.mrb[0].mxu0
  %v6818 = vadd.f32 0.0, %v6817
  %v6819 = vpop.f32.mrb[0].mxu0
  %v6820 = vadd.f32 0.0, %v6819
  %6821 = vdwg.mxu0
  %v6822 = vadd.f32 %v6717, %v6771
  %v6823 = vadd.f32 %v6718, %v6773
  %v6824 = vadd.f32 %v6719, %v6814
  %v6825 = vadd.f32 %v6720, %v6816
  %v6826 = vadd.f32 %v6721, %v6775
  %v6827 = vadd.f32 %v6722, %v6777
  %v6828 = vadd.f32 %v6723, %v6818
  %v6829 = vadd.f32 %v6724, %v6820
  %6830 = vrot.lane.b32.xlu0 %v4772, 111
  %v6831 = vpop.permute.xlu0 %6830
  %6832 = vrot.lane.b32.xlu0 %v4774, 111
  %v6833 = vpop.permute.xlu0 %6832
  %6834 = vrot.lane.b32.xlu0 %v4813, 111
  %v6835 = vpop.permute.xlu0 %6834
  %6836 = vrot.lane.b32.xlu0 %v4815, 111
  %v6837 = vpop.permute.xlu0 %6836
  %v6838 = vsel %vm1285, %v6835, %v6837
  %v6839 = vsel %vm1285, %v6833, %v6835
  %v6840 = vsel %vm1285, %v6831, %v6833
  %v6841 = vsel %vm1285, %v6837, %v6831
  %s6842 = scalar_lea.vmem %s17, 64
  %v6843 = vld [vmem:[%s6842] sm:$0xf]
  %v6844 = vld [vmem:[%s6842 + $0x4] sm:$0xf]
  %v6845 = vmul.f32 %v6840, %v1273
  %v6846 = vmul.f32 %v6839, %v1274
  %v6847 = vmul.f32 %v6838, %v1275
  %v6848 = vmul.f32 %v6841, %v1276
  %v6849 = vpack.c.bf16 %v6845, %v6845
  %v6850 = vpack.c.bf16 %v6846, %v6846
  %v6851 = vpack.c.bf16 %v6847, %v6847
  %v6852 = vpack.c.bf16 %v6848, %v6848
  %v6855 = vunpack.c.l.b16 %v6843
  %v6856 = vunpack.c.l.b16 %v6844
  %v6857 = vpack.c.b16 %v6856, %v6855
  %v6859 = vsel %vm214, %v6857, 0
  %v6862 = vsel %vm218, %v6849, 0
  %v6865 = vsel %vm218, %v6850, 0
  %v6868 = vsel %vm218, %v6851, 0
  %v6871 = vsel %vm218, %v6852, 0
  %6873 = vmatprep.subr.bf16.mxu0 %v6865
  %6874 = vmatpush1.bf16.msra.mxu0 %v6862
  %6875 = vmatprep.subr.bf16.mxu0 0
  %6876 = vmatpush1.bf16.msra.mxu0 0
  %6877 = vmatprep.subr.bf16.mxu0 0
  %6878 = vmatpush1.bf16.msra.mxu0 0
  %6879 = vmatprep.subr.bf16.mxu0 0
  %6880 = vmatpush1.bf16.msra.mxu0 0
  %6881 = vmatprep.subr.bf16.mxu0 0
  %6882 = vmatpush1.bf16.msra.mxu0 0
  %6883 = vmatprep.subr.bf16.mxu0 0
  %6884 = vmatpush1.bf16.msra.mxu0 0
  %6885 = vmatprep.subr.bf16.mxu0 0
  %6886 = vmatpush1.bf16.msra.mxu0 0
  %6887 = vmatprep.subr.bf16.mxu0 0
  %6888 = vmatpush1.bf16.msra.mxu0 0
  %6889 = vmatprep.subr.bf16.mxu0 0
  %6890 = vmatpush1.bf16.msra.mxu0 0
  %6891 = vmatprep.subr.bf16.mxu0 0
  %6892 = vmatpush1.bf16.msra.mxu0 0
  %6893 = vmatprep.subr.bf16.mxu0 0
  %6894 = vmatpush1.bf16.msra.mxu0 0
  %6895 = vmatprep.subr.bf16.mxu0 0
  %6896 = vmatpush1.bf16.msra.mxu0 0
  %6897 = vmatprep.subr.bf16.mxu0 0
  %6898 = vmatpush1.bf16.msra.mxu0 0
  %6899 = vmatprep.subr.bf16.mxu0 0
  %6900 = vmatpush1.bf16.msra.mxu0 0
  %6901 = vmatprep.subr.bf16.mxu0 0
  %6902 = vmatpush1.bf16.msra.mxu0 0
  %6903 = vmatprep.subr.bf16.mxu0 0
  %6904 = vmatpush1.bf16.msra.mxu0 0
  %6905 = vmatprep.mubr.bf16.mxu0 0
  %6906 = vmatmul.mubr.bf16.gmra.mrb[0].mxu0 %v6859
  %v6907 = vpop.f32.mrb[0].mxu0
  %v6908 = vadd.f32 0.0, %v6907
  %v6909 = vpop.f32.mrb[0].mxu0
  %v6910 = vadd.f32 0.0, %v6909
  %v6911 = vpop.f32.mrb[0].mxu0
  %v6912 = vadd.f32 0.0, %v6911
  %v6913 = vpop.f32.mrb[0].mxu0
  %v6914 = vadd.f32 0.0, %v6913
  %6915 = vdwg.mxu0
  %6916 = vmatprep.subr.bf16.mxu0 %v6871
  %6917 = vmatpush1.bf16.msra.mxu0 %v6868
  %6918 = vmatprep.subr.bf16.mxu0 0
  %6919 = vmatpush1.bf16.msra.mxu0 0
  %6920 = vmatprep.subr.bf16.mxu0 0
  %6921 = vmatpush1.bf16.msra.mxu0 0
  %6922 = vmatprep.subr.bf16.mxu0 0
  %6923 = vmatpush1.bf16.msra.mxu0 0
  %6924 = vmatprep.subr.bf16.mxu0 0
  %6925 = vmatpush1.bf16.msra.mxu0 0
  %6926 = vmatprep.subr.bf16.mxu0 0
  %6927 = vmatpush1.bf16.msra.mxu0 0
  %6928 = vmatprep.subr.bf16.mxu0 0
  %6929 = vmatpush1.bf16.msra.mxu0 0
  %6930 = vmatprep.subr.bf16.mxu0 0
  %6931 = vmatpush1.bf16.msra.mxu0 0
  %6932 = vmatprep.subr.bf16.mxu0 0
  %6933 = vmatpush1.bf16.msra.mxu0 0
  %6934 = vmatprep.subr.bf16.mxu0 0
  %6935 = vmatpush1.bf16.msra.mxu0 0
  %6936 = vmatprep.subr.bf16.mxu0 0
  %6937 = vmatpush1.bf16.msra.mxu0 0
  %6938 = vmatprep.subr.bf16.mxu0 0
  %6939 = vmatpush1.bf16.msra.mxu0 0
  %6940 = vmatprep.subr.bf16.mxu0 0
  %6941 = vmatpush1.bf16.msra.mxu0 0
  %6942 = vmatprep.subr.bf16.mxu0 0
  %6943 = vmatpush1.bf16.msra.mxu0 0
  %6944 = vmatprep.subr.bf16.mxu0 0
  %6945 = vmatpush1.bf16.msra.mxu0 0
  %6946 = vmatprep.subr.bf16.mxu0 0
  %6947 = vmatpush1.bf16.msra.mxu0 0
  %6948 = vmatprep.mubr.bf16.mxu0 0
  %6949 = vmatmul.mubr.bf16.gmra.mrb[0].mxu0 %v6859
  %v6950 = vpop.f32.mrb[0].mxu0
  %v6951 = vadd.f32 0.0, %v6950
  %v6952 = vpop.f32.mrb[0].mxu0
  %v6953 = vadd.f32 0.0, %v6952
  %v6954 = vpop.f32.mrb[0].mxu0
  %v6955 = vadd.f32 0.0, %v6954
  %v6956 = vpop.f32.mrb[0].mxu0
  %v6957 = vadd.f32 0.0, %v6956
  %6958 = vdwg.mxu0
  %v6959 = vadd.f32 %v6822, %v6908
  %v6960 = vadd.f32 %v6823, %v6910
  %v6961 = vadd.f32 %v6824, %v6951
  %v6962 = vadd.f32 %v6825, %v6953
  %v6963 = vadd.f32 %v6826, %v6912
  %v6964 = vadd.f32 %v6827, %v6914
  %v6965 = vadd.f32 %v6828, %v6955
  %v6966 = vadd.f32 %v6829, %v6957
  %v6967 = vld [vmem:[%s18] sm:$0xff]
  %v6968 = vld [vmem:[%s18 + $0x8] sm:$0xff]
  %6970 = vset.pattern.permute.xlu0 0
  %6971 = vperm.xlu0 %6970, %v6967
  %v6972 = vpop.permute.xlu0 %6971
  %6975 = vset.pattern.permute.xlu0 0
  %6976 = vperm.xlu0 %6975, %v6968
  %v6977 = vpop.permute.xlu0 %6976
  %v6979 = vmul.f32 %v6959, %v6972
  %v6980 = vmul.f32 %v6960, %v6972
  %v6981 = vmul.f32 %v6961, %v6972
  %v6982 = vmul.f32 %v6962, %v6972
  %v6983 = vmul.f32 %v6963, %v6977
  %v6984 = vmul.f32 %v6964, %v6977
  %v6985 = vmul.f32 %v6965, %v6977
  %v6986 = vmul.f32 %v6966, %v6977
  %v6987 = vld [vmem:[%s19] sm:$0xff]
  %v6988 = vld [vmem:[%s19 + $0x8] sm:$0xff]
  %6990 = vset.pattern.permute.xlu0 0
  %6991 = vperm.xlu0 %6990, %v6987
  %v6992 = vpop.permute.xlu0 %6991
  %6995 = vset.pattern.permute.xlu0 0
  %6996 = vperm.xlu0 %6995, %v6988
  %v6997 = vpop.permute.xlu0 %6996
  %v6999 = vadd.f32 %v6979, %v6992
  %v7000 = vadd.f32 %v6980, %v6992
  %v7001 = vadd.f32 %v6981, %v6992
  %v7002 = vadd.f32 %v6982, %v6992
  %v7003 = vadd.f32 %v6983, %v6997
  %v7004 = vadd.f32 %v6984, %v6997
  %v7005 = vadd.f32 %v6985, %v6997
  %v7006 = vadd.f32 %v6986, %v6997
  %v7007 = vmax.f32 %v6999, 0.0
  %v7008 = vmax.f32 %v7000, 0.0
  %v7009 = vmax.f32 %v7001, 0.0
  %v7010 = vmax.f32 %v7002, 0.0
  %v7011 = vmax.f32 %v7003, 0.0
  %v7012 = vmax.f32 %v7004, 0.0
  %v7013 = vmax.f32 %v7005, 0.0
  %v7014 = vmax.f32 %v7006, 0.0
  %v7015 = vld [vmem:[%s3] sm:$0xff]
  %v7016 = vld [vmem:[%s3 + $0x8] sm:$0xff]
  %v7017 = vld [vmem:[%s3 + $0x10] sm:$0xff]
  %v7018 = vld [vmem:[%s3 + $0x18] sm:$0xff]
  %v7019 = vld [vmem:[%s3 + $0x20] sm:$0xff]
  %v7020 = vld [vmem:[%s3 + $0x28] sm:$0xff]
  %v7021 = vld [vmem:[%s3 + $0x30] sm:$0xff]
  %v7022 = vld [vmem:[%s3 + $0x38] sm:$0xff]
  %v7023 = vld [vmem:[%s3 + $0x40] sm:$0xff]
  %v7024 = vld [vmem:[%s3 + $0x48] sm:$0xff]
  %v7025 = vld [vmem:[%s3 + $0x50] sm:$0xff]
  %v7026 = vld [vmem:[%s3 + $0x58] sm:$0xff]
  %v7027 = vld [vmem:[%s3 + $0x60] sm:$0xff]
  %v7028 = vld [vmem:[%s3 + $0x68] sm:$0xff]
  %v7029 = vld [vmem:[%s3 + $0x70] sm:$0xff]
  %v7030 = vld [vmem:[%s3 + $0x78] sm:$0xff]
  %v7031 = vld [vmem:[%s3 + $0x80] sm:$0xff]
  %v7032 = vld [vmem:[%s3 + $0x88] sm:$0xff]
  %v7033 = vld [vmem:[%s3 + $0x90] sm:$0xff]
  %v7034 = vld [vmem:[%s3 + $0x98] sm:$0xff]
  %v7035 = vld [vmem:[%s3 + $0xa0] sm:$0xff]
  %v7036 = vld [vmem:[%s3 + $0xa8] sm:$0xff]
  %v7037 = vld [vmem:[%s3 + $0xb0] sm:$0xff]
  %v7038 = vld [vmem:[%s3 + $0xb8] sm:$0xff]
  %v7039 = vld [vmem:[%s3 + $0xc0] sm:$0xff]
  %v7040 = vld [vmem:[%s3 + $0xc8] sm:$0xff]
  %v7041 = vld [vmem:[%s3 + $0xd0] sm:$0xff]
  %v7042 = vld [vmem:[%s3 + $0xd8] sm:$0xff]
  %v7043 = vld [vmem:[%s3 + $0xe0] sm:$0xff]
  %v7044 = vld [vmem:[%s3 + $0xe8] sm:$0xff]
  %v7045 = vld [vmem:[%s3 + $0xf0] sm:$0xff]
  %v7046 = vld [vmem:[%s3 + $0xf8] sm:$0xff]
  %v7047 = vld [vmem:[%s3 + $0x100] sm:$0xff]
  %v7048 = vld [vmem:[%s3 + $0x108] sm:$0xff]
  %v7049 = vld [vmem:[%s3 + $0x110] sm:$0xff]
  %v7050 = vld [vmem:[%s3 + $0x118] sm:$0xff]
  %v7051 = vld [vmem:[%s3 + $0x120] sm:$0xff]
  %v7052 = vld [vmem:[%s3 + $0x128] sm:$0xff]
  %v7053 = vld [vmem:[%s3 + $0x130] sm:$0xff]
  %v7054 = vld [vmem:[%s3 + $0x138] sm:$0xff]
  %v7055 = vld [vmem:[%s3 + $0x140] sm:$0xff]
  %v7056 = vld [vmem:[%s3 + $0x148] sm:$0xff]
  %v7057 = vld [vmem:[%s3 + $0x150] sm:$0xff]
  %v7058 = vld [vmem:[%s3 + $0x158] sm:$0xff]
  %v7059 = vld [vmem:[%s3 + $0x160] sm:$0xff]
  %v7060 = vld [vmem:[%s3 + $0x168] sm:$0xff]
  %v7061 = vld [vmem:[%s3 + $0x170] sm:$0xff]
  %v7062 = vld [vmem:[%s3 + $0x178] sm:$0xff]
  %v7063 = vld [vmem:[%s3 + $0x180] sm:$0xff]
  %v7064 = vld [vmem:[%s3 + $0x188] sm:$0xff]
  %v7065 = vld [vmem:[%s3 + $0x190] sm:$0xff]
  %v7066 = vld [vmem:[%s3 + $0x198] sm:$0xff]
  %v7067 = vld [vmem:[%s3 + $0x1a0] sm:$0xff]
  %v7068 = vld [vmem:[%s3 + $0x1a8] sm:$0xff]
  %v7069 = vld [vmem:[%s3 + $0x1b0] sm:$0xff]
  %v7070 = vld [vmem:[%s3 + $0x1b8] sm:$0xff]
  %v7071 = vld [vmem:[%s3 + $0x1c0] sm:$0xff]
  %v7072 = vld [vmem:[%s3 + $0x1c8] sm:$0xff]
  %v7073 = vld [vmem:[%s3 + $0x1d0] sm:$0xff]
  %v7074 = vld [vmem:[%s3 + $0x1d8] sm:$0xff]
  %v7075 = vld [vmem:[%s3 + $0x1e0] sm:$0xff]
  %v7076 = vld [vmem:[%s3 + $0x1e8] sm:$0xff]
  %v7077 = vld [vmem:[%s3 + $0x1f0] sm:$0xff]
  %v7078 = vld [vmem:[%s3 + $0x1f8] sm:$0xff]
  %7079 = vmatprep.subr.mxu0 0.0
  %7080 = vmatpush1.msra.mxu0 %v7015
  %7081 = vmatprep.subr.mxu0 0.0
  %7082 = vmatpush1.msra.mxu0 %v7016
  %7083 = vmatprep.subr.mxu0 0.0
  %7084 = vmatpush1.msra.mxu0 %v7017
  %7085 = vmatprep.subr.mxu0 0.0
  %7086 = vmatpush1.msra.mxu0 %v7018
  %7087 = vmatprep.subr.mxu0 0.0
  %7088 = vmatpush1.msra.mxu0 %v7019
  %7089 = vmatprep.subr.mxu0 0.0
  %7090 = vmatpush1.msra.mxu0 %v7020
  %7091 = vmatprep.subr.mxu0 0.0
  %7092 = vmatpush1.msra.mxu0 %v7021
  %7093 = vmatprep.subr.mxu0 0.0
  %7094 = vmatpush1.msra.mxu0 %v7022
  %7095 = vmatprep.subr.mxu0 0.0
  %7096 = vmatpush1.msra.mxu0 %v7023
  %7097 = vmatprep.subr.mxu0 0.0
  %7098 = vmatpush1.msra.mxu0 %v7024
  %7099 = vmatprep.subr.mxu0 0.0
  %7100 = vmatpush1.msra.mxu0 %v7025
  %7101 = vmatprep.subr.mxu0 0.0
  %7102 = vmatpush1.msra.mxu0 %v7026
  %7103 = vmatprep.subr.mxu0 0.0
  %7104 = vmatpush1.msra.mxu0 %v7027
  %7105 = vmatprep.subr.mxu0 0.0
  %7106 = vmatpush1.msra.mxu0 %v7028
  %7107 = vmatprep.subr.mxu0 0.0
  %7108 = vmatpush1.msra.mxu0 %v7029
  %7109 = vmatprep.subr.mxu0 0.0
  %7110 = vmatpush1.msra.mxu0 %v7030
  %7111 = vmatprep.subr.mxu0 0.0
  %7112 = vmatpush1.msra.mxu0 %v7031
  %7113 = vmatprep.subr.mxu0 0.0
  %7114 = vmatpush1.msra.mxu0 %v7032
  %7115 = vmatprep.subr.mxu0 0.0
  %7116 = vmatpush1.msra.mxu0 %v7033
  %7117 = vmatprep.subr.mxu0 0.0
  %7118 = vmatpush1.msra.mxu0 %v7034
  %7119 = vmatprep.subr.mxu0 0.0
  %7120 = vmatpush1.msra.mxu0 %v7035
  %7121 = vmatprep.subr.mxu0 0.0
  %7122 = vmatpush1.msra.mxu0 %v7036
  %7123 = vmatprep.subr.mxu0 0.0
  %7124 = vmatpush1.msra.mxu0 %v7037
  %7125 = vmatprep.subr.mxu0 0.0
  %7126 = vmatpush1.msra.mxu0 %v7038
  %7127 = vmatprep.subr.mxu0 0.0
  %7128 = vmatpush1.msra.mxu0 %v7039
  %7129 = vmatprep.subr.mxu0 0.0
  %7130 = vmatpush1.msra.mxu0 %v7040
  %7131 = vmatprep.subr.mxu0 0.0
  %7132 = vmatpush1.msra.mxu0 %v7041
  %7133 = vmatprep.subr.mxu0 0.0
  %7134 = vmatpush1.msra.mxu0 %v7042
  %7135 = vmatprep.subr.mxu0 0.0
  %7136 = vmatpush1.msra.mxu0 %v7043
  %7137 = vmatprep.subr.mxu0 0.0
  %7138 = vmatpush1.msra.mxu0 %v7044
  %7139 = vmatprep.subr.mxu0 0.0
  %7140 = vmatpush1.msra.mxu0 %v7045
  %7141 = vmatprep.subr.mxu0 0.0
  %7142 = vmatpush1.msra.mxu0 %v7046
  %7143 = vmatprep.mubr.f32.mxu0 %v7008
  %7144 = vmatmul.mubr.f32.gmra.mrb[0].mxu0 %v7007
  %v7145 = vpop.f32.mrb[0].mxu0
  %v7146 = vadd.f32 0.0, %v7145
  %v7147 = vpop.f32.mrb[0].mxu0
  %7148 = vmatprep.mubr.f32.mxu0 %v7012
  %7149 = vmatmul.mubr.f32.gmra.mrb[0].mxu0 %v7011
  %v7150 = vpop.f32.mrb[0].mxu0
  %v7151 = vadd.f32 0.0, %v7150
  %v7152 = vpop.f32.mrb[0].mxu0
  %7153 = vdwg.mxu0
  %7154 = vmatprep.subr.mxu0 0.0
  %7155 = vmatpush1.msra.mxu0 %v7047
  %7156 = vmatprep.subr.mxu0 0.0
  %7157 = vmatpush1.msra.mxu0 %v7048
  %7158 = vmatprep.subr.mxu0 0.0
  %7159 = vmatpush1.msra.mxu0 %v7049
  %7160 = vmatprep.subr.mxu0 0.0
  %7161 = vmatpush1.msra.mxu0 %v7050
  %7162 = vmatprep.subr.mxu0 0.0
  %7163 = vmatpush1.msra.mxu0 %v7051
  %7164 = vmatprep.subr.mxu0 0.0
  %7165 = vmatpush1.msra.mxu0 %v7052
  %7166 = vmatprep.subr.mxu0 0.0
  %7167 = vmatpush1.msra.mxu0 %v7053
  %7168 = vmatprep.subr.mxu0 0.0
  %7169 = vmatpush1.msra.mxu0 %v7054
  %7170 = vmatprep.subr.mxu0 0.0
  %7171 = vmatpush1.msra.mxu0 %v7055
  %7172 = vmatprep.subr.mxu0 0.0
  %7173 = vmatpush1.msra.mxu0 %v7056
  %7174 = vmatprep.subr.mxu0 0.0
  %7175 = vmatpush1.msra.mxu0 %v7057
  %7176 = vmatprep.subr.mxu0 0.0
  %7177 = vmatpush1.msra.mxu0 %v7058
  %7178 = vmatprep.subr.mxu0 0.0
  %7179 = vmatpush1.msra.mxu0 %v7059
  %7180 = vmatprep.subr.mxu0 0.0
  %7181 = vmatpush1.msra.mxu0 %v7060
  %7182 = vmatprep.subr.mxu0 0.0
  %7183 = vmatpush1.msra.mxu0 %v7061
  %7184 = vmatprep.subr.mxu0 0.0
  %7185 = vmatpush1.msra.mxu0 %v7062
  %7186 = vmatprep.subr.mxu0 0.0
  %7187 = vmatpush1.msra.mxu0 %v7063
  %7188 = vmatprep.subr.mxu0 0.0
  %7189 = vmatpush1.msra.mxu0 %v7064
  %7190 = vmatprep.subr.mxu0 0.0
  %7191 = vmatpush1.msra.mxu0 %v7065
  %7192 = vmatprep.subr.mxu0 0.0
  %7193 = vmatpush1.msra.mxu0 %v7066
  %7194 = vmatprep.subr.mxu0 0.0
  %7195 = vmatpush1.msra.mxu0 %v7067
  %7196 = vmatprep.subr.mxu0 0.0
  %7197 = vmatpush1.msra.mxu0 %v7068
  %7198 = vmatprep.subr.mxu0 0.0
  %7199 = vmatpush1.msra.mxu0 %v7069
  %7200 = vmatprep.subr.mxu0 0.0
  %7201 = vmatpush1.msra.mxu0 %v7070
  %7202 = vmatprep.subr.mxu0 0.0
  %7203 = vmatpush1.msra.mxu0 %v7071
  %7204 = vmatprep.subr.mxu0 0.0
  %7205 = vmatpush1.msra.mxu0 %v7072
  %7206 = vmatprep.subr.mxu0 0.0
  %7207 = vmatpush1.msra.mxu0 %v7073
  %7208 = vmatprep.subr.mxu0 0.0
  %7209 = vmatpush1.msra.mxu0 %v7074
  %7210 = vmatprep.subr.mxu0 0.0
  %7211 = vmatpush1.msra.mxu0 %v7075
  %7212 = vmatprep.subr.mxu0 0.0
  %7213 = vmatpush1.msra.mxu0 %v7076
  %7214 = vmatprep.subr.mxu0 0.0
  %7215 = vmatpush1.msra.mxu0 %v7077
  %7216 = vmatprep.subr.mxu0 0.0
  %7217 = vmatpush1.msra.mxu0 %v7078
  %7218 = vmatprep.mubr.f32.mxu0 %v7010
  %7219 = vmatmul.mubr.f32.gmra.mrb[0].mxu0 %v7009
  %v7220 = vpop.f32.mrb[0].mxu0
  %v7221 = vadd.f32 %v7146, %v7220
  %v7222 = vpop.f32.mrb[0].mxu0
  %7223 = vmatprep.mubr.f32.mxu0 %v7014
  %7224 = vmatmul.mubr.f32.gmra.mrb[0].mxu0 %v7013
  %v7225 = vpop.f32.mrb[0].mxu0
  %v7226 = vadd.f32 %v7151, %v7225
  %v7227 = vpop.f32.mrb[0].mxu0
  %7228 = vdwg.mxu0
  %v7229 = vld [vmem:[%s20] sm:$0xf]
  %v7230 = vld [vmem:[%s21] sm:$0xf]
  %7232 = vset.pattern.permute.xlu0 0
  %7233 = vperm.xlu0 %7232, %v7230
  %v7234 = vpop.permute.xlu0 %7233
  %v7237 = vsel %vm2576, %v7229, 0
  %7239 = vmatprep.subr.mxu0 0.0
  %7240 = vmatpush1.msra.mxu0 %v7221
  %7241 = vmatprep.subr.mxu0 0.0
  %7242 = vmatpush1.msra.mxu0 %v7226
  %7243 = vmatprep.subr.mxu0 0.0
  %7244 = vmatpush1.msra.mxu0 0.0
  %7245 = vmatprep.subr.mxu0 0.0
  %7246 = vmatpush1.msra.mxu0 0.0
  %7247 = vmatprep.subr.mxu0 0.0
  %7248 = vmatpush1.msra.mxu0 0.0
  %7249 = vmatprep.subr.mxu0 0.0
  %7250 = vmatpush1.msra.mxu0 0.0
  %7251 = vmatprep.subr.mxu0 0.0
  %7252 = vmatpush1.msra.mxu0 0.0
  %7253 = vmatprep.subr.mxu0 0.0
  %7254 = vmatpush1.msra.mxu0 0.0
  %7255 = vmatprep.subr.mxu0 0.0
  %7256 = vmatpush1.msra.mxu0 0.0
  %7257 = vmatprep.subr.mxu0 0.0
  %7258 = vmatpush1.msra.mxu0 0.0
  %7259 = vmatprep.subr.mxu0 0.0
  %7260 = vmatpush1.msra.mxu0 0.0
  %7261 = vmatprep.subr.mxu0 0.0
  %7262 = vmatpush1.msra.mxu0 0.0
  %7263 = vmatprep.subr.mxu0 0.0
  %7264 = vmatpush1.msra.mxu0 0.0
  %7265 = vmatprep.subr.mxu0 0.0
  %7266 = vmatpush1.msra.mxu0 0.0
  %7267 = vmatprep.subr.mxu0 0.0
  %7268 = vmatpush1.msra.mxu0 0.0
  %7269 = vmatprep.subr.mxu0 0.0
  %7270 = vmatpush1.msra.mxu0 0.0
  %7271 = vmatprep.subr.mxu0 0.0
  %7272 = vmatpush1.msra.mxu0 0.0
  %7273 = vmatprep.subr.mxu0 0.0
  %7274 = vmatpush1.msra.mxu0 0.0
  %7275 = vmatprep.subr.mxu0 0.0
  %7276 = vmatpush1.msra.mxu0 0.0
  %7277 = vmatprep.subr.mxu0 0.0
  %7278 = vmatpush1.msra.mxu0 0.0
  %7279 = vmatprep.subr.mxu0 0.0
  %7280 = vmatpush1.msra.mxu0 0.0
  %7281 = vmatprep.subr.mxu0 0.0
  %7282 = vmatpush1.msra.mxu0 0.0
  %7283 = vmatprep.subr.mxu0 0.0
  %7284 = vmatpush1.msra.mxu0 0.0
  %7285 = vmatprep.subr.mxu0 0.0
  %7286 = vmatpush1.msra.mxu0 0.0
  %7287 = vmatprep.subr.mxu0 0.0
  %7288 = vmatpush1.msra.mxu0 0.0
  %7289 = vmatprep.subr.mxu0 0.0
  %7290 = vmatpush1.msra.mxu0 0.0
  %7291 = vmatprep.subr.mxu0 0.0
  %7292 = vmatpush1.msra.mxu0 0.0
  %7293 = vmatprep.subr.mxu0 0.0
  %7294 = vmatpush1.msra.mxu0 0.0
  %7295 = vmatprep.subr.mxu0 0.0
  %7296 = vmatpush1.msra.mxu0 0.0
  %7297 = vmatprep.subr.mxu0 0.0
  %7298 = vmatpush1.msra.mxu0 0.0
  %7299 = vmatprep.subr.mxu0 0.0
  %7300 = vmatpush1.msra.mxu0 0.0
  %7301 = vmatprep.subr.mxu0 0.0
  %7302 = vmatpush1.msra.mxu0 0.0
  %7303 = vmatprep.mubr.f32.mxu0 0.0
  %7304 = vmatmul.mubr.f32.gmra.mrb[0].mxu0 %v7237
  %v7305 = vpop.f32.mrb[0].mxu0
  %v7306 = vadd.f32 %v7234, %v7305
  %v7307 = vpop.f32.mrb[0].mxu0
  %7308 = vdwg.mxu0
  %v7309 = vmax.f32 %v7306, 0.0
  %v7310 = vld [vmem:[%s22] sm:$0xff]
  %v7311 = vld [vmem:[%s22 + $0x8] sm:$0xff]
  %v7312 = vld [vmem:[%s23] sm:$0xff]
  %v7313 = vld [vmem:[%s23 + $0x8] sm:$0xff]
  %7315 = vset.pattern.permute.xlu0 0
  %7316 = vperm.xlu0 %7315, %v7312
  %v7317 = vpop.permute.xlu0 %7316
  %7320 = vset.pattern.permute.xlu0 0
  %7321 = vperm.xlu0 %7320, %v7313
  %v7322 = vpop.permute.xlu0 %7321
  %v7325 = vsel %vm214, %v7310, 0
  %v7328 = vsel %vm214, %v7311, 0
  %v7331 = vsel %vm1717, %v7309, 0
  %7333 = vmatprep.subr.mxu0 0.0
  %7334 = vmatpush1.msra.mxu0 %v7331
  %7335 = vmatprep.subr.mxu0 0.0
  %7336 = vmatpush1.msra.mxu0 0.0
  %7337 = vmatprep.subr.mxu0 0.0
  %7338 = vmatpush1.msra.mxu0 0.0
  %7339 = vmatprep.subr.mxu0 0.0
  %7340 = vmatpush1.msra.mxu0 0.0
  %7341 = vmatprep.subr.mxu0 0.0
  %7342 = vmatpush1.msra.mxu0 0.0
  %7343 = vmatprep.subr.mxu0 0.0
  %7344 = vmatpush1.msra.mxu0 0.0
  %7345 = vmatprep.subr.mxu0 0.0
  %7346 = vmatpush1.msra.mxu0 0.0
  %7347 = vmatprep.subr.mxu0 0.0
  %7348 = vmatpush1.msra.mxu0 0.0
  %7349 = vmatprep.subr.mxu0 0.0
  %7350 = vmatpush1.msra.mxu0 0.0
  %7351 = vmatprep.subr.mxu0 0.0
  %7352 = vmatpush1.msra.mxu0 0.0
  %7353 = vmatprep.subr.mxu0 0.0
  %7354 = vmatpush1.msra.mxu0 0.0
  %7355 = vmatprep.subr.mxu0 0.0
  %7356 = vmatpush1.msra.mxu0 0.0
  %7357 = vmatprep.subr.mxu0 0.0
  %7358 = vmatpush1.msra.mxu0 0.0
  %7359 = vmatprep.subr.mxu0 0.0
  %7360 = vmatpush1.msra.mxu0 0.0
  %7361 = vmatprep.subr.mxu0 0.0
  %7362 = vmatpush1.msra.mxu0 0.0
  %7363 = vmatprep.subr.mxu0 0.0
  %7364 = vmatpush1.msra.mxu0 0.0
  %7365 = vmatprep.subr.mxu0 0.0
  %7366 = vmatpush1.msra.mxu0 0.0
  %7367 = vmatprep.subr.mxu0 0.0
  %7368 = vmatpush1.msra.mxu0 0.0
  %7369 = vmatprep.subr.mxu0 0.0
  %7370 = vmatpush1.msra.mxu0 0.0
  %7371 = vmatprep.subr.mxu0 0.0
  %7372 = vmatpush1.msra.mxu0 0.0
  %7373 = vmatprep.subr.mxu0 0.0
  %7374 = vmatpush1.msra.mxu0 0.0
  %7375 = vmatprep.subr.mxu0 0.0
  %7376 = vmatpush1.msra.mxu0 0.0
  %7377 = vmatprep.subr.mxu0 0.0
  %7378 = vmatpush1.msra.mxu0 0.0
  %7379 = vmatprep.subr.mxu0 0.0
  %7380 = vmatpush1.msra.mxu0 0.0
  %7381 = vmatprep.subr.mxu0 0.0
  %7382 = vmatpush1.msra.mxu0 0.0
  %7383 = vmatprep.subr.mxu0 0.0
  %7384 = vmatpush1.msra.mxu0 0.0
  %7385 = vmatprep.subr.mxu0 0.0
  %7386 = vmatpush1.msra.mxu0 0.0
  %7387 = vmatprep.subr.mxu0 0.0
  %7388 = vmatpush1.msra.mxu0 0.0
  %7389 = vmatprep.subr.mxu0 0.0
  %7390 = vmatpush1.msra.mxu0 0.0
  %7391 = vmatprep.subr.mxu0 0.0
  %7392 = vmatpush1.msra.mxu0 0.0
  %7393 = vmatprep.subr.mxu0 0.0
  %7394 = vmatpush1.msra.mxu0 0.0
  %7395 = vmatprep.subr.mxu0 0.0
  %7396 = vmatpush1.msra.mxu0 0.0
  %7397 = vmatprep.mubr.f32.mxu0 0.0
  %7398 = vmatmul.mubr.f32.gmra.mrb[0].mxu0 %v7325
  %v7399 = vpop.f32.mrb[0].mxu0
  %v7400 = vadd.f32 %v7317, %v7399
  %v7401 = vpop.f32.mrb[0].mxu0
  %7402 = vmatprep.mubr.f32.mxu0 0.0
  %7403 = vmatmul.mubr.f32.gmra.mrb[0].mxu0 %v7328
  %v7404 = vpop.f32.mrb[0].mxu0
  %v7405 = vadd.f32 %v7322, %v7404
  %v7406 = vpop.f32.mrb[0].mxu0
  %7407 = vdwg.mxu0
  %v7408 = vxor.u32 %v7400, 2147483648
  %v7409 = vxor.u32 %v7405, 2147483648
  %v7410 = vmul.f32 %v7408, 1.442695
  %v7411 = vpow.pop %v7410
  %v7412 = vmul.f32 %v7409, 1.442695
  %v7413 = vpow.pop %v7412
  %v7414 = vadd.f32 %v7411, 1.0
  %v7415 = vadd.f32 %v7413, 1.0
  %v7416 = vrcp.pop %v7414
  %v7417 = vmul.f32 1.0, %v7416
  %v7418 = vrcp.pop %v7415
  %v7419 = vmul.f32 1.0, %v7418
  %v7420 = vmul.f32 %v7221, %v7417
  %v7421 = vmul.f32 %v7226, %v7419
  %v7422 = vld [vmem:[%s24] sm:$0x3]
  %v7423 = vld [vmem:[%s25] sm:$0x3]
  %7425 = vset.pattern.permute.xlu0 0
  %7426 = vperm.xlu0 %7425, %v7423
  %v7427 = vpop.permute.xlu0 %7426
  %v7430 = vsel %vm2576, %v7422, 0
  %7432 = vmatprep.subr.mxu0 0.0
  %7433 = vmatpush1.msra.mxu0 %v7420
  %7434 = vmatprep.subr.mxu0 0.0
  %7435 = vmatpush1.msra.mxu0 %v7421
  %7436 = vmatprep.subr.mxu0 0.0
  %7437 = vmatpush1.msra.mxu0 0.0
  %7438 = vmatprep.subr.mxu0 0.0
  %7439 = vmatpush1.msra.mxu0 0.0
  %7440 = vmatprep.subr.mxu0 0.0
  %7441 = vmatpush1.msra.mxu0 0.0
  %7442 = vmatprep.subr.mxu0 0.0
  %7443 = vmatpush1.msra.mxu0 0.0
  %7444 = vmatprep.subr.mxu0 0.0
  %7445 = vmatpush1.msra.mxu0 0.0
  %7446 = vmatprep.subr.mxu0 0.0
  %7447 = vmatpush1.msra.mxu0 0.0
  %7448 = vmatprep.subr.mxu0 0.0
  %7449 = vmatpush1.msra.mxu0 0.0
  %7450 = vmatprep.subr.mxu0 0.0
  %7451 = vmatpush1.msra.mxu0 0.0
  %7452 = vmatprep.subr.mxu0 0.0
  %7453 = vmatpush1.msra.mxu0 0.0
  %7454 = vmatprep.subr.mxu0 0.0
  %7455 = vmatpush1.msra.mxu0 0.0
  %7456 = vmatprep.subr.mxu0 0.0
  %7457 = vmatpush1.msra.mxu0 0.0
  %7458 = vmatprep.subr.mxu0 0.0
  %7459 = vmatpush1.msra.mxu0 0.0
  %7460 = vmatprep.subr.mxu0 0.0
  %7461 = vmatpush1.msra.mxu0 0.0
  %7462 = vmatprep.subr.mxu0 0.0
  %7463 = vmatpush1.msra.mxu0 0.0
  %7464 = vmatprep.subr.mxu0 0.0
  %7465 = vmatpush1.msra.mxu0 0.0
  %7466 = vmatprep.subr.mxu0 0.0
  %7467 = vmatpush1.msra.mxu0 0.0
  %7468 = vmatprep.subr.mxu0 0.0
  %7469 = vmatpush1.msra.mxu0 0.0
  %7470 = vmatprep.subr.mxu0 0.0
  %7471 = vmatpush1.msra.mxu0 0.0
  %7472 = vmatprep.subr.mxu0 0.0
  %7473 = vmatpush1.msra.mxu0 0.0
  %7474 = vmatprep.subr.mxu0 0.0
  %7475 = vmatpush1.msra.mxu0 0.0
  %7476 = vmatprep.subr.mxu0 0.0
  %7477 = vmatpush1.msra.mxu0 0.0
  %7478 = vmatprep.subr.mxu0 0.0
  %7479 = vmatpush1.msra.mxu0 0.0
  %7480 = vmatprep.subr.mxu0 0.0
  %7481 = vmatpush1.msra.mxu0 0.0
  %7482 = vmatprep.subr.mxu0 0.0
  %7483 = vmatpush1.msra.mxu0 0.0
  %7484 = vmatprep.subr.mxu0 0.0
  %7485 = vmatpush1.msra.mxu0 0.0
  %7486 = vmatprep.subr.mxu0 0.0
  %7487 = vmatpush1.msra.mxu0 0.0
  %7488 = vmatprep.subr.mxu0 0.0
  %7489 = vmatpush1.msra.mxu0 0.0
  %7490 = vmatprep.subr.mxu0 0.0
  %7491 = vmatpush1.msra.mxu0 0.0
  %7492 = vmatprep.subr.mxu0 0.0
  %7493 = vmatpush1.msra.mxu0 0.0
  %7494 = vmatprep.subr.mxu0 0.0
  %7495 = vmatpush1.msra.mxu0 0.0
  %7496 = vmatprep.mubr.f32.mxu0 0.0
  %7497 = vmatmul.mubr.f32.gmra.mrb[0].mxu0 %v7430
  %v7498 = vpop.f32.mrb[0].mxu0
  %v7499 = vadd.f32 %v7427, %v7498
  %v7500 = vpop.f32.mrb[0].mxu0
  %7501 = vdwg.mxu0
  %vm7502 = vcmask 9216
  %7503 = vst.msk [vmem:[%s26] sm:$0x3] %vm7502, %v7499
  // Predicated region
  $region106: #{twostage_forward.1} parent=0 // pred_check
    _
  $region107: #{twostage_forward.1} parent=0 // pred_check_branch
    %7505 = sbr.rel (0) target = $region109
  $region108: #{twostage_forward.1} parent=0 // pred_region
    _
  $region109: #{twostage_forward.1} parent=0 // pred_fallthru
    _
  // Predicated region
  $region110: #{twostage_forward.1} parent=0 // pred_check
    _
  $region111: #{twostage_forward.1} parent=0 // pred_check_branch
    %7507 = sbr.rel (0) target = $region113
  $region112: #{twostage_forward.1} parent=0 // pred_region
    _
  $region113: #{twostage_forward.1} parent=0 // pred_fallthru
    _

</llo_original>
